<compile_context>
chip_gen: v6e
topology: v6e:2x2x1
jax: 0.10.0
libtpu: 0.0.40
codegen_flags: <defaults>
</compile_context>

<pallas_src>
import functools

import numpy as np
import jax
import jax.numpy as jnp
from jax import lax
from jax.experimental import pallas as pl
from jax.experimental.pallas import tpu as pltpu


# ------------------------------ fused kernel -------------------------------- #

def _fused_forward_kernel(patches_ref, mask_ref,
                          e0w_ref, e0b_ref,
                          e1w_ref, e1b_ref,
                          rbw_ref, rbb_ref,
                          d0w_ref, d0b_ref,
                          dtw_ref, dtb_ref,
                          o_ref, *, Wo):
    """Whole Model.forward for Bb batch elements (grid=(B_pad//Bb,)).

    patches_ref : (R, 16*C + A) bf16   R = Bb*P rows; state patch + action cols
    mask_ref    : (9, R, 1)     bf16   0/1 validity masks for the 3x3 taps
    *_w / *_b   : weights (bf16) / biases (f32); 3x3 weights in fused
                  (9*Cin, Cout) layout, row = t*Cin + cin, t = dy*3 + dx
    o_ref       : (R, C*16)     f32    ConvTranspose output, cols (co, i, j)
    """
    bf16 = jnp.bfloat16
    R = patches_ref.shape[0]

    def mm(a, b):
        return jnp.dot(a, b, preferred_element_type=jnp.float32)

    masks = [mask_ref[t] for t in range(9)]          # each (R, 1) bf16

    def shift_rows(x, off):
        # y[r] = x[r + off] with zero fill outside [0, R); off is static.
        if off == 0:
            return x
        pad = jnp.zeros((abs(off), x.shape[1]), x.dtype)
        if off > 0:
            return jnp.concatenate([x[off:, :], pad], axis=0)
        return jnp.concatenate([pad, x[:R + off, :]], axis=0)

    def conv3x3(x, w_fused, b, residual=None):
        # x: (R, Cin) f32 ; w_fused: (9*Cin, Cout) bf16 ; b: (1, Cout) f32
        xb = x.astype(bf16)
        pieces = []
        for dy in range(3):
            for dx in range(3):
                off = (dy - 1) * Wo + (dx - 1)
                pieces.append(shift_rows(xb, off) * masks[dy * 3 + dx])
        xs = jnp.concatenate(pieces, axis=1)          # (R, 9*Cin) bf16 im2col
        acc = mm(xs, w_fused) + b                     # single K=9*Cin matmul
        if residual is not None:
            acc = acc + residual
        return jnp.maximum(acc, 0.0)

    # encoder conv0 (k=4, s=4): state patches + pre-reduced action columns
    x = jnp.maximum(mm(patches_ref[...], e0w_ref[...]) + e0b_ref[...], 0.0)

    # encoder conv1 (3x3, pad 1) + ReLU
    x = conv3x3(x, e1w_ref[...], e1b_ref[...])

    # two residual blocks: relu(conv1(relu(conv0(x))) + x)
    for k in range(2):
        h = conv3x3(x, rbw_ref[2 * k], rbb_ref[2 * k])
        x = conv3x3(h, rbw_ref[2 * k + 1], rbb_ref[2 * k + 1], residual=x)

    # decoder 1x1 conv + ReLU
    z = jnp.maximum(mm(x.astype(bf16), d0w_ref[...]) + d0b_ref[...], 0.0)

    # decoder ConvTranspose (k=4, s=4) as matmul + bias
    o_ref[...] = (mm(z.astype(bf16), dtw_ref[...]) + dtb_ref[...]).astype(o_ref.dtype)


# ------------------------------ parameters --------------------------------- #

def _xavier_uniform(key, shape, fan_in, fan_out):
    limit = float(np.sqrt(6.0 / (fan_in + fan_out)))
    return jax.random.uniform(key, shape, jnp.float32, -limit, limit)


def _bias_init(key, n, fan_in):
    bound = float(1.0 / np.sqrt(fan_in))
    return jax.random.uniform(key, (1, n), jnp.float32, -bound, bound)


def _build_masks(Bb, Ho, Wo):
    """(9, Bb*Ho*Wo, 1) 0/1 masks: tap t valid at latent position (h, w)."""
    P = Ho * Wo
    m = np.zeros((9, P, 1), np.float32)
    for dy in range(3):
        for dx in range(3):
            t = dy * 3 + dx
            for h in range(Ho):
                for w in range(Wo):
                    sh, sw = h + dy - 1, w + dx - 1
                    if 0 <= sh < Ho and 0 <= sw < Wo:
                        m[t, h * Wo + w, 0] = 1.0
    return np.tile(m, (1, Bb, 1))


def init_params(key, input_shape, outputs_count):
    C, H, W = input_shape
    A = outputs_count
    Cx = C + A
    bf = jnp.bfloat16
    keys = jax.random.split(key, 24)
    p = {}

    # encoder conv0: k=4, s=4, (C+A) -> 32 ; state rows ordered (ki, kj, c)
    fi0, fo0 = Cx * 16, 32 * 16
    ws = _xavier_uniform(keys[0], (16 * C, 32), fi0, fo0)
    wa = _xavier_uniform(keys[1], (16, A, 32), fi0, fo0)    # per-position action
    p['enc0_w'] = jnp.concatenate([ws, wa.sum(axis=0)], axis=0).astype(bf)
    p['enc0_wa_full'] = wa.astype(bf)                        # reference only
    p['enc0_b'] = _bias_init(keys[2], 32, fi0)

    # encoder conv1: 3x3, 32 -> 64 ; fused (9*32, 64), row = t*32 + cin
    p['enc1_w'] = _xavier_uniform(keys[3], (9 * 32, 64), 32 * 9, 64 * 9).astype(bf)
    p['enc1_b'] = _bias_init(keys[4], 64, 32 * 9)

    # two ResidualBlocks (64 channels) -> (4, 9*64, 64) / (4, 1, 64)
    rbw, rbb = [], []
    for i in range(4):
        rbw.append(_xavier_uniform(keys[5 + 2 * i], (9 * 64, 64), 64 * 9, 64 * 9))
        rbb.append(_bias_init(keys[6 + 2 * i], 64, 64 * 9))
    p['rb_w'] = jnp.stack(rbw).astype(bf)
    p['rb_b'] = jnp.stack(rbb)

    # decoder conv 1x1: 64 -> 32
    p['dec0_w'] = _xavier_uniform(keys[13], (64, 32), 64, 32).astype(bf)
    p['dec0_b'] = _bias_init(keys[14], 32, 64)

    # decoder ConvTranspose2d 32 -> C, k=4, s=4 ; columns ordered (co, i, j)
    p['dect_w'] = _xavier_uniform(keys[15], (32, C * 16), C * 16, 32 * 16).astype(bf)
    bnd = float(1.0 / np.sqrt(32 * 16))
    dect_b = jax.random.uniform(keys[16], (C,), jnp.float32, -bnd, bnd)
    p['dect_b'] = dect_b
    p['dect_b_rep'] = jnp.repeat(dect_b, 16)[None, :]
    return p


# ------------------------------- forward ----------------------------------- #

def model_forward(params, state, action, input_shape, outputs_count):
    """state: (B, C, H, W) NCHW (as in PyTorch), action: (B, outputs_count)."""
    C, H, W = input_shape
    assert H % 4 == 0 and W % 4 == 0
    B = state.shape[0]
    A = outputs_count
    Ho, Wo = H // 4, W // 4
    P = Ho * Wo
    Kp = 16 * C + A
    C16 = 16 * C

    # ---- batch blocking: aim for Bb*P = 128 MXU rows, >=2 grid steps ----
    Bb = max(1, 128 // P)
    if B < 2 * Bb:
        Bb = max(1, B // 2) if B >= 2 else 1
    if (Bb * P) % 8 != 0:           # fall back to a single full-array block
        Bb = max(1, B)
    B_pad = -(-B // Bb) * Bb
    R = Bb * P
    grid = (B_pad // Bb,)

    if B_pad != B:
        pad = B_pad - B
        state_p = jnp.concatenate([state, jnp.zeros((pad, C, H, W), state.dtype)], 0)
        action_p = jnp.concatenate([action, jnp.zeros((pad, A), action.dtype)], 0)
    else:
        state_p, action_p = state, action

    # ---- wrapper-side layout glue (patch extraction only) ----
    x_nhwc = jnp.transpose(state_p, (0, 2, 3, 1))
    sp = x_nhwc.reshape(B_pad, Ho, 4, Wo, 4, C).transpose(0, 1, 3, 2, 4, 5)
    sp = sp.reshape(B_pad, P, 16 * C)
    ap = jnp.broadcast_to(action_p[:, None, :], (B_pad, P, A))
    patches = jnp.concatenate([sp, ap], axis=-1).reshape(B_pad * P, Kp)
    patches = patches.astype(jnp.bfloat16)

    masks = jnp.asarray(_build_masks(Bb, Ho, Wo), jnp.bfloat16)       # (9, R, 1)

    # rough cost estimate (per-element FLOPs x rows; bf16 inputs, f32 out)
    flops_per_row = 2 * (Kp * 32 + 9 * 32 * 64 + 4 * 9 * 64 * 64 + 64 * 32 + 32 * C16)
    weight_bytes = 2 * (Kp * 32 + 9 * 32 * 64 + 4 * 9 * 64 * 64 + 64 * 32 + 32 * C16)
    cost = pl.CostEstimate(
        flops=flops_per_row * B_pad * P,
        transcendentals=0,
        bytes_accessed=B_pad * P * (2 * Kp + 4 * C16) + weight_bytes + 2 * 9 * R)

    out = pl.pallas_call(
        functools.partial(_fused_forward_kernel, Wo=Wo),
        out_shape=jax.ShapeDtypeStruct((B_pad * P, C16), jnp.float32),
        grid=grid,
        in_specs=[
            pl.BlockSpec((R, Kp), lambda i: (i, 0)),                # patches
            pl.BlockSpec((9, R, 1), lambda i: (0, 0, 0)),           # tap masks
            pl.BlockSpec((Kp, 32), lambda i: (0, 0)),               # enc0_w
            pl.BlockSpec((1, 32), lambda i: (0, 0)),                # enc0_b
            pl.BlockSpec((9 * 32, 64), lambda i: (0, 0)),           # enc1_w
            pl.BlockSpec((1, 64), lambda i: (0, 0)),                # enc1_b
            pl.BlockSpec((4, 9 * 64, 64), lambda i: (0, 0, 0)),     # rb_w
            pl.BlockSpec((4, 1, 64), lambda i: (0, 0, 0)),          # rb_b
            pl.BlockSpec((64, 32), lambda i: (0, 0)),               # dec0_w
            pl.BlockSpec((1, 32), lambda i: (0, 0)),                # dec0_b
            pl.BlockSpec((32, C16), lambda i: (0, 0)),              # dect_w
            pl.BlockSpec((1, C16), lambda i: (0, 0)),               # dect_b_rep
        ],
        out_specs=pl.BlockSpec((R, C16), lambda i: (i, 0)),
        compiler_params=pltpu.CompilerParams(
            dimension_semantics=("parallel",)),
        cost_estimate=cost,
    )(patches, masks,
      params['enc0_w'], params['enc0_b'], params['enc1_w'], params['enc1_b'],
      params['rb_w'], params['rb_b'], params['dec0_w'], params['dec0_b'],
      params['dect_w'], params['dect_b_rep'])

    # pixel-scatter back to NCHW and add the state residual (fused by XLA)
    out = out.reshape(B_pad, P, C16)[:B]
    out6 = out.reshape(B, Ho, Wo, C, 4, 4).transpose(0, 3, 1, 4, 2, 5)
    return out6.reshape(B, C, H, W) + state


# --------------------------- pure-JAX reference ----------------------------- #

def ref_forward(params, state, action, input_shape, outputs_count):
    C, H, W = input_shape
    B = state.shape[0]
    A = outputs_count
    dn = ('NHWC', 'HWIO', 'NHWC')
    hi = lax.Precision.HIGHEST
    f32 = jnp.float32

    x = jnp.transpose(state, (0, 2, 3, 1))
    act_map = jnp.broadcast_to(action[:, None, None, :], (B, H, W, A))
    xin = jnp.concatenate([x, act_map], axis=-1)

    ws = params['enc0_w'][:16 * C].astype(f32).reshape(4, 4, C, 32)
    wa = params['enc0_wa_full'].astype(f32).reshape(4, 4, A, 32)
    w0 = jnp.concatenate([ws, wa], axis=2)                       # (4,4,C+A,32)
    y = lax.conv_general_dilated(xin, w0, (4, 4), 'VALID',
                                 dimension_numbers=dn, precision=hi) + params['enc0_b'][0]
    y = jax.nn.relu(y)

    def c3(inp, wf, b):
        cin = wf.shape[0] // 9
        cout = wf.shape[1]
        wk = wf.astype(f32).reshape(3, 3, cin, cout)
        return lax.conv_general_dilated(inp, wk, (1, 1), ((1, 1), (1, 1)),
                                        dimension_numbers=dn, precision=hi) + b[0]

    y = jax.nn.relu(c3(y, params['enc1_w'], params['enc1_b']))
    for k in range(2):
        h0 = jax.nn.relu(c3(y, params['rb_w'][2 * k], params['rb_b'][2 * k]))
        y = jax.nn.relu(c3(h0, params['rb_w'][2 * k + 1], params['rb_b'][2 * k + 1]) + y)

    z = lax.conv_general_dilated(y, params['dec0_w'].astype(f32).reshape(1, 1, 64, 32),
                                 (1, 1), 'VALID', dimension_numbers=dn,
                                 precision=hi) + params['dec0_b'][0]
    z = jax.nn.relu(z)

    wt = params['dect_w'].astype(f32).reshape(32, C, 4, 4)
    t = jnp.einsum('bhwc,coij->bhiwjo', z, wt, precision=hi)
    t = t.reshape(B, H, W, C) + params['dect_b']
    out = t + x
    return jnp.transpose(out, (0, 3, 1, 2))


# --------------------------------- main ------------------------------------ #

if __name__ == "__main__":
    input_shape = (4, 16, 16)   # (C, H, W) — H, W multiples of 4
    outputs_count = 8           # action dim
    B = 16                      # gives Bb=8 (128 MXU rows) and 2 parallel steps

    key = jax.random.PRNGKey(0)
    kp, ks, ka = jax.random.split(key, 3)
    params = init_params(kp, input_shape, outputs_count)
    state = jax.random.normal(ks, (B,) + input_shape, jnp.float32)
    action = jax.random.normal(ka, (B, outputs_count), jnp.float32)

    fwd = jax.jit(functools.partial(model_forward,
                                    input_shape=input_shape,
                                    outputs_count=outputs_count))
    out = jax.block_until_ready(fwd(params, state, action))
    assert out.shape == (B,) + input_shape, out.shape

    ref = ref_forward(params, state, action, input_shape, outputs_count)
    np.testing.assert_allclose(np.asarray(out), np.asarray(ref),
                               rtol=5e-2, atol=5e-2)

    print("KERNEL_OK")
</pallas_src>

<mosaic_0001>
module attributes {stable_mosaic.version = 11 : i64} {
  func.func @_fused_forward_kernel(%arg0: i32, %arg1: memref<128x72xbf16, #tpu.memory_space<vmem>>, %arg2: memref<9x128x1xbf16, #tpu.memory_space<vmem>>, %arg3: memref<72x32xbf16, #tpu.memory_space<vmem>>, %arg4: memref<1x32xf32, #tpu.memory_space<vmem>>, %arg5: memref<288x64xbf16, #tpu.memory_space<vmem>>, %arg6: memref<1x64xf32, #tpu.memory_space<vmem>>, %arg7: memref<4x576x64xbf16, #tpu.memory_space<vmem>>, %arg8: memref<4x1x64xf32, #tpu.memory_space<vmem>>, %arg9: memref<64x32xbf16, #tpu.memory_space<vmem>>, %arg10: memref<1x32xf32, #tpu.memory_space<vmem>>, %arg11: memref<32x64xbf16, #tpu.memory_space<vmem>>, %arg12: memref<1x64xf32, #tpu.memory_space<vmem>>, %arg13: memref<128x64xf32, #tpu.memory_space<vmem>>) attributes {dimension_semantics = [#tpu.dimension_semantics<parallel>], iteration_bounds = array<i64: 2>, scalar_prefetch = 0 : i64, scratch_operands = 0 : i64, tpu.core_type = #tpu.core_type<tc>, window_params = [{transform_indices = @transform_0, window_bounds = array<i64: 128, 72>}, {pipeline_mode = #tpu.pipeline_mode<synchronous>, transform_indices = @transform_1, window_bounds = array<i64: 9, 128, 1>}, {pipeline_mode = #tpu.pipeline_mode<synchronous>, transform_indices = @transform_2, window_bounds = array<i64: 72, 32>}, {pipeline_mode = #tpu.pipeline_mode<synchronous>, transform_indices = @transform_3, window_bounds = array<i64: 1, 32>}, {pipeline_mode = #tpu.pipeline_mode<synchronous>, transform_indices = @transform_4, window_bounds = array<i64: 288, 64>}, {pipeline_mode = #tpu.pipeline_mode<synchronous>, transform_indices = @transform_5, window_bounds = array<i64: 1, 64>}, {pipeline_mode = #tpu.pipeline_mode<synchronous>, transform_indices = @transform_6, window_bounds = array<i64: 4, 576, 64>}, {pipeline_mode = #tpu.pipeline_mode<synchronous>, transform_indices = @transform_7, window_bounds = array<i64: 4, 1, 64>}, {pipeline_mode = #tpu.pipeline_mode<synchronous>, transform_indices = @transform_8, window_bounds = array<i64: 64, 32>}, {pipeline_mode = #tpu.pipeline_mode<synchronous>, transform_indices = @transform_9, window_bounds = array<i64: 1, 32>}, {pipeline_mode = #tpu.pipeline_mode<synchronous>, transform_indices = @transform_10, window_bounds = array<i64: 32, 64>}, {pipeline_mode = #tpu.pipeline_mode<synchronous>, transform_indices = @transform_11, window_bounds = array<i64: 1, 64>}, {transform_indices = @transform_12, window_bounds = array<i64: 128, 64>}]} {
    %c0 = arith.constant 0 : index
    %c0_0 = arith.constant 0 : index
    %c0_1 = arith.constant 0 : index
    %0 = vector.load %arg2[%c0, %c0_0, %c0_1] : memref<9x128x1xbf16, #tpu.memory_space<vmem>>, vector<1x128x1xbf16>
    %1 = vector.shape_cast %0 : vector<1x128x1xbf16> to vector<128x1xbf16>
    %c1 = arith.constant 1 : index
    %c0_2 = arith.constant 0 : index
    %c0_3 = arith.constant 0 : index
    %2 = vector.load %arg2[%c1, %c0_2, %c0_3] : memref<9x128x1xbf16, #tpu.memory_space<vmem>>, vector<1x128x1xbf16>
    %3 = vector.shape_cast %2 : vector<1x128x1xbf16> to vector<128x1xbf16>
    %c2 = arith.constant 2 : index
    %c0_4 = arith.constant 0 : index
    %c0_5 = arith.constant 0 : index
    %4 = vector.load %arg2[%c2, %c0_4, %c0_5] : memref<9x128x1xbf16, #tpu.memory_space<vmem>>, vector<1x128x1xbf16>
    %5 = vector.shape_cast %4 : vector<1x128x1xbf16> to vector<128x1xbf16>
    %c3 = arith.constant 3 : index
    %c0_6 = arith.constant 0 : index
    %c0_7 = arith.constant 0 : index
    %6 = vector.load %arg2[%c3, %c0_6, %c0_7] : memref<9x128x1xbf16, #tpu.memory_space<vmem>>, vector<1x128x1xbf16>
    %7 = vector.shape_cast %6 : vector<1x128x1xbf16> to vector<128x1xbf16>
    %c4 = arith.constant 4 : index
    %c0_8 = arith.constant 0 : index
    %c0_9 = arith.constant 0 : index
    %8 = vector.load %arg2[%c4, %c0_8, %c0_9] : memref<9x128x1xbf16, #tpu.memory_space<vmem>>, vector<1x128x1xbf16>
    %9 = vector.shape_cast %8 : vector<1x128x1xbf16> to vector<128x1xbf16>
    %c5 = arith.constant 5 : index
    %c0_10 = arith.constant 0 : index
    %c0_11 = arith.constant 0 : index
    %10 = vector.load %arg2[%c5, %c0_10, %c0_11] : memref<9x128x1xbf16, #tpu.memory_space<vmem>>, vector<1x128x1xbf16>
    %11 = vector.shape_cast %10 : vector<1x128x1xbf16> to vector<128x1xbf16>
    %c6 = arith.constant 6 : index
    %c0_12 = arith.constant 0 : index
    %c0_13 = arith.constant 0 : index
    %12 = vector.load %arg2[%c6, %c0_12, %c0_13] : memref<9x128x1xbf16, #tpu.memory_space<vmem>>, vector<1x128x1xbf16>
    %13 = vector.shape_cast %12 : vector<1x128x1xbf16> to vector<128x1xbf16>
    %c7 = arith.constant 7 : index
    %c0_14 = arith.constant 0 : index
    %c0_15 = arith.constant 0 : index
    %14 = vector.load %arg2[%c7, %c0_14, %c0_15] : memref<9x128x1xbf16, #tpu.memory_space<vmem>>, vector<1x128x1xbf16>
    %15 = vector.shape_cast %14 : vector<1x128x1xbf16> to vector<128x1xbf16>
    %c8 = arith.constant 8 : index
    %c0_16 = arith.constant 0 : index
    %c0_17 = arith.constant 0 : index
    %16 = vector.load %arg2[%c8, %c0_16, %c0_17] : memref<9x128x1xbf16, #tpu.memory_space<vmem>>, vector<1x128x1xbf16>
    %17 = vector.shape_cast %16 : vector<1x128x1xbf16> to vector<128x1xbf16>
    %c0_18 = arith.constant 0 : index
    %c0_19 = arith.constant 0 : index
    %18 = vector.load %arg1[%c0_18, %c0_19] : memref<128x72xbf16, #tpu.memory_space<vmem>>, vector<128x72xbf16>
    %c0_20 = arith.constant 0 : index
    %c0_21 = arith.constant 0 : index
    %19 = vector.load %arg3[%c0_20, %c0_21] : memref<72x32xbf16, #tpu.memory_space<vmem>>, vector<72x32xbf16>
    %cst = arith.constant dense<0.000000e+00> : vector<128x32xf32>
    %20 = tpu.matmul %18, %19, %cst {dimension_numbers = #tpu.dot_dimension_numbers<[1], [0], [0], [1], [0, 0, 1, 1], [], []>} : vector<128x72xbf16>, vector<72x32xbf16>, vector<128x32xf32> -> vector<128x32xf32>
    %c0_22 = arith.constant 0 : index
    %c0_23 = arith.constant 0 : index
    %21 = vector.load %arg4[%c0_22, %c0_23] : memref<1x32xf32, #tpu.memory_space<vmem>>, vector<1x32xf32>
    %22 = vector.broadcast %21 : vector<1x32xf32> to vector<128x32xf32>
    %23 = arith.addf %20, %22 : vector<128x32xf32>
    %cst_24 = arith.constant 0.000000e+00 : f32
    %24 = vector.broadcast %cst_24 : f32 to vector<128x32xf32>
    %25 = arith.maximumf %23, %24 : vector<128x32xf32>
    %c0_25 = arith.constant 0 : index
    %c0_26 = arith.constant 0 : index
    %26 = vector.load %arg5[%c0_25, %c0_26] : memref<288x64xbf16, #tpu.memory_space<vmem>>, vector<288x64xbf16>
    %c0_27 = arith.constant 0 : index
    %c0_28 = arith.constant 0 : index
    %27 = vector.load %arg6[%c0_27, %c0_28] : memref<1x64xf32, #tpu.memory_space<vmem>>, vector<1x64xf32>
    %28 = arith.truncf %25 : vector<128x32xf32> to vector<128x32xbf16>
    %cst_29 = arith.constant 0.000000e+00 : bf16
    %29 = vector.broadcast %cst_29 : bf16 to vector<5x32xbf16>
    %30 = vector.extract_strided_slice %28 {offsets = [0, 0], sizes = [123, 32], strides = [1, 1]} : vector<128x32xbf16> to vector<123x32xbf16>
    %31 = tpu.concatenate %29, %30 in 0 : vector<5x32xbf16>, vector<123x32xbf16> -> vector<128x32xbf16>
    %32 = vector.broadcast %1 : vector<128x1xbf16> to vector<128x32xbf16>
    %33 = arith.mulf %31, %32 : vector<128x32xbf16>
    %cst_30 = arith.constant 0.000000e+00 : bf16
    %34 = vector.broadcast %cst_30 : bf16 to vector<4x32xbf16>
    %35 = vector.extract_strided_slice %28 {offsets = [0, 0], sizes = [124, 32], strides = [1, 1]} : vector<128x32xbf16> to vector<124x32xbf16>
    %36 = tpu.concatenate %34, %35 in 0 : vector<4x32xbf16>, vector<124x32xbf16> -> vector<128x32xbf16>
    %37 = vector.broadcast %3 : vector<128x1xbf16> to vector<128x32xbf16>
    %38 = arith.mulf %36, %37 : vector<128x32xbf16>
    %cst_31 = arith.constant 0.000000e+00 : bf16
    %39 = vector.broadcast %cst_31 : bf16 to vector<3x32xbf16>
    %40 = vector.extract_strided_slice %28 {offsets = [0, 0], sizes = [125, 32], strides = [1, 1]} : vector<128x32xbf16> to vector<125x32xbf16>
    %41 = tpu.concatenate %39, %40 in 0 : vector<3x32xbf16>, vector<125x32xbf16> -> vector<128x32xbf16>
    %42 = vector.broadcast %5 : vector<128x1xbf16> to vector<128x32xbf16>
    %43 = arith.mulf %41, %42 : vector<128x32xbf16>
    %cst_32 = arith.constant 0.000000e+00 : bf16
    %44 = vector.broadcast %cst_32 : bf16 to vector<1x32xbf16>
    %45 = vector.extract_strided_slice %28 {offsets = [0, 0], sizes = [127, 32], strides = [1, 1]} : vector<128x32xbf16> to vector<127x32xbf16>
    %46 = tpu.concatenate %44, %45 in 0 : vector<1x32xbf16>, vector<127x32xbf16> -> vector<128x32xbf16>
    %47 = vector.broadcast %7 : vector<128x1xbf16> to vector<128x32xbf16>
    %48 = arith.mulf %46, %47 : vector<128x32xbf16>
    %49 = vector.broadcast %9 : vector<128x1xbf16> to vector<128x32xbf16>
    %50 = arith.mulf %28, %49 : vector<128x32xbf16>
    %cst_33 = arith.constant 0.000000e+00 : bf16
    %51 = vector.broadcast %cst_33 : bf16 to vector<1x32xbf16>
    %52 = vector.extract_strided_slice %28 {offsets = [1, 0], sizes = [127, 32], strides = [1, 1]} : vector<128x32xbf16> to vector<127x32xbf16>
    %53 = tpu.concatenate %52, %51 in 0 : vector<127x32xbf16>, vector<1x32xbf16> -> vector<128x32xbf16>
    %54 = vector.broadcast %11 : vector<128x1xbf16> to vector<128x32xbf16>
    %55 = arith.mulf %53, %54 : vector<128x32xbf16>
    %cst_34 = arith.constant 0.000000e+00 : bf16
    %56 = vector.broadcast %cst_34 : bf16 to vector<3x32xbf16>
    %57 = vector.extract_strided_slice %28 {offsets = [3, 0], sizes = [125, 32], strides = [1, 1]} : vector<128x32xbf16> to vector<125x32xbf16>
    %58 = tpu.concatenate %57, %56 in 0 : vector<125x32xbf16>, vector<3x32xbf16> -> vector<128x32xbf16>
    %59 = vector.broadcast %13 : vector<128x1xbf16> to vector<128x32xbf16>
    %60 = arith.mulf %58, %59 : vector<128x32xbf16>
    %cst_35 = arith.constant 0.000000e+00 : bf16
    %61 = vector.broadcast %cst_35 : bf16 to vector<4x32xbf16>
    %62 = vector.extract_strided_slice %28 {offsets = [4, 0], sizes = [124, 32], strides = [1, 1]} : vector<128x32xbf16> to vector<124x32xbf16>
    %63 = tpu.concatenate %62, %61 in 0 : vector<124x32xbf16>, vector<4x32xbf16> -> vector<128x32xbf16>
    %64 = vector.broadcast %15 : vector<128x1xbf16> to vector<128x32xbf16>
    %65 = arith.mulf %63, %64 : vector<128x32xbf16>
    %cst_36 = arith.constant 0.000000e+00 : bf16
    %66 = vector.broadcast %cst_36 : bf16 to vector<5x32xbf16>
    %67 = vector.extract_strided_slice %28 {offsets = [5, 0], sizes = [123, 32], strides = [1, 1]} : vector<128x32xbf16> to vector<123x32xbf16>
    %68 = tpu.concatenate %67, %66 in 0 : vector<123x32xbf16>, vector<5x32xbf16> -> vector<128x32xbf16>
    %69 = vector.broadcast %17 : vector<128x1xbf16> to vector<128x32xbf16>
    %70 = arith.mulf %68, %69 : vector<128x32xbf16>
    %71 = tpu.concatenate %33, %38, %43, %48, %50, %55, %60, %65, %70 in 1 : vector<128x32xbf16>, vector<128x32xbf16>, vector<128x32xbf16>, vector<128x32xbf16>, vector<128x32xbf16>, vector<128x32xbf16>, vector<128x32xbf16>, vector<128x32xbf16>, vector<128x32xbf16> -> vector<128x288xbf16>
    %cst_37 = arith.constant dense<0.000000e+00> : vector<128x64xf32>
    %72 = tpu.matmul %71, %26, %cst_37 {dimension_numbers = #tpu.dot_dimension_numbers<[1], [0], [0], [1], [0, 0, 1, 1], [], []>} : vector<128x288xbf16>, vector<288x64xbf16>, vector<128x64xf32> -> vector<128x64xf32>
    %73 = vector.broadcast %27 : vector<1x64xf32> to vector<128x64xf32>
    %74 = arith.addf %72, %73 : vector<128x64xf32>
    %cst_38 = arith.constant 0.000000e+00 : f32
    %75 = vector.broadcast %cst_38 : f32 to vector<128x64xf32>
    %76 = arith.maximumf %74, %75 : vector<128x64xf32>
    %c0_39 = arith.constant 0 : index
    %c0_40 = arith.constant 0 : index
    %c0_41 = arith.constant 0 : index
    %77 = vector.load %arg7[%c0_39, %c0_40, %c0_41] : memref<4x576x64xbf16, #tpu.memory_space<vmem>>, vector<1x576x64xbf16>
    %78 = vector.shape_cast %77 : vector<1x576x64xbf16> to vector<576x64xbf16>
    %c0_42 = arith.constant 0 : index
    %c0_43 = arith.constant 0 : index
    %c0_44 = arith.constant 0 : index
    %79 = vector.load %arg8[%c0_42, %c0_43, %c0_44] : memref<4x1x64xf32, #tpu.memory_space<vmem>>, vector<1x1x64xf32>
    %80 = vector.shape_cast %79 : vector<1x1x64xf32> to vector<1x64xf32>
    %81 = arith.truncf %76 : vector<128x64xf32> to vector<128x64xbf16>
    %cst_45 = arith.constant 0.000000e+00 : bf16
    %82 = vector.broadcast %cst_45 : bf16 to vector<5x64xbf16>
    %83 = vector.extract_strided_slice %81 {offsets = [0, 0], sizes = [123, 64], strides = [1, 1]} : vector<128x64xbf16> to vector<123x64xbf16>
    %84 = tpu.concatenate %82, %83 in 0 : vector<5x64xbf16>, vector<123x64xbf16> -> vector<128x64xbf16>
    %85 = vector.broadcast %1 : vector<128x1xbf16> to vector<128x64xbf16>
    %86 = arith.mulf %84, %85 : vector<128x64xbf16>
    %cst_46 = arith.constant 0.000000e+00 : bf16
    %87 = vector.broadcast %cst_46 : bf16 to vector<4x64xbf16>
    %88 = vector.extract_strided_slice %81 {offsets = [0, 0], sizes = [124, 64], strides = [1, 1]} : vector<128x64xbf16> to vector<124x64xbf16>
    %89 = tpu.concatenate %87, %88 in 0 : vector<4x64xbf16>, vector<124x64xbf16> -> vector<128x64xbf16>
    %90 = vector.broadcast %3 : vector<128x1xbf16> to vector<128x64xbf16>
    %91 = arith.mulf %89, %90 : vector<128x64xbf16>
    %cst_47 = arith.constant 0.000000e+00 : bf16
    %92 = vector.broadcast %cst_47 : bf16 to vector<3x64xbf16>
    %93 = vector.extract_strided_slice %81 {offsets = [0, 0], sizes = [125, 64], strides = [1, 1]} : vector<128x64xbf16> to vector<125x64xbf16>
    %94 = tpu.concatenate %92, %93 in 0 : vector<3x64xbf16>, vector<125x64xbf16> -> vector<128x64xbf16>
    %95 = vector.broadcast %5 : vector<128x1xbf16> to vector<128x64xbf16>
    %96 = arith.mulf %94, %95 : vector<128x64xbf16>
    %cst_48 = arith.constant 0.000000e+00 : bf16
    %97 = vector.broadcast %cst_48 : bf16 to vector<1x64xbf16>
    %98 = vector.extract_strided_slice %81 {offsets = [0, 0], sizes = [127, 64], strides = [1, 1]} : vector<128x64xbf16> to vector<127x64xbf16>
    %99 = tpu.concatenate %97, %98 in 0 : vector<1x64xbf16>, vector<127x64xbf16> -> vector<128x64xbf16>
    %100 = vector.broadcast %7 : vector<128x1xbf16> to vector<128x64xbf16>
    %101 = arith.mulf %99, %100 : vector<128x64xbf16>
    %102 = vector.broadcast %9 : vector<128x1xbf16> to vector<128x64xbf16>
    %103 = arith.mulf %81, %102 : vector<128x64xbf16>
    %cst_49 = arith.constant 0.000000e+00 : bf16
    %104 = vector.broadcast %cst_49 : bf16 to vector<1x64xbf16>
    %105 = vector.extract_strided_slice %81 {offsets = [1, 0], sizes = [127, 64], strides = [1, 1]} : vector<128x64xbf16> to vector<127x64xbf16>
    %106 = tpu.concatenate %105, %104 in 0 : vector<127x64xbf16>, vector<1x64xbf16> -> vector<128x64xbf16>
    %107 = vector.broadcast %11 : vector<128x1xbf16> to vector<128x64xbf16>
    %108 = arith.mulf %106, %107 : vector<128x64xbf16>
    %cst_50 = arith.constant 0.000000e+00 : bf16
    %109 = vector.broadcast %cst_50 : bf16 to vector<3x64xbf16>
    %110 = vector.extract_strided_slice %81 {offsets = [3, 0], sizes = [125, 64], strides = [1, 1]} : vector<128x64xbf16> to vector<125x64xbf16>
    %111 = tpu.concatenate %110, %109 in 0 : vector<125x64xbf16>, vector<3x64xbf16> -> vector<128x64xbf16>
    %112 = vector.broadcast %13 : vector<128x1xbf16> to vector<128x64xbf16>
    %113 = arith.mulf %111, %112 : vector<128x64xbf16>
    %cst_51 = arith.constant 0.000000e+00 : bf16
    %114 = vector.broadcast %cst_51 : bf16 to vector<4x64xbf16>
    %115 = vector.extract_strided_slice %81 {offsets = [4, 0], sizes = [124, 64], strides = [1, 1]} : vector<128x64xbf16> to vector<124x64xbf16>
    %116 = tpu.concatenate %115, %114 in 0 : vector<124x64xbf16>, vector<4x64xbf16> -> vector<128x64xbf16>
    %117 = vector.broadcast %15 : vector<128x1xbf16> to vector<128x64xbf16>
    %118 = arith.mulf %116, %117 : vector<128x64xbf16>
    %cst_52 = arith.constant 0.000000e+00 : bf16
    %119 = vector.broadcast %cst_52 : bf16 to vector<5x64xbf16>
    %120 = vector.extract_strided_slice %81 {offsets = [5, 0], sizes = [123, 64], strides = [1, 1]} : vector<128x64xbf16> to vector<123x64xbf16>
    %121 = tpu.concatenate %120, %119 in 0 : vector<123x64xbf16>, vector<5x64xbf16> -> vector<128x64xbf16>
    %122 = vector.broadcast %17 : vector<128x1xbf16> to vector<128x64xbf16>
    %123 = arith.mulf %121, %122 : vector<128x64xbf16>
    %124 = tpu.concatenate %86, %91, %96, %101, %103, %108, %113, %118, %123 in 1 : vector<128x64xbf16>, vector<128x64xbf16>, vector<128x64xbf16>, vector<128x64xbf16>, vector<128x64xbf16>, vector<128x64xbf16>, vector<128x64xbf16>, vector<128x64xbf16>, vector<128x64xbf16> -> vector<128x576xbf16>
    %cst_53 = arith.constant dense<0.000000e+00> : vector<128x64xf32>
    %125 = tpu.matmul %124, %78, %cst_53 {dimension_numbers = #tpu.dot_dimension_numbers<[1], [0], [0], [1], [0, 0, 1, 1], [], []>} : vector<128x576xbf16>, vector<576x64xbf16>, vector<128x64xf32> -> vector<128x64xf32>
    %126 = vector.broadcast %80 : vector<1x64xf32> to vector<128x64xf32>
    %127 = arith.addf %125, %126 : vector<128x64xf32>
    %cst_54 = arith.constant 0.000000e+00 : f32
    %128 = vector.broadcast %cst_54 : f32 to vector<128x64xf32>
    %129 = arith.maximumf %127, %128 : vector<128x64xf32>
    %c1_55 = arith.constant 1 : index
    %c0_56 = arith.constant 0 : index
    %c0_57 = arith.constant 0 : index
    %130 = vector.load %arg7[%c1_55, %c0_56, %c0_57] : memref<4x576x64xbf16, #tpu.memory_space<vmem>>, vector<1x576x64xbf16>
    %131 = vector.shape_cast %130 : vector<1x576x64xbf16> to vector<576x64xbf16>
    %c1_58 = arith.constant 1 : index
    %c0_59 = arith.constant 0 : index
    %c0_60 = arith.constant 0 : index
    %132 = vector.load %arg8[%c1_58, %c0_59, %c0_60] : memref<4x1x64xf32, #tpu.memory_space<vmem>>, vector<1x1x64xf32>
    %133 = vector.shape_cast %132 : vector<1x1x64xf32> to vector<1x64xf32>
    %134 = arith.truncf %129 : vector<128x64xf32> to vector<128x64xbf16>
    %cst_61 = arith.constant 0.000000e+00 : bf16
    %135 = vector.broadcast %cst_61 : bf16 to vector<5x64xbf16>
    %136 = vector.extract_strided_slice %134 {offsets = [0, 0], sizes = [123, 64], strides = [1, 1]} : vector<128x64xbf16> to vector<123x64xbf16>
    %137 = tpu.concatenate %135, %136 in 0 : vector<5x64xbf16>, vector<123x64xbf16> -> vector<128x64xbf16>
    %138 = vector.broadcast %1 : vector<128x1xbf16> to vector<128x64xbf16>
    %139 = arith.mulf %137, %138 : vector<128x64xbf16>
    %cst_62 = arith.constant 0.000000e+00 : bf16
    %140 = vector.broadcast %cst_62 : bf16 to vector<4x64xbf16>
    %141 = vector.extract_strided_slice %134 {offsets = [0, 0], sizes = [124, 64], strides = [1, 1]} : vector<128x64xbf16> to vector<124x64xbf16>
    %142 = tpu.concatenate %140, %141 in 0 : vector<4x64xbf16>, vector<124x64xbf16> -> vector<128x64xbf16>
    %143 = vector.broadcast %3 : vector<128x1xbf16> to vector<128x64xbf16>
    %144 = arith.mulf %142, %143 : vector<128x64xbf16>
    %cst_63 = arith.constant 0.000000e+00 : bf16
    %145 = vector.broadcast %cst_63 : bf16 to vector<3x64xbf16>
    %146 = vector.extract_strided_slice %134 {offsets = [0, 0], sizes = [125, 64], strides = [1, 1]} : vector<128x64xbf16> to vector<125x64xbf16>
    %147 = tpu.concatenate %145, %146 in 0 : vector<3x64xbf16>, vector<125x64xbf16> -> vector<128x64xbf16>
    %148 = vector.broadcast %5 : vector<128x1xbf16> to vector<128x64xbf16>
    %149 = arith.mulf %147, %148 : vector<128x64xbf16>
    %cst_64 = arith.constant 0.000000e+00 : bf16
    %150 = vector.broadcast %cst_64 : bf16 to vector<1x64xbf16>
    %151 = vector.extract_strided_slice %134 {offsets = [0, 0], sizes = [127, 64], strides = [1, 1]} : vector<128x64xbf16> to vector<127x64xbf16>
    %152 = tpu.concatenate %150, %151 in 0 : vector<1x64xbf16>, vector<127x64xbf16> -> vector<128x64xbf16>
    %153 = vector.broadcast %7 : vector<128x1xbf16> to vector<128x64xbf16>
    %154 = arith.mulf %152, %153 : vector<128x64xbf16>
    %155 = vector.broadcast %9 : vector<128x1xbf16> to vector<128x64xbf16>
    %156 = arith.mulf %134, %155 : vector<128x64xbf16>
    %cst_65 = arith.constant 0.000000e+00 : bf16
    %157 = vector.broadcast %cst_65 : bf16 to vector<1x64xbf16>
    %158 = vector.extract_strided_slice %134 {offsets = [1, 0], sizes = [127, 64], strides = [1, 1]} : vector<128x64xbf16> to vector<127x64xbf16>
    %159 = tpu.concatenate %158, %157 in 0 : vector<127x64xbf16>, vector<1x64xbf16> -> vector<128x64xbf16>
    %160 = vector.broadcast %11 : vector<128x1xbf16> to vector<128x64xbf16>
    %161 = arith.mulf %159, %160 : vector<128x64xbf16>
    %cst_66 = arith.constant 0.000000e+00 : bf16
    %162 = vector.broadcast %cst_66 : bf16 to vector<3x64xbf16>
    %163 = vector.extract_strided_slice %134 {offsets = [3, 0], sizes = [125, 64], strides = [1, 1]} : vector<128x64xbf16> to vector<125x64xbf16>
    %164 = tpu.concatenate %163, %162 in 0 : vector<125x64xbf16>, vector<3x64xbf16> -> vector<128x64xbf16>
    %165 = vector.broadcast %13 : vector<128x1xbf16> to vector<128x64xbf16>
    %166 = arith.mulf %164, %165 : vector<128x64xbf16>
    %cst_67 = arith.constant 0.000000e+00 : bf16
    %167 = vector.broadcast %cst_67 : bf16 to vector<4x64xbf16>
    %168 = vector.extract_strided_slice %134 {offsets = [4, 0], sizes = [124, 64], strides = [1, 1]} : vector<128x64xbf16> to vector<124x64xbf16>
    %169 = tpu.concatenate %168, %167 in 0 : vector<124x64xbf16>, vector<4x64xbf16> -> vector<128x64xbf16>
    %170 = vector.broadcast %15 : vector<128x1xbf16> to vector<128x64xbf16>
    %171 = arith.mulf %169, %170 : vector<128x64xbf16>
    %cst_68 = arith.constant 0.000000e+00 : bf16
    %172 = vector.broadcast %cst_68 : bf16 to vector<5x64xbf16>
    %173 = vector.extract_strided_slice %134 {offsets = [5, 0], sizes = [123, 64], strides = [1, 1]} : vector<128x64xbf16> to vector<123x64xbf16>
    %174 = tpu.concatenate %173, %172 in 0 : vector<123x64xbf16>, vector<5x64xbf16> -> vector<128x64xbf16>
    %175 = vector.broadcast %17 : vector<128x1xbf16> to vector<128x64xbf16>
    %176 = arith.mulf %174, %175 : vector<128x64xbf16>
    %177 = tpu.concatenate %139, %144, %149, %154, %156, %161, %166, %171, %176 in 1 : vector<128x64xbf16>, vector<128x64xbf16>, vector<128x64xbf16>, vector<128x64xbf16>, vector<128x64xbf16>, vector<128x64xbf16>, vector<128x64xbf16>, vector<128x64xbf16>, vector<128x64xbf16> -> vector<128x576xbf16>
    %cst_69 = arith.constant dense<0.000000e+00> : vector<128x64xf32>
    %178 = tpu.matmul %177, %131, %cst_69 {dimension_numbers = #tpu.dot_dimension_numbers<[1], [0], [0], [1], [0, 0, 1, 1], [], []>} : vector<128x576xbf16>, vector<576x64xbf16>, vector<128x64xf32> -> vector<128x64xf32>
    %179 = vector.broadcast %133 : vector<1x64xf32> to vector<128x64xf32>
    %180 = arith.addf %178, %179 : vector<128x64xf32>
    %181 = arith.addf %180, %76 : vector<128x64xf32>
    %cst_70 = arith.constant 0.000000e+00 : f32
    %182 = vector.broadcast %cst_70 : f32 to vector<128x64xf32>
    %183 = arith.maximumf %181, %182 : vector<128x64xf32>
    %c2_71 = arith.constant 2 : index
    %c0_72 = arith.constant 0 : index
    %c0_73 = arith.constant 0 : index
    %184 = vector.load %arg7[%c2_71, %c0_72, %c0_73] : memref<4x576x64xbf16, #tpu.memory_space<vmem>>, vector<1x576x64xbf16>
    %185 = vector.shape_cast %184 : vector<1x576x64xbf16> to vector<576x64xbf16>
    %c2_74 = arith.constant 2 : index
    %c0_75 = arith.constant 0 : index
    %c0_76 = arith.constant 0 : index
    %186 = vector.load %arg8[%c2_74, %c0_75, %c0_76] : memref<4x1x64xf32, #tpu.memory_space<vmem>>, vector<1x1x64xf32>
    %187 = vector.shape_cast %186 : vector<1x1x64xf32> to vector<1x64xf32>
    %188 = arith.truncf %183 : vector<128x64xf32> to vector<128x64xbf16>
    %cst_77 = arith.constant 0.000000e+00 : bf16
    %189 = vector.broadcast %cst_77 : bf16 to vector<5x64xbf16>
    %190 = vector.extract_strided_slice %188 {offsets = [0, 0], sizes = [123, 64], strides = [1, 1]} : vector<128x64xbf16> to vector<123x64xbf16>
    %191 = tpu.concatenate %189, %190 in 0 : vector<5x64xbf16>, vector<123x64xbf16> -> vector<128x64xbf16>
    %192 = vector.broadcast %1 : vector<128x1xbf16> to vector<128x64xbf16>
    %193 = arith.mulf %191, %192 : vector<128x64xbf16>
    %cst_78 = arith.constant 0.000000e+00 : bf16
    %194 = vector.broadcast %cst_78 : bf16 to vector<4x64xbf16>
    %195 = vector.extract_strided_slice %188 {offsets = [0, 0], sizes = [124, 64], strides = [1, 1]} : vector<128x64xbf16> to vector<124x64xbf16>
    %196 = tpu.concatenate %194, %195 in 0 : vector<4x64xbf16>, vector<124x64xbf16> -> vector<128x64xbf16>
    %197 = vector.broadcast %3 : vector<128x1xbf16> to vector<128x64xbf16>
    %198 = arith.mulf %196, %197 : vector<128x64xbf16>
    %cst_79 = arith.constant 0.000000e+00 : bf16
    %199 = vector.broadcast %cst_79 : bf16 to vector<3x64xbf16>
    %200 = vector.extract_strided_slice %188 {offsets = [0, 0], sizes = [125, 64], strides = [1, 1]} : vector<128x64xbf16> to vector<125x64xbf16>
    %201 = tpu.concatenate %199, %200 in 0 : vector<3x64xbf16>, vector<125x64xbf16> -> vector<128x64xbf16>
    %202 = vector.broadcast %5 : vector<128x1xbf16> to vector<128x64xbf16>
    %203 = arith.mulf %201, %202 : vector<128x64xbf16>
    %cst_80 = arith.constant 0.000000e+00 : bf16
    %204 = vector.broadcast %cst_80 : bf16 to vector<1x64xbf16>
    %205 = vector.extract_strided_slice %188 {offsets = [0, 0], sizes = [127, 64], strides = [1, 1]} : vector<128x64xbf16> to vector<127x64xbf16>
    %206 = tpu.concatenate %204, %205 in 0 : vector<1x64xbf16>, vector<127x64xbf16> -> vector<128x64xbf16>
    %207 = vector.broadcast %7 : vector<128x1xbf16> to vector<128x64xbf16>
    %208 = arith.mulf %206, %207 : vector<128x64xbf16>
    %209 = vector.broadcast %9 : vector<128x1xbf16> to vector<128x64xbf16>
    %210 = arith.mulf %188, %209 : vector<128x64xbf16>
    %cst_81 = arith.constant 0.000000e+00 : bf16
    %211 = vector.broadcast %cst_81 : bf16 to vector<1x64xbf16>
    %212 = vector.extract_strided_slice %188 {offsets = [1, 0], sizes = [127, 64], strides = [1, 1]} : vector<128x64xbf16> to vector<127x64xbf16>
    %213 = tpu.concatenate %212, %211 in 0 : vector<127x64xbf16>, vector<1x64xbf16> -> vector<128x64xbf16>
    %214 = vector.broadcast %11 : vector<128x1xbf16> to vector<128x64xbf16>
    %215 = arith.mulf %213, %214 : vector<128x64xbf16>
    %cst_82 = arith.constant 0.000000e+00 : bf16
    %216 = vector.broadcast %cst_82 : bf16 to vector<3x64xbf16>
    %217 = vector.extract_strided_slice %188 {offsets = [3, 0], sizes = [125, 64], strides = [1, 1]} : vector<128x64xbf16> to vector<125x64xbf16>
    %218 = tpu.concatenate %217, %216 in 0 : vector<125x64xbf16>, vector<3x64xbf16> -> vector<128x64xbf16>
    %219 = vector.broadcast %13 : vector<128x1xbf16> to vector<128x64xbf16>
    %220 = arith.mulf %218, %219 : vector<128x64xbf16>
    %cst_83 = arith.constant 0.000000e+00 : bf16
    %221 = vector.broadcast %cst_83 : bf16 to vector<4x64xbf16>
    %222 = vector.extract_strided_slice %188 {offsets = [4, 0], sizes = [124, 64], strides = [1, 1]} : vector<128x64xbf16> to vector<124x64xbf16>
    %223 = tpu.concatenate %222, %221 in 0 : vector<124x64xbf16>, vector<4x64xbf16> -> vector<128x64xbf16>
    %224 = vector.broadcast %15 : vector<128x1xbf16> to vector<128x64xbf16>
    %225 = arith.mulf %223, %224 : vector<128x64xbf16>
    %cst_84 = arith.constant 0.000000e+00 : bf16
    %226 = vector.broadcast %cst_84 : bf16 to vector<5x64xbf16>
    %227 = vector.extract_strided_slice %188 {offsets = [5, 0], sizes = [123, 64], strides = [1, 1]} : vector<128x64xbf16> to vector<123x64xbf16>
    %228 = tpu.concatenate %227, %226 in 0 : vector<123x64xbf16>, vector<5x64xbf16> -> vector<128x64xbf16>
    %229 = vector.broadcast %17 : vector<128x1xbf16> to vector<128x64xbf16>
    %230 = arith.mulf %228, %229 : vector<128x64xbf16>
    %231 = tpu.concatenate %193, %198, %203, %208, %210, %215, %220, %225, %230 in 1 : vector<128x64xbf16>, vector<128x64xbf16>, vector<128x64xbf16>, vector<128x64xbf16>, vector<128x64xbf16>, vector<128x64xbf16>, vector<128x64xbf16>, vector<128x64xbf16>, vector<128x64xbf16> -> vector<128x576xbf16>
    %cst_85 = arith.constant dense<0.000000e+00> : vector<128x64xf32>
    %232 = tpu.matmul %231, %185, %cst_85 {dimension_numbers = #tpu.dot_dimension_numbers<[1], [0], [0], [1], [0, 0, 1, 1], [], []>} : vector<128x576xbf16>, vector<576x64xbf16>, vector<128x64xf32> -> vector<128x64xf32>
    %233 = vector.broadcast %187 : vector<1x64xf32> to vector<128x64xf32>
    %234 = arith.addf %232, %233 : vector<128x64xf32>
    %cst_86 = arith.constant 0.000000e+00 : f32
    %235 = vector.broadcast %cst_86 : f32 to vector<128x64xf32>
    %236 = arith.maximumf %234, %235 : vector<128x64xf32>
    %c3_87 = arith.constant 3 : index
    %c0_88 = arith.constant 0 : index
    %c0_89 = arith.constant 0 : index
    %237 = vector.load %arg7[%c3_87, %c0_88, %c0_89] : memref<4x576x64xbf16, #tpu.memory_space<vmem>>, vector<1x576x64xbf16>
    %238 = vector.shape_cast %237 : vector<1x576x64xbf16> to vector<576x64xbf16>
    %c3_90 = arith.constant 3 : index
    %c0_91 = arith.constant 0 : index
    %c0_92 = arith.constant 0 : index
    %239 = vector.load %arg8[%c3_90, %c0_91, %c0_92] : memref<4x1x64xf32, #tpu.memory_space<vmem>>, vector<1x1x64xf32>
    %240 = vector.shape_cast %239 : vector<1x1x64xf32> to vector<1x64xf32>
    %241 = arith.truncf %236 : vector<128x64xf32> to vector<128x64xbf16>
    %cst_93 = arith.constant 0.000000e+00 : bf16
    %242 = vector.broadcast %cst_93 : bf16 to vector<5x64xbf16>
    %243 = vector.extract_strided_slice %241 {offsets = [0, 0], sizes = [123, 64], strides = [1, 1]} : vector<128x64xbf16> to vector<123x64xbf16>
    %244 = tpu.concatenate %242, %243 in 0 : vector<5x64xbf16>, vector<123x64xbf16> -> vector<128x64xbf16>
    %245 = vector.broadcast %1 : vector<128x1xbf16> to vector<128x64xbf16>
    %246 = arith.mulf %244, %245 : vector<128x64xbf16>
    %cst_94 = arith.constant 0.000000e+00 : bf16
    %247 = vector.broadcast %cst_94 : bf16 to vector<4x64xbf16>
    %248 = vector.extract_strided_slice %241 {offsets = [0, 0], sizes = [124, 64], strides = [1, 1]} : vector<128x64xbf16> to vector<124x64xbf16>
    %249 = tpu.concatenate %247, %248 in 0 : vector<4x64xbf16>, vector<124x64xbf16> -> vector<128x64xbf16>
    %250 = vector.broadcast %3 : vector<128x1xbf16> to vector<128x64xbf16>
    %251 = arith.mulf %249, %250 : vector<128x64xbf16>
    %cst_95 = arith.constant 0.000000e+00 : bf16
    %252 = vector.broadcast %cst_95 : bf16 to vector<3x64xbf16>
    %253 = vector.extract_strided_slice %241 {offsets = [0, 0], sizes = [125, 64], strides = [1, 1]} : vector<128x64xbf16> to vector<125x64xbf16>
    %254 = tpu.concatenate %252, %253 in 0 : vector<3x64xbf16>, vector<125x64xbf16> -> vector<128x64xbf16>
    %255 = vector.broadcast %5 : vector<128x1xbf16> to vector<128x64xbf16>
    %256 = arith.mulf %254, %255 : vector<128x64xbf16>
    %cst_96 = arith.constant 0.000000e+00 : bf16
    %257 = vector.broadcast %cst_96 : bf16 to vector<1x64xbf16>
    %258 = vector.extract_strided_slice %241 {offsets = [0, 0], sizes = [127, 64], strides = [1, 1]} : vector<128x64xbf16> to vector<127x64xbf16>
    %259 = tpu.concatenate %257, %258 in 0 : vector<1x64xbf16>, vector<127x64xbf16> -> vector<128x64xbf16>
    %260 = vector.broadcast %7 : vector<128x1xbf16> to vector<128x64xbf16>
    %261 = arith.mulf %259, %260 : vector<128x64xbf16>
    %262 = vector.broadcast %9 : vector<128x1xbf16> to vector<128x64xbf16>
    %263 = arith.mulf %241, %262 : vector<128x64xbf16>
    %cst_97 = arith.constant 0.000000e+00 : bf16
    %264 = vector.broadcast %cst_97 : bf16 to vector<1x64xbf16>
    %265 = vector.extract_strided_slice %241 {offsets = [1, 0], sizes = [127, 64], strides = [1, 1]} : vector<128x64xbf16> to vector<127x64xbf16>
    %266 = tpu.concatenate %265, %264 in 0 : vector<127x64xbf16>, vector<1x64xbf16> -> vector<128x64xbf16>
    %267 = vector.broadcast %11 : vector<128x1xbf16> to vector<128x64xbf16>
    %268 = arith.mulf %266, %267 : vector<128x64xbf16>
    %cst_98 = arith.constant 0.000000e+00 : bf16
    %269 = vector.broadcast %cst_98 : bf16 to vector<3x64xbf16>
    %270 = vector.extract_strided_slice %241 {offsets = [3, 0], sizes = [125, 64], strides = [1, 1]} : vector<128x64xbf16> to vector<125x64xbf16>
    %271 = tpu.concatenate %270, %269 in 0 : vector<125x64xbf16>, vector<3x64xbf16> -> vector<128x64xbf16>
    %272 = vector.broadcast %13 : vector<128x1xbf16> to vector<128x64xbf16>
    %273 = arith.mulf %271, %272 : vector<128x64xbf16>
    %cst_99 = arith.constant 0.000000e+00 : bf16
    %274 = vector.broadcast %cst_99 : bf16 to vector<4x64xbf16>
    %275 = vector.extract_strided_slice %241 {offsets = [4, 0], sizes = [124, 64], strides = [1, 1]} : vector<128x64xbf16> to vector<124x64xbf16>
    %276 = tpu.concatenate %275, %274 in 0 : vector<124x64xbf16>, vector<4x64xbf16> -> vector<128x64xbf16>
    %277 = vector.broadcast %15 : vector<128x1xbf16> to vector<128x64xbf16>
    %278 = arith.mulf %276, %277 : vector<128x64xbf16>
    %cst_100 = arith.constant 0.000000e+00 : bf16
    %279 = vector.broadcast %cst_100 : bf16 to vector<5x64xbf16>
    %280 = vector.extract_strided_slice %241 {offsets = [5, 0], sizes = [123, 64], strides = [1, 1]} : vector<128x64xbf16> to vector<123x64xbf16>
    %281 = tpu.concatenate %280, %279 in 0 : vector<123x64xbf16>, vector<5x64xbf16> -> vector<128x64xbf16>
    %282 = vector.broadcast %17 : vector<128x1xbf16> to vector<128x64xbf16>
    %283 = arith.mulf %281, %282 : vector<128x64xbf16>
    %284 = tpu.concatenate %246, %251, %256, %261, %263, %268, %273, %278, %283 in 1 : vector<128x64xbf16>, vector<128x64xbf16>, vector<128x64xbf16>, vector<128x64xbf16>, vector<128x64xbf16>, vector<128x64xbf16>, vector<128x64xbf16>, vector<128x64xbf16>, vector<128x64xbf16> -> vector<128x576xbf16>
    %cst_101 = arith.constant dense<0.000000e+00> : vector<128x64xf32>
    %285 = tpu.matmul %284, %238, %cst_101 {dimension_numbers = #tpu.dot_dimension_numbers<[1], [0], [0], [1], [0, 0, 1, 1], [], []>} : vector<128x576xbf16>, vector<576x64xbf16>, vector<128x64xf32> -> vector<128x64xf32>
    %286 = vector.broadcast %240 : vector<1x64xf32> to vector<128x64xf32>
    %287 = arith.addf %285, %286 : vector<128x64xf32>
    %288 = arith.addf %287, %183 : vector<128x64xf32>
    %cst_102 = arith.constant 0.000000e+00 : f32
    %289 = vector.broadcast %cst_102 : f32 to vector<128x64xf32>
    %290 = arith.maximumf %288, %289 : vector<128x64xf32>
    %291 = arith.truncf %290 : vector<128x64xf32> to vector<128x64xbf16>
    %c0_103 = arith.constant 0 : index
    %c0_104 = arith.constant 0 : index
    %292 = vector.load %arg9[%c0_103, %c0_104] : memref<64x32xbf16, #tpu.memory_space<vmem>>, vector<64x32xbf16>
    %cst_105 = arith.constant dense<0.000000e+00> : vector<128x32xf32>
    %293 = tpu.matmul %291, %292, %cst_105 {dimension_numbers = #tpu.dot_dimension_numbers<[1], [0], [0], [1], [0, 0, 1, 1], [], []>} : vector<128x64xbf16>, vector<64x32xbf16>, vector<128x32xf32> -> vector<128x32xf32>
    %c0_106 = arith.constant 0 : index
    %c0_107 = arith.constant 0 : index
    %294 = vector.load %arg10[%c0_106, %c0_107] : memref<1x32xf32, #tpu.memory_space<vmem>>, vector<1x32xf32>
    %295 = vector.broadcast %294 : vector<1x32xf32> to vector<128x32xf32>
    %296 = arith.addf %293, %295 : vector<128x32xf32>
    %cst_108 = arith.constant 0.000000e+00 : f32
    %297 = vector.broadcast %cst_108 : f32 to vector<128x32xf32>
    %298 = arith.maximumf %296, %297 : vector<128x32xf32>
    %299 = arith.truncf %298 : vector<128x32xf32> to vector<128x32xbf16>
    %c0_109 = arith.constant 0 : index
    %c0_110 = arith.constant 0 : index
    %300 = vector.load %arg11[%c0_109, %c0_110] : memref<32x64xbf16, #tpu.memory_space<vmem>>, vector<32x64xbf16>
    %cst_111 = arith.constant dense<0.000000e+00> : vector<128x64xf32>
    %301 = tpu.matmul %299, %300, %cst_111 {dimension_numbers = #tpu.dot_dimension_numbers<[1], [0], [0], [1], [0, 0, 1, 1], [], []>} : vector<128x32xbf16>, vector<32x64xbf16>, vector<128x64xf32> -> vector<128x64xf32>
    %c0_112 = arith.constant 0 : index
    %c0_113 = arith.constant 0 : index
    %302 = vector.load %arg12[%c0_112, %c0_113] : memref<1x64xf32, #tpu.memory_space<vmem>>, vector<1x64xf32>
    %303 = vector.broadcast %302 : vector<1x64xf32> to vector<128x64xf32>
    %304 = arith.addf %301, %303 : vector<128x64xf32>
    %c0_114 = arith.constant 0 : index
    %c0_115 = arith.constant 0 : index
    %305 = vector.load %arg13[%c0_114, %c0_115] : memref<128x64xf32, #tpu.memory_space<vmem>>, vector<128x64xf32>
    tpu.vector_store %arg13[%c0_114, %c0_115], %304 {strides = array<i32>} : memref<128x64xf32, #tpu.memory_space<vmem>>, vector<128x64xf32>,
    return
  }
  func.func @transform_0(%arg0: i32) -> (i32, i32) {
    %c0_i32 = arith.constant 0 : i32
    %c0_i32_0 = arith.constant 0 : i32
    return %arg0, %c0_i32 : i32, i32
  }
  func.func @transform_1(%arg0: i32) -> (i32, i32, i32) {
    %c0_i32 = arith.constant 0 : i32
    %c0_i32_0 = arith.constant 0 : i32
    %c0_i32_1 = arith.constant 0 : i32
    %c0_i32_2 = arith.constant 0 : i32
    return %c0_i32, %c0_i32_0, %c0_i32_1 : i32, i32, i32
  }
  func.func @transform_2(%arg0: i32) -> (i32, i32) {
    %c0_i32 = arith.constant 0 : i32
    %c0_i32_0 = arith.constant 0 : i32
    %c0_i32_1 = arith.constant 0 : i32
    return %c0_i32, %c0_i32_0 : i32, i32
  }
  func.func @transform_3(%arg0: i32) -> (i32, i32) {
    %c0_i32 = arith.constant 0 : i32
    %c0_i32_0 = arith.constant 0 : i32
    %c0_i32_1 = arith.constant 0 : i32
    return %c0_i32, %c0_i32_0 : i32, i32
  }
  func.func @transform_4(%arg0: i32) -> (i32, i32) {
    %c0_i32 = arith.constant 0 : i32
    %c0_i32_0 = arith.constant 0 : i32
    %c0_i32_1 = arith.constant 0 : i32
    return %c0_i32, %c0_i32_0 : i32, i32
  }
  func.func @transform_5(%arg0: i32) -> (i32, i32) {
    %c0_i32 = arith.constant 0 : i32
    %c0_i32_0 = arith.constant 0 : i32
    %c0_i32_1 = arith.constant 0 : i32
    return %c0_i32, %c0_i32_0 : i32, i32
  }
  func.func @transform_6(%arg0: i32) -> (i32, i32, i32) {
    %c0_i32 = arith.constant 0 : i32
    %c0_i32_0 = arith.constant 0 : i32
    %c0_i32_1 = arith.constant 0 : i32
    %c0_i32_2 = arith.constant 0 : i32
    return %c0_i32, %c0_i32_0, %c0_i32_1 : i32, i32, i32
  }
  func.func @transform_7(%arg0: i32) -> (i32, i32, i32) {
    %c0_i32 = arith.constant 0 : i32
    %c0_i32_0 = arith.constant 0 : i32
    %c0_i32_1 = arith.constant 0 : i32
    %c0_i32_2 = arith.constant 0 : i32
    return %c0_i32, %c0_i32_0, %c0_i32_1 : i32, i32, i32
  }
  func.func @transform_8(%arg0: i32) -> (i32, i32) {
    %c0_i32 = arith.constant 0 : i32
    %c0_i32_0 = arith.constant 0 : i32
    %c0_i32_1 = arith.constant 0 : i32
    return %c0_i32, %c0_i32_0 : i32, i32
  }
  func.func @transform_9(%arg0: i32) -> (i32, i32) {
    %c0_i32 = arith.constant 0 : i32
    %c0_i32_0 = arith.constant 0 : i32
    %c0_i32_1 = arith.constant 0 : i32
    return %c0_i32, %c0_i32_0 : i32, i32
  }
  func.func @transform_10(%arg0: i32) -> (i32, i32) {
    %c0_i32 = arith.constant 0 : i32
    %c0_i32_0 = arith.constant 0 : i32
    %c0_i32_1 = arith.constant 0 : i32
    return %c0_i32, %c0_i32_0 : i32, i32
  }
  func.func @transform_11(%arg0: i32) -> (i32, i32) {
    %c0_i32 = arith.constant 0 : i32
    %c0_i32_0 = arith.constant 0 : i32
    %c0_i32_1 = arith.constant 0 : i32
    return %c0_i32, %c0_i32_0 : i32, i32
  }
  func.func @transform_12(%arg0: i32) -> (i32, i32) {
    %c0_i32 = arith.constant 0 : i32
    %c0_i32_0 = arith.constant 0 : i32
    return %arg0, %c0_i32 : i32, i32
  }
}

</mosaic_0001>

<llo_original>
// kernel: model_forward.1
$region0: #{model_forward.1}
  #allocation0 [shape = 'u32[]', space=smem, size = 0x4, offset = 0x4, fixed_abs, tag = 'smem constant byte address 0x4 - core index']
  #allocation1 [shape = 'u32[144,128]{1,0:T(1,128)}', space=vmem, size = 0x12000, scoped, tag = 'internal scratch']
  %s0 = inlined_call_operand.vmem [shape: bf16[256,72], index: 0, kind: input, shape index: {}]
  %s1 = inlined_call_operand.vmem [shape: bf16[9,128,1], index: 1, kind: input, shape index: {}]
  %s2 = inlined_call_operand.vmem [shape: bf16[72,32], index: 2, kind: input, shape index: {}]
  %s3 = inlined_call_operand.vmem [shape: f32[1,32], index: 3, kind: input, shape index: {}]
  %s4 = inlined_call_operand.vmem [shape: bf16[288,64], index: 4, kind: input, shape index: {}]
  %s5 = inlined_call_operand.vmem [shape: f32[1,64], index: 5, kind: input, shape index: {}]
  %s6 = inlined_call_operand.vmem [shape: bf16[4,576,64], index: 6, kind: input, shape index: {}]
  %s7 = inlined_call_operand.vmem [shape: f32[4,1,64], index: 7, kind: input, shape index: {}]
  %s8 = inlined_call_operand.vmem [shape: bf16[64,32], index: 8, kind: input, shape index: {}]
  %s9 = inlined_call_operand.vmem [shape: f32[1,32], index: 9, kind: input, shape index: {}]
  %s10 = inlined_call_operand.vmem [shape: bf16[32,64], index: 10, kind: input, shape index: {}]
  %s11 = inlined_call_operand.vmem [shape: f32[1,64], index: 11, kind: input, shape index: {}]
  %s12 = inlined_call_operand.vmem [shape: f32[256,64], index: 12, kind: output, shape index: {}]
  %s13 = sld [smem:[#allocation0]]
  $region81: #{model_forward.1} parent=0
    _
  %s15 = ssub.s32 1, %s13
  %s16 = scalar_select 0, %s15, %s13
  loop: start=0, step=1, limit=4
  $region2: #{model_forward.1} parent=0 // loop_pre_header
    _
  $region3: #{model_forward.1} parent=0 // loop_header
    %s18 = sphi 0, %s22
    %p19 = scmp.ge.s32.totalorder %s18, 4
    %s28 = sphi 0, %s30
    %s31 = sphi 0, %s28
    %s32 = sphi 0, %s31
    %s48 = sphi 0, %s32
    %s52 = sphi 0, %s52
    %s54 = sphi 0, %s52
    %s55 = sphi 0, %s54
    %s69 = sphi 0, %s55
    %s73 = sphi 0, %s73
    %s75 = sphi 0, %s73
    %s76 = sphi 0, %s75
    %s90 = sphi 0, %s76
    %s94 = sphi 0, %s94
    %s96 = sphi 0, %s94
    %s97 = sphi 0, %s96
    %s111 = sphi 0, %s97
    %s115 = sphi 0, %s115
    %s117 = sphi 0, %s115
    %s118 = sphi 0, %s117
    %s132 = sphi 0, %s118
    %s136 = sphi 0, %s136
    %s138 = sphi 0, %s136
    %s139 = sphi 0, %s138
    %s153 = sphi 0, %s139
    %s157 = sphi 0, %s157
    %s159 = sphi 0, %s157
    %s160 = sphi 0, %s159
    %s174 = sphi 0, %s160
    %s178 = sphi 0, %s178
    %s180 = sphi 0, %s178
    %s181 = sphi 0, %s180
    %s195 = sphi 0, %s181
    %s199 = sphi 0, %s199
    %s201 = sphi 0, %s199
    %s202 = sphi 0, %s201
    %s216 = sphi 0, %s202
    %s220 = sphi 0, %s220
    %s222 = sphi 0, %s220
    %s223 = sphi 0, %s222
    %s237 = sphi 0, %s223
    %s241 = sphi 0, %s241
    %s243 = sphi 0, %s241
    %s244 = sphi 0, %s243
    %s258 = sphi 0, %s244
    %s262 = sphi 0, %s262
    %s264 = sphi 0, %s262
    %s265 = sphi 0, %s264
    %s279 = sphi 0, %s265
    %s285 = sphi 0, %s287
    %s288 = sphi 0, %s285
    %s289 = sphi 0, %s288
    %s305 = sphi 0, %s289
  $region4: #{model_forward.1} parent=0 // loop_header_branch
    %21 = sbr.rel (%p19) target = $region8
  $region5: #{model_forward.1} parent=0 // loop_body
    %s23 = ssub.s32 %s18, 1
    %s24 = ssub.s32 %s18, 2
    %s25 = sadd.s32 %s18, 1
    %s26 = ssub.s32 %s18, %s25
    %p27 = scmp.eq.s32.totalorder %s26, 0
    %s29 = sadd.s32 %s28, 1
    %s30 = scalar_select %p27, %s28, %s29
    %p33 = pneg %p27
    %p34 = scmp.eq.s32.totalorder %s18, 1
    %p35 = por %p33, %p34
    %p36 = scmp.ne.s32.totalorder %s28, %s31
    %p37 = scmp.eq.s32.totalorder %s18, 0
    %p38 = por %p36, %p37
    %p39 = scmp.ne.s32.totalorder %s28, %s31
    %p40 = scmp.eq.s32.totalorder %s23, 1
    %p41 = por %p39, %p40
    %p42 = scmp.ne.s32.totalorder %s31, %s32
    %p43 = scmp.eq.s32.totalorder %s23, 0
    %p44 = por %p42, %p43
    %p45 = scmp.ne.s32.totalorder %s31, %s32
    %p46 = scmp.eq.s32.totalorder %s24, 1
    %p47 = por %p45, %p46
    %p49 = scmp.ne.s32.totalorder %s32, %s48
    %p50 = scmp.eq.s32.totalorder %s24, 0
    %p51 = por %p49, %p50
    %s53 = sadd.s32 %s52, 1
    %p56 = scmp.eq.s32.totalorder %s18, 1
    %p57 = scmp.ne.s32.totalorder %s52, %s54
    %p58 = scmp.eq.s32.totalorder %s18, 0
    %p59 = por %p57, %p58
    %p60 = scmp.ne.s32.totalorder %s52, %s54
    %p61 = scmp.eq.s32.totalorder %s23, 1
    %p62 = por %p60, %p61
    %p63 = scmp.ne.s32.totalorder %s54, %s55
    %p64 = scmp.eq.s32.totalorder %s23, 0
    %p65 = por %p63, %p64
    %p66 = scmp.ne.s32.totalorder %s54, %s55
    %p67 = scmp.eq.s32.totalorder %s24, 1
    %p68 = por %p66, %p67
    %p70 = scmp.ne.s32.totalorder %s55, %s69
    %p71 = scmp.eq.s32.totalorder %s24, 0
    %p72 = por %p70, %p71
    %s74 = sadd.s32 %s73, 1
    %p77 = scmp.eq.s32.totalorder %s18, 1
    %p78 = scmp.ne.s32.totalorder %s73, %s75
    %p79 = scmp.eq.s32.totalorder %s18, 0
    %p80 = por %p78, %p79
    %p81 = scmp.ne.s32.totalorder %s73, %s75
    %p82 = scmp.eq.s32.totalorder %s23, 1
    %p83 = por %p81, %p82
    %p84 = scmp.ne.s32.totalorder %s75, %s76
    %p85 = scmp.eq.s32.totalorder %s23, 0
    %p86 = por %p84, %p85
    %p87 = scmp.ne.s32.totalorder %s75, %s76
    %p88 = scmp.eq.s32.totalorder %s24, 1
    %p89 = por %p87, %p88
    %p91 = scmp.ne.s32.totalorder %s76, %s90
    %p92 = scmp.eq.s32.totalorder %s24, 0
    %p93 = por %p91, %p92
    %s95 = sadd.s32 %s94, 1
    %p98 = scmp.eq.s32.totalorder %s18, 1
    %p99 = scmp.ne.s32.totalorder %s94, %s96
    %p100 = scmp.eq.s32.totalorder %s18, 0
    %p101 = por %p99, %p100
    %p102 = scmp.ne.s32.totalorder %s94, %s96
    %p103 = scmp.eq.s32.totalorder %s23, 1
    %p104 = por %p102, %p103
    %p105 = scmp.ne.s32.totalorder %s96, %s97
    %p106 = scmp.eq.s32.totalorder %s23, 0
    %p107 = por %p105, %p106
    %p108 = scmp.ne.s32.totalorder %s96, %s97
    %p109 = scmp.eq.s32.totalorder %s24, 1
    %p110 = por %p108, %p109
    %p112 = scmp.ne.s32.totalorder %s97, %s111
    %p113 = scmp.eq.s32.totalorder %s24, 0
    %p114 = por %p112, %p113
    %s116 = sadd.s32 %s115, 1
    %p119 = scmp.eq.s32.totalorder %s18, 1
    %p120 = scmp.ne.s32.totalorder %s115, %s117
    %p121 = scmp.eq.s32.totalorder %s18, 0
    %p122 = por %p120, %p121
    %p123 = scmp.ne.s32.totalorder %s115, %s117
    %p124 = scmp.eq.s32.totalorder %s23, 1
    %p125 = por %p123, %p124
    %p126 = scmp.ne.s32.totalorder %s117, %s118
    %p127 = scmp.eq.s32.totalorder %s23, 0
    %p128 = por %p126, %p127
    %p129 = scmp.ne.s32.totalorder %s117, %s118
    %p130 = scmp.eq.s32.totalorder %s24, 1
    %p131 = por %p129, %p130
    %p133 = scmp.ne.s32.totalorder %s118, %s132
    %p134 = scmp.eq.s32.totalorder %s24, 0
    %p135 = por %p133, %p134
    %s137 = sadd.s32 %s136, 1
    %p140 = scmp.eq.s32.totalorder %s18, 1
    %p141 = scmp.ne.s32.totalorder %s136, %s138
    %p142 = scmp.eq.s32.totalorder %s18, 0
    %p143 = por %p141, %p142
    %p144 = scmp.ne.s32.totalorder %s136, %s138
    %p145 = scmp.eq.s32.totalorder %s23, 1
    %p146 = por %p144, %p145
    %p147 = scmp.ne.s32.totalorder %s138, %s139
    %p148 = scmp.eq.s32.totalorder %s23, 0
    %p149 = por %p147, %p148
    %p150 = scmp.ne.s32.totalorder %s138, %s139
    %p151 = scmp.eq.s32.totalorder %s24, 1
    %p152 = por %p150, %p151
    %p154 = scmp.ne.s32.totalorder %s139, %s153
    %p155 = scmp.eq.s32.totalorder %s24, 0
    %p156 = por %p154, %p155
    %s158 = sadd.s32 %s157, 1
    %p161 = scmp.eq.s32.totalorder %s18, 1
    %p162 = scmp.ne.s32.totalorder %s157, %s159
    %p163 = scmp.eq.s32.totalorder %s18, 0
    %p164 = por %p162, %p163
    %p165 = scmp.ne.s32.totalorder %s157, %s159
    %p166 = scmp.eq.s32.totalorder %s23, 1
    %p167 = por %p165, %p166
    %p168 = scmp.ne.s32.totalorder %s159, %s160
    %p169 = scmp.eq.s32.totalorder %s23, 0
    %p170 = por %p168, %p169
    %p171 = scmp.ne.s32.totalorder %s159, %s160
    %p172 = scmp.eq.s32.totalorder %s24, 1
    %p173 = por %p171, %p172
    %p175 = scmp.ne.s32.totalorder %s160, %s174
    %p176 = scmp.eq.s32.totalorder %s24, 0
    %p177 = por %p175, %p176
    %s179 = sadd.s32 %s178, 1
    %p182 = scmp.eq.s32.totalorder %s18, 1
    %p183 = scmp.ne.s32.totalorder %s178, %s180
    %p184 = scmp.eq.s32.totalorder %s18, 0
    %p185 = por %p183, %p184
    %p186 = scmp.ne.s32.totalorder %s178, %s180
    %p187 = scmp.eq.s32.totalorder %s23, 1
    %p188 = por %p186, %p187
    %p189 = scmp.ne.s32.totalorder %s180, %s181
    %p190 = scmp.eq.s32.totalorder %s23, 0
    %p191 = por %p189, %p190
    %p192 = scmp.ne.s32.totalorder %s180, %s181
    %p193 = scmp.eq.s32.totalorder %s24, 1
    %p194 = por %p192, %p193
    %p196 = scmp.ne.s32.totalorder %s181, %s195
    %p197 = scmp.eq.s32.totalorder %s24, 0
    %p198 = por %p196, %p197
    %s200 = sadd.s32 %s199, 1
    %p203 = scmp.eq.s32.totalorder %s18, 1
    %p204 = scmp.ne.s32.totalorder %s199, %s201
    %p205 = scmp.eq.s32.totalorder %s18, 0
    %p206 = por %p204, %p205
    %p207 = scmp.ne.s32.totalorder %s199, %s201
    %p208 = scmp.eq.s32.totalorder %s23, 1
    %p209 = por %p207, %p208
    %p210 = scmp.ne.s32.totalorder %s201, %s202
    %p211 = scmp.eq.s32.totalorder %s23, 0
    %p212 = por %p210, %p211
    %p213 = scmp.ne.s32.totalorder %s201, %s202
    %p214 = scmp.eq.s32.totalorder %s24, 1
    %p215 = por %p213, %p214
    %p217 = scmp.ne.s32.totalorder %s202, %s216
    %p218 = scmp.eq.s32.totalorder %s24, 0
    %p219 = por %p217, %p218
    %s221 = sadd.s32 %s220, 1
    %p224 = scmp.eq.s32.totalorder %s18, 1
    %p225 = scmp.ne.s32.totalorder %s220, %s222
    %p226 = scmp.eq.s32.totalorder %s18, 0
    %p227 = por %p225, %p226
    %p228 = scmp.ne.s32.totalorder %s220, %s222
    %p229 = scmp.eq.s32.totalorder %s23, 1
    %p230 = por %p228, %p229
    %p231 = scmp.ne.s32.totalorder %s222, %s223
    %p232 = scmp.eq.s32.totalorder %s23, 0
    %p233 = por %p231, %p232
    %p234 = scmp.ne.s32.totalorder %s222, %s223
    %p235 = scmp.eq.s32.totalorder %s24, 1
    %p236 = por %p234, %p235
    %p238 = scmp.ne.s32.totalorder %s223, %s237
    %p239 = scmp.eq.s32.totalorder %s24, 0
    %p240 = por %p238, %p239
    %s242 = sadd.s32 %s241, 1
    %p245 = scmp.eq.s32.totalorder %s18, 1
    %p246 = scmp.ne.s32.totalorder %s241, %s243
    %p247 = scmp.eq.s32.totalorder %s18, 0
    %p248 = por %p246, %p247
    %p249 = scmp.ne.s32.totalorder %s241, %s243
    %p250 = scmp.eq.s32.totalorder %s23, 1
    %p251 = por %p249, %p250
    %p252 = scmp.ne.s32.totalorder %s243, %s244
    %p253 = scmp.eq.s32.totalorder %s23, 0
    %p254 = por %p252, %p253
    %p255 = scmp.ne.s32.totalorder %s243, %s244
    %p256 = scmp.eq.s32.totalorder %s24, 1
    %p257 = por %p255, %p256
    %p259 = scmp.ne.s32.totalorder %s244, %s258
    %p260 = scmp.eq.s32.totalorder %s24, 0
    %p261 = por %p259, %p260
    %s263 = sadd.s32 %s262, 1
    %p266 = scmp.eq.s32.totalorder %s18, 1
    %p267 = scmp.ne.s32.totalorder %s262, %s264
    %p268 = scmp.eq.s32.totalorder %s18, 0
    %p269 = por %p267, %p268
    %p270 = scmp.ne.s32.totalorder %s262, %s264
    %p271 = scmp.eq.s32.totalorder %s23, 1
    %p272 = por %p270, %p271
    %p273 = scmp.ne.s32.totalorder %s264, %s265
    %p274 = scmp.eq.s32.totalorder %s23, 0
    %p275 = por %p273, %p274
    %p276 = scmp.ne.s32.totalorder %s264, %s265
    %p277 = scmp.eq.s32.totalorder %s24, 1
    %p278 = por %p276, %p277
    %p280 = scmp.ne.s32.totalorder %s265, %s279
    %p281 = scmp.eq.s32.totalorder %s24, 0
    %p282 = por %p280, %p281
    %s283 = ssub.s32 %s18, %s25
    %p284 = scmp.eq.s32.totalorder %s283, 0
    %s286 = sadd.s32 %s285, 1
    %s287 = scalar_select %p284, %s285, %s286
    %p290 = pneg %p284
    %p291 = scmp.eq.s32.totalorder %s18, 1
    %p292 = por %p290, %p291
    %p293 = scmp.ne.s32.totalorder %s285, %s288
    %p294 = scmp.eq.s32.totalorder %s18, 0
    %p295 = por %p293, %p294
    %p296 = scmp.ne.s32.totalorder %s285, %s288
    %p297 = scmp.eq.s32.totalorder %s23, 1
    %p298 = por %p296, %p297
    %p299 = scmp.ne.s32.totalorder %s288, %s289
    %p300 = scmp.eq.s32.totalorder %s23, 0
    %p301 = por %p299, %p300
    %p302 = scmp.ne.s32.totalorder %s288, %s289
    %p303 = scmp.eq.s32.totalorder %s24, 1
    %p304 = por %p302, %p303
    %p306 = scmp.ne.s32.totalorder %s289, %s305
    %p307 = scmp.eq.s32.totalorder %s24, 0
    %p308 = por %p306, %p307
    %p309 = scmp.le.s32.totalorder 1, %s18
    %p310 = scmp.lt.s32.totalorder %s18, 3
    %p311 = pnand %p309, %p310
    %p312 = pneg %p311
    // Predicated region
    $region9: #{model_forward.1} parent=5 // pred_check
      _
    $region10: #{model_forward.1} parent=5 // pred_check_branch
      %314 = sbr.rel (%p311) target = $region12
    $region11: #{model_forward.1} parent=5 // pred_region
      %s315 = ssub.s32 %s18, 1
      // Predicated region
      $region13: #{model_forward.1} parent=11 // pred_check
        %p316 = pneg %p65
      $region14: #{model_forward.1} parent=11 // pred_check_branch
        %318 = sbr.rel (%p316) target = $region16
      $region15: #{model_forward.1} parent=11 // pred_region
        _
      $region16: #{model_forward.1} parent=11 // pred_fallthru
        _
      // Predicated region
      $region17: #{model_forward.1} parent=11 // pred_check
        %p319 = pneg %p86
      $region18: #{model_forward.1} parent=11 // pred_check_branch
        %321 = sbr.rel (%p319) target = $region20
      $region19: #{model_forward.1} parent=11 // pred_region
        _
      $region20: #{model_forward.1} parent=11 // pred_fallthru
        _
      // Predicated region
      $region21: #{model_forward.1} parent=11 // pred_check
        %p322 = pneg %p107
      $region22: #{model_forward.1} parent=11 // pred_check_branch
        %324 = sbr.rel (%p322) target = $region24
      $region23: #{model_forward.1} parent=11 // pred_region
        _
      $region24: #{model_forward.1} parent=11 // pred_fallthru
        _
      // Predicated region
      $region25: #{model_forward.1} parent=11 // pred_check
        %p325 = pneg %p128
      $region26: #{model_forward.1} parent=11 // pred_check_branch
        %327 = sbr.rel (%p325) target = $region28
      $region27: #{model_forward.1} parent=11 // pred_region
        _
      $region28: #{model_forward.1} parent=11 // pred_fallthru
        _
      // Predicated region
      $region29: #{model_forward.1} parent=11 // pred_check
        %p328 = pneg %p149
      $region30: #{model_forward.1} parent=11 // pred_check_branch
        %330 = sbr.rel (%p328) target = $region32
      $region31: #{model_forward.1} parent=11 // pred_region
        _
      $region32: #{model_forward.1} parent=11 // pred_fallthru
        _
      // Predicated region
      $region33: #{model_forward.1} parent=11 // pred_check
        %p331 = pneg %p170
      $region34: #{model_forward.1} parent=11 // pred_check_branch
        %333 = sbr.rel (%p331) target = $region36
      $region35: #{model_forward.1} parent=11 // pred_region
        _
      $region36: #{model_forward.1} parent=11 // pred_fallthru
        _
      // Predicated region
      $region37: #{model_forward.1} parent=11 // pred_check
        %p334 = pneg %p191
      $region38: #{model_forward.1} parent=11 // pred_check_branch
        %336 = sbr.rel (%p334) target = $region40
      $region39: #{model_forward.1} parent=11 // pred_region
        _
      $region40: #{model_forward.1} parent=11 // pred_fallthru
        _
      // Predicated region
      $region41: #{model_forward.1} parent=11 // pred_check
        %p337 = pneg %p212
      $region42: #{model_forward.1} parent=11 // pred_check_branch
        %339 = sbr.rel (%p337) target = $region44
      $region43: #{model_forward.1} parent=11 // pred_region
        _
      $region44: #{model_forward.1} parent=11 // pred_fallthru
        _
      // Predicated region
      $region45: #{model_forward.1} parent=11 // pred_check
        %p340 = pneg %p233
      $region46: #{model_forward.1} parent=11 // pred_check_branch
        %342 = sbr.rel (%p340) target = $region48
      $region47: #{model_forward.1} parent=11 // pred_region
        _
      $region48: #{model_forward.1} parent=11 // pred_fallthru
        _
      // Predicated region
      $region49: #{model_forward.1} parent=11 // pred_check
        %p343 = pneg %p254
      $region50: #{model_forward.1} parent=11 // pred_check_branch
        %345 = sbr.rel (%p343) target = $region52
      $region51: #{model_forward.1} parent=11 // pred_region
        _
      $region52: #{model_forward.1} parent=11 // pred_fallthru
        _
      // Predicated region
      $region53: #{model_forward.1} parent=11 // pred_check
        %p346 = pneg %p275
      $region54: #{model_forward.1} parent=11 // pred_check_branch
        %348 = sbr.rel (%p346) target = $region56
      $region55: #{model_forward.1} parent=11 // pred_region
        _
      $region56: #{model_forward.1} parent=11 // pred_fallthru
        _
    $region12: #{model_forward.1} parent=5 // pred_fallthru
      _
    %p349 = scmp.lt.s32.totalorder %s18, 2
    // Predicated region
    $region57: #{model_forward.1} parent=5 // pred_check
      %p350 = pneg %p349
    $region58: #{model_forward.1} parent=5 // pred_check_branch
      %352 = sbr.rel (%p350) target = $region60
    $region59: #{model_forward.1} parent=5 // pred_region
      // Predicated region
      $region61: #{model_forward.1} parent=59 // pred_check
        %p353 = pneg %p38
      $region62: #{model_forward.1} parent=59 // pred_check_branch
        %355 = sbr.rel (%p353) target = $region64
      $region63: #{model_forward.1} parent=59 // pred_region
        %s356 = smul.u32 16, %s18
        %p357 = scmp.lt.s32.totalorder %s356, 31
        %s358 = scalar_select %p357, %s356, 31
        %s359 = smul.addr %s358, 4
        %s360 = scalar_lea.vmem %s0, %s359
        %s361 = smul.u32 16, %s18
      $region64: #{model_forward.1} parent=59 // pred_fallthru
        _
    $region60: #{model_forward.1} parent=5 // pred_fallthru
      _
    %p362 = scmp.le.s32.totalorder 1, %s18
    %p363 = scmp.lt.s32.totalorder %s18, 3
    %p364 = pnand %p362, %p363
    %p365 = pneg %p364
    // Predicated region
    $region65: #{model_forward.1} parent=5 // pred_check
      _
    $region66: #{model_forward.1} parent=5 // pred_check_branch
      %367 = sbr.rel (%p364) target = $region68
    $region67: #{model_forward.1} parent=5 // pred_region
      %s368 = ssub.s32 %s18, 1
      %s369 = smul.u32 16, %s23
      %p370 = scmp.lt.s32.totalorder %s369, 31
      %s371 = scalar_select %p370, %s369, 31
      %s372 = smul.addr %s371, 4
      %s373 = scalar_lea.vmem %s0, %s372
      %p374 = pneg %p44
      %p375 = pneg %p41
      %p376 = pneg %p65
      %p377 = pneg %p62
      %p378 = pneg %p86
      %p379 = pneg %p83
      %p380 = pneg %p107
      %p381 = pneg %p104
      %p382 = pneg %p128
      %p383 = pneg %p125
      %p384 = pneg %p149
      %p385 = pneg %p146
      %p386 = pneg %p170
      %p387 = pneg %p167
      %p388 = pneg %p191
      %p389 = pneg %p188
      %p390 = pneg %p212
      %p391 = pneg %p209
      %p392 = pneg %p233
      %p393 = pneg %p230
      %p394 = pneg %p254
      %p395 = pneg %p251
      %p396 = pneg %p275
      %p397 = pneg %p272
      %p398 = pneg %p301
      %p399 = pneg %p298
      %s400 = smul.u32 16, %s23
      %p401 = scmp.lt.s32.totalorder %s400, 31
      %s402 = scalar_select %p401, %s400, 31
      %s403 = smul.addr %s402, 8
      %s404 = scalar_lea.vmem %s12, %s403
      %s405 = smul.u32 16, %s23
      %p406 = scmp.lt.s32.totalorder %s405, 31
      %s407 = scalar_select %p406, %s405, 31
      %s408 = smul.addr %s407, 4
      %s409 = scalar_lea.vmem %s0, %s408
      %s410 = smul.u32 16, %s23
      %s411 = smul.u32 16, %s23
      %p412 = scmp.lt.s32.totalorder %s411, 31
      %s413 = scalar_select %p412, %s411, 31
      %s414 = smul.addr %s413, 8
      %s415 = scalar_lea.vmem %s12, %s414
      %s416 = smul.u32 16, %s23
      %v418 = vld [vmem:[%s1] sm:$0xf]
      %v419 = vld [vmem:[%s1 + $0x4] sm:$0xf]
      %v420 = vld [vmem:[%s1 + $0x8] sm:$0xf]
      %v421 = vld [vmem:[%s1 + $0xc] sm:$0xf]
      %v422 = vld [vmem:[%s1 + $0x10] sm:$0xf]
      %v423 = vld [vmem:[%s1 + $0x14] sm:$0xf]
      %v424 = vld [vmem:[%s1 + $0x18] sm:$0xf]
      %v425 = vld [vmem:[%s1 + $0x1c] sm:$0xf]
      %v426 = vld [vmem:[%s1 + $0x20] sm:$0xf]
      %v427 = vld [vmem:[%s1 + $0x24] sm:$0xf]
      %v428 = vld [vmem:[%s1 + $0x28] sm:$0xf]
      %v429 = vld [vmem:[%s1 + $0x2c] sm:$0xf]
      %v430 = vld [vmem:[%s1 + $0x30] sm:$0xf]
      %v431 = vld [vmem:[%s1 + $0x34] sm:$0xf]
      %v432 = vld [vmem:[%s1 + $0x38] sm:$0xf]
      %v433 = vld [vmem:[%s1 + $0x3c] sm:$0xf]
      %s434 = scalar_lea.vmem %s1, 64
      %v435 = vld [vmem:[%s434] sm:$0xf]
      %v436 = vld [vmem:[%s434 + $0x4] sm:$0xf]
      %v437 = vld [vmem:[%s434 + $0x8] sm:$0xf]
      %v438 = vld [vmem:[%s434 + $0xc] sm:$0xf]
      %v439 = vld [vmem:[%s434 + $0x10] sm:$0xf]
      %v440 = vld [vmem:[%s434 + $0x14] sm:$0xf]
      %v441 = vld [vmem:[%s434 + $0x18] sm:$0xf]
      %v442 = vld [vmem:[%s434 + $0x1c] sm:$0xf]
      %v443 = vld [vmem:[%s434 + $0x20] sm:$0xf]
      %v444 = vld [vmem:[%s434 + $0x24] sm:$0xf]
      %v445 = vld [vmem:[%s434 + $0x28] sm:$0xf]
      %v446 = vld [vmem:[%s434 + $0x2c] sm:$0xf]
      %v447 = vld [vmem:[%s434 + $0x30] sm:$0xf]
      %v448 = vld [vmem:[%s434 + $0x34] sm:$0xf]
      %v449 = vld [vmem:[%s434 + $0x38] sm:$0xf]
      %v450 = vld [vmem:[%s434 + $0x3c] sm:$0xf]
      %s451 = scalar_lea.vmem %s1, 128
      %v452 = vld [vmem:[%s451] sm:$0xf]
      %v453 = vld [vmem:[%s451 + $0x4] sm:$0xf]
      %v454 = vld [vmem:[%s451 + $0x8] sm:$0xf]
      %v455 = vld [vmem:[%s451 + $0xc] sm:$0xf]
      %v456 = vld [vmem:[%s451 + $0x10] sm:$0xf]
      %v457 = vld [vmem:[%s451 + $0x14] sm:$0xf]
      %v458 = vld [vmem:[%s451 + $0x18] sm:$0xf]
      %v459 = vld [vmem:[%s451 + $0x1c] sm:$0xf]
      %v460 = vld [vmem:[%s451 + $0x20] sm:$0xf]
      %v461 = vld [vmem:[%s451 + $0x24] sm:$0xf]
      %v462 = vld [vmem:[%s451 + $0x28] sm:$0xf]
      %v463 = vld [vmem:[%s451 + $0x2c] sm:$0xf]
      %v464 = vld [vmem:[%s451 + $0x30] sm:$0xf]
      %v465 = vld [vmem:[%s451 + $0x34] sm:$0xf]
      %v466 = vld [vmem:[%s451 + $0x38] sm:$0xf]
      %v467 = vld [vmem:[%s451 + $0x3c] sm:$0xf]
      %s468 = scalar_lea.vmem %s1, 192
      %v469 = vld [vmem:[%s468] sm:$0xf]
      %v470 = vld [vmem:[%s468 + $0x4] sm:$0xf]
      %v471 = vld [vmem:[%s468 + $0x8] sm:$0xf]
      %v472 = vld [vmem:[%s468 + $0xc] sm:$0xf]
      %v473 = vld [vmem:[%s468 + $0x10] sm:$0xf]
      %v474 = vld [vmem:[%s468 + $0x14] sm:$0xf]
      %v475 = vld [vmem:[%s468 + $0x18] sm:$0xf]
      %v476 = vld [vmem:[%s468 + $0x1c] sm:$0xf]
      %v477 = vld [vmem:[%s468 + $0x20] sm:$0xf]
      %v478 = vld [vmem:[%s468 + $0x24] sm:$0xf]
      %v479 = vld [vmem:[%s468 + $0x28] sm:$0xf]
      %v480 = vld [vmem:[%s468 + $0x2c] sm:$0xf]
      %v481 = vld [vmem:[%s468 + $0x30] sm:$0xf]
      %v482 = vld [vmem:[%s468 + $0x34] sm:$0xf]
      %v483 = vld [vmem:[%s468 + $0x38] sm:$0xf]
      %v484 = vld [vmem:[%s468 + $0x3c] sm:$0xf]
      %s485 = scalar_lea.vmem %s1, 256
      %v486 = vld [vmem:[%s485] sm:$0xf]
      %v487 = vld [vmem:[%s485 + $0x4] sm:$0xf]
      %v488 = vld [vmem:[%s485 + $0x8] sm:$0xf]
      %v489 = vld [vmem:[%s485 + $0xc] sm:$0xf]
      %v490 = vld [vmem:[%s485 + $0x10] sm:$0xf]
      %v491 = vld [vmem:[%s485 + $0x14] sm:$0xf]
      %v492 = vld [vmem:[%s485 + $0x18] sm:$0xf]
      %v493 = vld [vmem:[%s485 + $0x1c] sm:$0xf]
      %v494 = vld [vmem:[%s485 + $0x20] sm:$0xf]
      %v495 = vld [vmem:[%s485 + $0x24] sm:$0xf]
      %v496 = vld [vmem:[%s485 + $0x28] sm:$0xf]
      %v497 = vld [vmem:[%s485 + $0x2c] sm:$0xf]
      %v498 = vld [vmem:[%s485 + $0x30] sm:$0xf]
      %v499 = vld [vmem:[%s485 + $0x34] sm:$0xf]
      %v500 = vld [vmem:[%s485 + $0x38] sm:$0xf]
      %v501 = vld [vmem:[%s485 + $0x3c] sm:$0xf]
      %s502 = scalar_lea.vmem %s1, 320
      %v503 = vld [vmem:[%s502] sm:$0xf]
      %v504 = vld [vmem:[%s502 + $0x4] sm:$0xf]
      %v505 = vld [vmem:[%s502 + $0x8] sm:$0xf]
      %v506 = vld [vmem:[%s502 + $0xc] sm:$0xf]
      %v507 = vld [vmem:[%s502 + $0x10] sm:$0xf]
      %v508 = vld [vmem:[%s502 + $0x14] sm:$0xf]
      %v509 = vld [vmem:[%s502 + $0x18] sm:$0xf]
      %v510 = vld [vmem:[%s502 + $0x1c] sm:$0xf]
      %v511 = vld [vmem:[%s502 + $0x20] sm:$0xf]
      %v512 = vld [vmem:[%s502 + $0x24] sm:$0xf]
      %v513 = vld [vmem:[%s502 + $0x28] sm:$0xf]
      %v514 = vld [vmem:[%s502 + $0x2c] sm:$0xf]
      %v515 = vld [vmem:[%s502 + $0x30] sm:$0xf]
      %v516 = vld [vmem:[%s502 + $0x34] sm:$0xf]
      %v517 = vld [vmem:[%s502 + $0x38] sm:$0xf]
      %v518 = vld [vmem:[%s502 + $0x3c] sm:$0xf]
      %s519 = scalar_lea.vmem %s1, 384
      %v520 = vld [vmem:[%s519] sm:$0xf]
      %v521 = vld [vmem:[%s519 + $0x4] sm:$0xf]
      %v522 = vld [vmem:[%s519 + $0x8] sm:$0xf]
      %v523 = vld [vmem:[%s519 + $0xc] sm:$0xf]
      %v524 = vld [vmem:[%s519 + $0x10] sm:$0xf]
      %v525 = vld [vmem:[%s519 + $0x14] sm:$0xf]
      %v526 = vld [vmem:[%s519 + $0x18] sm:$0xf]
      %v527 = vld [vmem:[%s519 + $0x1c] sm:$0xf]
      %v528 = vld [vmem:[%s519 + $0x20] sm:$0xf]
      %v529 = vld [vmem:[%s519 + $0x24] sm:$0xf]
      %v530 = vld [vmem:[%s519 + $0x28] sm:$0xf]
      %v531 = vld [vmem:[%s519 + $0x2c] sm:$0xf]
      %v532 = vld [vmem:[%s519 + $0x30] sm:$0xf]
      %v533 = vld [vmem:[%s519 + $0x34] sm:$0xf]
      %v534 = vld [vmem:[%s519 + $0x38] sm:$0xf]
      %v535 = vld [vmem:[%s519 + $0x3c] sm:$0xf]
      %s536 = scalar_lea.vmem %s1, 448
      %v537 = vld [vmem:[%s536] sm:$0xf]
      %v538 = vld [vmem:[%s536 + $0x4] sm:$0xf]
      %v539 = vld [vmem:[%s536 + $0x8] sm:$0xf]
      %v540 = vld [vmem:[%s536 + $0xc] sm:$0xf]
      %v541 = vld [vmem:[%s536 + $0x10] sm:$0xf]
      %v542 = vld [vmem:[%s536 + $0x14] sm:$0xf]
      %v543 = vld [vmem:[%s536 + $0x18] sm:$0xf]
      %v544 = vld [vmem:[%s536 + $0x1c] sm:$0xf]
      %v545 = vld [vmem:[%s536 + $0x20] sm:$0xf]
      %v546 = vld [vmem:[%s536 + $0x24] sm:$0xf]
      %v547 = vld [vmem:[%s536 + $0x28] sm:$0xf]
      %v548 = vld [vmem:[%s536 + $0x2c] sm:$0xf]
      %v549 = vld [vmem:[%s536 + $0x30] sm:$0xf]
      %v550 = vld [vmem:[%s536 + $0x34] sm:$0xf]
      %v551 = vld [vmem:[%s536 + $0x38] sm:$0xf]
      %v552 = vld [vmem:[%s536 + $0x3c] sm:$0xf]
      %s553 = scalar_lea.vmem %s1, 512
      %v554 = vld [vmem:[%s553] sm:$0xf]
      %v555 = vld [vmem:[%s553 + $0x4] sm:$0xf]
      %v556 = vld [vmem:[%s553 + $0x8] sm:$0xf]
      %v557 = vld [vmem:[%s553 + $0xc] sm:$0xf]
      %v558 = vld [vmem:[%s553 + $0x10] sm:$0xf]
      %v559 = vld [vmem:[%s553 + $0x14] sm:$0xf]
      %v560 = vld [vmem:[%s553 + $0x18] sm:$0xf]
      %v561 = vld [vmem:[%s553 + $0x1c] sm:$0xf]
      %v562 = vld [vmem:[%s553 + $0x20] sm:$0xf]
      %v563 = vld [vmem:[%s553 + $0x24] sm:$0xf]
      %v564 = vld [vmem:[%s553 + $0x28] sm:$0xf]
      %v565 = vld [vmem:[%s553 + $0x2c] sm:$0xf]
      %v566 = vld [vmem:[%s553 + $0x30] sm:$0xf]
      %v567 = vld [vmem:[%s553 + $0x34] sm:$0xf]
      %v568 = vld [vmem:[%s553 + $0x38] sm:$0xf]
      %v569 = vld [vmem:[%s553 + $0x3c] sm:$0xf]
      %v570 = vld [vmem:[%s409] sm:$0xf]
      %v571 = vld [vmem:[%s409 + $0x4] sm:$0xf]
      %v572 = vld [vmem:[%s409 + $0x8] sm:$0xf]
      %v573 = vld [vmem:[%s409 + $0xc] sm:$0xf]
      %v574 = vld [vmem:[%s409 + $0x10] sm:$0xf]
      %v575 = vld [vmem:[%s409 + $0x14] sm:$0xf]
      %v576 = vld [vmem:[%s409 + $0x18] sm:$0xf]
      %v577 = vld [vmem:[%s409 + $0x1c] sm:$0xf]
      %v578 = vld [vmem:[%s409 + $0x20] sm:$0xf]
      %v579 = vld [vmem:[%s409 + $0x24] sm:$0xf]
      %v580 = vld [vmem:[%s409 + $0x28] sm:$0xf]
      %v581 = vld [vmem:[%s409 + $0x2c] sm:$0xf]
      %v582 = vld [vmem:[%s409 + $0x30] sm:$0xf]
      %v583 = vld [vmem:[%s409 + $0x34] sm:$0xf]
      %v584 = vld [vmem:[%s409 + $0x38] sm:$0xf]
      %v585 = vld [vmem:[%s409 + $0x3c] sm:$0xf]
      %v586 = vld [vmem:[%s2] sm:$0xf]
      %v587 = vld [vmem:[%s2 + $0x4] sm:$0xf]
      %v588 = vld [vmem:[%s2 + $0x8] sm:$0xf]
      %v589 = vld [vmem:[%s2 + $0xc] sm:$0xf]
      %v590 = vld [vmem:[%s2 + $0x10] sm:$0xf]
      %v591 = vld [vmem:[%s2 + $0x14] sm:$0xf]
      %v592 = vld [vmem:[%s2 + $0x18] sm:$0xf]
      %v593 = vld [vmem:[%s2 + $0x1c] sm:$0xf]
      %v594 = vld [vmem:[%s2 + $0x20] sm:$0xf]
      %v595 = vld [vmem:[%s3] sm:$0x1]
      %v597 = vlaneseq
      %v598 = vshrl.u32 %v597, 7
      %v599 = vsub.s32 0, %v598
      %v600 = vrot.slane %v595, %v599
      %v618 = vunpack.c.l.b16 %v570
      %v619 = vunpack.c.l.b16 %v571
      %v620 = vunpack.c.l.b16 %v572
      %v621 = vunpack.c.l.b16 %v573
      %v622 = vunpack.c.l.b16 %v574
      %v623 = vunpack.c.l.b16 %v575
      %v624 = vunpack.c.l.b16 %v576
      %v625 = vunpack.c.l.b16 %v577
      %v626 = vunpack.c.l.b16 %v578
      %v627 = vunpack.c.l.b16 %v579
      %v628 = vunpack.c.l.b16 %v580
      %v629 = vunpack.c.l.b16 %v581
      %v630 = vunpack.c.l.b16 %v582
      %v631 = vunpack.c.l.b16 %v583
      %v632 = vunpack.c.l.b16 %v584
      %v633 = vunpack.c.l.b16 %v585
      %v634 = vpack.c.b16 %v619, %v618
      %v635 = vpack.c.b16 %v621, %v620
      %v636 = vpack.c.b16 %v623, %v622
      %v637 = vpack.c.b16 %v625, %v624
      %v638 = vpack.c.b16 %v627, %v626
      %v639 = vpack.c.b16 %v629, %v628
      %v640 = vpack.c.b16 %v631, %v630
      %v641 = vpack.c.b16 %v633, %v632
      %v651 = vunpack.c.l.b16 %v586
      %v652 = vunpack.c.l.b16 %v587
      %v653 = vunpack.c.l.b16 %v588
      %v654 = vunpack.c.l.b16 %v589
      %v655 = vunpack.c.l.b16 %v590
      %v656 = vunpack.c.l.b16 %v591
      %v657 = vunpack.c.l.b16 %v592
      %v658 = vunpack.c.l.b16 %v593
      %v659 = vunpack.c.l.b16 %v594
      %v660 = vpack.c.b16 %v652, %v651
      %v661 = vpack.c.b16 %v654, %v653
      %v662 = vpack.c.b16 %v656, %v655
      %v663 = vpack.c.b16 %v658, %v657
      %v664 = vpack.c.b16 %v659, %v659
      %vm669 = vcmask 588800
      %v671 = vsel %vm669, %v634, 0
      %v674 = vsel %vm669, %v635, 0
      %v677 = vsel %vm669, %v636, 0
      %v680 = vsel %vm669, %v637, 0
      %v683 = vsel %vm669, %v638, 0
      %v686 = vsel %vm669, %v639, 0
      %v689 = vsel %vm669, %v640, 0
      %v692 = vsel %vm669, %v641, 0
      %vm694 = vcmask 1043456
      %v696 = vsel %vm694, %v664, 0
      %698 = vmatprep.subr.bf16.mxu0 0
      %699 = vmatpush1.bf16.msra.mxu0 0
      %700 = vmatprep.subr.bf16.mxu0 0
      %701 = vmatpush1.bf16.msra.mxu0 0
      %702 = vmatprep.subr.bf16.mxu0 0
      %703 = vmatpush1.bf16.msra.mxu0 0
      %704 = vmatprep.subr.bf16.mxu0 0
      %705 = vmatpush1.bf16.msra.mxu0 %v696
      %706 = vmatprep.subr.bf16.mxu0 0
      %707 = vmatpush1.bf16.msra.mxu0 %v663
      %708 = vmatprep.subr.bf16.mxu0 0
      %709 = vmatpush1.bf16.msra.mxu0 %v662
      %710 = vmatprep.subr.bf16.mxu0 0
      %711 = vmatpush1.bf16.msra.mxu0 %v661
      %712 = vmatprep.subr.bf16.mxu0 0
      %713 = vmatpush1.bf16.msra.mxu0 %v660
      %714 = vmatprep.subr.bf16.mxu0 0
      %715 = vmatpush2.bf16.msra.mxu0 0
      %716 = vmatprep.subr.bf16.mxu0 0
      %717 = vmatpush2.bf16.msra.mxu0 0
      %718 = vmatprep.subr.bf16.mxu0 0
      %719 = vmatpush2.bf16.msra.mxu0 0
      %720 = vmatprep.subr.bf16.mxu0 0
      %721 = vmatpush2.bf16.msra.mxu0 0
      %722 = vmatprep.subr.bf16.mxu0 0
      %723 = vmatpush2.bf16.msra.mxu0 0
      %724 = vmatprep.subr.bf16.mxu0 0
      %725 = vmatpush2.bf16.msra.mxu0 0
      %726 = vmatprep.subr.bf16.mxu0 0
      %727 = vmatpush2.bf16.msra.mxu0 0
      %728 = vmatprep.subr.bf16.mxu0 0
      %729 = vmatpush2.bf16.msra.mxu0 0
      %730 = vmatprep.mubr.bf16.mxu0 0
      %731 = vmatmul.mubr.bf16.gmra.mxu0 %v671
      %v732 = vpop.f32.mrf.mxu0
      %v733 = vadd.f32 %v600, %v732
      %v734 = vpop.f32.mrf.mxu0
      %v735 = vpop.f32.mrf.mxu0
      %v736 = vadd.f32 %v600, %v735
      %v737 = vpop.f32.mrf.mxu0
      %738 = vmatprep.mubr.bf16.mxu0 0
      %739 = vmatmul.mubr.bf16.gmra.mxu0 %v674
      %v740 = vpop.f32.mrf.mxu0
      %v741 = vadd.f32 %v600, %v740
      %v742 = vpop.f32.mrf.mxu0
      %v743 = vpop.f32.mrf.mxu0
      %v744 = vadd.f32 %v600, %v743
      %v745 = vpop.f32.mrf.mxu0
      %746 = vmatprep.mubr.bf16.mxu0 0
      %747 = vmatmul.mubr.bf16.gmra.mxu0 %v677
      %v748 = vpop.f32.mrf.mxu0
      %v749 = vadd.f32 %v600, %v748
      %v750 = vpop.f32.mrf.mxu0
      %v751 = vpop.f32.mrf.mxu0
      %v752 = vadd.f32 %v600, %v751
      %v753 = vpop.f32.mrf.mxu0
      %754 = vmatprep.mubr.bf16.mxu0 0
      %755 = vmatmul.mubr.bf16.gmra.mxu0 %v680
      %v756 = vpop.f32.mrf.mxu0
      %v757 = vadd.f32 %v600, %v756
      %v758 = vpop.f32.mrf.mxu0
      %v759 = vpop.f32.mrf.mxu0
      %v760 = vadd.f32 %v600, %v759
      %v761 = vpop.f32.mrf.mxu0
      %762 = vmatprep.mubr.bf16.mxu0 0
      %763 = vmatmul.mubr.bf16.gmra.mxu0 %v683
      %v764 = vpop.f32.mrf.mxu0
      %v765 = vadd.f32 %v600, %v764
      %v766 = vpop.f32.mrf.mxu0
      %v767 = vpop.f32.mrf.mxu0
      %v768 = vadd.f32 %v600, %v767
      %v769 = vpop.f32.mrf.mxu0
      %770 = vmatprep.mubr.bf16.mxu0 0
      %771 = vmatmul.mubr.bf16.gmra.mxu0 %v686
      %v772 = vpop.f32.mrf.mxu0
      %v773 = vadd.f32 %v600, %v772
      %v774 = vpop.f32.mrf.mxu0
      %v775 = vpop.f32.mrf.mxu0
      %v776 = vadd.f32 %v600, %v775
      %v777 = vpop.f32.mrf.mxu0
      %778 = vmatprep.mubr.bf16.mxu0 0
      %779 = vmatmul.mubr.bf16.gmra.mxu0 %v689
      %v780 = vpop.f32.mrf.mxu0
      %v781 = vadd.f32 %v600, %v780
      %v782 = vpop.f32.mrf.mxu0
      %v783 = vpop.f32.mrf.mxu0
      %v784 = vadd.f32 %v600, %v783
      %v785 = vpop.f32.mrf.mxu0
      %786 = vmatprep.mubr.bf16.mxu0 0
      %787 = vmatmul.mubr.bf16.gmra.mxu0 %v692
      %v788 = vpop.f32.mrf.mxu0
      %v789 = vadd.f32 %v600, %v788
      %v790 = vpop.f32.mrf.mxu0
      %v791 = vpop.f32.mrf.mxu0
      %v792 = vadd.f32 %v600, %v791
      %v793 = vpop.f32.mrf.mxu0
      %794 = vdwg.mxu0
      %v795 = vmax.f32 %v733, 0.0
      %v796 = vmax.f32 %v736, 0.0
      %v797 = vmax.f32 %v741, 0.0
      %v798 = vmax.f32 %v744, 0.0
      %v799 = vmax.f32 %v749, 0.0
      %v800 = vmax.f32 %v752, 0.0
      %v801 = vmax.f32 %v757, 0.0
      %v802 = vmax.f32 %v760, 0.0
      %v803 = vmax.f32 %v765, 0.0
      %v804 = vmax.f32 %v768, 0.0
      %v805 = vmax.f32 %v773, 0.0
      %v806 = vmax.f32 %v776, 0.0
      %v807 = vmax.f32 %v781, 0.0
      %v808 = vmax.f32 %v784, 0.0
      %v809 = vmax.f32 %v789, 0.0
      %v810 = vmax.f32 %v792, 0.0
      %v811 = vld [vmem:[%s4] sm:$0xf]
      %v812 = vld [vmem:[%s4 + $0x4] sm:$0xf]
      %v813 = vld [vmem:[%s4 + $0x8] sm:$0xf]
      %v814 = vld [vmem:[%s4 + $0xc] sm:$0xf]
      %v815 = vld [vmem:[%s4 + $0x10] sm:$0xf]
      %v816 = vld [vmem:[%s4 + $0x14] sm:$0xf]
      %v817 = vld [vmem:[%s4 + $0x18] sm:$0xf]
      %v818 = vld [vmem:[%s4 + $0x1c] sm:$0xf]
      %v819 = vld [vmem:[%s4 + $0x20] sm:$0xf]
      %v820 = vld [vmem:[%s4 + $0x24] sm:$0xf]
      %v821 = vld [vmem:[%s4 + $0x28] sm:$0xf]
      %v822 = vld [vmem:[%s4 + $0x2c] sm:$0xf]
      %v823 = vld [vmem:[%s4 + $0x30] sm:$0xf]
      %v824 = vld [vmem:[%s4 + $0x34] sm:$0xf]
      %v825 = vld [vmem:[%s4 + $0x38] sm:$0xf]
      %v826 = vld [vmem:[%s4 + $0x3c] sm:$0xf]
      %v827 = vld [vmem:[%s4 + $0x40] sm:$0xf]
      %v828 = vld [vmem:[%s4 + $0x44] sm:$0xf]
      %v829 = vld [vmem:[%s4 + $0x48] sm:$0xf]
      %v830 = vld [vmem:[%s4 + $0x4c] sm:$0xf]
      %v831 = vld [vmem:[%s4 + $0x50] sm:$0xf]
      %v832 = vld [vmem:[%s4 + $0x54] sm:$0xf]
      %v833 = vld [vmem:[%s4 + $0x58] sm:$0xf]
      %v834 = vld [vmem:[%s4 + $0x5c] sm:$0xf]
      %v835 = vld [vmem:[%s4 + $0x60] sm:$0xf]
      %v836 = vld [vmem:[%s4 + $0x64] sm:$0xf]
      %v837 = vld [vmem:[%s4 + $0x68] sm:$0xf]
      %v838 = vld [vmem:[%s4 + $0x6c] sm:$0xf]
      %v839 = vld [vmem:[%s4 + $0x70] sm:$0xf]
      %v840 = vld [vmem:[%s4 + $0x74] sm:$0xf]
      %v841 = vld [vmem:[%s4 + $0x78] sm:$0xf]
      %v842 = vld [vmem:[%s4 + $0x7c] sm:$0xf]
      %v843 = vld [vmem:[%s4 + $0x80] sm:$0xf]
      %v844 = vld [vmem:[%s4 + $0x84] sm:$0xf]
      %v845 = vld [vmem:[%s4 + $0x88] sm:$0xf]
      %v846 = vld [vmem:[%s4 + $0x8c] sm:$0xf]
      %v847 = vld [vmem:[%s5] sm:$0x1]
      %v848 = vpack.c.bf16 %v796, %v795
      %v849 = vpack.c.bf16 %v798, %v797
      %v850 = vpack.c.bf16 %v800, %v799
      %v851 = vpack.c.bf16 %v802, %v801
      %v852 = vpack.c.bf16 %v804, %v803
      %v853 = vpack.c.bf16 %v806, %v805
      %v854 = vpack.c.bf16 %v808, %v807
      %v855 = vpack.c.bf16 %v810, %v809
      %vm856 = vsmask.f32 2304
      %v858 = vshrl.u32 %v848, 16
      %v860 = vrot.slane %v858, 5
      %v861 = vshll.u32 %v848, 16
      %v863 = vrot.slane %v861, 6
      %v864 = vor.u32 %v860, %v863
      %v866 = vshrl.u32 %v849, 16
      %v868 = vrot.slane %v866, 5
      %v869 = vshll.u32 %v849, 16
      %v871 = vrot.slane %v869, 6
      %v872 = vor.u32 %v868, %v871
      %v873 = vsel %vm856, %v864, %v872
      %v875 = vshrl.u32 %v850, 16
      %v877 = vrot.slane %v875, 5
      %v878 = vshll.u32 %v850, 16
      %v880 = vrot.slane %v878, 6
      %v881 = vor.u32 %v877, %v880
      %v882 = vsel %vm856, %v872, %v881
      %v884 = vshrl.u32 %v851, 16
      %v886 = vrot.slane %v884, 5
      %v887 = vshll.u32 %v851, 16
      %v889 = vrot.slane %v887, 6
      %v890 = vor.u32 %v886, %v889
      %v891 = vsel %vm856, %v881, %v890
      %v893 = vshrl.u32 %v852, 16
      %v895 = vrot.slane %v893, 5
      %v896 = vshll.u32 %v852, 16
      %v898 = vrot.slane %v896, 6
      %v899 = vor.u32 %v895, %v898
      %v900 = vsel %vm856, %v890, %v899
      %v902 = vshrl.u32 %v853, 16
      %v904 = vrot.slane %v902, 5
      %v905 = vshll.u32 %v853, 16
      %v907 = vrot.slane %v905, 6
      %v908 = vor.u32 %v904, %v907
      %v909 = vsel %vm856, %v899, %v908
      %v911 = vshrl.u32 %v854, 16
      %v913 = vrot.slane %v911, 5
      %v914 = vshll.u32 %v854, 16
      %v916 = vrot.slane %v914, 6
      %v917 = vor.u32 %v913, %v916
      %v918 = vsel %vm856, %v908, %v917
      %v920 = vshrl.u32 %v855, 16
      %v922 = vrot.slane %v920, 5
      %v923 = vshll.u32 %v855, 16
      %v925 = vrot.slane %v923, 6
      %v926 = vor.u32 %v922, %v925
      %v927 = vsel %vm856, %v917, %v926
      %vm936 = vcmask 1042432
      %vm937 = vmand %vm936, %vm856
      %v938 = vsel %vm937, 0, %v864
      %940 = vset.pattern.permute.xlu0 0
      %941 = vperm.xlu0 %940, %v418
      %v942 = vpop.permute.xlu0 %941
      %v945 = vunpack.c.l.s4 839922192
      %v946 = vunpack.c.0.s8 %v945
      %v947 = vlaneseq
      %v948 = vshrl.u32 %v947, 7
      %v949 = vsub.s32 %v946, %v948
      %v950 = vrot.slane %v942, %v949
      %952 = vset.pattern.permute.xlu0 0
      %953 = vperm.xlu0 %952, %v419
      %v954 = vpop.permute.xlu0 %953
      %v957 = vunpack.c.l.s4 839922192
      %v958 = vunpack.c.0.s8 %v957
      %v959 = vlaneseq
      %v960 = vshrl.u32 %v959, 7
      %v961 = vsub.s32 %v958, %v960
      %v962 = vrot.slane %v954, %v961
      %964 = vset.pattern.permute.xlu0 0
      %965 = vperm.xlu0 %964, %v420
      %v966 = vpop.permute.xlu0 %965
      %v969 = vunpack.c.l.s4 839922192
      %v970 = vunpack.c.0.s8 %v969
      %v971 = vlaneseq
      %v972 = vshrl.u32 %v971, 7
      %v973 = vsub.s32 %v970, %v972
      %v974 = vrot.slane %v966, %v973
      %976 = vset.pattern.permute.xlu0 0
      %977 = vperm.xlu0 %976, %v421
      %v978 = vpop.permute.xlu0 %977
      %v981 = vunpack.c.l.s4 839922192
      %v982 = vunpack.c.0.s8 %v981
      %v983 = vlaneseq
      %v984 = vshrl.u32 %v983, 7
      %v985 = vsub.s32 %v982, %v984
      %v986 = vrot.slane %v978, %v985
      %988 = vset.pattern.permute.xlu0 0
      %989 = vperm.xlu0 %988, %v422
      %v990 = vpop.permute.xlu0 %989
      %v993 = vunpack.c.l.s4 839922192
      %v994 = vunpack.c.0.s8 %v993
      %v995 = vlaneseq
      %v996 = vshrl.u32 %v995, 7
      %v997 = vsub.s32 %v994, %v996
      %v998 = vrot.slane %v990, %v997
      %1000 = vset.pattern.permute.xlu0 0
      %1001 = vperm.xlu0 %1000, %v423
      %v1002 = vpop.permute.xlu0 %1001
      %v1005 = vunpack.c.l.s4 839922192
      %v1006 = vunpack.c.0.s8 %v1005
      %v1007 = vlaneseq
      %v1008 = vshrl.u32 %v1007, 7
      %v1009 = vsub.s32 %v1006, %v1008
      %v1010 = vrot.slane %v1002, %v1009
      %1012 = vset.pattern.permute.xlu0 0
      %1013 = vperm.xlu0 %1012, %v424
      %v1014 = vpop.permute.xlu0 %1013
      %v1017 = vunpack.c.l.s4 839922192
      %v1018 = vunpack.c.0.s8 %v1017
      %v1019 = vlaneseq
      %v1020 = vshrl.u32 %v1019, 7
      %v1021 = vsub.s32 %v1018, %v1020
      %v1022 = vrot.slane %v1014, %v1021
      %1024 = vset.pattern.permute.xlu0 0
      %1025 = vperm.xlu0 %1024, %v425
      %v1026 = vpop.permute.xlu0 %1025
      %v1029 = vunpack.c.l.s4 839922192
      %v1030 = vunpack.c.0.s8 %v1029
      %v1031 = vlaneseq
      %v1032 = vshrl.u32 %v1031, 7
      %v1033 = vsub.s32 %v1030, %v1032
      %v1034 = vrot.slane %v1026, %v1033
      %1036 = vset.pattern.permute.xlu0 0
      %1037 = vperm.xlu0 %1036, %v426
      %v1038 = vpop.permute.xlu0 %1037
      %v1041 = vunpack.c.l.s4 839922192
      %v1042 = vunpack.c.0.s8 %v1041
      %v1043 = vlaneseq
      %v1044 = vshrl.u32 %v1043, 7
      %v1045 = vsub.s32 %v1042, %v1044
      %v1046 = vrot.slane %v1038, %v1045
      %1048 = vset.pattern.permute.xlu0 0
      %1049 = vperm.xlu0 %1048, %v427
      %v1050 = vpop.permute.xlu0 %1049
      %v1053 = vunpack.c.l.s4 839922192
      %v1054 = vunpack.c.0.s8 %v1053
      %v1055 = vlaneseq
      %v1056 = vshrl.u32 %v1055, 7
      %v1057 = vsub.s32 %v1054, %v1056
      %v1058 = vrot.slane %v1050, %v1057
      %1060 = vset.pattern.permute.xlu0 0
      %1061 = vperm.xlu0 %1060, %v428
      %v1062 = vpop.permute.xlu0 %1061
      %v1065 = vunpack.c.l.s4 839922192
      %v1066 = vunpack.c.0.s8 %v1065
      %v1067 = vlaneseq
      %v1068 = vshrl.u32 %v1067, 7
      %v1069 = vsub.s32 %v1066, %v1068
      %v1070 = vrot.slane %v1062, %v1069
      %1072 = vset.pattern.permute.xlu0 0
      %1073 = vperm.xlu0 %1072, %v429
      %v1074 = vpop.permute.xlu0 %1073
      %v1077 = vunpack.c.l.s4 839922192
      %v1078 = vunpack.c.0.s8 %v1077
      %v1079 = vlaneseq
      %v1080 = vshrl.u32 %v1079, 7
      %v1081 = vsub.s32 %v1078, %v1080
      %v1082 = vrot.slane %v1074, %v1081
      %1084 = vset.pattern.permute.xlu0 0
      %1085 = vperm.xlu0 %1084, %v430
      %v1086 = vpop.permute.xlu0 %1085
      %v1089 = vunpack.c.l.s4 839922192
      %v1090 = vunpack.c.0.s8 %v1089
      %v1091 = vlaneseq
      %v1092 = vshrl.u32 %v1091, 7
      %v1093 = vsub.s32 %v1090, %v1092
      %v1094 = vrot.slane %v1086, %v1093
      %1096 = vset.pattern.permute.xlu0 0
      %1097 = vperm.xlu0 %1096, %v431
      %v1098 = vpop.permute.xlu0 %1097
      %v1101 = vunpack.c.l.s4 839922192
      %v1102 = vunpack.c.0.s8 %v1101
      %v1103 = vlaneseq
      %v1104 = vshrl.u32 %v1103, 7
      %v1105 = vsub.s32 %v1102, %v1104
      %v1106 = vrot.slane %v1098, %v1105
      %1108 = vset.pattern.permute.xlu0 0
      %1109 = vperm.xlu0 %1108, %v432
      %v1110 = vpop.permute.xlu0 %1109
      %v1113 = vunpack.c.l.s4 839922192
      %v1114 = vunpack.c.0.s8 %v1113
      %v1115 = vlaneseq
      %v1116 = vshrl.u32 %v1115, 7
      %v1117 = vsub.s32 %v1114, %v1116
      %v1118 = vrot.slane %v1110, %v1117
      %1120 = vset.pattern.permute.xlu0 0
      %1121 = vperm.xlu0 %1120, %v433
      %v1122 = vpop.permute.xlu0 %1121
      %v1125 = vunpack.c.l.s4 839922192
      %v1126 = vunpack.c.0.s8 %v1125
      %v1127 = vlaneseq
      %v1128 = vshrl.u32 %v1127, 7
      %v1129 = vsub.s32 %v1126, %v1128
      %v1130 = vrot.slane %v1122, %v1129
      %v1147 = vunpack.c.l.b16 %v950
      %v1148 = vunpack.c.l.b16 %v962
      %v1149 = vunpack.c.l.b16 %v974
      %v1150 = vunpack.c.l.b16 %v986
      %v1151 = vunpack.c.l.b16 %v998
      %v1152 = vunpack.c.l.b16 %v1010
      %v1153 = vunpack.c.l.b16 %v1022
      %v1154 = vunpack.c.l.b16 %v1034
      %v1155 = vunpack.c.l.b16 %v1046
      %v1156 = vunpack.c.l.b16 %v1058
      %v1157 = vunpack.c.l.b16 %v1070
      %v1158 = vunpack.c.l.b16 %v1082
      %v1159 = vunpack.c.l.b16 %v1094
      %v1160 = vunpack.c.l.b16 %v1106
      %v1161 = vunpack.c.l.b16 %v1118
      %v1162 = vunpack.c.l.b16 %v1130
      %v1163 = vpack.c.b16 %v1148, %v1147
      %v1164 = vpack.c.b16 %v1150, %v1149
      %v1165 = vpack.c.b16 %v1152, %v1151
      %v1166 = vpack.c.b16 %v1154, %v1153
      %v1167 = vpack.c.b16 %v1156, %v1155
      %v1168 = vpack.c.b16 %v1158, %v1157
      %v1169 = vpack.c.b16 %v1160, %v1159
      %v1170 = vpack.c.b16 %v1162, %v1161
      %v1179 = vmul.bf16 %v938, %v1163
      %v1180 = vmul.bf16 %v873, %v1164
      %v1181 = vmul.bf16 %v882, %v1165
      %v1182 = vmul.bf16 %v891, %v1166
      %v1183 = vmul.bf16 %v900, %v1167
      %v1184 = vmul.bf16 %v909, %v1168
      %v1185 = vmul.bf16 %v918, %v1169
      %v1186 = vmul.bf16 %v927, %v1170
      %vm1195 = vcmask 1041408
      %v1196 = vrot.slane %v848, 6
      %v1197 = vrot.slane %v849, 6
      %v1198 = vsel %vm1195, %v1196, %v1197
      %v1199 = vrot.slane %v850, 6
      %v1200 = vsel %vm1195, %v1197, %v1199
      %v1201 = vrot.slane %v851, 6
      %v1202 = vsel %vm1195, %v1199, %v1201
      %v1203 = vrot.slane %v852, 6
      %v1204 = vsel %vm1195, %v1201, %v1203
      %v1205 = vrot.slane %v853, 6
      %v1206 = vsel %vm1195, %v1203, %v1205
      %v1207 = vrot.slane %v854, 6
      %v1208 = vsel %vm1195, %v1205, %v1207
      %v1209 = vrot.slane %v855, 6
      %v1210 = vsel %vm1195, %v1207, %v1209
      %vm1218 = vcmask 1041408
      %v1221 = vsel %vm1218, 0, %v1196
      %1224 = vset.pattern.permute.xlu0 0
      %1225 = vperm.xlu0 %1224, %v435
      %v1226 = vpop.permute.xlu0 %1225
      %v1229 = vunpack.c.l.s4 839922192
      %v1230 = vunpack.c.0.s8 %v1229
      %v1231 = vlaneseq
      %v1232 = vshrl.u32 %v1231, 7
      %v1233 = vsub.s32 %v1230, %v1232
      %v1234 = vrot.slane %v1226, %v1233
      %1236 = vset.pattern.permute.xlu0 0
      %1237 = vperm.xlu0 %1236, %v436
      %v1238 = vpop.permute.xlu0 %1237
      %v1241 = vunpack.c.l.s4 839922192
      %v1242 = vunpack.c.0.s8 %v1241
      %v1243 = vlaneseq
      %v1244 = vshrl.u32 %v1243, 7
      %v1245 = vsub.s32 %v1242, %v1244
      %v1246 = vrot.slane %v1238, %v1245
      %1248 = vset.pattern.permute.xlu0 0
      %1249 = vperm.xlu0 %1248, %v437
      %v1250 = vpop.permute.xlu0 %1249
      %v1253 = vunpack.c.l.s4 839922192
      %v1254 = vunpack.c.0.s8 %v1253
      %v1255 = vlaneseq
      %v1256 = vshrl.u32 %v1255, 7
      %v1257 = vsub.s32 %v1254, %v1256
      %v1258 = vrot.slane %v1250, %v1257
      %1260 = vset.pattern.permute.xlu0 0
      %1261 = vperm.xlu0 %1260, %v438
      %v1262 = vpop.permute.xlu0 %1261
      %v1265 = vunpack.c.l.s4 839922192
      %v1266 = vunpack.c.0.s8 %v1265
      %v1267 = vlaneseq
      %v1268 = vshrl.u32 %v1267, 7
      %v1269 = vsub.s32 %v1266, %v1268
      %v1270 = vrot.slane %v1262, %v1269
      %1272 = vset.pattern.permute.xlu0 0
      %1273 = vperm.xlu0 %1272, %v439
      %v1274 = vpop.permute.xlu0 %1273
      %v1277 = vunpack.c.l.s4 839922192
      %v1278 = vunpack.c.0.s8 %v1277
      %v1279 = vlaneseq
      %v1280 = vshrl.u32 %v1279, 7
      %v1281 = vsub.s32 %v1278, %v1280
      %v1282 = vrot.slane %v1274, %v1281
      %1284 = vset.pattern.permute.xlu0 0
      %1285 = vperm.xlu0 %1284, %v440
      %v1286 = vpop.permute.xlu0 %1285
      %v1289 = vunpack.c.l.s4 839922192
      %v1290 = vunpack.c.0.s8 %v1289
      %v1291 = vlaneseq
      %v1292 = vshrl.u32 %v1291, 7
      %v1293 = vsub.s32 %v1290, %v1292
      %v1294 = vrot.slane %v1286, %v1293
      %1296 = vset.pattern.permute.xlu0 0
      %1297 = vperm.xlu0 %1296, %v441
      %v1298 = vpop.permute.xlu0 %1297
      %v1301 = vunpack.c.l.s4 839922192
      %v1302 = vunpack.c.0.s8 %v1301
      %v1303 = vlaneseq
      %v1304 = vshrl.u32 %v1303, 7
      %v1305 = vsub.s32 %v1302, %v1304
      %v1306 = vrot.slane %v1298, %v1305
      %1308 = vset.pattern.permute.xlu0 0
      %1309 = vperm.xlu0 %1308, %v442
      %v1310 = vpop.permute.xlu0 %1309
      %v1313 = vunpack.c.l.s4 839922192
      %v1314 = vunpack.c.0.s8 %v1313
      %v1315 = vlaneseq
      %v1316 = vshrl.u32 %v1315, 7
      %v1317 = vsub.s32 %v1314, %v1316
      %v1318 = vrot.slane %v1310, %v1317
      %1320 = vset.pattern.permute.xlu0 0
      %1321 = vperm.xlu0 %1320, %v443
      %v1322 = vpop.permute.xlu0 %1321
      %v1325 = vunpack.c.l.s4 839922192
      %v1326 = vunpack.c.0.s8 %v1325
      %v1327 = vlaneseq
      %v1328 = vshrl.u32 %v1327, 7
      %v1329 = vsub.s32 %v1326, %v1328
      %v1330 = vrot.slane %v1322, %v1329
      %1332 = vset.pattern.permute.xlu0 0
      %1333 = vperm.xlu0 %1332, %v444
      %v1334 = vpop.permute.xlu0 %1333
      %v1337 = vunpack.c.l.s4 839922192
      %v1338 = vunpack.c.0.s8 %v1337
      %v1339 = vlaneseq
      %v1340 = vshrl.u32 %v1339, 7
      %v1341 = vsub.s32 %v1338, %v1340
      %v1342 = vrot.slane %v1334, %v1341
      %1344 = vset.pattern.permute.xlu0 0
      %1345 = vperm.xlu0 %1344, %v445
      %v1346 = vpop.permute.xlu0 %1345
      %v1349 = vunpack.c.l.s4 839922192
      %v1350 = vunpack.c.0.s8 %v1349
      %v1351 = vlaneseq
      %v1352 = vshrl.u32 %v1351, 7
      %v1353 = vsub.s32 %v1350, %v1352
      %v1354 = vrot.slane %v1346, %v1353
      %1356 = vset.pattern.permute.xlu0 0
      %1357 = vperm.xlu0 %1356, %v446
      %v1358 = vpop.permute.xlu0 %1357
      %v1361 = vunpack.c.l.s4 839922192
      %v1362 = vunpack.c.0.s8 %v1361
      %v1363 = vlaneseq
      %v1364 = vshrl.u32 %v1363, 7
      %v1365 = vsub.s32 %v1362, %v1364
      %v1366 = vrot.slane %v1358, %v1365
      %1368 = vset.pattern.permute.xlu0 0
      %1369 = vperm.xlu0 %1368, %v447
      %v1370 = vpop.permute.xlu0 %1369
      %v1373 = vunpack.c.l.s4 839922192
      %v1374 = vunpack.c.0.s8 %v1373
      %v1375 = vlaneseq
      %v1376 = vshrl.u32 %v1375, 7
      %v1377 = vsub.s32 %v1374, %v1376
      %v1378 = vrot.slane %v1370, %v1377
      %1380 = vset.pattern.permute.xlu0 0
      %1381 = vperm.xlu0 %1380, %v448
      %v1382 = vpop.permute.xlu0 %1381
      %v1385 = vunpack.c.l.s4 839922192
      %v1386 = vunpack.c.0.s8 %v1385
      %v1387 = vlaneseq
      %v1388 = vshrl.u32 %v1387, 7
      %v1389 = vsub.s32 %v1386, %v1388
      %v1390 = vrot.slane %v1382, %v1389
      %1392 = vset.pattern.permute.xlu0 0
      %1393 = vperm.xlu0 %1392, %v449
      %v1394 = vpop.permute.xlu0 %1393
      %v1397 = vunpack.c.l.s4 839922192
      %v1398 = vunpack.c.0.s8 %v1397
      %v1399 = vlaneseq
      %v1400 = vshrl.u32 %v1399, 7
      %v1401 = vsub.s32 %v1398, %v1400
      %v1402 = vrot.slane %v1394, %v1401
      %1404 = vset.pattern.permute.xlu0 0
      %1405 = vperm.xlu0 %1404, %v450
      %v1406 = vpop.permute.xlu0 %1405
      %v1409 = vunpack.c.l.s4 839922192
      %v1410 = vunpack.c.0.s8 %v1409
      %v1411 = vlaneseq
      %v1412 = vshrl.u32 %v1411, 7
      %v1413 = vsub.s32 %v1410, %v1412
      %v1414 = vrot.slane %v1406, %v1413
      %v1431 = vunpack.c.l.b16 %v1234
      %v1432 = vunpack.c.l.b16 %v1246
      %v1433 = vunpack.c.l.b16 %v1258
      %v1434 = vunpack.c.l.b16 %v1270
      %v1435 = vunpack.c.l.b16 %v1282
      %v1436 = vunpack.c.l.b16 %v1294
      %v1437 = vunpack.c.l.b16 %v1306
      %v1438 = vunpack.c.l.b16 %v1318
      %v1439 = vunpack.c.l.b16 %v1330
      %v1440 = vunpack.c.l.b16 %v1342
      %v1441 = vunpack.c.l.b16 %v1354
      %v1442 = vunpack.c.l.b16 %v1366
      %v1443 = vunpack.c.l.b16 %v1378
      %v1444 = vunpack.c.l.b16 %v1390
      %v1445 = vunpack.c.l.b16 %v1402
      %v1446 = vunpack.c.l.b16 %v1414
      %v1447 = vpack.c.b16 %v1432, %v1431
      %v1448 = vpack.c.b16 %v1434, %v1433
      %v1449 = vpack.c.b16 %v1436, %v1435
      %v1450 = vpack.c.b16 %v1438, %v1437
      %v1451 = vpack.c.b16 %v1440, %v1439
      %v1452 = vpack.c.b16 %v1442, %v1441
      %v1453 = vpack.c.b16 %v1444, %v1443
      %v1454 = vpack.c.b16 %v1446, %v1445
      %v1463 = vmul.bf16 %v1221, %v1447
      %v1464 = vmul.bf16 %v1198, %v1448
      %v1465 = vmul.bf16 %v1200, %v1449
      %v1466 = vmul.bf16 %v1202, %v1450
      %v1467 = vmul.bf16 %v1204, %v1451
      %v1468 = vmul.bf16 %v1206, %v1452
      %v1469 = vmul.bf16 %v1208, %v1453
      %v1470 = vmul.bf16 %v1210, %v1454
      %vm1471 = vsmask.f32 1280
      %v1472 = vrot.slane %v858, 6
      %v1473 = vrot.slane %v861, 7
      %v1474 = vor.u32 %v1472, %v1473
      %v1475 = vrot.slane %v866, 6
      %v1476 = vrot.slane %v869, 7
      %v1477 = vor.u32 %v1475, %v1476
      %v1478 = vsel %vm1471, %v1474, %v1477
      %v1479 = vrot.slane %v875, 6
      %v1480 = vrot.slane %v878, 7
      %v1481 = vor.u32 %v1479, %v1480
      %v1482 = vsel %vm1471, %v1477, %v1481
      %v1483 = vrot.slane %v884, 6
      %v1484 = vrot.slane %v887, 7
      %v1485 = vor.u32 %v1483, %v1484
      %v1486 = vsel %vm1471, %v1481, %v1485
      %v1487 = vrot.slane %v893, 6
      %v1488 = vrot.slane %v896, 7
      %v1489 = vor.u32 %v1487, %v1488
      %v1490 = vsel %vm1471, %v1485, %v1489
      %v1491 = vrot.slane %v902, 6
      %v1492 = vrot.slane %v905, 7
      %v1493 = vor.u32 %v1491, %v1492
      %v1494 = vsel %vm1471, %v1489, %v1493
      %v1495 = vrot.slane %v911, 6
      %v1496 = vrot.slane %v914, 7
      %v1497 = vor.u32 %v1495, %v1496
      %v1498 = vsel %vm1471, %v1493, %v1497
      %v1499 = vrot.slane %v920, 6
      %v1500 = vrot.slane %v923, 7
      %v1501 = vor.u32 %v1499, %v1500
      %v1502 = vsel %vm1471, %v1497, %v1501
      %vm1511 = vmand %vm1195, %vm1471
      %v1512 = vsel %vm1511, 0, %v1474
      %1514 = vset.pattern.permute.xlu0 0
      %1515 = vperm.xlu0 %1514, %v452
      %v1516 = vpop.permute.xlu0 %1515
      %v1519 = vunpack.c.l.s4 839922192
      %v1520 = vunpack.c.0.s8 %v1519
      %v1521 = vlaneseq
      %v1522 = vshrl.u32 %v1521, 7
      %v1523 = vsub.s32 %v1520, %v1522
      %v1524 = vrot.slane %v1516, %v1523
      %1526 = vset.pattern.permute.xlu0 0
      %1527 = vperm.xlu0 %1526, %v453
      %v1528 = vpop.permute.xlu0 %1527
      %v1531 = vunpack.c.l.s4 839922192
      %v1532 = vunpack.c.0.s8 %v1531
      %v1533 = vlaneseq
      %v1534 = vshrl.u32 %v1533, 7
      %v1535 = vsub.s32 %v1532, %v1534
      %v1536 = vrot.slane %v1528, %v1535
      %1538 = vset.pattern.permute.xlu0 0
      %1539 = vperm.xlu0 %1538, %v454
      %v1540 = vpop.permute.xlu0 %1539
      %v1543 = vunpack.c.l.s4 839922192
      %v1544 = vunpack.c.0.s8 %v1543
      %v1545 = vlaneseq
      %v1546 = vshrl.u32 %v1545, 7
      %v1547 = vsub.s32 %v1544, %v1546
      %v1548 = vrot.slane %v1540, %v1547
      %1550 = vset.pattern.permute.xlu0 0
      %1551 = vperm.xlu0 %1550, %v455
      %v1552 = vpop.permute.xlu0 %1551
      %v1555 = vunpack.c.l.s4 839922192
      %v1556 = vunpack.c.0.s8 %v1555
      %v1557 = vlaneseq
      %v1558 = vshrl.u32 %v1557, 7
      %v1559 = vsub.s32 %v1556, %v1558
      %v1560 = vrot.slane %v1552, %v1559
      %1562 = vset.pattern.permute.xlu0 0
      %1563 = vperm.xlu0 %1562, %v456
      %v1564 = vpop.permute.xlu0 %1563
      %v1567 = vunpack.c.l.s4 839922192
      %v1568 = vunpack.c.0.s8 %v1567
      %v1569 = vlaneseq
      %v1570 = vshrl.u32 %v1569, 7
      %v1571 = vsub.s32 %v1568, %v1570
      %v1572 = vrot.slane %v1564, %v1571
      %1574 = vset.pattern.permute.xlu0 0
      %1575 = vperm.xlu0 %1574, %v457
      %v1576 = vpop.permute.xlu0 %1575
      %v1579 = vunpack.c.l.s4 839922192
      %v1580 = vunpack.c.0.s8 %v1579
      %v1581 = vlaneseq
      %v1582 = vshrl.u32 %v1581, 7
      %v1583 = vsub.s32 %v1580, %v1582
      %v1584 = vrot.slane %v1576, %v1583
      %1586 = vset.pattern.permute.xlu0 0
      %1587 = vperm.xlu0 %1586, %v458
      %v1588 = vpop.permute.xlu0 %1587
      %v1591 = vunpack.c.l.s4 839922192
      %v1592 = vunpack.c.0.s8 %v1591
      %v1593 = vlaneseq
      %v1594 = vshrl.u32 %v1593, 7
      %v1595 = vsub.s32 %v1592, %v1594
      %v1596 = vrot.slane %v1588, %v1595
      %1598 = vset.pattern.permute.xlu0 0
      %1599 = vperm.xlu0 %1598, %v459
      %v1600 = vpop.permute.xlu0 %1599
      %v1603 = vunpack.c.l.s4 839922192
      %v1604 = vunpack.c.0.s8 %v1603
      %v1605 = vlaneseq
      %v1606 = vshrl.u32 %v1605, 7
      %v1607 = vsub.s32 %v1604, %v1606
      %v1608 = vrot.slane %v1600, %v1607
      %1610 = vset.pattern.permute.xlu0 0
      %1611 = vperm.xlu0 %1610, %v460
      %v1612 = vpop.permute.xlu0 %1611
      %v1615 = vunpack.c.l.s4 839922192
      %v1616 = vunpack.c.0.s8 %v1615
      %v1617 = vlaneseq
      %v1618 = vshrl.u32 %v1617, 7
      %v1619 = vsub.s32 %v1616, %v1618
      %v1620 = vrot.slane %v1612, %v1619
      %1622 = vset.pattern.permute.xlu0 0
      %1623 = vperm.xlu0 %1622, %v461
      %v1624 = vpop.permute.xlu0 %1623
      %v1627 = vunpack.c.l.s4 839922192
      %v1628 = vunpack.c.0.s8 %v1627
      %v1629 = vlaneseq
      %v1630 = vshrl.u32 %v1629, 7
      %v1631 = vsub.s32 %v1628, %v1630
      %v1632 = vrot.slane %v1624, %v1631
      %1634 = vset.pattern.permute.xlu0 0
      %1635 = vperm.xlu0 %1634, %v462
      %v1636 = vpop.permute.xlu0 %1635
      %v1639 = vunpack.c.l.s4 839922192
      %v1640 = vunpack.c.0.s8 %v1639
      %v1641 = vlaneseq
      %v1642 = vshrl.u32 %v1641, 7
      %v1643 = vsub.s32 %v1640, %v1642
      %v1644 = vrot.slane %v1636, %v1643
      %1646 = vset.pattern.permute.xlu0 0
      %1647 = vperm.xlu0 %1646, %v463
      %v1648 = vpop.permute.xlu0 %1647
      %v1651 = vunpack.c.l.s4 839922192
      %v1652 = vunpack.c.0.s8 %v1651
      %v1653 = vlaneseq
      %v1654 = vshrl.u32 %v1653, 7
      %v1655 = vsub.s32 %v1652, %v1654
      %v1656 = vrot.slane %v1648, %v1655
      %1658 = vset.pattern.permute.xlu0 0
      %1659 = vperm.xlu0 %1658, %v464
      %v1660 = vpop.permute.xlu0 %1659
      %v1663 = vunpack.c.l.s4 839922192
      %v1664 = vunpack.c.0.s8 %v1663
      %v1665 = vlaneseq
      %v1666 = vshrl.u32 %v1665, 7
      %v1667 = vsub.s32 %v1664, %v1666
      %v1668 = vrot.slane %v1660, %v1667
      %1670 = vset.pattern.permute.xlu0 0
      %1671 = vperm.xlu0 %1670, %v465
      %v1672 = vpop.permute.xlu0 %1671
      %v1675 = vunpack.c.l.s4 839922192
      %v1676 = vunpack.c.0.s8 %v1675
      %v1677 = vlaneseq
      %v1678 = vshrl.u32 %v1677, 7
      %v1679 = vsub.s32 %v1676, %v1678
      %v1680 = vrot.slane %v1672, %v1679
      %1682 = vset.pattern.permute.xlu0 0
      %1683 = vperm.xlu0 %1682, %v466
      %v1684 = vpop.permute.xlu0 %1683
      %v1687 = vunpack.c.l.s4 839922192
      %v1688 = vunpack.c.0.s8 %v1687
      %v1689 = vlaneseq
      %v1690 = vshrl.u32 %v1689, 7
      %v1691 = vsub.s32 %v1688, %v1690
      %v1692 = vrot.slane %v1684, %v1691
      %1694 = vset.pattern.permute.xlu0 0
      %1695 = vperm.xlu0 %1694, %v467
      %v1696 = vpop.permute.xlu0 %1695
      %v1699 = vunpack.c.l.s4 839922192
      %v1700 = vunpack.c.0.s8 %v1699
      %v1701 = vlaneseq
      %v1702 = vshrl.u32 %v1701, 7
      %v1703 = vsub.s32 %v1700, %v1702
      %v1704 = vrot.slane %v1696, %v1703
      %v1721 = vunpack.c.l.b16 %v1524
      %v1722 = vunpack.c.l.b16 %v1536
      %v1723 = vunpack.c.l.b16 %v1548
      %v1724 = vunpack.c.l.b16 %v1560
      %v1725 = vunpack.c.l.b16 %v1572
      %v1726 = vunpack.c.l.b16 %v1584
      %v1727 = vunpack.c.l.b16 %v1596
      %v1728 = vunpack.c.l.b16 %v1608
      %v1729 = vunpack.c.l.b16 %v1620
      %v1730 = vunpack.c.l.b16 %v1632
      %v1731 = vunpack.c.l.b16 %v1644
      %v1732 = vunpack.c.l.b16 %v1656
      %v1733 = vunpack.c.l.b16 %v1668
      %v1734 = vunpack.c.l.b16 %v1680
      %v1735 = vunpack.c.l.b16 %v1692
      %v1736 = vunpack.c.l.b16 %v1704
      %v1737 = vpack.c.b16 %v1722, %v1721
      %v1738 = vpack.c.b16 %v1724, %v1723
      %v1739 = vpack.c.b16 %v1726, %v1725
      %v1740 = vpack.c.b16 %v1728, %v1727
      %v1741 = vpack.c.b16 %v1730, %v1729
      %v1742 = vpack.c.b16 %v1732, %v1731
      %v1743 = vpack.c.b16 %v1734, %v1733
      %v1744 = vpack.c.b16 %v1736, %v1735
      %v1753 = vmul.bf16 %v1512, %v1737
      %v1754 = vmul.bf16 %v1478, %v1738
      %v1755 = vmul.bf16 %v1482, %v1739
      %v1756 = vmul.bf16 %v1486, %v1740
      %v1757 = vmul.bf16 %v1490, %v1741
      %v1758 = vmul.bf16 %v1494, %v1742
      %v1759 = vmul.bf16 %v1498, %v1743
      %v1760 = vmul.bf16 %v1502, %v1744
      %vm1761 = vsmask.f32 256
      %v1762 = vrot.slane %v858, 7
      %v1763 = vor.u32 %v1762, %v861
      %v1764 = vrot.slane %v866, 7
      %v1765 = vor.u32 %v1764, %v869
      %v1766 = vsel %vm1761, %v1762, %v1765
      %v1767 = vrot.slane %v875, 7
      %v1768 = vor.u32 %v1767, %v878
      %v1769 = vsel %vm1761, %v1764, %v1768
      %v1770 = vrot.slane %v884, 7
      %v1771 = vor.u32 %v1770, %v887
      %v1772 = vsel %vm1761, %v1767, %v1771
      %v1773 = vrot.slane %v893, 7
      %v1774 = vor.u32 %v1773, %v896
      %v1775 = vsel %vm1761, %v1770, %v1774
      %v1776 = vrot.slane %v902, 7
      %v1777 = vor.u32 %v1776, %v905
      %v1778 = vsel %vm1761, %v1773, %v1777
      %v1779 = vrot.slane %v911, 7
      %v1780 = vor.u32 %v1779, %v914
      %v1781 = vsel %vm1761, %v1776, %v1780
      %v1782 = vrot.slane %v920, 7
      %v1783 = vor.u32 %v1782, %v923
      %v1784 = vsel %vm1761, %v1779, %v1783
      %vm1793 = vcmask 1040384
      %vm1794 = vmand %vm1793, %vm1761
      %v1795 = vsel %vm1794, 0, %v1763
      %1797 = vset.pattern.permute.xlu0 0
      %1798 = vperm.xlu0 %1797, %v469
      %v1799 = vpop.permute.xlu0 %1798
      %v1802 = vunpack.c.l.s4 839922192
      %v1803 = vunpack.c.0.s8 %v1802
      %v1804 = vlaneseq
      %v1805 = vshrl.u32 %v1804, 7
      %v1806 = vsub.s32 %v1803, %v1805
      %v1807 = vrot.slane %v1799, %v1806
      %1809 = vset.pattern.permute.xlu0 0
      %1810 = vperm.xlu0 %1809, %v470
      %v1811 = vpop.permute.xlu0 %1810
      %v1814 = vunpack.c.l.s4 839922192
      %v1815 = vunpack.c.0.s8 %v1814
      %v1816 = vlaneseq
      %v1817 = vshrl.u32 %v1816, 7
      %v1818 = vsub.s32 %v1815, %v1817
      %v1819 = vrot.slane %v1811, %v1818
      %1821 = vset.pattern.permute.xlu0 0
      %1822 = vperm.xlu0 %1821, %v471
      %v1823 = vpop.permute.xlu0 %1822
      %v1826 = vunpack.c.l.s4 839922192
      %v1827 = vunpack.c.0.s8 %v1826
      %v1828 = vlaneseq
      %v1829 = vshrl.u32 %v1828, 7
      %v1830 = vsub.s32 %v1827, %v1829
      %v1831 = vrot.slane %v1823, %v1830
      %1833 = vset.pattern.permute.xlu0 0
      %1834 = vperm.xlu0 %1833, %v472
      %v1835 = vpop.permute.xlu0 %1834
      %v1838 = vunpack.c.l.s4 839922192
      %v1839 = vunpack.c.0.s8 %v1838
      %v1840 = vlaneseq
      %v1841 = vshrl.u32 %v1840, 7
      %v1842 = vsub.s32 %v1839, %v1841
      %v1843 = vrot.slane %v1835, %v1842
      %1845 = vset.pattern.permute.xlu0 0
      %1846 = vperm.xlu0 %1845, %v473
      %v1847 = vpop.permute.xlu0 %1846
      %v1850 = vunpack.c.l.s4 839922192
      %v1851 = vunpack.c.0.s8 %v1850
      %v1852 = vlaneseq
      %v1853 = vshrl.u32 %v1852, 7
      %v1854 = vsub.s32 %v1851, %v1853
      %v1855 = vrot.slane %v1847, %v1854
      %1857 = vset.pattern.permute.xlu0 0
      %1858 = vperm.xlu0 %1857, %v474
      %v1859 = vpop.permute.xlu0 %1858
      %v1862 = vunpack.c.l.s4 839922192
      %v1863 = vunpack.c.0.s8 %v1862
      %v1864 = vlaneseq
      %v1865 = vshrl.u32 %v1864, 7
      %v1866 = vsub.s32 %v1863, %v1865
      %v1867 = vrot.slane %v1859, %v1866
      %1869 = vset.pattern.permute.xlu0 0
      %1870 = vperm.xlu0 %1869, %v475
      %v1871 = vpop.permute.xlu0 %1870
      %v1874 = vunpack.c.l.s4 839922192
      %v1875 = vunpack.c.0.s8 %v1874
      %v1876 = vlaneseq
      %v1877 = vshrl.u32 %v1876, 7
      %v1878 = vsub.s32 %v1875, %v1877
      %v1879 = vrot.slane %v1871, %v1878
      %1881 = vset.pattern.permute.xlu0 0
      %1882 = vperm.xlu0 %1881, %v476
      %v1883 = vpop.permute.xlu0 %1882
      %v1886 = vunpack.c.l.s4 839922192
      %v1887 = vunpack.c.0.s8 %v1886
      %v1888 = vlaneseq
      %v1889 = vshrl.u32 %v1888, 7
      %v1890 = vsub.s32 %v1887, %v1889
      %v1891 = vrot.slane %v1883, %v1890
      %1893 = vset.pattern.permute.xlu0 0
      %1894 = vperm.xlu0 %1893, %v477
      %v1895 = vpop.permute.xlu0 %1894
      %v1898 = vunpack.c.l.s4 839922192
      %v1899 = vunpack.c.0.s8 %v1898
      %v1900 = vlaneseq
      %v1901 = vshrl.u32 %v1900, 7
      %v1902 = vsub.s32 %v1899, %v1901
      %v1903 = vrot.slane %v1895, %v1902
      %1905 = vset.pattern.permute.xlu0 0
      %1906 = vperm.xlu0 %1905, %v478
      %v1907 = vpop.permute.xlu0 %1906
      %v1910 = vunpack.c.l.s4 839922192
      %v1911 = vunpack.c.0.s8 %v1910
      %v1912 = vlaneseq
      %v1913 = vshrl.u32 %v1912, 7
      %v1914 = vsub.s32 %v1911, %v1913
      %v1915 = vrot.slane %v1907, %v1914
      %1917 = vset.pattern.permute.xlu0 0
      %1918 = vperm.xlu0 %1917, %v479
      %v1919 = vpop.permute.xlu0 %1918
      %v1922 = vunpack.c.l.s4 839922192
      %v1923 = vunpack.c.0.s8 %v1922
      %v1924 = vlaneseq
      %v1925 = vshrl.u32 %v1924, 7
      %v1926 = vsub.s32 %v1923, %v1925
      %v1927 = vrot.slane %v1919, %v1926
      %1929 = vset.pattern.permute.xlu0 0
      %1930 = vperm.xlu0 %1929, %v480
      %v1931 = vpop.permute.xlu0 %1930
      %v1934 = vunpack.c.l.s4 839922192
      %v1935 = vunpack.c.0.s8 %v1934
      %v1936 = vlaneseq
      %v1937 = vshrl.u32 %v1936, 7
      %v1938 = vsub.s32 %v1935, %v1937
      %v1939 = vrot.slane %v1931, %v1938
      %1941 = vset.pattern.permute.xlu0 0
      %1942 = vperm.xlu0 %1941, %v481
      %v1943 = vpop.permute.xlu0 %1942
      %v1946 = vunpack.c.l.s4 839922192
      %v1947 = vunpack.c.0.s8 %v1946
      %v1948 = vlaneseq
      %v1949 = vshrl.u32 %v1948, 7
      %v1950 = vsub.s32 %v1947, %v1949
      %v1951 = vrot.slane %v1943, %v1950
      %1953 = vset.pattern.permute.xlu0 0
      %1954 = vperm.xlu0 %1953, %v482
      %v1955 = vpop.permute.xlu0 %1954
      %v1958 = vunpack.c.l.s4 839922192
      %v1959 = vunpack.c.0.s8 %v1958
      %v1960 = vlaneseq
      %v1961 = vshrl.u32 %v1960, 7
      %v1962 = vsub.s32 %v1959, %v1961
      %v1963 = vrot.slane %v1955, %v1962
      %1965 = vset.pattern.permute.xlu0 0
      %1966 = vperm.xlu0 %1965, %v483
      %v1967 = vpop.permute.xlu0 %1966
      %v1970 = vunpack.c.l.s4 839922192
      %v1971 = vunpack.c.0.s8 %v1970
      %v1972 = vlaneseq
      %v1973 = vshrl.u32 %v1972, 7
      %v1974 = vsub.s32 %v1971, %v1973
      %v1975 = vrot.slane %v1967, %v1974
      %1977 = vset.pattern.permute.xlu0 0
      %1978 = vperm.xlu0 %1977, %v484
      %v1979 = vpop.permute.xlu0 %1978
      %v1982 = vunpack.c.l.s4 839922192
      %v1983 = vunpack.c.0.s8 %v1982
      %v1984 = vlaneseq
      %v1985 = vshrl.u32 %v1984, 7
      %v1986 = vsub.s32 %v1983, %v1985
      %v1987 = vrot.slane %v1979, %v1986
      %v2004 = vunpack.c.l.b16 %v1807
      %v2005 = vunpack.c.l.b16 %v1819
      %v2006 = vunpack.c.l.b16 %v1831
      %v2007 = vunpack.c.l.b16 %v1843
      %v2008 = vunpack.c.l.b16 %v1855
      %v2009 = vunpack.c.l.b16 %v1867
      %v2010 = vunpack.c.l.b16 %v1879
      %v2011 = vunpack.c.l.b16 %v1891
      %v2012 = vunpack.c.l.b16 %v1903
      %v2013 = vunpack.c.l.b16 %v1915
      %v2014 = vunpack.c.l.b16 %v1927
      %v2015 = vunpack.c.l.b16 %v1939
      %v2016 = vunpack.c.l.b16 %v1951
      %v2017 = vunpack.c.l.b16 %v1963
      %v2018 = vunpack.c.l.b16 %v1975
      %v2019 = vunpack.c.l.b16 %v1987
      %v2020 = vpack.c.b16 %v2005, %v2004
      %v2021 = vpack.c.b16 %v2007, %v2006
      %v2022 = vpack.c.b16 %v2009, %v2008
      %v2023 = vpack.c.b16 %v2011, %v2010
      %v2024 = vpack.c.b16 %v2013, %v2012
      %v2025 = vpack.c.b16 %v2015, %v2014
      %v2026 = vpack.c.b16 %v2017, %v2016
      %v2027 = vpack.c.b16 %v2019, %v2018
      %v2036 = vmul.bf16 %v1795, %v2020
      %v2037 = vmul.bf16 %v1766, %v2021
      %v2038 = vmul.bf16 %v1769, %v2022
      %v2039 = vmul.bf16 %v1772, %v2023
      %v2040 = vmul.bf16 %v1775, %v2024
      %v2041 = vmul.bf16 %v1778, %v2025
      %v2042 = vmul.bf16 %v1781, %v2026
      %v2043 = vmul.bf16 %v1784, %v2027
      %2045 = vset.pattern.permute.xlu0 0
      %2046 = vperm.xlu0 %2045, %v486
      %v2047 = vpop.permute.xlu0 %2046
      %v2050 = vunpack.c.l.s4 839922192
      %v2051 = vunpack.c.0.s8 %v2050
      %v2052 = vlaneseq
      %v2053 = vshrl.u32 %v2052, 7
      %v2054 = vsub.s32 %v2051, %v2053
      %v2055 = vrot.slane %v2047, %v2054
      %2057 = vset.pattern.permute.xlu0 0
      %2058 = vperm.xlu0 %2057, %v487
      %v2059 = vpop.permute.xlu0 %2058
      %v2062 = vunpack.c.l.s4 839922192
      %v2063 = vunpack.c.0.s8 %v2062
      %v2064 = vlaneseq
      %v2065 = vshrl.u32 %v2064, 7
      %v2066 = vsub.s32 %v2063, %v2065
      %v2067 = vrot.slane %v2059, %v2066
      %2069 = vset.pattern.permute.xlu0 0
      %2070 = vperm.xlu0 %2069, %v488
      %v2071 = vpop.permute.xlu0 %2070
      %v2074 = vunpack.c.l.s4 839922192
      %v2075 = vunpack.c.0.s8 %v2074
      %v2076 = vlaneseq
      %v2077 = vshrl.u32 %v2076, 7
      %v2078 = vsub.s32 %v2075, %v2077
      %v2079 = vrot.slane %v2071, %v2078
      %2081 = vset.pattern.permute.xlu0 0
      %2082 = vperm.xlu0 %2081, %v489
      %v2083 = vpop.permute.xlu0 %2082
      %v2086 = vunpack.c.l.s4 839922192
      %v2087 = vunpack.c.0.s8 %v2086
      %v2088 = vlaneseq
      %v2089 = vshrl.u32 %v2088, 7
      %v2090 = vsub.s32 %v2087, %v2089
      %v2091 = vrot.slane %v2083, %v2090
      %2093 = vset.pattern.permute.xlu0 0
      %2094 = vperm.xlu0 %2093, %v490
      %v2095 = vpop.permute.xlu0 %2094
      %v2098 = vunpack.c.l.s4 839922192
      %v2099 = vunpack.c.0.s8 %v2098
      %v2100 = vlaneseq
      %v2101 = vshrl.u32 %v2100, 7
      %v2102 = vsub.s32 %v2099, %v2101
      %v2103 = vrot.slane %v2095, %v2102
      %2105 = vset.pattern.permute.xlu0 0
      %2106 = vperm.xlu0 %2105, %v491
      %v2107 = vpop.permute.xlu0 %2106
      %v2110 = vunpack.c.l.s4 839922192
      %v2111 = vunpack.c.0.s8 %v2110
      %v2112 = vlaneseq
      %v2113 = vshrl.u32 %v2112, 7
      %v2114 = vsub.s32 %v2111, %v2113
      %v2115 = vrot.slane %v2107, %v2114
      %2117 = vset.pattern.permute.xlu0 0
      %2118 = vperm.xlu0 %2117, %v492
      %v2119 = vpop.permute.xlu0 %2118
      %v2122 = vunpack.c.l.s4 839922192
      %v2123 = vunpack.c.0.s8 %v2122
      %v2124 = vlaneseq
      %v2125 = vshrl.u32 %v2124, 7
      %v2126 = vsub.s32 %v2123, %v2125
      %v2127 = vrot.slane %v2119, %v2126
      %2129 = vset.pattern.permute.xlu0 0
      %2130 = vperm.xlu0 %2129, %v493
      %v2131 = vpop.permute.xlu0 %2130
      %v2134 = vunpack.c.l.s4 839922192
      %v2135 = vunpack.c.0.s8 %v2134
      %v2136 = vlaneseq
      %v2137 = vshrl.u32 %v2136, 7
      %v2138 = vsub.s32 %v2135, %v2137
      %v2139 = vrot.slane %v2131, %v2138
      %2141 = vset.pattern.permute.xlu0 0
      %2142 = vperm.xlu0 %2141, %v494
      %v2143 = vpop.permute.xlu0 %2142
      %v2146 = vunpack.c.l.s4 839922192
      %v2147 = vunpack.c.0.s8 %v2146
      %v2148 = vlaneseq
      %v2149 = vshrl.u32 %v2148, 7
      %v2150 = vsub.s32 %v2147, %v2149
      %v2151 = vrot.slane %v2143, %v2150
      %2153 = vset.pattern.permute.xlu0 0
      %2154 = vperm.xlu0 %2153, %v495
      %v2155 = vpop.permute.xlu0 %2154
      %v2158 = vunpack.c.l.s4 839922192
      %v2159 = vunpack.c.0.s8 %v2158
      %v2160 = vlaneseq
      %v2161 = vshrl.u32 %v2160, 7
      %v2162 = vsub.s32 %v2159, %v2161
      %v2163 = vrot.slane %v2155, %v2162
      %2165 = vset.pattern.permute.xlu0 0
      %2166 = vperm.xlu0 %2165, %v496
      %v2167 = vpop.permute.xlu0 %2166
      %v2170 = vunpack.c.l.s4 839922192
      %v2171 = vunpack.c.0.s8 %v2170
      %v2172 = vlaneseq
      %v2173 = vshrl.u32 %v2172, 7
      %v2174 = vsub.s32 %v2171, %v2173
      %v2175 = vrot.slane %v2167, %v2174
      %2177 = vset.pattern.permute.xlu0 0
      %2178 = vperm.xlu0 %2177, %v497
      %v2179 = vpop.permute.xlu0 %2178
      %v2182 = vunpack.c.l.s4 839922192
      %v2183 = vunpack.c.0.s8 %v2182
      %v2184 = vlaneseq
      %v2185 = vshrl.u32 %v2184, 7
      %v2186 = vsub.s32 %v2183, %v2185
      %v2187 = vrot.slane %v2179, %v2186
      %2189 = vset.pattern.permute.xlu0 0
      %2190 = vperm.xlu0 %2189, %v498
      %v2191 = vpop.permute.xlu0 %2190
      %v2194 = vunpack.c.l.s4 839922192
      %v2195 = vunpack.c.0.s8 %v2194
      %v2196 = vlaneseq
      %v2197 = vshrl.u32 %v2196, 7
      %v2198 = vsub.s32 %v2195, %v2197
      %v2199 = vrot.slane %v2191, %v2198
      %2201 = vset.pattern.permute.xlu0 0
      %2202 = vperm.xlu0 %2201, %v499
      %v2203 = vpop.permute.xlu0 %2202
      %v2206 = vunpack.c.l.s4 839922192
      %v2207 = vunpack.c.0.s8 %v2206
      %v2208 = vlaneseq
      %v2209 = vshrl.u32 %v2208, 7
      %v2210 = vsub.s32 %v2207, %v2209
      %v2211 = vrot.slane %v2203, %v2210
      %2213 = vset.pattern.permute.xlu0 0
      %2214 = vperm.xlu0 %2213, %v500
      %v2215 = vpop.permute.xlu0 %2214
      %v2218 = vunpack.c.l.s4 839922192
      %v2219 = vunpack.c.0.s8 %v2218
      %v2220 = vlaneseq
      %v2221 = vshrl.u32 %v2220, 7
      %v2222 = vsub.s32 %v2219, %v2221
      %v2223 = vrot.slane %v2215, %v2222
      %2225 = vset.pattern.permute.xlu0 0
      %2226 = vperm.xlu0 %2225, %v501
      %v2227 = vpop.permute.xlu0 %2226
      %v2230 = vunpack.c.l.s4 839922192
      %v2231 = vunpack.c.0.s8 %v2230
      %v2232 = vlaneseq
      %v2233 = vshrl.u32 %v2232, 7
      %v2234 = vsub.s32 %v2231, %v2233
      %v2235 = vrot.slane %v2227, %v2234
      %v2252 = vunpack.c.l.b16 %v2055
      %v2253 = vunpack.c.l.b16 %v2067
      %v2254 = vunpack.c.l.b16 %v2079
      %v2255 = vunpack.c.l.b16 %v2091
      %v2256 = vunpack.c.l.b16 %v2103
      %v2257 = vunpack.c.l.b16 %v2115
      %v2258 = vunpack.c.l.b16 %v2127
      %v2259 = vunpack.c.l.b16 %v2139
      %v2260 = vunpack.c.l.b16 %v2151
      %v2261 = vunpack.c.l.b16 %v2163
      %v2262 = vunpack.c.l.b16 %v2175
      %v2263 = vunpack.c.l.b16 %v2187
      %v2264 = vunpack.c.l.b16 %v2199
      %v2265 = vunpack.c.l.b16 %v2211
      %v2266 = vunpack.c.l.b16 %v2223
      %v2267 = vunpack.c.l.b16 %v2235
      %v2268 = vpack.c.b16 %v2253, %v2252
      %v2269 = vpack.c.b16 %v2255, %v2254
      %v2270 = vpack.c.b16 %v2257, %v2256
      %v2271 = vpack.c.b16 %v2259, %v2258
      %v2272 = vpack.c.b16 %v2261, %v2260
      %v2273 = vpack.c.b16 %v2263, %v2262
      %v2274 = vpack.c.b16 %v2265, %v2264
      %v2275 = vpack.c.b16 %v2267, %v2266
      %v2284 = vmul.bf16 %v848, %v2268
      %v2285 = vmul.bf16 %v849, %v2269
      %v2286 = vmul.bf16 %v850, %v2270
      %v2287 = vmul.bf16 %v851, %v2271
      %v2288 = vmul.bf16 %v852, %v2272
      %v2289 = vmul.bf16 %v853, %v2273
      %v2290 = vmul.bf16 %v854, %v2274
      %v2291 = vmul.bf16 %v855, %v2275
      %vm2292 = vsmask.f32 7424
      %v2293 = vrot.slane %v861, 1
      %v2294 = vor.u32 %v858, %v2293
      %v2295 = vrot.slane %v869, 1
      %v2296 = vsel %vm2292, %v2294, %v2295
      %v2297 = vor.u32 %v866, %v2295
      %v2298 = vrot.slane %v878, 1
      %v2299 = vsel %vm2292, %v2297, %v2298
      %v2300 = vor.u32 %v875, %v2298
      %v2301 = vrot.slane %v887, 1
      %v2302 = vsel %vm2292, %v2300, %v2301
      %v2303 = vor.u32 %v884, %v2301
      %v2304 = vrot.slane %v896, 1
      %v2305 = vsel %vm2292, %v2303, %v2304
      %v2306 = vor.u32 %v893, %v2304
      %v2307 = vrot.slane %v905, 1
      %v2308 = vsel %vm2292, %v2306, %v2307
      %v2309 = vor.u32 %v902, %v2307
      %v2310 = vrot.slane %v914, 1
      %v2311 = vsel %vm2292, %v2309, %v2310
      %v2312 = vor.u32 %v911, %v2310
      %v2313 = vrot.slane %v923, 1
      %v2314 = vsel %vm2292, %v2312, %v2313
      %v2315 = vor.u32 %v920, %v2313
      %vm2324 = vcmask 1047552
      %vm2325 = vmand %vm2324, %vm2292
      %v2326 = vsel %vm2325, %v2315, 0
      %2328 = vset.pattern.permute.xlu0 0
      %2329 = vperm.xlu0 %2328, %v503
      %v2330 = vpop.permute.xlu0 %2329
      %v2333 = vunpack.c.l.s4 839922192
      %v2334 = vunpack.c.0.s8 %v2333
      %v2335 = vlaneseq
      %v2336 = vshrl.u32 %v2335, 7
      %v2337 = vsub.s32 %v2334, %v2336
      %v2338 = vrot.slane %v2330, %v2337
      %2340 = vset.pattern.permute.xlu0 0
      %2341 = vperm.xlu0 %2340, %v504
      %v2342 = vpop.permute.xlu0 %2341
      %v2345 = vunpack.c.l.s4 839922192
      %v2346 = vunpack.c.0.s8 %v2345
      %v2347 = vlaneseq
      %v2348 = vshrl.u32 %v2347, 7
      %v2349 = vsub.s32 %v2346, %v2348
      %v2350 = vrot.slane %v2342, %v2349
      %2352 = vset.pattern.permute.xlu0 0
      %2353 = vperm.xlu0 %2352, %v505
      %v2354 = vpop.permute.xlu0 %2353
      %v2357 = vunpack.c.l.s4 839922192
      %v2358 = vunpack.c.0.s8 %v2357
      %v2359 = vlaneseq
      %v2360 = vshrl.u32 %v2359, 7
      %v2361 = vsub.s32 %v2358, %v2360
      %v2362 = vrot.slane %v2354, %v2361
      %2364 = vset.pattern.permute.xlu0 0
      %2365 = vperm.xlu0 %2364, %v506
      %v2366 = vpop.permute.xlu0 %2365
      %v2369 = vunpack.c.l.s4 839922192
      %v2370 = vunpack.c.0.s8 %v2369
      %v2371 = vlaneseq
      %v2372 = vshrl.u32 %v2371, 7
      %v2373 = vsub.s32 %v2370, %v2372
      %v2374 = vrot.slane %v2366, %v2373
      %2376 = vset.pattern.permute.xlu0 0
      %2377 = vperm.xlu0 %2376, %v507
      %v2378 = vpop.permute.xlu0 %2377
      %v2381 = vunpack.c.l.s4 839922192
      %v2382 = vunpack.c.0.s8 %v2381
      %v2383 = vlaneseq
      %v2384 = vshrl.u32 %v2383, 7
      %v2385 = vsub.s32 %v2382, %v2384
      %v2386 = vrot.slane %v2378, %v2385
      %2388 = vset.pattern.permute.xlu0 0
      %2389 = vperm.xlu0 %2388, %v508
      %v2390 = vpop.permute.xlu0 %2389
      %v2393 = vunpack.c.l.s4 839922192
      %v2394 = vunpack.c.0.s8 %v2393
      %v2395 = vlaneseq
      %v2396 = vshrl.u32 %v2395, 7
      %v2397 = vsub.s32 %v2394, %v2396
      %v2398 = vrot.slane %v2390, %v2397
      %2400 = vset.pattern.permute.xlu0 0
      %2401 = vperm.xlu0 %2400, %v509
      %v2402 = vpop.permute.xlu0 %2401
      %v2405 = vunpack.c.l.s4 839922192
      %v2406 = vunpack.c.0.s8 %v2405
      %v2407 = vlaneseq
      %v2408 = vshrl.u32 %v2407, 7
      %v2409 = vsub.s32 %v2406, %v2408
      %v2410 = vrot.slane %v2402, %v2409
      %2412 = vset.pattern.permute.xlu0 0
      %2413 = vperm.xlu0 %2412, %v510
      %v2414 = vpop.permute.xlu0 %2413
      %v2417 = vunpack.c.l.s4 839922192
      %v2418 = vunpack.c.0.s8 %v2417
      %v2419 = vlaneseq
      %v2420 = vshrl.u32 %v2419, 7
      %v2421 = vsub.s32 %v2418, %v2420
      %v2422 = vrot.slane %v2414, %v2421
      %2424 = vset.pattern.permute.xlu0 0
      %2425 = vperm.xlu0 %2424, %v511
      %v2426 = vpop.permute.xlu0 %2425
      %v2429 = vunpack.c.l.s4 839922192
      %v2430 = vunpack.c.0.s8 %v2429
      %v2431 = vlaneseq
      %v2432 = vshrl.u32 %v2431, 7
      %v2433 = vsub.s32 %v2430, %v2432
      %v2434 = vrot.slane %v2426, %v2433
      %2436 = vset.pattern.permute.xlu0 0
      %2437 = vperm.xlu0 %2436, %v512
      %v2438 = vpop.permute.xlu0 %2437
      %v2441 = vunpack.c.l.s4 839922192
      %v2442 = vunpack.c.0.s8 %v2441
      %v2443 = vlaneseq
      %v2444 = vshrl.u32 %v2443, 7
      %v2445 = vsub.s32 %v2442, %v2444
      %v2446 = vrot.slane %v2438, %v2445
      %2448 = vset.pattern.permute.xlu0 0
      %2449 = vperm.xlu0 %2448, %v513
      %v2450 = vpop.permute.xlu0 %2449
      %v2453 = vunpack.c.l.s4 839922192
      %v2454 = vunpack.c.0.s8 %v2453
      %v2455 = vlaneseq
      %v2456 = vshrl.u32 %v2455, 7
      %v2457 = vsub.s32 %v2454, %v2456
      %v2458 = vrot.slane %v2450, %v2457
      %2460 = vset.pattern.permute.xlu0 0
      %2461 = vperm.xlu0 %2460, %v514
      %v2462 = vpop.permute.xlu0 %2461
      %v2465 = vunpack.c.l.s4 839922192
      %v2466 = vunpack.c.0.s8 %v2465
      %v2467 = vlaneseq
      %v2468 = vshrl.u32 %v2467, 7
      %v2469 = vsub.s32 %v2466, %v2468
      %v2470 = vrot.slane %v2462, %v2469
      %2472 = vset.pattern.permute.xlu0 0
      %2473 = vperm.xlu0 %2472, %v515
      %v2474 = vpop.permute.xlu0 %2473
      %v2477 = vunpack.c.l.s4 839922192
      %v2478 = vunpack.c.0.s8 %v2477
      %v2479 = vlaneseq
      %v2480 = vshrl.u32 %v2479, 7
      %v2481 = vsub.s32 %v2478, %v2480
      %v2482 = vrot.slane %v2474, %v2481
      %2484 = vset.pattern.permute.xlu0 0
      %2485 = vperm.xlu0 %2484, %v516
      %v2486 = vpop.permute.xlu0 %2485
      %v2489 = vunpack.c.l.s4 839922192
      %v2490 = vunpack.c.0.s8 %v2489
      %v2491 = vlaneseq
      %v2492 = vshrl.u32 %v2491, 7
      %v2493 = vsub.s32 %v2490, %v2492
      %v2494 = vrot.slane %v2486, %v2493
      %2496 = vset.pattern.permute.xlu0 0
      %2497 = vperm.xlu0 %2496, %v517
      %v2498 = vpop.permute.xlu0 %2497
      %v2501 = vunpack.c.l.s4 839922192
      %v2502 = vunpack.c.0.s8 %v2501
      %v2503 = vlaneseq
      %v2504 = vshrl.u32 %v2503, 7
      %v2505 = vsub.s32 %v2502, %v2504
      %v2506 = vrot.slane %v2498, %v2505
      %2508 = vset.pattern.permute.xlu0 0
      %2509 = vperm.xlu0 %2508, %v518
      %v2510 = vpop.permute.xlu0 %2509
      %v2513 = vunpack.c.l.s4 839922192
      %v2514 = vunpack.c.0.s8 %v2513
      %v2515 = vlaneseq
      %v2516 = vshrl.u32 %v2515, 7
      %v2517 = vsub.s32 %v2514, %v2516
      %v2518 = vrot.slane %v2510, %v2517
      %v2535 = vunpack.c.l.b16 %v2338
      %v2536 = vunpack.c.l.b16 %v2350
      %v2537 = vunpack.c.l.b16 %v2362
      %v2538 = vunpack.c.l.b16 %v2374
      %v2539 = vunpack.c.l.b16 %v2386
      %v2540 = vunpack.c.l.b16 %v2398
      %v2541 = vunpack.c.l.b16 %v2410
      %v2542 = vunpack.c.l.b16 %v2422
      %v2543 = vunpack.c.l.b16 %v2434
      %v2544 = vunpack.c.l.b16 %v2446
      %v2545 = vunpack.c.l.b16 %v2458
      %v2546 = vunpack.c.l.b16 %v2470
      %v2547 = vunpack.c.l.b16 %v2482
      %v2548 = vunpack.c.l.b16 %v2494
      %v2549 = vunpack.c.l.b16 %v2506
      %v2550 = vunpack.c.l.b16 %v2518
      %v2551 = vpack.c.b16 %v2536, %v2535
      %v2552 = vpack.c.b16 %v2538, %v2537
      %v2553 = vpack.c.b16 %v2540, %v2539
      %v2554 = vpack.c.b16 %v2542, %v2541
      %v2555 = vpack.c.b16 %v2544, %v2543
      %v2556 = vpack.c.b16 %v2546, %v2545
      %v2557 = vpack.c.b16 %v2548, %v2547
      %v2558 = vpack.c.b16 %v2550, %v2549
      %v2567 = vmul.bf16 %v2296, %v2551
      %v2568 = vmul.bf16 %v2299, %v2552
      %v2569 = vmul.bf16 %v2302, %v2553
      %v2570 = vmul.bf16 %v2305, %v2554
      %v2571 = vmul.bf16 %v2308, %v2555
      %v2572 = vmul.bf16 %v2311, %v2556
      %v2573 = vmul.bf16 %v2314, %v2557
      %v2574 = vmul.bf16 %v2326, %v2558
      %vm2575 = vsmask.f32 6400
      %v2576 = vrot.slane %v858, 1
      %v2577 = vrot.slane %v861, 2
      %v2578 = vor.u32 %v2576, %v2577
      %v2579 = vrot.slane %v866, 1
      %v2580 = vrot.slane %v869, 2
      %v2581 = vor.u32 %v2579, %v2580
      %v2582 = vsel %vm2575, %v2578, %v2581
      %v2583 = vrot.slane %v875, 1
      %v2584 = vrot.slane %v878, 2
      %v2585 = vor.u32 %v2583, %v2584
      %v2586 = vsel %vm2575, %v2581, %v2585
      %v2587 = vrot.slane %v884, 1
      %v2588 = vrot.slane %v887, 2
      %v2589 = vor.u32 %v2587, %v2588
      %v2590 = vsel %vm2575, %v2585, %v2589
      %v2591 = vrot.slane %v893, 1
      %v2592 = vrot.slane %v896, 2
      %v2593 = vor.u32 %v2591, %v2592
      %v2594 = vsel %vm2575, %v2589, %v2593
      %v2595 = vrot.slane %v902, 1
      %v2596 = vrot.slane %v905, 2
      %v2597 = vor.u32 %v2595, %v2596
      %v2598 = vsel %vm2575, %v2593, %v2597
      %v2599 = vrot.slane %v911, 1
      %v2600 = vrot.slane %v914, 2
      %v2601 = vor.u32 %v2599, %v2600
      %v2602 = vsel %vm2575, %v2597, %v2601
      %v2603 = vrot.slane %v920, 1
      %v2604 = vrot.slane %v923, 2
      %v2605 = vor.u32 %v2603, %v2604
      %v2606 = vsel %vm2575, %v2601, %v2605
      %vm2615 = vcmask 1046528
      %vm2616 = vmand %vm2615, %vm2575
      %v2617 = vsel %vm2616, %v2605, 0
      %2619 = vset.pattern.permute.xlu0 0
      %2620 = vperm.xlu0 %2619, %v520
      %v2621 = vpop.permute.xlu0 %2620
      %v2624 = vunpack.c.l.s4 839922192
      %v2625 = vunpack.c.0.s8 %v2624
      %v2626 = vlaneseq
      %v2627 = vshrl.u32 %v2626, 7
      %v2628 = vsub.s32 %v2625, %v2627
      %v2629 = vrot.slane %v2621, %v2628
      %2631 = vset.pattern.permute.xlu0 0
      %2632 = vperm.xlu0 %2631, %v521
      %v2633 = vpop.permute.xlu0 %2632
      %v2636 = vunpack.c.l.s4 839922192
      %v2637 = vunpack.c.0.s8 %v2636
      %v2638 = vlaneseq
      %v2639 = vshrl.u32 %v2638, 7
      %v2640 = vsub.s32 %v2637, %v2639
      %v2641 = vrot.slane %v2633, %v2640
      %2643 = vset.pattern.permute.xlu0 0
      %2644 = vperm.xlu0 %2643, %v522
      %v2645 = vpop.permute.xlu0 %2644
      %v2648 = vunpack.c.l.s4 839922192
      %v2649 = vunpack.c.0.s8 %v2648
      %v2650 = vlaneseq
      %v2651 = vshrl.u32 %v2650, 7
      %v2652 = vsub.s32 %v2649, %v2651
      %v2653 = vrot.slane %v2645, %v2652
      %2655 = vset.pattern.permute.xlu0 0
      %2656 = vperm.xlu0 %2655, %v523
      %v2657 = vpop.permute.xlu0 %2656
      %v2660 = vunpack.c.l.s4 839922192
      %v2661 = vunpack.c.0.s8 %v2660
      %v2662 = vlaneseq
      %v2663 = vshrl.u32 %v2662, 7
      %v2664 = vsub.s32 %v2661, %v2663
      %v2665 = vrot.slane %v2657, %v2664
      %2667 = vset.pattern.permute.xlu0 0
      %2668 = vperm.xlu0 %2667, %v524
      %v2669 = vpop.permute.xlu0 %2668
      %v2672 = vunpack.c.l.s4 839922192
      %v2673 = vunpack.c.0.s8 %v2672
      %v2674 = vlaneseq
      %v2675 = vshrl.u32 %v2674, 7
      %v2676 = vsub.s32 %v2673, %v2675
      %v2677 = vrot.slane %v2669, %v2676
      %2679 = vset.pattern.permute.xlu0 0
      %2680 = vperm.xlu0 %2679, %v525
      %v2681 = vpop.permute.xlu0 %2680
      %v2684 = vunpack.c.l.s4 839922192
      %v2685 = vunpack.c.0.s8 %v2684
      %v2686 = vlaneseq
      %v2687 = vshrl.u32 %v2686, 7
      %v2688 = vsub.s32 %v2685, %v2687
      %v2689 = vrot.slane %v2681, %v2688
      %2691 = vset.pattern.permute.xlu0 0
      %2692 = vperm.xlu0 %2691, %v526
      %v2693 = vpop.permute.xlu0 %2692
      %v2696 = vunpack.c.l.s4 839922192
      %v2697 = vunpack.c.0.s8 %v2696
      %v2698 = vlaneseq
      %v2699 = vshrl.u32 %v2698, 7
      %v2700 = vsub.s32 %v2697, %v2699
      %v2701 = vrot.slane %v2693, %v2700
      %2703 = vset.pattern.permute.xlu0 0
      %2704 = vperm.xlu0 %2703, %v527
      %v2705 = vpop.permute.xlu0 %2704
      %v2708 = vunpack.c.l.s4 839922192
      %v2709 = vunpack.c.0.s8 %v2708
      %v2710 = vlaneseq
      %v2711 = vshrl.u32 %v2710, 7
      %v2712 = vsub.s32 %v2709, %v2711
      %v2713 = vrot.slane %v2705, %v2712
      %2715 = vset.pattern.permute.xlu0 0
      %2716 = vperm.xlu0 %2715, %v528
      %v2717 = vpop.permute.xlu0 %2716
      %v2720 = vunpack.c.l.s4 839922192
      %v2721 = vunpack.c.0.s8 %v2720
      %v2722 = vlaneseq
      %v2723 = vshrl.u32 %v2722, 7
      %v2724 = vsub.s32 %v2721, %v2723
      %v2725 = vrot.slane %v2717, %v2724
      %2727 = vset.pattern.permute.xlu0 0
      %2728 = vperm.xlu0 %2727, %v529
      %v2729 = vpop.permute.xlu0 %2728
      %v2732 = vunpack.c.l.s4 839922192
      %v2733 = vunpack.c.0.s8 %v2732
      %v2734 = vlaneseq
      %v2735 = vshrl.u32 %v2734, 7
      %v2736 = vsub.s32 %v2733, %v2735
      %v2737 = vrot.slane %v2729, %v2736
      %2739 = vset.pattern.permute.xlu0 0
      %2740 = vperm.xlu0 %2739, %v530
      %v2741 = vpop.permute.xlu0 %2740
      %v2744 = vunpack.c.l.s4 839922192
      %v2745 = vunpack.c.0.s8 %v2744
      %v2746 = vlaneseq
      %v2747 = vshrl.u32 %v2746, 7
      %v2748 = vsub.s32 %v2745, %v2747
      %v2749 = vrot.slane %v2741, %v2748
      %2751 = vset.pattern.permute.xlu0 0
      %2752 = vperm.xlu0 %2751, %v531
      %v2753 = vpop.permute.xlu0 %2752
      %v2756 = vunpack.c.l.s4 839922192
      %v2757 = vunpack.c.0.s8 %v2756
      %v2758 = vlaneseq
      %v2759 = vshrl.u32 %v2758, 7
      %v2760 = vsub.s32 %v2757, %v2759
      %v2761 = vrot.slane %v2753, %v2760
      %2763 = vset.pattern.permute.xlu0 0
      %2764 = vperm.xlu0 %2763, %v532
      %v2765 = vpop.permute.xlu0 %2764
      %v2768 = vunpack.c.l.s4 839922192
      %v2769 = vunpack.c.0.s8 %v2768
      %v2770 = vlaneseq
      %v2771 = vshrl.u32 %v2770, 7
      %v2772 = vsub.s32 %v2769, %v2771
      %v2773 = vrot.slane %v2765, %v2772
      %2775 = vset.pattern.permute.xlu0 0
      %2776 = vperm.xlu0 %2775, %v533
      %v2777 = vpop.permute.xlu0 %2776
      %v2780 = vunpack.c.l.s4 839922192
      %v2781 = vunpack.c.0.s8 %v2780
      %v2782 = vlaneseq
      %v2783 = vshrl.u32 %v2782, 7
      %v2784 = vsub.s32 %v2781, %v2783
      %v2785 = vrot.slane %v2777, %v2784
      %2787 = vset.pattern.permute.xlu0 0
      %2788 = vperm.xlu0 %2787, %v534
      %v2789 = vpop.permute.xlu0 %2788
      %v2792 = vunpack.c.l.s4 839922192
      %v2793 = vunpack.c.0.s8 %v2792
      %v2794 = vlaneseq
      %v2795 = vshrl.u32 %v2794, 7
      %v2796 = vsub.s32 %v2793, %v2795
      %v2797 = vrot.slane %v2789, %v2796
      %2799 = vset.pattern.permute.xlu0 0
      %2800 = vperm.xlu0 %2799, %v535
      %v2801 = vpop.permute.xlu0 %2800
      %v2804 = vunpack.c.l.s4 839922192
      %v2805 = vunpack.c.0.s8 %v2804
      %v2806 = vlaneseq
      %v2807 = vshrl.u32 %v2806, 7
      %v2808 = vsub.s32 %v2805, %v2807
      %v2809 = vrot.slane %v2801, %v2808
      %v2826 = vunpack.c.l.b16 %v2629
      %v2827 = vunpack.c.l.b16 %v2641
      %v2828 = vunpack.c.l.b16 %v2653
      %v2829 = vunpack.c.l.b16 %v2665
      %v2830 = vunpack.c.l.b16 %v2677
      %v2831 = vunpack.c.l.b16 %v2689
      %v2832 = vunpack.c.l.b16 %v2701
      %v2833 = vunpack.c.l.b16 %v2713
      %v2834 = vunpack.c.l.b16 %v2725
      %v2835 = vunpack.c.l.b16 %v2737
      %v2836 = vunpack.c.l.b16 %v2749
      %v2837 = vunpack.c.l.b16 %v2761
      %v2838 = vunpack.c.l.b16 %v2773
      %v2839 = vunpack.c.l.b16 %v2785
      %v2840 = vunpack.c.l.b16 %v2797
      %v2841 = vunpack.c.l.b16 %v2809
      %v2842 = vpack.c.b16 %v2827, %v2826
      %v2843 = vpack.c.b16 %v2829, %v2828
      %v2844 = vpack.c.b16 %v2831, %v2830
      %v2845 = vpack.c.b16 %v2833, %v2832
      %v2846 = vpack.c.b16 %v2835, %v2834
      %v2847 = vpack.c.b16 %v2837, %v2836
      %v2848 = vpack.c.b16 %v2839, %v2838
      %v2849 = vpack.c.b16 %v2841, %v2840
      %v2858 = vmul.bf16 %v2582, %v2842
      %v2859 = vmul.bf16 %v2586, %v2843
      %v2860 = vmul.bf16 %v2590, %v2844
      %v2861 = vmul.bf16 %v2594, %v2845
      %v2862 = vmul.bf16 %v2598, %v2846
      %v2863 = vmul.bf16 %v2602, %v2847
      %v2864 = vmul.bf16 %v2606, %v2848
      %v2865 = vmul.bf16 %v2617, %v2849
      %vm2866 = vcmask 1045504
      %v2867 = vrot.slane %v848, 2
      %v2868 = vrot.slane %v849, 2
      %v2869 = vsel %vm2866, %v2867, %v2868
      %v2870 = vrot.slane %v850, 2
      %v2871 = vsel %vm2866, %v2868, %v2870
      %v2872 = vrot.slane %v851, 2
      %v2873 = vsel %vm2866, %v2870, %v2872
      %v2874 = vrot.slane %v852, 2
      %v2875 = vsel %vm2866, %v2872, %v2874
      %v2876 = vrot.slane %v853, 2
      %v2877 = vsel %vm2866, %v2874, %v2876
      %v2878 = vrot.slane %v854, 2
      %v2879 = vsel %vm2866, %v2876, %v2878
      %v2880 = vrot.slane %v855, 2
      %v2881 = vsel %vm2866, %v2878, %v2880
      %vm2889 = vcmask 1045504
      %v2891 = vsel %vm2889, %v2880, 0
      %2894 = vset.pattern.permute.xlu0 0
      %2895 = vperm.xlu0 %2894, %v537
      %v2896 = vpop.permute.xlu0 %2895
      %v2899 = vunpack.c.l.s4 839922192
      %v2900 = vunpack.c.0.s8 %v2899
      %v2901 = vlaneseq
      %v2902 = vshrl.u32 %v2901, 7
      %v2903 = vsub.s32 %v2900, %v2902
      %v2904 = vrot.slane %v2896, %v2903
      %2906 = vset.pattern.permute.xlu0 0
      %2907 = vperm.xlu0 %2906, %v538
      %v2908 = vpop.permute.xlu0 %2907
      %v2911 = vunpack.c.l.s4 839922192
      %v2912 = vunpack.c.0.s8 %v2911
      %v2913 = vlaneseq
      %v2914 = vshrl.u32 %v2913, 7
      %v2915 = vsub.s32 %v2912, %v2914
      %v2916 = vrot.slane %v2908, %v2915
      %2918 = vset.pattern.permute.xlu0 0
      %2919 = vperm.xlu0 %2918, %v539
      %v2920 = vpop.permute.xlu0 %2919
      %v2923 = vunpack.c.l.s4 839922192
      %v2924 = vunpack.c.0.s8 %v2923
      %v2925 = vlaneseq
      %v2926 = vshrl.u32 %v2925, 7
      %v2927 = vsub.s32 %v2924, %v2926
      %v2928 = vrot.slane %v2920, %v2927
      %2930 = vset.pattern.permute.xlu0 0
      %2931 = vperm.xlu0 %2930, %v540
      %v2932 = vpop.permute.xlu0 %2931
      %v2935 = vunpack.c.l.s4 839922192
      %v2936 = vunpack.c.0.s8 %v2935
      %v2937 = vlaneseq
      %v2938 = vshrl.u32 %v2937, 7
      %v2939 = vsub.s32 %v2936, %v2938
      %v2940 = vrot.slane %v2932, %v2939
      %2942 = vset.pattern.permute.xlu0 0
      %2943 = vperm.xlu0 %2942, %v541
      %v2944 = vpop.permute.xlu0 %2943
      %v2947 = vunpack.c.l.s4 839922192
      %v2948 = vunpack.c.0.s8 %v2947
      %v2949 = vlaneseq
      %v2950 = vshrl.u32 %v2949, 7
      %v2951 = vsub.s32 %v2948, %v2950
      %v2952 = vrot.slane %v2944, %v2951
      %2954 = vset.pattern.permute.xlu0 0
      %2955 = vperm.xlu0 %2954, %v542
      %v2956 = vpop.permute.xlu0 %2955
      %v2959 = vunpack.c.l.s4 839922192
      %v2960 = vunpack.c.0.s8 %v2959
      %v2961 = vlaneseq
      %v2962 = vshrl.u32 %v2961, 7
      %v2963 = vsub.s32 %v2960, %v2962
      %v2964 = vrot.slane %v2956, %v2963
      %2966 = vset.pattern.permute.xlu0 0
      %2967 = vperm.xlu0 %2966, %v543
      %v2968 = vpop.permute.xlu0 %2967
      %v2971 = vunpack.c.l.s4 839922192
      %v2972 = vunpack.c.0.s8 %v2971
      %v2973 = vlaneseq
      %v2974 = vshrl.u32 %v2973, 7
      %v2975 = vsub.s32 %v2972, %v2974
      %v2976 = vrot.slane %v2968, %v2975
      %2978 = vset.pattern.permute.xlu0 0
      %2979 = vperm.xlu0 %2978, %v544
      %v2980 = vpop.permute.xlu0 %2979
      %v2983 = vunpack.c.l.s4 839922192
      %v2984 = vunpack.c.0.s8 %v2983
      %v2985 = vlaneseq
      %v2986 = vshrl.u32 %v2985, 7
      %v2987 = vsub.s32 %v2984, %v2986
      %v2988 = vrot.slane %v2980, %v2987
      %2990 = vset.pattern.permute.xlu0 0
      %2991 = vperm.xlu0 %2990, %v545
      %v2992 = vpop.permute.xlu0 %2991
      %v2995 = vunpack.c.l.s4 839922192
      %v2996 = vunpack.c.0.s8 %v2995
      %v2997 = vlaneseq
      %v2998 = vshrl.u32 %v2997, 7
      %v2999 = vsub.s32 %v2996, %v2998
      %v3000 = vrot.slane %v2992, %v2999
      %3002 = vset.pattern.permute.xlu0 0
      %3003 = vperm.xlu0 %3002, %v546
      %v3004 = vpop.permute.xlu0 %3003
      %v3007 = vunpack.c.l.s4 839922192
      %v3008 = vunpack.c.0.s8 %v3007
      %v3009 = vlaneseq
      %v3010 = vshrl.u32 %v3009, 7
      %v3011 = vsub.s32 %v3008, %v3010
      %v3012 = vrot.slane %v3004, %v3011
      %3014 = vset.pattern.permute.xlu0 0
      %3015 = vperm.xlu0 %3014, %v547
      %v3016 = vpop.permute.xlu0 %3015
      %v3019 = vunpack.c.l.s4 839922192
      %v3020 = vunpack.c.0.s8 %v3019
      %v3021 = vlaneseq
      %v3022 = vshrl.u32 %v3021, 7
      %v3023 = vsub.s32 %v3020, %v3022
      %v3024 = vrot.slane %v3016, %v3023
      %3026 = vset.pattern.permute.xlu0 0
      %3027 = vperm.xlu0 %3026, %v548
      %v3028 = vpop.permute.xlu0 %3027
      %v3031 = vunpack.c.l.s4 839922192
      %v3032 = vunpack.c.0.s8 %v3031
      %v3033 = vlaneseq
      %v3034 = vshrl.u32 %v3033, 7
      %v3035 = vsub.s32 %v3032, %v3034
      %v3036 = vrot.slane %v3028, %v3035
      %3038 = vset.pattern.permute.xlu0 0
      %3039 = vperm.xlu0 %3038, %v549
      %v3040 = vpop.permute.xlu0 %3039
      %v3043 = vunpack.c.l.s4 839922192
      %v3044 = vunpack.c.0.s8 %v3043
      %v3045 = vlaneseq
      %v3046 = vshrl.u32 %v3045, 7
      %v3047 = vsub.s32 %v3044, %v3046
      %v3048 = vrot.slane %v3040, %v3047
      %3050 = vset.pattern.permute.xlu0 0
      %3051 = vperm.xlu0 %3050, %v550
      %v3052 = vpop.permute.xlu0 %3051
      %v3055 = vunpack.c.l.s4 839922192
      %v3056 = vunpack.c.0.s8 %v3055
      %v3057 = vlaneseq
      %v3058 = vshrl.u32 %v3057, 7
      %v3059 = vsub.s32 %v3056, %v3058
      %v3060 = vrot.slane %v3052, %v3059
      %3062 = vset.pattern.permute.xlu0 0
      %3063 = vperm.xlu0 %3062, %v551
      %v3064 = vpop.permute.xlu0 %3063
      %v3067 = vunpack.c.l.s4 839922192
      %v3068 = vunpack.c.0.s8 %v3067
      %v3069 = vlaneseq
      %v3070 = vshrl.u32 %v3069, 7
      %v3071 = vsub.s32 %v3068, %v3070
      %v3072 = vrot.slane %v3064, %v3071
      %3074 = vset.pattern.permute.xlu0 0
      %3075 = vperm.xlu0 %3074, %v552
      %v3076 = vpop.permute.xlu0 %3075
      %v3079 = vunpack.c.l.s4 839922192
      %v3080 = vunpack.c.0.s8 %v3079
      %v3081 = vlaneseq
      %v3082 = vshrl.u32 %v3081, 7
      %v3083 = vsub.s32 %v3080, %v3082
      %v3084 = vrot.slane %v3076, %v3083
      %v3101 = vunpack.c.l.b16 %v2904
      %v3102 = vunpack.c.l.b16 %v2916
      %v3103 = vunpack.c.l.b16 %v2928
      %v3104 = vunpack.c.l.b16 %v2940
      %v3105 = vunpack.c.l.b16 %v2952
      %v3106 = vunpack.c.l.b16 %v2964
      %v3107 = vunpack.c.l.b16 %v2976
      %v3108 = vunpack.c.l.b16 %v2988
      %v3109 = vunpack.c.l.b16 %v3000
      %v3110 = vunpack.c.l.b16 %v3012
      %v3111 = vunpack.c.l.b16 %v3024
      %v3112 = vunpack.c.l.b16 %v3036
      %v3113 = vunpack.c.l.b16 %v3048
      %v3114 = vunpack.c.l.b16 %v3060
      %v3115 = vunpack.c.l.b16 %v3072
      %v3116 = vunpack.c.l.b16 %v3084
      %v3117 = vpack.c.b16 %v3102, %v3101
      %v3118 = vpack.c.b16 %v3104, %v3103
      %v3119 = vpack.c.b16 %v3106, %v3105
      %v3120 = vpack.c.b16 %v3108, %v3107
      %v3121 = vpack.c.b16 %v3110, %v3109
      %v3122 = vpack.c.b16 %v3112, %v3111
      %v3123 = vpack.c.b16 %v3114, %v3113
      %v3124 = vpack.c.b16 %v3116, %v3115
      %v3133 = vmul.bf16 %v2869, %v3117
      %v3134 = vmul.bf16 %v2871, %v3118
      %v3135 = vmul.bf16 %v2873, %v3119
      %v3136 = vmul.bf16 %v2875, %v3120
      %v3137 = vmul.bf16 %v2877, %v3121
      %v3138 = vmul.bf16 %v2879, %v3122
      %v3139 = vmul.bf16 %v2881, %v3123
      %v3140 = vmul.bf16 %v2891, %v3124
      %vm3141 = vsmask.f32 5376
      %v3142 = vrot.slane %v858, 2
      %v3143 = vrot.slane %v861, 3
      %v3144 = vor.u32 %v3142, %v3143
      %v3145 = vrot.slane %v866, 2
      %v3146 = vrot.slane %v869, 3
      %v3147 = vor.u32 %v3145, %v3146
      %v3148 = vsel %vm3141, %v3144, %v3147
      %v3149 = vrot.slane %v875, 2
      %v3150 = vrot.slane %v878, 3
      %v3151 = vor.u32 %v3149, %v3150
      %v3152 = vsel %vm3141, %v3147, %v3151
      %v3153 = vrot.slane %v884, 2
      %v3154 = vrot.slane %v887, 3
      %v3155 = vor.u32 %v3153, %v3154
      %v3156 = vsel %vm3141, %v3151, %v3155
      %v3157 = vrot.slane %v893, 2
      %v3158 = vrot.slane %v896, 3
      %v3159 = vor.u32 %v3157, %v3158
      %v3160 = vsel %vm3141, %v3155, %v3159
      %v3161 = vrot.slane %v902, 2
      %v3162 = vrot.slane %v905, 3
      %v3163 = vor.u32 %v3161, %v3162
      %v3164 = vsel %vm3141, %v3159, %v3163
      %v3165 = vrot.slane %v911, 2
      %v3166 = vrot.slane %v914, 3
      %v3167 = vor.u32 %v3165, %v3166
      %v3168 = vsel %vm3141, %v3163, %v3167
      %v3169 = vrot.slane %v920, 2
      %v3170 = vrot.slane %v923, 3
      %v3171 = vor.u32 %v3169, %v3170
      %v3172 = vsel %vm3141, %v3167, %v3171
      %vm3181 = vmand %vm2866, %vm3141
      %v3182 = vsel %vm3181, %v3171, 0
      %3184 = vset.pattern.permute.xlu0 0
      %3185 = vperm.xlu0 %3184, %v554
      %v3186 = vpop.permute.xlu0 %3185
      %v3189 = vunpack.c.l.s4 839922192
      %v3190 = vunpack.c.0.s8 %v3189
      %v3191 = vlaneseq
      %v3192 = vshrl.u32 %v3191, 7
      %v3193 = vsub.s32 %v3190, %v3192
      %v3194 = vrot.slane %v3186, %v3193
      %3196 = vset.pattern.permute.xlu0 0
      %3197 = vperm.xlu0 %3196, %v555
      %v3198 = vpop.permute.xlu0 %3197
      %v3201 = vunpack.c.l.s4 839922192
      %v3202 = vunpack.c.0.s8 %v3201
      %v3203 = vlaneseq
      %v3204 = vshrl.u32 %v3203, 7
      %v3205 = vsub.s32 %v3202, %v3204
      %v3206 = vrot.slane %v3198, %v3205
      %3208 = vset.pattern.permute.xlu0 0
      %3209 = vperm.xlu0 %3208, %v556
      %v3210 = vpop.permute.xlu0 %3209
      %v3213 = vunpack.c.l.s4 839922192
      %v3214 = vunpack.c.0.s8 %v3213
      %v3215 = vlaneseq
      %v3216 = vshrl.u32 %v3215, 7
      %v3217 = vsub.s32 %v3214, %v3216
      %v3218 = vrot.slane %v3210, %v3217
      %3220 = vset.pattern.permute.xlu0 0
      %3221 = vperm.xlu0 %3220, %v557
      %v3222 = vpop.permute.xlu0 %3221
      %v3225 = vunpack.c.l.s4 839922192
      %v3226 = vunpack.c.0.s8 %v3225
      %v3227 = vlaneseq
      %v3228 = vshrl.u32 %v3227, 7
      %v3229 = vsub.s32 %v3226, %v3228
      %v3230 = vrot.slane %v3222, %v3229
      %3232 = vset.pattern.permute.xlu0 0
      %3233 = vperm.xlu0 %3232, %v558
      %v3234 = vpop.permute.xlu0 %3233
      %v3237 = vunpack.c.l.s4 839922192
      %v3238 = vunpack.c.0.s8 %v3237
      %v3239 = vlaneseq
      %v3240 = vshrl.u32 %v3239, 7
      %v3241 = vsub.s32 %v3238, %v3240
      %v3242 = vrot.slane %v3234, %v3241
      %3244 = vset.pattern.permute.xlu0 0
      %3245 = vperm.xlu0 %3244, %v559
      %v3246 = vpop.permute.xlu0 %3245
      %v3249 = vunpack.c.l.s4 839922192
      %v3250 = vunpack.c.0.s8 %v3249
      %v3251 = vlaneseq
      %v3252 = vshrl.u32 %v3251, 7
      %v3253 = vsub.s32 %v3250, %v3252
      %v3254 = vrot.slane %v3246, %v3253
      %3256 = vset.pattern.permute.xlu0 0
      %3257 = vperm.xlu0 %3256, %v560
      %v3258 = vpop.permute.xlu0 %3257
      %v3261 = vunpack.c.l.s4 839922192
      %v3262 = vunpack.c.0.s8 %v3261
      %v3263 = vlaneseq
      %v3264 = vshrl.u32 %v3263, 7
      %v3265 = vsub.s32 %v3262, %v3264
      %v3266 = vrot.slane %v3258, %v3265
      %3268 = vset.pattern.permute.xlu0 0
      %3269 = vperm.xlu0 %3268, %v561
      %v3270 = vpop.permute.xlu0 %3269
      %v3273 = vunpack.c.l.s4 839922192
      %v3274 = vunpack.c.0.s8 %v3273
      %v3275 = vlaneseq
      %v3276 = vshrl.u32 %v3275, 7
      %v3277 = vsub.s32 %v3274, %v3276
      %v3278 = vrot.slane %v3270, %v3277
      %3280 = vset.pattern.permute.xlu0 0
      %3281 = vperm.xlu0 %3280, %v562
      %v3282 = vpop.permute.xlu0 %3281
      %v3285 = vunpack.c.l.s4 839922192
      %v3286 = vunpack.c.0.s8 %v3285
      %v3287 = vlaneseq
      %v3288 = vshrl.u32 %v3287, 7
      %v3289 = vsub.s32 %v3286, %v3288
      %v3290 = vrot.slane %v3282, %v3289
      %3292 = vset.pattern.permute.xlu0 0
      %3293 = vperm.xlu0 %3292, %v563
      %v3294 = vpop.permute.xlu0 %3293
      %v3297 = vunpack.c.l.s4 839922192
      %v3298 = vunpack.c.0.s8 %v3297
      %v3299 = vlaneseq
      %v3300 = vshrl.u32 %v3299, 7
      %v3301 = vsub.s32 %v3298, %v3300
      %v3302 = vrot.slane %v3294, %v3301
      %3304 = vset.pattern.permute.xlu0 0
      %3305 = vperm.xlu0 %3304, %v564
      %v3306 = vpop.permute.xlu0 %3305
      %v3309 = vunpack.c.l.s4 839922192
      %v3310 = vunpack.c.0.s8 %v3309
      %v3311 = vlaneseq
      %v3312 = vshrl.u32 %v3311, 7
      %v3313 = vsub.s32 %v3310, %v3312
      %v3314 = vrot.slane %v3306, %v3313
      %3316 = vset.pattern.permute.xlu0 0
      %3317 = vperm.xlu0 %3316, %v565
      %v3318 = vpop.permute.xlu0 %3317
      %v3321 = vunpack.c.l.s4 839922192
      %v3322 = vunpack.c.0.s8 %v3321
      %v3323 = vlaneseq
      %v3324 = vshrl.u32 %v3323, 7
      %v3325 = vsub.s32 %v3322, %v3324
      %v3326 = vrot.slane %v3318, %v3325
      %3328 = vset.pattern.permute.xlu0 0
      %3329 = vperm.xlu0 %3328, %v566
      %v3330 = vpop.permute.xlu0 %3329
      %v3333 = vunpack.c.l.s4 839922192
      %v3334 = vunpack.c.0.s8 %v3333
      %v3335 = vlaneseq
      %v3336 = vshrl.u32 %v3335, 7
      %v3337 = vsub.s32 %v3334, %v3336
      %v3338 = vrot.slane %v3330, %v3337
      %3340 = vset.pattern.permute.xlu0 0
      %3341 = vperm.xlu0 %3340, %v567
      %v3342 = vpop.permute.xlu0 %3341
      %v3345 = vunpack.c.l.s4 839922192
      %v3346 = vunpack.c.0.s8 %v3345
      %v3347 = vlaneseq
      %v3348 = vshrl.u32 %v3347, 7
      %v3349 = vsub.s32 %v3346, %v3348
      %v3350 = vrot.slane %v3342, %v3349
      %3352 = vset.pattern.permute.xlu0 0
      %3353 = vperm.xlu0 %3352, %v568
      %v3354 = vpop.permute.xlu0 %3353
      %v3357 = vunpack.c.l.s4 839922192
      %v3358 = vunpack.c.0.s8 %v3357
      %v3359 = vlaneseq
      %v3360 = vshrl.u32 %v3359, 7
      %v3361 = vsub.s32 %v3358, %v3360
      %v3362 = vrot.slane %v3354, %v3361
      %3364 = vset.pattern.permute.xlu0 0
      %3365 = vperm.xlu0 %3364, %v569
      %v3366 = vpop.permute.xlu0 %3365
      %v3369 = vunpack.c.l.s4 839922192
      %v3370 = vunpack.c.0.s8 %v3369
      %v3371 = vlaneseq
      %v3372 = vshrl.u32 %v3371, 7
      %v3373 = vsub.s32 %v3370, %v3372
      %v3374 = vrot.slane %v3366, %v3373
      %v3391 = vunpack.c.l.b16 %v3194
      %v3392 = vunpack.c.l.b16 %v3206
      %v3393 = vunpack.c.l.b16 %v3218
      %v3394 = vunpack.c.l.b16 %v3230
      %v3395 = vunpack.c.l.b16 %v3242
      %v3396 = vunpack.c.l.b16 %v3254
      %v3397 = vunpack.c.l.b16 %v3266
      %v3398 = vunpack.c.l.b16 %v3278
      %v3399 = vunpack.c.l.b16 %v3290
      %v3400 = vunpack.c.l.b16 %v3302
      %v3401 = vunpack.c.l.b16 %v3314
      %v3402 = vunpack.c.l.b16 %v3326
      %v3403 = vunpack.c.l.b16 %v3338
      %v3404 = vunpack.c.l.b16 %v3350
      %v3405 = vunpack.c.l.b16 %v3362
      %v3406 = vunpack.c.l.b16 %v3374
      %v3407 = vpack.c.b16 %v3392, %v3391
      %v3408 = vpack.c.b16 %v3394, %v3393
      %v3409 = vpack.c.b16 %v3396, %v3395
      %v3410 = vpack.c.b16 %v3398, %v3397
      %v3411 = vpack.c.b16 %v3400, %v3399
      %v3412 = vpack.c.b16 %v3402, %v3401
      %v3413 = vpack.c.b16 %v3404, %v3403
      %v3414 = vpack.c.b16 %v3406, %v3405
      %v3423 = vmul.bf16 %v3148, %v3407
      %v3424 = vmul.bf16 %v3152, %v3408
      %v3425 = vmul.bf16 %v3156, %v3409
      %v3426 = vmul.bf16 %v3160, %v3410
      %v3427 = vmul.bf16 %v3164, %v3411
      %v3428 = vmul.bf16 %v3168, %v3412
      %v3429 = vmul.bf16 %v3172, %v3413
      %v3430 = vmul.bf16 %v3182, %v3414
      %3439 = vrot.lane.b32.xlu0 %v1463, 32
      %v3440 = vpop.permute.xlu0 %3439
      %3441 = vrot.lane.b32.xlu0 %v1464, 32
      %v3442 = vpop.permute.xlu0 %3441
      %3443 = vrot.lane.b32.xlu0 %v1465, 32
      %v3444 = vpop.permute.xlu0 %3443
      %3445 = vrot.lane.b32.xlu0 %v1466, 32
      %v3446 = vpop.permute.xlu0 %3445
      %3447 = vrot.lane.b32.xlu0 %v1467, 32
      %v3448 = vpop.permute.xlu0 %3447
      %3449 = vrot.lane.b32.xlu0 %v1468, 32
      %v3450 = vpop.permute.xlu0 %3449
      %3451 = vrot.lane.b32.xlu0 %v1469, 32
      %v3452 = vpop.permute.xlu0 %3451
      %3453 = vrot.lane.b32.xlu0 %v1470, 32
      %v3454 = vpop.permute.xlu0 %3453
      %3463 = vrot.lane.b32.xlu0 %v1753, 64
      %v3464 = vpop.permute.xlu0 %3463
      %3465 = vrot.lane.b32.xlu0 %v1754, 64
      %v3466 = vpop.permute.xlu0 %3465
      %3467 = vrot.lane.b32.xlu0 %v1755, 64
      %v3468 = vpop.permute.xlu0 %3467
      %3469 = vrot.lane.b32.xlu0 %v1756, 64
      %v3470 = vpop.permute.xlu0 %3469
      %3471 = vrot.lane.b32.xlu0 %v1757, 64
      %v3472 = vpop.permute.xlu0 %3471
      %3473 = vrot.lane.b32.xlu0 %v1758, 64
      %v3474 = vpop.permute.xlu0 %3473
      %3475 = vrot.lane.b32.xlu0 %v1759, 64
      %v3476 = vpop.permute.xlu0 %3475
      %3477 = vrot.lane.b32.xlu0 %v1760, 64
      %v3478 = vpop.permute.xlu0 %3477
      %3487 = vrot.lane.b32.xlu0 %v2036, 96
      %v3488 = vpop.permute.xlu0 %3487
      %3489 = vrot.lane.b32.xlu0 %v2037, 96
      %v3490 = vpop.permute.xlu0 %3489
      %3491 = vrot.lane.b32.xlu0 %v2038, 96
      %v3492 = vpop.permute.xlu0 %3491
      %3493 = vrot.lane.b32.xlu0 %v2039, 96
      %v3494 = vpop.permute.xlu0 %3493
      %3495 = vrot.lane.b32.xlu0 %v2040, 96
      %v3496 = vpop.permute.xlu0 %3495
      %3497 = vrot.lane.b32.xlu0 %v2041, 96
      %v3498 = vpop.permute.xlu0 %3497
      %3499 = vrot.lane.b32.xlu0 %v2042, 96
      %v3500 = vpop.permute.xlu0 %3499
      %3501 = vrot.lane.b32.xlu0 %v2043, 96
      %v3502 = vpop.permute.xlu0 %3501
      %3511 = vrot.lane.b32.xlu0 %v2567, 32
      %v3512 = vpop.permute.xlu0 %3511
      %3513 = vrot.lane.b32.xlu0 %v2568, 32
      %v3514 = vpop.permute.xlu0 %3513
      %3515 = vrot.lane.b32.xlu0 %v2569, 32
      %v3516 = vpop.permute.xlu0 %3515
      %3517 = vrot.lane.b32.xlu0 %v2570, 32
      %v3518 = vpop.permute.xlu0 %3517
      %3519 = vrot.lane.b32.xlu0 %v2571, 32
      %v3520 = vpop.permute.xlu0 %3519
      %3521 = vrot.lane.b32.xlu0 %v2572, 32
      %v3522 = vpop.permute.xlu0 %3521
      %3523 = vrot.lane.b32.xlu0 %v2573, 32
      %v3524 = vpop.permute.xlu0 %3523
      %3525 = vrot.lane.b32.xlu0 %v2574, 32
      %v3526 = vpop.permute.xlu0 %3525
      %3535 = vrot.lane.b32.xlu0 %v2858, 64
      %v3536 = vpop.permute.xlu0 %3535
      %3537 = vrot.lane.b32.xlu0 %v2859, 64
      %v3538 = vpop.permute.xlu0 %3537
      %3539 = vrot.lane.b32.xlu0 %v2860, 64
      %v3540 = vpop.permute.xlu0 %3539
      %3541 = vrot.lane.b32.xlu0 %v2861, 64
      %v3542 = vpop.permute.xlu0 %3541
      %3543 = vrot.lane.b32.xlu0 %v2862, 64
      %v3544 = vpop.permute.xlu0 %3543
      %3545 = vrot.lane.b32.xlu0 %v2863, 64
      %v3546 = vpop.permute.xlu0 %3545
      %3547 = vrot.lane.b32.xlu0 %v2864, 64
      %v3548 = vpop.permute.xlu0 %3547
      %3549 = vrot.lane.b32.xlu0 %v2865, 64
      %v3550 = vpop.permute.xlu0 %3549
      %3559 = vrot.lane.b32.xlu0 %v3133, 96
      %v3560 = vpop.permute.xlu0 %3559
      %3561 = vrot.lane.b32.xlu0 %v3134, 96
      %v3562 = vpop.permute.xlu0 %3561
      %3563 = vrot.lane.b32.xlu0 %v3135, 96
      %v3564 = vpop.permute.xlu0 %3563
      %3565 = vrot.lane.b32.xlu0 %v3136, 96
      %v3566 = vpop.permute.xlu0 %3565
      %3567 = vrot.lane.b32.xlu0 %v3137, 96
      %v3568 = vpop.permute.xlu0 %3567
      %3569 = vrot.lane.b32.xlu0 %v3138, 96
      %v3570 = vpop.permute.xlu0 %3569
      %3571 = vrot.lane.b32.xlu0 %v3139, 96
      %v3572 = vpop.permute.xlu0 %3571
      %3573 = vrot.lane.b32.xlu0 %v3140, 96
      %v3574 = vpop.permute.xlu0 %3573
      %vm3575 = vcmask 261120
      %v3578 = vsel %vm3575, %v1179, %v3440
      %v3581 = vsel %vm3575, %v1180, %v3442
      %v3584 = vsel %vm3575, %v1181, %v3444
      %v3587 = vsel %vm3575, %v1182, %v3446
      %v3590 = vsel %vm3575, %v1183, %v3448
      %v3593 = vsel %vm3575, %v1184, %v3450
      %v3596 = vsel %vm3575, %v1185, %v3452
      %v3599 = vsel %vm3575, %v1186, %v3454
      %vm3600 = vcmask 523264
      %v3602 = vsel %vm3600, %v3578, %v3464
      %v3604 = vsel %vm3600, %v3581, %v3466
      %v3606 = vsel %vm3600, %v3584, %v3468
      %v3608 = vsel %vm3600, %v3587, %v3470
      %v3610 = vsel %vm3600, %v3590, %v3472
      %v3612 = vsel %vm3600, %v3593, %v3474
      %v3614 = vsel %vm3600, %v3596, %v3476
      %v3616 = vsel %vm3600, %v3599, %v3478
      %vm3617 = vcmask 785408
      %v3619 = vsel %vm3617, %v3602, %v3488
      %v3622 = vsel %vm3617, %v3604, %v3490
      %v3625 = vsel %vm3617, %v3606, %v3492
      %v3628 = vsel %vm3617, %v3608, %v3494
      %v3631 = vsel %vm3617, %v3610, %v3496
      %v3634 = vsel %vm3617, %v3612, %v3498
      %v3637 = vsel %vm3617, %v3614, %v3500
      %v3640 = vsel %vm3617, %v3616, %v3502
      %v3644 = vsel %vm3575, %v2284, %v3512
      %v3647 = vsel %vm3575, %v2285, %v3514
      %v3650 = vsel %vm3575, %v2286, %v3516
      %v3653 = vsel %vm3575, %v2287, %v3518
      %v3656 = vsel %vm3575, %v2288, %v3520
      %v3659 = vsel %vm3575, %v2289, %v3522
      %v3662 = vsel %vm3575, %v2290, %v3524
      %v3665 = vsel %vm3575, %v2291, %v3526
      %v3667 = vsel %vm3600, %v3644, %v3536
      %v3669 = vsel %vm3600, %v3647, %v3538
      %v3671 = vsel %vm3600, %v3650, %v3540
      %v3673 = vsel %vm3600, %v3653, %v3542
      %v3675 = vsel %vm3600, %v3656, %v3544
      %v3677 = vsel %vm3600, %v3659, %v3546
      %v3679 = vsel %vm3600, %v3662, %v3548
      %v3681 = vsel %vm3600, %v3665, %v3550
      %v3683 = vsel %vm3617, %v3667, %v3560
      %v3686 = vsel %vm3617, %v3669, %v3562
      %v3689 = vsel %vm3617, %v3671, %v3564
      %v3692 = vsel %vm3617, %v3673, %v3566
      %v3695 = vsel %vm3617, %v3675, %v3568
      %v3698 = vsel %vm3617, %v3677, %v3570
      %v3701 = vsel %vm3617, %v3679, %v3572
      %v3704 = vsel %vm3617, %v3681, %v3574
      %v3707 = vlaneseq
      %v3708 = vshrl.u32 %v3707, 7
      %v3709 = vsub.s32 0, %v3708
      %v3710 = vrot.slane %v847, %v3709
      %v3748 = vunpack.c.l.b16 %v811
      %v3749 = vunpack.c.l.b16 %v812
      %v3750 = vunpack.c.l.b16 %v813
      %v3751 = vunpack.c.l.b16 %v814
      %v3752 = vunpack.c.l.b16 %v815
      %v3753 = vunpack.c.l.b16 %v816
      %v3754 = vunpack.c.l.b16 %v817
      %v3755 = vunpack.c.l.b16 %v818
      %v3756 = vunpack.c.l.b16 %v819
      %v3757 = vunpack.c.l.b16 %v820
      %v3758 = vunpack.c.l.b16 %v821
      %v3759 = vunpack.c.l.b16 %v822
      %v3760 = vunpack.c.l.b16 %v823
      %v3761 = vunpack.c.l.b16 %v824
      %v3762 = vunpack.c.l.b16 %v825
      %v3763 = vunpack.c.l.b16 %v826
      %v3764 = vunpack.c.l.b16 %v827
      %v3765 = vunpack.c.l.b16 %v828
      %v3766 = vunpack.c.l.b16 %v829
      %v3767 = vunpack.c.l.b16 %v830
      %v3768 = vunpack.c.l.b16 %v831
      %v3769 = vunpack.c.l.b16 %v832
      %v3770 = vunpack.c.l.b16 %v833
      %v3771 = vunpack.c.l.b16 %v834
      %v3772 = vunpack.c.l.b16 %v835
      %v3773 = vunpack.c.l.b16 %v836
      %v3774 = vunpack.c.l.b16 %v837
      %v3775 = vunpack.c.l.b16 %v838
      %v3776 = vunpack.c.l.b16 %v839
      %v3777 = vunpack.c.l.b16 %v840
      %v3778 = vunpack.c.l.b16 %v841
      %v3779 = vunpack.c.l.b16 %v842
      %v3780 = vunpack.c.l.b16 %v843
      %v3781 = vunpack.c.l.b16 %v844
      %v3782 = vunpack.c.l.b16 %v845
      %v3783 = vunpack.c.l.b16 %v846
      %v3784 = vpack.c.b16 %v3749, %v3748
      %v3785 = vpack.c.b16 %v3751, %v3750
      %v3786 = vpack.c.b16 %v3753, %v3752
      %v3787 = vpack.c.b16 %v3755, %v3754
      %v3788 = vpack.c.b16 %v3757, %v3756
      %v3789 = vpack.c.b16 %v3759, %v3758
      %v3790 = vpack.c.b16 %v3761, %v3760
      %v3791 = vpack.c.b16 %v3763, %v3762
      %v3792 = vpack.c.b16 %v3765, %v3764
      %v3793 = vpack.c.b16 %v3767, %v3766
      %v3794 = vpack.c.b16 %v3769, %v3768
      %v3795 = vpack.c.b16 %v3771, %v3770
      %v3796 = vpack.c.b16 %v3773, %v3772
      %v3797 = vpack.c.b16 %v3775, %v3774
      %v3798 = vpack.c.b16 %v3777, %v3776
      %v3799 = vpack.c.b16 %v3779, %v3778
      %v3800 = vpack.c.b16 %v3781, %v3780
      %v3801 = vpack.c.b16 %v3783, %v3782
      %v3821 = vsel %vm3575, %v3423, 0
      %v3824 = vsel %vm3575, %v3424, 0
      %v3827 = vsel %vm3575, %v3425, 0
      %v3830 = vsel %vm3575, %v3426, 0
      %v3833 = vsel %vm3575, %v3427, 0
      %v3836 = vsel %vm3575, %v3428, 0
      %v3839 = vsel %vm3575, %v3429, 0
      %v3842 = vsel %vm3575, %v3430, 0
      %3844 = vmatprep.subr.bf16.mxu0 0
      %3845 = vmatpush1.bf16.msra.mxu0 %v3791
      %3846 = vmatprep.subr.bf16.mxu0 0
      %3847 = vmatpush1.bf16.msra.mxu0 %v3790
      %3848 = vmatprep.subr.bf16.mxu0 0
      %3849 = vmatpush1.bf16.msra.mxu0 %v3789
      %3850 = vmatprep.subr.bf16.mxu0 0
      %3851 = vmatpush1.bf16.msra.mxu0 %v3788
      %3852 = vmatprep.subr.bf16.mxu0 0
      %3853 = vmatpush1.bf16.msra.mxu0 %v3787
      %3854 = vmatprep.subr.bf16.mxu0 0
      %3855 = vmatpush1.bf16.msra.mxu0 %v3786
      %3856 = vmatprep.subr.bf16.mxu0 0
      %3857 = vmatpush1.bf16.msra.mxu0 %v3785
      %3858 = vmatprep.subr.bf16.mxu0 0
      %3859 = vmatpush1.bf16.msra.mxu0 %v3784
      %3860 = vmatprep.subr.bf16.mxu0 0
      %3861 = vmatpush2.bf16.msra.mxu0 %v3799
      %3862 = vmatprep.subr.bf16.mxu0 0
      %3863 = vmatpush2.bf16.msra.mxu0 %v3798
      %3864 = vmatprep.subr.bf16.mxu0 0
      %3865 = vmatpush2.bf16.msra.mxu0 %v3797
      %3866 = vmatprep.subr.bf16.mxu0 0
      %3867 = vmatpush2.bf16.msra.mxu0 %v3796
      %3868 = vmatprep.subr.bf16.mxu0 0
      %3869 = vmatpush2.bf16.msra.mxu0 %v3795
      %3870 = vmatprep.subr.bf16.mxu0 0
      %3871 = vmatpush2.bf16.msra.mxu0 %v3794
      %3872 = vmatprep.subr.bf16.mxu0 0
      %3873 = vmatpush2.bf16.msra.mxu0 %v3793
      %3874 = vmatprep.subr.bf16.mxu0 0
      %3875 = vmatpush2.bf16.msra.mxu0 %v3792
      %3876 = vmatprep.mubr.bf16.mxu0 %v3683
      %3877 = vmatmul.mubr.bf16.gmra.mxu0 %v3619
      %v3878 = vpop.f32.mrf.mxu0
      %v3879 = vadd.f32 %v3710, %v3878
      %v3880 = vpop.f32.mrf.mxu0
      %v3881 = vpop.f32.mrf.mxu0
      %v3882 = vadd.f32 %v3710, %v3881
      %v3883 = vpop.f32.mrf.mxu0
      %3884 = vmatprep.mubr.bf16.mxu0 %v3686
      %3885 = vmatmul.mubr.bf16.gmra.mxu0 %v3622
      %v3886 = vpop.f32.mrf.mxu0
      %v3887 = vadd.f32 %v3710, %v3886
      %v3888 = vpop.f32.mrf.mxu0
      %v3889 = vpop.f32.mrf.mxu0
      %v3890 = vadd.f32 %v3710, %v3889
      %v3891 = vpop.f32.mrf.mxu0
      %3892 = vmatprep.mubr.bf16.mxu0 %v3689
      %3893 = vmatmul.mubr.bf16.gmra.mxu0 %v3625
      %v3894 = vpop.f32.mrf.mxu0
      %v3895 = vadd.f32 %v3710, %v3894
      %v3896 = vpop.f32.mrf.mxu0
      %v3897 = vpop.f32.mrf.mxu0
      %v3898 = vadd.f32 %v3710, %v3897
      %v3899 = vpop.f32.mrf.mxu0
      %3900 = vmatprep.mubr.bf16.mxu0 %v3692
      %3901 = vmatmul.mubr.bf16.gmra.mxu0 %v3628
      %v3902 = vpop.f32.mrf.mxu0
      %v3903 = vadd.f32 %v3710, %v3902
      %v3904 = vpop.f32.mrf.mxu0
      %v3905 = vpop.f32.mrf.mxu0
      %v3906 = vadd.f32 %v3710, %v3905
      %v3907 = vpop.f32.mrf.mxu0
      %3908 = vmatprep.mubr.bf16.mxu0 %v3695
      %3909 = vmatmul.mubr.bf16.gmra.mxu0 %v3631
      %v3910 = vpop.f32.mrf.mxu0
      %v3911 = vadd.f32 %v3710, %v3910
      %v3912 = vpop.f32.mrf.mxu0
      %v3913 = vpop.f32.mrf.mxu0
      %v3914 = vadd.f32 %v3710, %v3913
      %v3915 = vpop.f32.mrf.mxu0
      %3916 = vmatprep.mubr.bf16.mxu0 %v3698
      %3917 = vmatmul.mubr.bf16.gmra.mxu0 %v3634
      %v3918 = vpop.f32.mrf.mxu0
      %v3919 = vadd.f32 %v3710, %v3918
      %v3920 = vpop.f32.mrf.mxu0
      %v3921 = vpop.f32.mrf.mxu0
      %v3922 = vadd.f32 %v3710, %v3921
      %v3923 = vpop.f32.mrf.mxu0
      %3924 = vmatprep.mubr.bf16.mxu0 %v3701
      %3925 = vmatmul.mubr.bf16.gmra.mxu0 %v3637
      %v3926 = vpop.f32.mrf.mxu0
      %v3927 = vadd.f32 %v3710, %v3926
      %v3928 = vpop.f32.mrf.mxu0
      %v3929 = vpop.f32.mrf.mxu0
      %v3930 = vadd.f32 %v3710, %v3929
      %v3931 = vpop.f32.mrf.mxu0
      %3932 = vmatprep.mubr.bf16.mxu0 %v3704
      %3933 = vmatmul.mubr.bf16.gmra.mxu0 %v3640
      %v3934 = vpop.f32.mrf.mxu0
      %v3935 = vadd.f32 %v3710, %v3934
      %v3936 = vpop.f32.mrf.mxu0
      %v3937 = vpop.f32.mrf.mxu0
      %v3938 = vadd.f32 %v3710, %v3937
      %v3939 = vpop.f32.mrf.mxu0
      %3940 = vdwg.mxu0
      %3941 = vmatprep.subr.bf16.mxu0 0
      %3942 = vmatpush1.bf16.msra.mxu0 0
      %3943 = vmatprep.subr.bf16.mxu0 0
      %3944 = vmatpush1.bf16.msra.mxu0 0
      %3945 = vmatprep.subr.bf16.mxu0 0
      %3946 = vmatpush1.bf16.msra.mxu0 0
      %3947 = vmatprep.subr.bf16.mxu0 0
      %3948 = vmatpush1.bf16.msra.mxu0 0
      %3949 = vmatprep.subr.bf16.mxu0 0
      %3950 = vmatpush1.bf16.msra.mxu0 0
      %3951 = vmatprep.subr.bf16.mxu0 0
      %3952 = vmatpush1.bf16.msra.mxu0 0
      %3953 = vmatprep.subr.bf16.mxu0 0
      %3954 = vmatpush1.bf16.msra.mxu0 %v3801
      %3955 = vmatprep.subr.bf16.mxu0 0
      %3956 = vmatpush1.bf16.msra.mxu0 %v3800
      %3957 = vmatprep.subr.bf16.mxu0 0
      %3958 = vmatpush2.bf16.msra.mxu0 0
      %3959 = vmatprep.subr.bf16.mxu0 0
      %3960 = vmatpush2.bf16.msra.mxu0 0
      %3961 = vmatprep.subr.bf16.mxu0 0
      %3962 = vmatpush2.bf16.msra.mxu0 0
      %3963 = vmatprep.subr.bf16.mxu0 0
      %3964 = vmatpush2.bf16.msra.mxu0 0
      %3965 = vmatprep.subr.bf16.mxu0 0
      %3966 = vmatpush2.bf16.msra.mxu0 0
      %3967 = vmatprep.subr.bf16.mxu0 0
      %3968 = vmatpush2.bf16.msra.mxu0 0
      %3969 = vmatprep.subr.bf16.mxu0 0
      %3970 = vmatpush2.bf16.msra.mxu0 0
      %3971 = vmatprep.subr.bf16.mxu0 0
      %3972 = vmatpush2.bf16.msra.mxu0 0
      %3973 = vmatprep.mubr.bf16.mxu0 0
      %3974 = vmatmul.mubr.bf16.gmra.mxu0 %v3821
      %v3975 = vpop.f32.mrf.mxu0
      %v3976 = vadd.f32 %v3879, %v3975
      %v3977 = vpop.f32.mrf.mxu0
      %v3978 = vpop.f32.mrf.mxu0
      %v3979 = vadd.f32 %v3882, %v3978
      %v3980 = vpop.f32.mrf.mxu0
      %3981 = vmatprep.mubr.bf16.mxu0 0
      %3982 = vmatmul.mubr.bf16.gmra.mxu0 %v3824
      %v3983 = vpop.f32.mrf.mxu0
      %v3984 = vadd.f32 %v3887, %v3983
      %v3985 = vpop.f32.mrf.mxu0
      %v3986 = vpop.f32.mrf.mxu0
      %v3987 = vadd.f32 %v3890, %v3986
      %v3988 = vpop.f32.mrf.mxu0
      %3989 = vmatprep.mubr.bf16.mxu0 0
      %3990 = vmatmul.mubr.bf16.gmra.mxu0 %v3827
      %v3991 = vpop.f32.mrf.mxu0
      %v3992 = vadd.f32 %v3895, %v3991
      %v3993 = vpop.f32.mrf.mxu0
      %v3994 = vpop.f32.mrf.mxu0
      %v3995 = vadd.f32 %v3898, %v3994
      %v3996 = vpop.f32.mrf.mxu0
      %3997 = vmatprep.mubr.bf16.mxu0 0
      %3998 = vmatmul.mubr.bf16.gmra.mxu0 %v3830
      %v3999 = vpop.f32.mrf.mxu0
      %v4000 = vadd.f32 %v3903, %v3999
      %v4001 = vpop.f32.mrf.mxu0
      %v4002 = vpop.f32.mrf.mxu0
      %v4003 = vadd.f32 %v3906, %v4002
      %v4004 = vpop.f32.mrf.mxu0
      %4005 = vmatprep.mubr.bf16.mxu0 0
      %4006 = vmatmul.mubr.bf16.gmra.mxu0 %v3833
      %v4007 = vpop.f32.mrf.mxu0
      %v4008 = vadd.f32 %v3911, %v4007
      %v4009 = vpop.f32.mrf.mxu0
      %v4010 = vpop.f32.mrf.mxu0
      %v4011 = vadd.f32 %v3914, %v4010
      %v4012 = vpop.f32.mrf.mxu0
      %4013 = vmatprep.mubr.bf16.mxu0 0
      %4014 = vmatmul.mubr.bf16.gmra.mxu0 %v3836
      %v4015 = vpop.f32.mrf.mxu0
      %v4016 = vadd.f32 %v3919, %v4015
      %v4017 = vpop.f32.mrf.mxu0
      %v4018 = vpop.f32.mrf.mxu0
      %v4019 = vadd.f32 %v3922, %v4018
      %v4020 = vpop.f32.mrf.mxu0
      %4021 = vmatprep.mubr.bf16.mxu0 0
      %4022 = vmatmul.mubr.bf16.gmra.mxu0 %v3839
      %v4023 = vpop.f32.mrf.mxu0
      %v4024 = vadd.f32 %v3927, %v4023
      %v4025 = vpop.f32.mrf.mxu0
      %v4026 = vpop.f32.mrf.mxu0
      %v4027 = vadd.f32 %v3930, %v4026
      %v4028 = vpop.f32.mrf.mxu0
      %4029 = vmatprep.mubr.bf16.mxu0 0
      %4030 = vmatmul.mubr.bf16.gmra.mxu0 %v3842
      %v4031 = vpop.f32.mrf.mxu0
      %v4032 = vadd.f32 %v3935, %v4031
      %v4033 = vpop.f32.mrf.mxu0
      %v4034 = vpop.f32.mrf.mxu0
      %v4035 = vadd.f32 %v3938, %v4034
      %v4036 = vpop.f32.mrf.mxu0
      %4037 = vdwg.mxu0
      %v4038 = vmax.f32 %v3976, 0.0
      %v4039 = vmax.f32 %v3979, 0.0
      %v4040 = vmax.f32 %v3984, 0.0
      %v4041 = vmax.f32 %v3987, 0.0
      %v4042 = vmax.f32 %v3992, 0.0
      %v4043 = vmax.f32 %v3995, 0.0
      %v4044 = vmax.f32 %v4000, 0.0
      %v4045 = vmax.f32 %v4003, 0.0
      %v4046 = vmax.f32 %v4008, 0.0
      %v4047 = vmax.f32 %v4011, 0.0
      %v4048 = vmax.f32 %v4016, 0.0
      %v4049 = vmax.f32 %v4019, 0.0
      %v4050 = vmax.f32 %v4024, 0.0
      %v4051 = vmax.f32 %v4027, 0.0
      %v4052 = vmax.f32 %v4032, 0.0
      %v4053 = vmax.f32 %v4035, 0.0
      %v4054 = vld [vmem:[%s6] sm:$0xf]
      %v4055 = vld [vmem:[%s6 + $0x4] sm:$0xf]
      %v4056 = vld [vmem:[%s6 + $0x8] sm:$0xf]
      %v4057 = vld [vmem:[%s6 + $0xc] sm:$0xf]
      %v4058 = vld [vmem:[%s6 + $0x10] sm:$0xf]
      %v4059 = vld [vmem:[%s6 + $0x14] sm:$0xf]
      %v4060 = vld [vmem:[%s6 + $0x18] sm:$0xf]
      %v4061 = vld [vmem:[%s6 + $0x1c] sm:$0xf]
      %v4062 = vld [vmem:[%s6 + $0x20] sm:$0xf]
      %v4063 = vld [vmem:[%s6 + $0x24] sm:$0xf]
      %v4064 = vld [vmem:[%s6 + $0x28] sm:$0xf]
      %v4065 = vld [vmem:[%s6 + $0x2c] sm:$0xf]
      %v4066 = vld [vmem:[%s6 + $0x30] sm:$0xf]
      %v4067 = vld [vmem:[%s6 + $0x34] sm:$0xf]
      %v4068 = vld [vmem:[%s6 + $0x38] sm:$0xf]
      %v4069 = vld [vmem:[%s6 + $0x3c] sm:$0xf]
      %v4070 = vld [vmem:[%s6 + $0x40] sm:$0xf]
      %v4071 = vld [vmem:[%s6 + $0x44] sm:$0xf]
      %v4072 = vld [vmem:[%s6 + $0x48] sm:$0xf]
      %v4073 = vld [vmem:[%s6 + $0x4c] sm:$0xf]
      %v4074 = vld [vmem:[%s6 + $0x50] sm:$0xf]
      %v4075 = vld [vmem:[%s6 + $0x54] sm:$0xf]
      %v4076 = vld [vmem:[%s6 + $0x58] sm:$0xf]
      %v4077 = vld [vmem:[%s6 + $0x5c] sm:$0xf]
      %v4078 = vld [vmem:[%s6 + $0x60] sm:$0xf]
      %v4079 = vld [vmem:[%s6 + $0x64] sm:$0xf]
      %v4080 = vld [vmem:[%s6 + $0x68] sm:$0xf]
      %v4081 = vld [vmem:[%s6 + $0x6c] sm:$0xf]
      %v4082 = vld [vmem:[%s6 + $0x70] sm:$0xf]
      %v4083 = vld [vmem:[%s6 + $0x74] sm:$0xf]
      %v4084 = vld [vmem:[%s6 + $0x78] sm:$0xf]
      %v4085 = vld [vmem:[%s6 + $0x7c] sm:$0xf]
      %v4086 = vld [vmem:[%s6 + $0x80] sm:$0xf]
      %v4087 = vld [vmem:[%s6 + $0x84] sm:$0xf]
      %v4088 = vld [vmem:[%s6 + $0x88] sm:$0xf]
      %v4089 = vld [vmem:[%s6 + $0x8c] sm:$0xf]
      %v4090 = vld [vmem:[%s6 + $0x90] sm:$0xf]
      %v4091 = vld [vmem:[%s6 + $0x94] sm:$0xf]
      %v4092 = vld [vmem:[%s6 + $0x98] sm:$0xf]
      %v4093 = vld [vmem:[%s6 + $0x9c] sm:$0xf]
      %v4094 = vld [vmem:[%s6 + $0xa0] sm:$0xf]
      %v4095 = vld [vmem:[%s6 + $0xa4] sm:$0xf]
      %v4096 = vld [vmem:[%s6 + $0xa8] sm:$0xf]
      %v4097 = vld [vmem:[%s6 + $0xac] sm:$0xf]
      %v4098 = vld [vmem:[%s6 + $0xb0] sm:$0xf]
      %v4099 = vld [vmem:[%s6 + $0xb4] sm:$0xf]
      %v4100 = vld [vmem:[%s6 + $0xb8] sm:$0xf]
      %v4101 = vld [vmem:[%s6 + $0xbc] sm:$0xf]
      %v4102 = vld [vmem:[%s6 + $0xc0] sm:$0xf]
      %v4103 = vld [vmem:[%s6 + $0xc4] sm:$0xf]
      %v4104 = vld [vmem:[%s6 + $0xc8] sm:$0xf]
      %v4105 = vld [vmem:[%s6 + $0xcc] sm:$0xf]
      %v4106 = vld [vmem:[%s6 + $0xd0] sm:$0xf]
      %v4107 = vld [vmem:[%s6 + $0xd4] sm:$0xf]
      %v4108 = vld [vmem:[%s6 + $0xd8] sm:$0xf]
      %v4109 = vld [vmem:[%s6 + $0xdc] sm:$0xf]
      %v4110 = vld [vmem:[%s6 + $0xe0] sm:$0xf]
      %v4111 = vld [vmem:[%s6 + $0xe4] sm:$0xf]
      %v4112 = vld [vmem:[%s6 + $0xe8] sm:$0xf]
      %v4113 = vld [vmem:[%s6 + $0xec] sm:$0xf]
      %v4114 = vld [vmem:[%s6 + $0xf0] sm:$0xf]
      %v4115 = vld [vmem:[%s6 + $0xf4] sm:$0xf]
      %v4116 = vld [vmem:[%s6 + $0xf8] sm:$0xf]
      %v4117 = vld [vmem:[%s6 + $0xfc] sm:$0xf]
      %v4118 = vld [vmem:[%s6 + $0x100] sm:$0xf]
      %v4119 = vld [vmem:[%s6 + $0x104] sm:$0xf]
      %v4120 = vld [vmem:[%s6 + $0x108] sm:$0xf]
      %v4121 = vld [vmem:[%s6 + $0x10c] sm:$0xf]
      %v4122 = vld [vmem:[%s6 + $0x110] sm:$0xf]
      %v4123 = vld [vmem:[%s6 + $0x114] sm:$0xf]
      %v4124 = vld [vmem:[%s6 + $0x118] sm:$0xf]
      %v4125 = vld [vmem:[%s6 + $0x11c] sm:$0xf]
      %v4126 = vld [vmem:[%s7] sm:$0x1]
      %v4127 = vpack.c.bf16 %v4039, %v4038
      %v4128 = vpack.c.bf16 %v4041, %v4040
      %v4129 = vpack.c.bf16 %v4043, %v4042
      %v4130 = vpack.c.bf16 %v4045, %v4044
      %v4131 = vpack.c.bf16 %v4047, %v4046
      %v4132 = vpack.c.bf16 %v4049, %v4048
      %v4133 = vpack.c.bf16 %v4051, %v4050
      %v4134 = vpack.c.bf16 %v4053, %v4052
      %v4136 = vshrl.u32 %v4127, 16
      %v4138 = vrot.slane %v4136, 5
      %v4139 = vshll.u32 %v4127, 16
      %v4141 = vrot.slane %v4139, 6
      %v4142 = vor.u32 %v4138, %v4141
      %v4144 = vshrl.u32 %v4128, 16
      %v4146 = vrot.slane %v4144, 5
      %v4147 = vshll.u32 %v4128, 16
      %v4149 = vrot.slane %v4147, 6
      %v4150 = vor.u32 %v4146, %v4149
      %v4151 = vsel %vm856, %v4142, %v4150
      %v4153 = vshrl.u32 %v4129, 16
      %v4155 = vrot.slane %v4153, 5
      %v4156 = vshll.u32 %v4129, 16
      %v4158 = vrot.slane %v4156, 6
      %v4159 = vor.u32 %v4155, %v4158
      %v4160 = vsel %vm856, %v4150, %v4159
      %v4162 = vshrl.u32 %v4130, 16
      %v4164 = vrot.slane %v4162, 5
      %v4165 = vshll.u32 %v4130, 16
      %v4167 = vrot.slane %v4165, 6
      %v4168 = vor.u32 %v4164, %v4167
      %v4169 = vsel %vm856, %v4159, %v4168
      %v4171 = vshrl.u32 %v4131, 16
      %v4173 = vrot.slane %v4171, 5
      %v4174 = vshll.u32 %v4131, 16
      %v4176 = vrot.slane %v4174, 6
      %v4177 = vor.u32 %v4173, %v4176
      %v4178 = vsel %vm856, %v4168, %v4177
      %v4180 = vshrl.u32 %v4132, 16
      %v4182 = vrot.slane %v4180, 5
      %v4183 = vshll.u32 %v4132, 16
      %v4185 = vrot.slane %v4183, 6
      %v4186 = vor.u32 %v4182, %v4185
      %v4187 = vsel %vm856, %v4177, %v4186
      %v4189 = vshrl.u32 %v4133, 16
      %v4191 = vrot.slane %v4189, 5
      %v4192 = vshll.u32 %v4133, 16
      %v4194 = vrot.slane %v4192, 6
      %v4195 = vor.u32 %v4191, %v4194
      %v4196 = vsel %vm856, %v4186, %v4195
      %v4198 = vshrl.u32 %v4134, 16
      %v4200 = vrot.slane %v4198, 5
      %v4201 = vshll.u32 %v4134, 16
      %v4203 = vrot.slane %v4201, 6
      %v4204 = vor.u32 %v4200, %v4203
      %v4205 = vsel %vm856, %v4195, %v4204
      %v4214 = vsel %vm937, 0, %v4142
      %v4215 = vmul.bf16 %v4214, %v1163
      %v4216 = vmul.bf16 %v4151, %v1164
      %v4217 = vmul.bf16 %v4160, %v1165
      %v4218 = vmul.bf16 %v4169, %v1166
      %v4219 = vmul.bf16 %v4178, %v1167
      %v4220 = vmul.bf16 %v4187, %v1168
      %v4221 = vmul.bf16 %v4196, %v1169
      %v4222 = vmul.bf16 %v4205, %v1170
      %v4231 = vrot.slane %v4127, 6
      %v4232 = vrot.slane %v4128, 6
      %v4233 = vsel %vm1195, %v4231, %v4232
      %v4234 = vrot.slane %v4129, 6
      %v4235 = vsel %vm1195, %v4232, %v4234
      %v4236 = vrot.slane %v4130, 6
      %v4237 = vsel %vm1195, %v4234, %v4236
      %v4238 = vrot.slane %v4131, 6
      %v4239 = vsel %vm1195, %v4236, %v4238
      %v4240 = vrot.slane %v4132, 6
      %v4241 = vsel %vm1195, %v4238, %v4240
      %v4242 = vrot.slane %v4133, 6
      %v4243 = vsel %vm1195, %v4240, %v4242
      %v4244 = vrot.slane %v4134, 6
      %v4245 = vsel %vm1195, %v4242, %v4244
      %v4254 = vsel %vm1218, 0, %v4231
      %v4256 = vmul.bf16 %v4254, %v1447
      %v4257 = vmul.bf16 %v4233, %v1448
      %v4258 = vmul.bf16 %v4235, %v1449
      %v4259 = vmul.bf16 %v4237, %v1450
      %v4260 = vmul.bf16 %v4239, %v1451
      %v4261 = vmul.bf16 %v4241, %v1452
      %v4262 = vmul.bf16 %v4243, %v1453
      %v4263 = vmul.bf16 %v4245, %v1454
      %v4264 = vrot.slane %v4136, 6
      %v4265 = vrot.slane %v4139, 7
      %v4266 = vor.u32 %v4264, %v4265
      %v4267 = vrot.slane %v4144, 6
      %v4268 = vrot.slane %v4147, 7
      %v4269 = vor.u32 %v4267, %v4268
      %v4270 = vsel %vm1471, %v4266, %v4269
      %v4271 = vrot.slane %v4153, 6
      %v4272 = vrot.slane %v4156, 7
      %v4273 = vor.u32 %v4271, %v4272
      %v4274 = vsel %vm1471, %v4269, %v4273
      %v4275 = vrot.slane %v4162, 6
      %v4276 = vrot.slane %v4165, 7
      %v4277 = vor.u32 %v4275, %v4276
      %v4278 = vsel %vm1471, %v4273, %v4277
      %v4279 = vrot.slane %v4171, 6
      %v4280 = vrot.slane %v4174, 7
      %v4281 = vor.u32 %v4279, %v4280
      %v4282 = vsel %vm1471, %v4277, %v4281
      %v4283 = vrot.slane %v4180, 6
      %v4284 = vrot.slane %v4183, 7
      %v4285 = vor.u32 %v4283, %v4284
      %v4286 = vsel %vm1471, %v4281, %v4285
      %v4287 = vrot.slane %v4189, 6
      %v4288 = vrot.slane %v4192, 7
      %v4289 = vor.u32 %v4287, %v4288
      %v4290 = vsel %vm1471, %v4285, %v4289
      %v4291 = vrot.slane %v4198, 6
      %v4292 = vrot.slane %v4201, 7
      %v4293 = vor.u32 %v4291, %v4292
      %v4294 = vsel %vm1471, %v4289, %v4293
      %v4303 = vsel %vm1511, 0, %v4266
      %v4304 = vmul.bf16 %v4303, %v1737
      %v4305 = vmul.bf16 %v4270, %v1738
      %v4306 = vmul.bf16 %v4274, %v1739
      %v4307 = vmul.bf16 %v4278, %v1740
      %v4308 = vmul.bf16 %v4282, %v1741
      %v4309 = vmul.bf16 %v4286, %v1742
      %v4310 = vmul.bf16 %v4290, %v1743
      %v4311 = vmul.bf16 %v4294, %v1744
      %v4312 = vrot.slane %v4136, 7
      %v4313 = vor.u32 %v4312, %v4139
      %v4314 = vrot.slane %v4144, 7
      %v4315 = vor.u32 %v4314, %v4147
      %v4316 = vsel %vm1761, %v4312, %v4315
      %v4317 = vrot.slane %v4153, 7
      %v4318 = vor.u32 %v4317, %v4156
      %v4319 = vsel %vm1761, %v4314, %v4318
      %v4320 = vrot.slane %v4162, 7
      %v4321 = vor.u32 %v4320, %v4165
      %v4322 = vsel %vm1761, %v4317, %v4321
      %v4323 = vrot.slane %v4171, 7
      %v4324 = vor.u32 %v4323, %v4174
      %v4325 = vsel %vm1761, %v4320, %v4324
      %v4326 = vrot.slane %v4180, 7
      %v4327 = vor.u32 %v4326, %v4183
      %v4328 = vsel %vm1761, %v4323, %v4327
      %v4329 = vrot.slane %v4189, 7
      %v4330 = vor.u32 %v4329, %v4192
      %v4331 = vsel %vm1761, %v4326, %v4330
      %v4332 = vrot.slane %v4198, 7
      %v4333 = vor.u32 %v4332, %v4201
      %v4334 = vsel %vm1761, %v4329, %v4333
      %v4343 = vsel %vm1794, 0, %v4313
      %v4344 = vmul.bf16 %v4343, %v2020
      %v4345 = vmul.bf16 %v4316, %v2021
      %v4346 = vmul.bf16 %v4319, %v2022
      %v4347 = vmul.bf16 %v4322, %v2023
      %v4348 = vmul.bf16 %v4325, %v2024
      %v4349 = vmul.bf16 %v4328, %v2025
      %v4350 = vmul.bf16 %v4331, %v2026
      %v4351 = vmul.bf16 %v4334, %v2027
      %v4352 = vmul.bf16 %v4127, %v2268
      %v4353 = vmul.bf16 %v4128, %v2269
      %v4354 = vmul.bf16 %v4129, %v2270
      %v4355 = vmul.bf16 %v4130, %v2271
      %v4356 = vmul.bf16 %v4131, %v2272
      %v4357 = vmul.bf16 %v4132, %v2273
      %v4358 = vmul.bf16 %v4133, %v2274
      %v4359 = vmul.bf16 %v4134, %v2275
      %v4360 = vrot.slane %v4139, 1
      %v4361 = vor.u32 %v4136, %v4360
      %v4362 = vrot.slane %v4147, 1
      %v4363 = vsel %vm2292, %v4361, %v4362
      %v4364 = vor.u32 %v4144, %v4362
      %v4365 = vrot.slane %v4156, 1
      %v4366 = vsel %vm2292, %v4364, %v4365
      %v4367 = vor.u32 %v4153, %v4365
      %v4368 = vrot.slane %v4165, 1
      %v4369 = vsel %vm2292, %v4367, %v4368
      %v4370 = vor.u32 %v4162, %v4368
      %v4371 = vrot.slane %v4174, 1
      %v4372 = vsel %vm2292, %v4370, %v4371
      %v4373 = vor.u32 %v4171, %v4371
      %v4374 = vrot.slane %v4183, 1
      %v4375 = vsel %vm2292, %v4373, %v4374
      %v4376 = vor.u32 %v4180, %v4374
      %v4377 = vrot.slane %v4192, 1
      %v4378 = vsel %vm2292, %v4376, %v4377
      %v4379 = vor.u32 %v4189, %v4377
      %v4380 = vrot.slane %v4201, 1
      %v4381 = vsel %vm2292, %v4379, %v4380
      %v4382 = vor.u32 %v4198, %v4380
      %v4391 = vsel %vm2325, %v4382, 0
      %v4392 = vmul.bf16 %v4363, %v2551
      %v4393 = vmul.bf16 %v4366, %v2552
      %v4394 = vmul.bf16 %v4369, %v2553
      %v4395 = vmul.bf16 %v4372, %v2554
      %v4396 = vmul.bf16 %v4375, %v2555
      %v4397 = vmul.bf16 %v4378, %v2556
      %v4398 = vmul.bf16 %v4381, %v2557
      %v4399 = vmul.bf16 %v4391, %v2558
      %v4400 = vrot.slane %v4136, 1
      %v4401 = vrot.slane %v4139, 2
      %v4402 = vor.u32 %v4400, %v4401
      %v4403 = vrot.slane %v4144, 1
      %v4404 = vrot.slane %v4147, 2
      %v4405 = vor.u32 %v4403, %v4404
      %v4406 = vsel %vm2575, %v4402, %v4405
      %v4407 = vrot.slane %v4153, 1
      %v4408 = vrot.slane %v4156, 2
      %v4409 = vor.u32 %v4407, %v4408
      %v4410 = vsel %vm2575, %v4405, %v4409
      %v4411 = vrot.slane %v4162, 1
      %v4412 = vrot.slane %v4165, 2
      %v4413 = vor.u32 %v4411, %v4412
      %v4414 = vsel %vm2575, %v4409, %v4413
      %v4415 = vrot.slane %v4171, 1
      %v4416 = vrot.slane %v4174, 2
      %v4417 = vor.u32 %v4415, %v4416
      %v4418 = vsel %vm2575, %v4413, %v4417
      %v4419 = vrot.slane %v4180, 1
      %v4420 = vrot.slane %v4183, 2
      %v4421 = vor.u32 %v4419, %v4420
      %v4422 = vsel %vm2575, %v4417, %v4421
      %v4423 = vrot.slane %v4189, 1
      %v4424 = vrot.slane %v4192, 2
      %v4425 = vor.u32 %v4423, %v4424
      %v4426 = vsel %vm2575, %v4421, %v4425
      %v4427 = vrot.slane %v4198, 1
      %v4428 = vrot.slane %v4201, 2
      %v4429 = vor.u32 %v4427, %v4428
      %v4430 = vsel %vm2575, %v4425, %v4429
      %v4439 = vsel %vm2616, %v4429, 0
      %v4440 = vmul.bf16 %v4406, %v2842
      %v4441 = vmul.bf16 %v4410, %v2843
      %v4442 = vmul.bf16 %v4414, %v2844
      %v4443 = vmul.bf16 %v4418, %v2845
      %v4444 = vmul.bf16 %v4422, %v2846
      %v4445 = vmul.bf16 %v4426, %v2847
      %v4446 = vmul.bf16 %v4430, %v2848
      %v4447 = vmul.bf16 %v4439, %v2849
      %v4448 = vrot.slane %v4127, 2
      %v4449 = vrot.slane %v4128, 2
      %v4450 = vsel %vm2866, %v4448, %v4449
      %v4451 = vrot.slane %v4129, 2
      %v4452 = vsel %vm2866, %v4449, %v4451
      %v4453 = vrot.slane %v4130, 2
      %v4454 = vsel %vm2866, %v4451, %v4453
      %v4455 = vrot.slane %v4131, 2
      %v4456 = vsel %vm2866, %v4453, %v4455
      %v4457 = vrot.slane %v4132, 2
      %v4458 = vsel %vm2866, %v4455, %v4457
      %v4459 = vrot.slane %v4133, 2
      %v4460 = vsel %vm2866, %v4457, %v4459
      %v4461 = vrot.slane %v4134, 2
      %v4462 = vsel %vm2866, %v4459, %v4461
      %v4471 = vsel %vm2889, %v4461, 0
      %v4473 = vmul.bf16 %v4450, %v3117
      %v4474 = vmul.bf16 %v4452, %v3118
      %v4475 = vmul.bf16 %v4454, %v3119
      %v4476 = vmul.bf16 %v4456, %v3120
      %v4477 = vmul.bf16 %v4458, %v3121
      %v4478 = vmul.bf16 %v4460, %v3122
      %v4479 = vmul.bf16 %v4462, %v3123
      %v4480 = vmul.bf16 %v4471, %v3124
      %v4481 = vrot.slane %v4136, 2
      %v4482 = vrot.slane %v4139, 3
      %v4483 = vor.u32 %v4481, %v4482
      %v4484 = vrot.slane %v4144, 2
      %v4485 = vrot.slane %v4147, 3
      %v4486 = vor.u32 %v4484, %v4485
      %v4487 = vsel %vm3141, %v4483, %v4486
      %v4488 = vrot.slane %v4153, 2
      %v4489 = vrot.slane %v4156, 3
      %v4490 = vor.u32 %v4488, %v4489
      %v4491 = vsel %vm3141, %v4486, %v4490
      %v4492 = vrot.slane %v4162, 2
      %v4493 = vrot.slane %v4165, 3
      %v4494 = vor.u32 %v4492, %v4493
      %v4495 = vsel %vm3141, %v4490, %v4494
      %v4496 = vrot.slane %v4171, 2
      %v4497 = vrot.slane %v4174, 3
      %v4498 = vor.u32 %v4496, %v4497
      %v4499 = vsel %vm3141, %v4494, %v4498
      %v4500 = vrot.slane %v4180, 2
      %v4501 = vrot.slane %v4183, 3
      %v4502 = vor.u32 %v4500, %v4501
      %v4503 = vsel %vm3141, %v4498, %v4502
      %v4504 = vrot.slane %v4189, 2
      %v4505 = vrot.slane %v4192, 3
      %v4506 = vor.u32 %v4504, %v4505
      %v4507 = vsel %vm3141, %v4502, %v4506
      %v4508 = vrot.slane %v4198, 2
      %v4509 = vrot.slane %v4201, 3
      %v4510 = vor.u32 %v4508, %v4509
      %v4511 = vsel %vm3141, %v4506, %v4510
      %v4520 = vsel %vm3181, %v4510, 0
      %v4521 = vmul.bf16 %v4487, %v3407
      %v4522 = vmul.bf16 %v4491, %v3408
      %v4523 = vmul.bf16 %v4495, %v3409
      %v4524 = vmul.bf16 %v4499, %v3410
      %v4525 = vmul.bf16 %v4503, %v3411
      %v4526 = vmul.bf16 %v4507, %v3412
      %v4527 = vmul.bf16 %v4511, %v3413
      %v4528 = vmul.bf16 %v4520, %v3414
      %4537 = vrot.lane.b32.xlu0 %v4256, 64
      %v4538 = vpop.permute.xlu0 %4537
      %4539 = vrot.lane.b32.xlu0 %v4257, 64
      %v4540 = vpop.permute.xlu0 %4539
      %4541 = vrot.lane.b32.xlu0 %v4258, 64
      %v4542 = vpop.permute.xlu0 %4541
      %4543 = vrot.lane.b32.xlu0 %v4259, 64
      %v4544 = vpop.permute.xlu0 %4543
      %4545 = vrot.lane.b32.xlu0 %v4260, 64
      %v4546 = vpop.permute.xlu0 %4545
      %4547 = vrot.lane.b32.xlu0 %v4261, 64
      %v4548 = vpop.permute.xlu0 %4547
      %4549 = vrot.lane.b32.xlu0 %v4262, 64
      %v4550 = vpop.permute.xlu0 %4549
      %4551 = vrot.lane.b32.xlu0 %v4263, 64
      %v4552 = vpop.permute.xlu0 %4551
      %4561 = vrot.lane.b32.xlu0 %v4344, 64
      %v4562 = vpop.permute.xlu0 %4561
      %4563 = vrot.lane.b32.xlu0 %v4345, 64
      %v4564 = vpop.permute.xlu0 %4563
      %4565 = vrot.lane.b32.xlu0 %v4346, 64
      %v4566 = vpop.permute.xlu0 %4565
      %4567 = vrot.lane.b32.xlu0 %v4347, 64
      %v4568 = vpop.permute.xlu0 %4567
      %4569 = vrot.lane.b32.xlu0 %v4348, 64
      %v4570 = vpop.permute.xlu0 %4569
      %4571 = vrot.lane.b32.xlu0 %v4349, 64
      %v4572 = vpop.permute.xlu0 %4571
      %4573 = vrot.lane.b32.xlu0 %v4350, 64
      %v4574 = vpop.permute.xlu0 %4573
      %4575 = vrot.lane.b32.xlu0 %v4351, 64
      %v4576 = vpop.permute.xlu0 %4575
      %4585 = vrot.lane.b32.xlu0 %v4392, 64
      %v4586 = vpop.permute.xlu0 %4585
      %4587 = vrot.lane.b32.xlu0 %v4393, 64
      %v4588 = vpop.permute.xlu0 %4587
      %4589 = vrot.lane.b32.xlu0 %v4394, 64
      %v4590 = vpop.permute.xlu0 %4589
      %4591 = vrot.lane.b32.xlu0 %v4395, 64
      %v4592 = vpop.permute.xlu0 %4591
      %4593 = vrot.lane.b32.xlu0 %v4396, 64
      %v4594 = vpop.permute.xlu0 %4593
      %4595 = vrot.lane.b32.xlu0 %v4397, 64
      %v4596 = vpop.permute.xlu0 %4595
      %4597 = vrot.lane.b32.xlu0 %v4398, 64
      %v4598 = vpop.permute.xlu0 %4597
      %4599 = vrot.lane.b32.xlu0 %v4399, 64
      %v4600 = vpop.permute.xlu0 %4599
      %4609 = vrot.lane.b32.xlu0 %v4473, 64
      %v4610 = vpop.permute.xlu0 %4609
      %4611 = vrot.lane.b32.xlu0 %v4474, 64
      %v4612 = vpop.permute.xlu0 %4611
      %4613 = vrot.lane.b32.xlu0 %v4475, 64
      %v4614 = vpop.permute.xlu0 %4613
      %4615 = vrot.lane.b32.xlu0 %v4476, 64
      %v4616 = vpop.permute.xlu0 %4615
      %4617 = vrot.lane.b32.xlu0 %v4477, 64
      %v4618 = vpop.permute.xlu0 %4617
      %4619 = vrot.lane.b32.xlu0 %v4478, 64
      %v4620 = vpop.permute.xlu0 %4619
      %4621 = vrot.lane.b32.xlu0 %v4479, 64
      %v4622 = vpop.permute.xlu0 %4621
      %4623 = vrot.lane.b32.xlu0 %v4480, 64
      %v4624 = vpop.permute.xlu0 %4623
      %v4627 = vsel %vm3600, %v4215, %v4538
      %v4631 = vsel %vm3600, %v4216, %v4540
      %v4635 = vsel %vm3600, %v4217, %v4542
      %v4639 = vsel %vm3600, %v4218, %v4544
      %v4643 = vsel %vm3600, %v4219, %v4546
      %v4647 = vsel %vm3600, %v4220, %v4548
      %v4651 = vsel %vm3600, %v4221, %v4550
      %v4655 = vsel %vm3600, %v4222, %v4552
      %v4659 = vsel %vm3600, %v4304, %v4562
      %v4663 = vsel %vm3600, %v4305, %v4564
      %v4667 = vsel %vm3600, %v4306, %v4566
      %v4671 = vsel %vm3600, %v4307, %v4568
      %v4675 = vsel %vm3600, %v4308, %v4570
      %v4679 = vsel %vm3600, %v4309, %v4572
      %v4683 = vsel %vm3600, %v4310, %v4574
      %v4687 = vsel %vm3600, %v4311, %v4576
      %v4691 = vsel %vm3600, %v4352, %v4586
      %v4695 = vsel %vm3600, %v4353, %v4588
      %v4699 = vsel %vm3600, %v4354, %v4590
      %v4703 = vsel %vm3600, %v4355, %v4592
      %v4707 = vsel %vm3600, %v4356, %v4594
      %v4711 = vsel %vm3600, %v4357, %v4596
      %v4715 = vsel %vm3600, %v4358, %v4598
      %v4719 = vsel %vm3600, %v4359, %v4600
      %v4723 = vsel %vm3600, %v4440, %v4610
      %v4727 = vsel %vm3600, %v4441, %v4612
      %v4731 = vsel %vm3600, %v4442, %v4614
      %v4735 = vsel %vm3600, %v4443, %v4616
      %v4739 = vsel %vm3600, %v4444, %v4618
      %v4743 = vsel %vm3600, %v4445, %v4620
      %v4747 = vsel %vm3600, %v4446, %v4622
      %v4751 = vsel %vm3600, %v4447, %v4624
      %v4754 = vlaneseq
      %v4755 = vshrl.u32 %v4754, 7
      %v4756 = vsub.s32 0, %v4755
      %v4757 = vrot.slane %v4126, %v4756
      %v4831 = vunpack.c.l.b16 %v4054
      %v4832 = vunpack.c.l.b16 %v4055
      %v4833 = vunpack.c.l.b16 %v4056
      %v4834 = vunpack.c.l.b16 %v4057
      %v4835 = vunpack.c.l.b16 %v4058
      %v4836 = vunpack.c.l.b16 %v4059
      %v4837 = vunpack.c.l.b16 %v4060
      %v4838 = vunpack.c.l.b16 %v4061
      %v4839 = vunpack.c.l.b16 %v4062
      %v4840 = vunpack.c.l.b16 %v4063
      %v4841 = vunpack.c.l.b16 %v4064
      %v4842 = vunpack.c.l.b16 %v4065
      %v4843 = vunpack.c.l.b16 %v4066
      %v4844 = vunpack.c.l.b16 %v4067
      %v4845 = vunpack.c.l.b16 %v4068
      %v4846 = vunpack.c.l.b16 %v4069
      %v4847 = vunpack.c.l.b16 %v4070
      %v4848 = vunpack.c.l.b16 %v4071
      %v4849 = vunpack.c.l.b16 %v4072
      %v4850 = vunpack.c.l.b16 %v4073
      %v4851 = vunpack.c.l.b16 %v4074
      %v4852 = vunpack.c.l.b16 %v4075
      %v4853 = vunpack.c.l.b16 %v4076
      %v4854 = vunpack.c.l.b16 %v4077
      %v4855 = vunpack.c.l.b16 %v4078
      %v4856 = vunpack.c.l.b16 %v4079
      %v4857 = vunpack.c.l.b16 %v4080
      %v4858 = vunpack.c.l.b16 %v4081
      %v4859 = vunpack.c.l.b16 %v4082
      %v4860 = vunpack.c.l.b16 %v4083
      %v4861 = vunpack.c.l.b16 %v4084
      %v4862 = vunpack.c.l.b16 %v4085
      %v4863 = vunpack.c.l.b16 %v4086
      %v4864 = vunpack.c.l.b16 %v4087
      %v4865 = vunpack.c.l.b16 %v4088
      %v4866 = vunpack.c.l.b16 %v4089
      %v4867 = vunpack.c.l.b16 %v4090
      %v4868 = vunpack.c.l.b16 %v4091
      %v4869 = vunpack.c.l.b16 %v4092
      %v4870 = vunpack.c.l.b16 %v4093
      %v4871 = vunpack.c.l.b16 %v4094
      %v4872 = vunpack.c.l.b16 %v4095
      %v4873 = vunpack.c.l.b16 %v4096
      %v4874 = vunpack.c.l.b16 %v4097
      %v4875 = vunpack.c.l.b16 %v4098
      %v4876 = vunpack.c.l.b16 %v4099
      %v4877 = vunpack.c.l.b16 %v4100
      %v4878 = vunpack.c.l.b16 %v4101
      %v4879 = vunpack.c.l.b16 %v4102
      %v4880 = vunpack.c.l.b16 %v4103
      %v4881 = vunpack.c.l.b16 %v4104
      %v4882 = vunpack.c.l.b16 %v4105
      %v4883 = vunpack.c.l.b16 %v4106
      %v4884 = vunpack.c.l.b16 %v4107
      %v4885 = vunpack.c.l.b16 %v4108
      %v4886 = vunpack.c.l.b16 %v4109
      %v4887 = vunpack.c.l.b16 %v4110
      %v4888 = vunpack.c.l.b16 %v4111
      %v4889 = vunpack.c.l.b16 %v4112
      %v4890 = vunpack.c.l.b16 %v4113
      %v4891 = vunpack.c.l.b16 %v4114
      %v4892 = vunpack.c.l.b16 %v4115
      %v4893 = vunpack.c.l.b16 %v4116
      %v4894 = vunpack.c.l.b16 %v4117
      %v4895 = vunpack.c.l.b16 %v4118
      %v4896 = vunpack.c.l.b16 %v4119
      %v4897 = vunpack.c.l.b16 %v4120
      %v4898 = vunpack.c.l.b16 %v4121
      %v4899 = vunpack.c.l.b16 %v4122
      %v4900 = vunpack.c.l.b16 %v4123
      %v4901 = vunpack.c.l.b16 %v4124
      %v4902 = vunpack.c.l.b16 %v4125
      %v4903 = vpack.c.b16 %v4832, %v4831
      %v4904 = vpack.c.b16 %v4834, %v4833
      %v4905 = vpack.c.b16 %v4836, %v4835
      %v4906 = vpack.c.b16 %v4838, %v4837
      %v4907 = vpack.c.b16 %v4840, %v4839
      %v4908 = vpack.c.b16 %v4842, %v4841
      %v4909 = vpack.c.b16 %v4844, %v4843
      %v4910 = vpack.c.b16 %v4846, %v4845
      %v4911 = vpack.c.b16 %v4848, %v4847
      %v4912 = vpack.c.b16 %v4850, %v4849
      %v4913 = vpack.c.b16 %v4852, %v4851
      %v4914 = vpack.c.b16 %v4854, %v4853
      %v4915 = vpack.c.b16 %v4856, %v4855
      %v4916 = vpack.c.b16 %v4858, %v4857
      %v4917 = vpack.c.b16 %v4860, %v4859
      %v4918 = vpack.c.b16 %v4862, %v4861
      %v4919 = vpack.c.b16 %v4864, %v4863
      %v4920 = vpack.c.b16 %v4866, %v4865
      %v4921 = vpack.c.b16 %v4868, %v4867
      %v4922 = vpack.c.b16 %v4870, %v4869
      %v4923 = vpack.c.b16 %v4872, %v4871
      %v4924 = vpack.c.b16 %v4874, %v4873
      %v4925 = vpack.c.b16 %v4876, %v4875
      %v4926 = vpack.c.b16 %v4878, %v4877
      %v4927 = vpack.c.b16 %v4880, %v4879
      %v4928 = vpack.c.b16 %v4882, %v4881
      %v4929 = vpack.c.b16 %v4884, %v4883
      %v4930 = vpack.c.b16 %v4886, %v4885
      %v4931 = vpack.c.b16 %v4888, %v4887
      %v4932 = vpack.c.b16 %v4890, %v4889
      %v4933 = vpack.c.b16 %v4892, %v4891
      %v4934 = vpack.c.b16 %v4894, %v4893
      %v4935 = vpack.c.b16 %v4896, %v4895
      %v4936 = vpack.c.b16 %v4898, %v4897
      %v4937 = vpack.c.b16 %v4900, %v4899
      %v4938 = vpack.c.b16 %v4902, %v4901
      %v4976 = vsel %vm3600, %v4521, 0
      %v4979 = vsel %vm3600, %v4522, 0
      %v4982 = vsel %vm3600, %v4523, 0
      %v4985 = vsel %vm3600, %v4524, 0
      %v4988 = vsel %vm3600, %v4525, 0
      %v4991 = vsel %vm3600, %v4526, 0
      %v4994 = vsel %vm3600, %v4527, 0
      %v4997 = vsel %vm3600, %v4528, 0
      %4999 = vmatprep.subr.bf16.mxu0 0
      %5000 = vmatpush1.bf16.msra.mxu0 %v4910
      %5001 = vmatprep.subr.bf16.mxu0 0
      %5002 = vmatpush1.bf16.msra.mxu0 %v4909
      %5003 = vmatprep.subr.bf16.mxu0 0
      %5004 = vmatpush1.bf16.msra.mxu0 %v4908
      %5005 = vmatprep.subr.bf16.mxu0 0
      %5006 = vmatpush1.bf16.msra.mxu0 %v4907
      %5007 = vmatprep.subr.bf16.mxu0 0
      %5008 = vmatpush1.bf16.msra.mxu0 %v4906
      %5009 = vmatprep.subr.bf16.mxu0 0
      %5010 = vmatpush1.bf16.msra.mxu0 %v4905
      %5011 = vmatprep.subr.bf16.mxu0 0
      %5012 = vmatpush1.bf16.msra.mxu0 %v4904
      %5013 = vmatprep.subr.bf16.mxu0 0
      %5014 = vmatpush1.bf16.msra.mxu0 %v4903
      %5015 = vmatprep.subr.bf16.mxu0 0
      %5016 = vmatpush2.bf16.msra.mxu0 %v4918
      %5017 = vmatprep.subr.bf16.mxu0 0
      %5018 = vmatpush2.bf16.msra.mxu0 %v4917
      %5019 = vmatprep.subr.bf16.mxu0 0
      %5020 = vmatpush2.bf16.msra.mxu0 %v4916
      %5021 = vmatprep.subr.bf16.mxu0 0
      %5022 = vmatpush2.bf16.msra.mxu0 %v4915
      %5023 = vmatprep.subr.bf16.mxu0 0
      %5024 = vmatpush2.bf16.msra.mxu0 %v4914
      %5025 = vmatprep.subr.bf16.mxu0 0
      %5026 = vmatpush2.bf16.msra.mxu0 %v4913
      %5027 = vmatprep.subr.bf16.mxu0 0
      %5028 = vmatpush2.bf16.msra.mxu0 %v4912
      %5029 = vmatprep.subr.bf16.mxu0 0
      %5030 = vmatpush2.bf16.msra.mxu0 %v4911
      %5031 = vmatprep.mubr.bf16.mxu0 %v4659
      %5032 = vmatmul.mubr.bf16.gmra.mxu0 %v4627
      %v5033 = vpop.f32.mrf.mxu0
      %v5034 = vadd.f32 %v4757, %v5033
      %v5035 = vpop.f32.mrf.mxu0
      %v5036 = vpop.f32.mrf.mxu0
      %v5037 = vadd.f32 %v4757, %v5036
      %v5038 = vpop.f32.mrf.mxu0
      %5039 = vmatprep.mubr.bf16.mxu0 %v4663
      %5040 = vmatmul.mubr.bf16.gmra.mxu0 %v4631
      %v5041 = vpop.f32.mrf.mxu0
      %v5042 = vadd.f32 %v4757, %v5041
      %v5043 = vpop.f32.mrf.mxu0
      %v5044 = vpop.f32.mrf.mxu0
      %v5045 = vadd.f32 %v4757, %v5044
      %v5046 = vpop.f32.mrf.mxu0
      %5047 = vmatprep.mubr.bf16.mxu0 %v4667
      %5048 = vmatmul.mubr.bf16.gmra.mxu0 %v4635
      %v5049 = vpop.f32.mrf.mxu0
      %v5050 = vadd.f32 %v4757, %v5049
      %v5051 = vpop.f32.mrf.mxu0
      %v5052 = vpop.f32.mrf.mxu0
      %v5053 = vadd.f32 %v4757, %v5052
      %v5054 = vpop.f32.mrf.mxu0
      %5055 = vmatprep.mubr.bf16.mxu0 %v4671
      %5056 = vmatmul.mubr.bf16.gmra.mxu0 %v4639
      %v5057 = vpop.f32.mrf.mxu0
      %v5058 = vadd.f32 %v4757, %v5057
      %v5059 = vpop.f32.mrf.mxu0
      %v5060 = vpop.f32.mrf.mxu0
      %v5061 = vadd.f32 %v4757, %v5060
      %v5062 = vpop.f32.mrf.mxu0
      %5063 = vmatprep.mubr.bf16.mxu0 %v4675
      %5064 = vmatmul.mubr.bf16.gmra.mxu0 %v4643
      %v5065 = vpop.f32.mrf.mxu0
      %v5066 = vadd.f32 %v4757, %v5065
      %v5067 = vpop.f32.mrf.mxu0
      %v5068 = vpop.f32.mrf.mxu0
      %v5069 = vadd.f32 %v4757, %v5068
      %v5070 = vpop.f32.mrf.mxu0
      %5071 = vmatprep.mubr.bf16.mxu0 %v4679
      %5072 = vmatmul.mubr.bf16.gmra.mxu0 %v4647
      %v5073 = vpop.f32.mrf.mxu0
      %v5074 = vadd.f32 %v4757, %v5073
      %v5075 = vpop.f32.mrf.mxu0
      %v5076 = vpop.f32.mrf.mxu0
      %v5077 = vadd.f32 %v4757, %v5076
      %v5078 = vpop.f32.mrf.mxu0
      %5079 = vmatprep.mubr.bf16.mxu0 %v4683
      %5080 = vmatmul.mubr.bf16.gmra.mxu0 %v4651
      %v5081 = vpop.f32.mrf.mxu0
      %v5082 = vadd.f32 %v4757, %v5081
      %v5083 = vpop.f32.mrf.mxu0
      %v5084 = vpop.f32.mrf.mxu0
      %v5085 = vadd.f32 %v4757, %v5084
      %v5086 = vpop.f32.mrf.mxu0
      %5087 = vmatprep.mubr.bf16.mxu0 %v4687
      %5088 = vmatmul.mubr.bf16.gmra.mxu0 %v4655
      %v5089 = vpop.f32.mrf.mxu0
      %v5090 = vadd.f32 %v4757, %v5089
      %v5091 = vpop.f32.mrf.mxu0
      %v5092 = vpop.f32.mrf.mxu0
      %v5093 = vadd.f32 %v4757, %v5092
      %v5094 = vpop.f32.mrf.mxu0
      %5095 = vdwg.mxu0
      %5096 = vmatprep.subr.bf16.mxu0 0
      %5097 = vmatpush1.bf16.msra.mxu0 %v4926
      %5098 = vmatprep.subr.bf16.mxu0 0
      %5099 = vmatpush1.bf16.msra.mxu0 %v4925
      %5100 = vmatprep.subr.bf16.mxu0 0
      %5101 = vmatpush1.bf16.msra.mxu0 %v4924
      %5102 = vmatprep.subr.bf16.mxu0 0
      %5103 = vmatpush1.bf16.msra.mxu0 %v4923
      %5104 = vmatprep.subr.bf16.mxu0 0
      %5105 = vmatpush1.bf16.msra.mxu0 %v4922
      %5106 = vmatprep.subr.bf16.mxu0 0
      %5107 = vmatpush1.bf16.msra.mxu0 %v4921
      %5108 = vmatprep.subr.bf16.mxu0 0
      %5109 = vmatpush1.bf16.msra.mxu0 %v4920
      %5110 = vmatprep.subr.bf16.mxu0 0
      %5111 = vmatpush1.bf16.msra.mxu0 %v4919
      %5112 = vmatprep.subr.bf16.mxu0 0
      %5113 = vmatpush2.bf16.msra.mxu0 %v4934
      %5114 = vmatprep.subr.bf16.mxu0 0
      %5115 = vmatpush2.bf16.msra.mxu0 %v4933
      %5116 = vmatprep.subr.bf16.mxu0 0
      %5117 = vmatpush2.bf16.msra.mxu0 %v4932
      %5118 = vmatprep.subr.bf16.mxu0 0
      %5119 = vmatpush2.bf16.msra.mxu0 %v4931
      %5120 = vmatprep.subr.bf16.mxu0 0
      %5121 = vmatpush2.bf16.msra.mxu0 %v4930
      %5122 = vmatprep.subr.bf16.mxu0 0
      %5123 = vmatpush2.bf16.msra.mxu0 %v4929
      %5124 = vmatprep.subr.bf16.mxu0 0
      %5125 = vmatpush2.bf16.msra.mxu0 %v4928
      %5126 = vmatprep.subr.bf16.mxu0 0
      %5127 = vmatpush2.bf16.msra.mxu0 %v4927
      %5128 = vmatprep.mubr.bf16.mxu0 %v4723
      %5129 = vmatmul.mubr.bf16.gmra.mxu0 %v4691
      %v5130 = vpop.f32.mrf.mxu0
      %v5131 = vadd.f32 %v5034, %v5130
      %v5132 = vpop.f32.mrf.mxu0
      %v5133 = vpop.f32.mrf.mxu0
      %v5134 = vadd.f32 %v5037, %v5133
      %v5135 = vpop.f32.mrf.mxu0
      %5136 = vmatprep.mubr.bf16.mxu0 %v4727
      %5137 = vmatmul.mubr.bf16.gmra.mxu0 %v4695
      %v5138 = vpop.f32.mrf.mxu0
      %v5139 = vadd.f32 %v5042, %v5138
      %v5140 = vpop.f32.mrf.mxu0
      %v5141 = vpop.f32.mrf.mxu0
      %v5142 = vadd.f32 %v5045, %v5141
      %v5143 = vpop.f32.mrf.mxu0
      %5144 = vmatprep.mubr.bf16.mxu0 %v4731
      %5145 = vmatmul.mubr.bf16.gmra.mxu0 %v4699
      %v5146 = vpop.f32.mrf.mxu0
      %v5147 = vadd.f32 %v5050, %v5146
      %v5148 = vpop.f32.mrf.mxu0
      %v5149 = vpop.f32.mrf.mxu0
      %v5150 = vadd.f32 %v5053, %v5149
      %v5151 = vpop.f32.mrf.mxu0
      %5152 = vmatprep.mubr.bf16.mxu0 %v4735
      %5153 = vmatmul.mubr.bf16.gmra.mxu0 %v4703
      %v5154 = vpop.f32.mrf.mxu0
      %v5155 = vadd.f32 %v5058, %v5154
      %v5156 = vpop.f32.mrf.mxu0
      %v5157 = vpop.f32.mrf.mxu0
      %v5158 = vadd.f32 %v5061, %v5157
      %v5159 = vpop.f32.mrf.mxu0
      %5160 = vmatprep.mubr.bf16.mxu0 %v4739
      %5161 = vmatmul.mubr.bf16.gmra.mxu0 %v4707
      %v5162 = vpop.f32.mrf.mxu0
      %v5163 = vadd.f32 %v5066, %v5162
      %v5164 = vpop.f32.mrf.mxu0
      %v5165 = vpop.f32.mrf.mxu0
      %v5166 = vadd.f32 %v5069, %v5165
      %v5167 = vpop.f32.mrf.mxu0
      %5168 = vmatprep.mubr.bf16.mxu0 %v4743
      %5169 = vmatmul.mubr.bf16.gmra.mxu0 %v4711
      %v5170 = vpop.f32.mrf.mxu0
      %v5171 = vadd.f32 %v5074, %v5170
      %v5172 = vpop.f32.mrf.mxu0
      %v5173 = vpop.f32.mrf.mxu0
      %v5174 = vadd.f32 %v5077, %v5173
      %v5175 = vpop.f32.mrf.mxu0
      %5176 = vmatprep.mubr.bf16.mxu0 %v4747
      %5177 = vmatmul.mubr.bf16.gmra.mxu0 %v4715
      %v5178 = vpop.f32.mrf.mxu0
      %v5179 = vadd.f32 %v5082, %v5178
      %v5180 = vpop.f32.mrf.mxu0
      %v5181 = vpop.f32.mrf.mxu0
      %v5182 = vadd.f32 %v5085, %v5181
      %v5183 = vpop.f32.mrf.mxu0
      %5184 = vmatprep.mubr.bf16.mxu0 %v4751
      %5185 = vmatmul.mubr.bf16.gmra.mxu0 %v4719
      %v5186 = vpop.f32.mrf.mxu0
      %v5187 = vadd.f32 %v5090, %v5186
      %v5188 = vpop.f32.mrf.mxu0
      %v5189 = vpop.f32.mrf.mxu0
      %v5190 = vadd.f32 %v5093, %v5189
      %v5191 = vpop.f32.mrf.mxu0
      %5192 = vdwg.mxu0
      %5193 = vmatprep.subr.bf16.mxu0 0
      %5194 = vmatpush1.bf16.msra.mxu0 0
      %5195 = vmatprep.subr.bf16.mxu0 0
      %5196 = vmatpush1.bf16.msra.mxu0 0
      %5197 = vmatprep.subr.bf16.mxu0 0
      %5198 = vmatpush1.bf16.msra.mxu0 0
      %5199 = vmatprep.subr.bf16.mxu0 0
      %5200 = vmatpush1.bf16.msra.mxu0 0
      %5201 = vmatprep.subr.bf16.mxu0 0
      %5202 = vmatpush1.bf16.msra.mxu0 %v4938
      %5203 = vmatprep.subr.bf16.mxu0 0
      %5204 = vmatpush1.bf16.msra.mxu0 %v4937
      %5205 = vmatprep.subr.bf16.mxu0 0
      %5206 = vmatpush1.bf16.msra.mxu0 %v4936
      %5207 = vmatprep.subr.bf16.mxu0 0
      %5208 = vmatpush1.bf16.msra.mxu0 %v4935
      %5209 = vmatprep.subr.bf16.mxu0 0
      %5210 = vmatpush2.bf16.msra.mxu0 0
      %5211 = vmatprep.subr.bf16.mxu0 0
      %5212 = vmatpush2.bf16.msra.mxu0 0
      %5213 = vmatprep.subr.bf16.mxu0 0
      %5214 = vmatpush2.bf16.msra.mxu0 0
      %5215 = vmatprep.subr.bf16.mxu0 0
      %5216 = vmatpush2.bf16.msra.mxu0 0
      %5217 = vmatprep.subr.bf16.mxu0 0
      %5218 = vmatpush2.bf16.msra.mxu0 0
      %5219 = vmatprep.subr.bf16.mxu0 0
      %5220 = vmatpush2.bf16.msra.mxu0 0
      %5221 = vmatprep.subr.bf16.mxu0 0
      %5222 = vmatpush2.bf16.msra.mxu0 0
      %5223 = vmatprep.subr.bf16.mxu0 0
      %5224 = vmatpush2.bf16.msra.mxu0 0
      %5225 = vmatprep.mubr.bf16.mxu0 0
      %5226 = vmatmul.mubr.bf16.gmra.mxu0 %v4976
      %v5227 = vpop.f32.mrf.mxu0
      %v5228 = vadd.f32 %v5131, %v5227
      %v5229 = vpop.f32.mrf.mxu0
      %v5230 = vpop.f32.mrf.mxu0
      %v5231 = vadd.f32 %v5134, %v5230
      %v5232 = vpop.f32.mrf.mxu0
      %5233 = vmatprep.mubr.bf16.mxu0 0
      %5234 = vmatmul.mubr.bf16.gmra.mxu0 %v4979
      %v5235 = vpop.f32.mrf.mxu0
      %v5236 = vadd.f32 %v5139, %v5235
      %v5237 = vpop.f32.mrf.mxu0
      %v5238 = vpop.f32.mrf.mxu0
      %v5239 = vadd.f32 %v5142, %v5238
      %v5240 = vpop.f32.mrf.mxu0
      %5241 = vmatprep.mubr.bf16.mxu0 0
      %5242 = vmatmul.mubr.bf16.gmra.mxu0 %v4982
      %v5243 = vpop.f32.mrf.mxu0
      %v5244 = vadd.f32 %v5147, %v5243
      %v5245 = vpop.f32.mrf.mxu0
      %v5246 = vpop.f32.mrf.mxu0
      %v5247 = vadd.f32 %v5150, %v5246
      %v5248 = vpop.f32.mrf.mxu0
      %5249 = vmatprep.mubr.bf16.mxu0 0
      %5250 = vmatmul.mubr.bf16.gmra.mxu0 %v4985
      %v5251 = vpop.f32.mrf.mxu0
      %v5252 = vadd.f32 %v5155, %v5251
      %v5253 = vpop.f32.mrf.mxu0
      %v5254 = vpop.f32.mrf.mxu0
      %v5255 = vadd.f32 %v5158, %v5254
      %v5256 = vpop.f32.mrf.mxu0
      %5257 = vmatprep.mubr.bf16.mxu0 0
      %5258 = vmatmul.mubr.bf16.gmra.mxu0 %v4988
      %v5259 = vpop.f32.mrf.mxu0
      %v5260 = vadd.f32 %v5163, %v5259
      %v5261 = vpop.f32.mrf.mxu0
      %v5262 = vpop.f32.mrf.mxu0
      %v5263 = vadd.f32 %v5166, %v5262
      %v5264 = vpop.f32.mrf.mxu0
      %5265 = vmatprep.mubr.bf16.mxu0 0
      %5266 = vmatmul.mubr.bf16.gmra.mxu0 %v4991
      %v5267 = vpop.f32.mrf.mxu0
      %v5268 = vadd.f32 %v5171, %v5267
      %v5269 = vpop.f32.mrf.mxu0
      %v5270 = vpop.f32.mrf.mxu0
      %v5271 = vadd.f32 %v5174, %v5270
      %v5272 = vpop.f32.mrf.mxu0
      %5273 = vmatprep.mubr.bf16.mxu0 0
      %5274 = vmatmul.mubr.bf16.gmra.mxu0 %v4994
      %v5275 = vpop.f32.mrf.mxu0
      %v5276 = vadd.f32 %v5179, %v5275
      %v5277 = vpop.f32.mrf.mxu0
      %v5278 = vpop.f32.mrf.mxu0
      %v5279 = vadd.f32 %v5182, %v5278
      %v5280 = vpop.f32.mrf.mxu0
      %5281 = vmatprep.mubr.bf16.mxu0 0
      %5282 = vmatmul.mubr.bf16.gmra.mxu0 %v4997
      %v5283 = vpop.f32.mrf.mxu0
      %v5284 = vadd.f32 %v5187, %v5283
      %v5285 = vpop.f32.mrf.mxu0
      %v5286 = vpop.f32.mrf.mxu0
      %v5287 = vadd.f32 %v5190, %v5286
      %v5288 = vpop.f32.mrf.mxu0
      %5289 = vdwg.mxu0
      %v5290 = vmax.f32 %v5228, 0.0
      %v5291 = vmax.f32 %v5231, 0.0
      %v5292 = vmax.f32 %v5236, 0.0
      %v5293 = vmax.f32 %v5239, 0.0
      %v5294 = vmax.f32 %v5244, 0.0
      %v5295 = vmax.f32 %v5247, 0.0
      %v5296 = vmax.f32 %v5252, 0.0
      %v5297 = vmax.f32 %v5255, 0.0
      %v5298 = vmax.f32 %v5260, 0.0
      %v5299 = vmax.f32 %v5263, 0.0
      %v5300 = vmax.f32 %v5268, 0.0
      %v5301 = vmax.f32 %v5271, 0.0
      %v5302 = vmax.f32 %v5276, 0.0
      %v5303 = vmax.f32 %v5279, 0.0
      %v5304 = vmax.f32 %v5284, 0.0
      %v5305 = vmax.f32 %v5287, 0.0
      %s5306 = scalar_lea.vmem %s6, 288
      %v5307 = vld [vmem:[%s5306] sm:$0xf]
      %v5308 = vld [vmem:[%s5306 + $0x4] sm:$0xf]
      %v5309 = vld [vmem:[%s5306 + $0x8] sm:$0xf]
      %v5310 = vld [vmem:[%s5306 + $0xc] sm:$0xf]
      %v5311 = vld [vmem:[%s5306 + $0x10] sm:$0xf]
      %v5312 = vld [vmem:[%s5306 + $0x14] sm:$0xf]
      %v5313 = vld [vmem:[%s5306 + $0x18] sm:$0xf]
      %v5314 = vld [vmem:[%s5306 + $0x1c] sm:$0xf]
      %v5315 = vld [vmem:[%s5306 + $0x20] sm:$0xf]
      %v5316 = vld [vmem:[%s5306 + $0x24] sm:$0xf]
      %v5317 = vld [vmem:[%s5306 + $0x28] sm:$0xf]
      %v5318 = vld [vmem:[%s5306 + $0x2c] sm:$0xf]
      %v5319 = vld [vmem:[%s5306 + $0x30] sm:$0xf]
      %v5320 = vld [vmem:[%s5306 + $0x34] sm:$0xf]
      %v5321 = vld [vmem:[%s5306 + $0x38] sm:$0xf]
      %v5322 = vld [vmem:[%s5306 + $0x3c] sm:$0xf]
      %v5323 = vld [vmem:[%s5306 + $0x40] sm:$0xf]
      %v5324 = vld [vmem:[%s5306 + $0x44] sm:$0xf]
      %v5325 = vld [vmem:[%s5306 + $0x48] sm:$0xf]
      %v5326 = vld [vmem:[%s5306 + $0x4c] sm:$0xf]
      %v5327 = vld [vmem:[%s5306 + $0x50] sm:$0xf]
      %v5328 = vld [vmem:[%s5306 + $0x54] sm:$0xf]
      %v5329 = vld [vmem:[%s5306 + $0x58] sm:$0xf]
      %v5330 = vld [vmem:[%s5306 + $0x5c] sm:$0xf]
      %v5331 = vld [vmem:[%s5306 + $0x60] sm:$0xf]
      %v5332 = vld [vmem:[%s5306 + $0x64] sm:$0xf]
      %v5333 = vld [vmem:[%s5306 + $0x68] sm:$0xf]
      %v5334 = vld [vmem:[%s5306 + $0x6c] sm:$0xf]
      %v5335 = vld [vmem:[%s5306 + $0x70] sm:$0xf]
      %v5336 = vld [vmem:[%s5306 + $0x74] sm:$0xf]
      %v5337 = vld [vmem:[%s5306 + $0x78] sm:$0xf]
      %v5338 = vld [vmem:[%s5306 + $0x7c] sm:$0xf]
      %v5339 = vld [vmem:[%s5306 + $0x80] sm:$0xf]
      %v5340 = vld [vmem:[%s5306 + $0x84] sm:$0xf]
      %v5341 = vld [vmem:[%s5306 + $0x88] sm:$0xf]
      %v5342 = vld [vmem:[%s5306 + $0x8c] sm:$0xf]
      %v5343 = vld [vmem:[%s5306 + $0x90] sm:$0xf]
      %v5344 = vld [vmem:[%s5306 + $0x94] sm:$0xf]
      %v5345 = vld [vmem:[%s5306 + $0x98] sm:$0xf]
      %v5346 = vld [vmem:[%s5306 + $0x9c] sm:$0xf]
      %v5347 = vld [vmem:[%s5306 + $0xa0] sm:$0xf]
      %v5348 = vld [vmem:[%s5306 + $0xa4] sm:$0xf]
      %v5349 = vld [vmem:[%s5306 + $0xa8] sm:$0xf]
      %v5350 = vld [vmem:[%s5306 + $0xac] sm:$0xf]
      %v5351 = vld [vmem:[%s5306 + $0xb0] sm:$0xf]
      %v5352 = vld [vmem:[%s5306 + $0xb4] sm:$0xf]
      %v5353 = vld [vmem:[%s5306 + $0xb8] sm:$0xf]
      %v5354 = vld [vmem:[%s5306 + $0xbc] sm:$0xf]
      %v5355 = vld [vmem:[%s5306 + $0xc0] sm:$0xf]
      %v5356 = vld [vmem:[%s5306 + $0xc4] sm:$0xf]
      %v5357 = vld [vmem:[%s5306 + $0xc8] sm:$0xf]
      %v5358 = vld [vmem:[%s5306 + $0xcc] sm:$0xf]
      %v5359 = vld [vmem:[%s5306 + $0xd0] sm:$0xf]
      %v5360 = vld [vmem:[%s5306 + $0xd4] sm:$0xf]
      %v5361 = vld [vmem:[%s5306 + $0xd8] sm:$0xf]
      %v5362 = vld [vmem:[%s5306 + $0xdc] sm:$0xf]
      %v5363 = vld [vmem:[%s5306 + $0xe0] sm:$0xf]
      %v5364 = vld [vmem:[%s5306 + $0xe4] sm:$0xf]
      %v5365 = vld [vmem:[%s5306 + $0xe8] sm:$0xf]
      %v5366 = vld [vmem:[%s5306 + $0xec] sm:$0xf]
      %v5367 = vld [vmem:[%s5306 + $0xf0] sm:$0xf]
      %v5368 = vld [vmem:[%s5306 + $0xf4] sm:$0xf]
      %v5369 = vld [vmem:[%s5306 + $0xf8] sm:$0xf]
      %v5370 = vld [vmem:[%s5306 + $0xfc] sm:$0xf]
      %v5371 = vld [vmem:[%s5306 + $0x100] sm:$0xf]
      %v5372 = vld [vmem:[%s5306 + $0x104] sm:$0xf]
      %v5373 = vld [vmem:[%s5306 + $0x108] sm:$0xf]
      %v5374 = vld [vmem:[%s5306 + $0x10c] sm:$0xf]
      %v5375 = vld [vmem:[%s5306 + $0x110] sm:$0xf]
      %v5376 = vld [vmem:[%s5306 + $0x114] sm:$0xf]
      %v5377 = vld [vmem:[%s5306 + $0x118] sm:$0xf]
      %v5378 = vld [vmem:[%s5306 + $0x11c] sm:$0xf]
      %s5379 = scalar_lea.vmem %s7, 1
      %v5380 = vld [vmem:[%s5379] sm:$0x1]
      %v5381 = vpack.c.bf16 %v5291, %v5290
      %v5382 = vpack.c.bf16 %v5293, %v5292
      %v5383 = vpack.c.bf16 %v5295, %v5294
      %v5384 = vpack.c.bf16 %v5297, %v5296
      %v5385 = vpack.c.bf16 %v5299, %v5298
      %v5386 = vpack.c.bf16 %v5301, %v5300
      %v5387 = vpack.c.bf16 %v5303, %v5302
      %v5388 = vpack.c.bf16 %v5305, %v5304
      %v5390 = vshrl.u32 %v5381, 16
      %v5392 = vrot.slane %v5390, 5
      %v5393 = vshll.u32 %v5381, 16
      %v5395 = vrot.slane %v5393, 6
      %v5396 = vor.u32 %v5392, %v5395
      %v5398 = vshrl.u32 %v5382, 16
      %v5400 = vrot.slane %v5398, 5
      %v5401 = vshll.u32 %v5382, 16
      %v5403 = vrot.slane %v5401, 6
      %v5404 = vor.u32 %v5400, %v5403
      %v5405 = vsel %vm856, %v5396, %v5404
      %v5407 = vshrl.u32 %v5383, 16
      %v5409 = vrot.slane %v5407, 5
      %v5410 = vshll.u32 %v5383, 16
      %v5412 = vrot.slane %v5410, 6
      %v5413 = vor.u32 %v5409, %v5412
      %v5414 = vsel %vm856, %v5404, %v5413
      %v5416 = vshrl.u32 %v5384, 16
      %v5418 = vrot.slane %v5416, 5
      %v5419 = vshll.u32 %v5384, 16
      %v5421 = vrot.slane %v5419, 6
      %v5422 = vor.u32 %v5418, %v5421
      %v5423 = vsel %vm856, %v5413, %v5422
      %v5425 = vshrl.u32 %v5385, 16
      %v5427 = vrot.slane %v5425, 5
      %v5428 = vshll.u32 %v5385, 16
      %v5430 = vrot.slane %v5428, 6
      %v5431 = vor.u32 %v5427, %v5430
      %v5432 = vsel %vm856, %v5422, %v5431
      %v5434 = vshrl.u32 %v5386, 16
      %v5436 = vrot.slane %v5434, 5
      %v5437 = vshll.u32 %v5386, 16
      %v5439 = vrot.slane %v5437, 6
      %v5440 = vor.u32 %v5436, %v5439
      %v5441 = vsel %vm856, %v5431, %v5440
      %v5443 = vshrl.u32 %v5387, 16
      %v5445 = vrot.slane %v5443, 5
      %v5446 = vshll.u32 %v5387, 16
      %v5448 = vrot.slane %v5446, 6
      %v5449 = vor.u32 %v5445, %v5448
      %v5450 = vsel %vm856, %v5440, %v5449
      %v5452 = vshrl.u32 %v5388, 16
      %v5454 = vrot.slane %v5452, 5
      %v5455 = vshll.u32 %v5388, 16
      %v5457 = vrot.slane %v5455, 6
      %v5458 = vor.u32 %v5454, %v5457
      %v5459 = vsel %vm856, %v5449, %v5458
      %v5468 = vsel %vm937, 0, %v5396
      %v5469 = vmul.bf16 %v5468, %v1163
      %v5470 = vmul.bf16 %v5405, %v1164
      %v5471 = vmul.bf16 %v5414, %v1165
      %v5472 = vmul.bf16 %v5423, %v1166
      %v5473 = vmul.bf16 %v5432, %v1167
      %v5474 = vmul.bf16 %v5441, %v1168
      %v5475 = vmul.bf16 %v5450, %v1169
      %v5476 = vmul.bf16 %v5459, %v1170
      %v5485 = vrot.slane %v5381, 6
      %v5486 = vrot.slane %v5382, 6
      %v5487 = vsel %vm1195, %v5485, %v5486
      %v5488 = vrot.slane %v5383, 6
      %v5489 = vsel %vm1195, %v5486, %v5488
      %v5490 = vrot.slane %v5384, 6
      %v5491 = vsel %vm1195, %v5488, %v5490
      %v5492 = vrot.slane %v5385, 6
      %v5493 = vsel %vm1195, %v5490, %v5492
      %v5494 = vrot.slane %v5386, 6
      %v5495 = vsel %vm1195, %v5492, %v5494
      %v5496 = vrot.slane %v5387, 6
      %v5497 = vsel %vm1195, %v5494, %v5496
      %v5498 = vrot.slane %v5388, 6
      %v5499 = vsel %vm1195, %v5496, %v5498
      %v5508 = vsel %vm1218, 0, %v5485
      %v5510 = vmul.bf16 %v5508, %v1447
      %v5511 = vmul.bf16 %v5487, %v1448
      %v5512 = vmul.bf16 %v5489, %v1449
      %v5513 = vmul.bf16 %v5491, %v1450
      %v5514 = vmul.bf16 %v5493, %v1451
      %v5515 = vmul.bf16 %v5495, %v1452
      %v5516 = vmul.bf16 %v5497, %v1453
      %v5517 = vmul.bf16 %v5499, %v1454
      %v5518 = vrot.slane %v5390, 6
      %v5519 = vrot.slane %v5393, 7
      %v5520 = vor.u32 %v5518, %v5519
      %v5521 = vrot.slane %v5398, 6
      %v5522 = vrot.slane %v5401, 7
      %v5523 = vor.u32 %v5521, %v5522
      %v5524 = vsel %vm1471, %v5520, %v5523
      %v5525 = vrot.slane %v5407, 6
      %v5526 = vrot.slane %v5410, 7
      %v5527 = vor.u32 %v5525, %v5526
      %v5528 = vsel %vm1471, %v5523, %v5527
      %v5529 = vrot.slane %v5416, 6
      %v5530 = vrot.slane %v5419, 7
      %v5531 = vor.u32 %v5529, %v5530
      %v5532 = vsel %vm1471, %v5527, %v5531
      %v5533 = vrot.slane %v5425, 6
      %v5534 = vrot.slane %v5428, 7
      %v5535 = vor.u32 %v5533, %v5534
      %v5536 = vsel %vm1471, %v5531, %v5535
      %v5537 = vrot.slane %v5434, 6
      %v5538 = vrot.slane %v5437, 7
      %v5539 = vor.u32 %v5537, %v5538
      %v5540 = vsel %vm1471, %v5535, %v5539
      %v5541 = vrot.slane %v5443, 6
      %v5542 = vrot.slane %v5446, 7
      %v5543 = vor.u32 %v5541, %v5542
      %v5544 = vsel %vm1471, %v5539, %v5543
      %v5545 = vrot.slane %v5452, 6
      %v5546 = vrot.slane %v5455, 7
      %v5547 = vor.u32 %v5545, %v5546
      %v5548 = vsel %vm1471, %v5543, %v5547
      %v5557 = vsel %vm1511, 0, %v5520
      %v5558 = vmul.bf16 %v5557, %v1737
      %v5559 = vmul.bf16 %v5524, %v1738
      %v5560 = vmul.bf16 %v5528, %v1739
      %v5561 = vmul.bf16 %v5532, %v1740
      %v5562 = vmul.bf16 %v5536, %v1741
      %v5563 = vmul.bf16 %v5540, %v1742
      %v5564 = vmul.bf16 %v5544, %v1743
      %v5565 = vmul.bf16 %v5548, %v1744
      %v5566 = vrot.slane %v5390, 7
      %v5567 = vor.u32 %v5566, %v5393
      %v5568 = vrot.slane %v5398, 7
      %v5569 = vor.u32 %v5568, %v5401
      %v5570 = vsel %vm1761, %v5566, %v5569
      %v5571 = vrot.slane %v5407, 7
      %v5572 = vor.u32 %v5571, %v5410
      %v5573 = vsel %vm1761, %v5568, %v5572
      %v5574 = vrot.slane %v5416, 7
      %v5575 = vor.u32 %v5574, %v5419
      %v5576 = vsel %vm1761, %v5571, %v5575
      %v5577 = vrot.slane %v5425, 7
      %v5578 = vor.u32 %v5577, %v5428
      %v5579 = vsel %vm1761, %v5574, %v5578
      %v5580 = vrot.slane %v5434, 7
      %v5581 = vor.u32 %v5580, %v5437
      %v5582 = vsel %vm1761, %v5577, %v5581
      %v5583 = vrot.slane %v5443, 7
      %v5584 = vor.u32 %v5583, %v5446
      %v5585 = vsel %vm1761, %v5580, %v5584
      %v5586 = vrot.slane %v5452, 7
      %v5587 = vor.u32 %v5586, %v5455
      %v5588 = vsel %vm1761, %v5583, %v5587
      %v5597 = vsel %vm1794, 0, %v5567
      %v5598 = vmul.bf16 %v5597, %v2020
      %v5599 = vmul.bf16 %v5570, %v2021
      %v5600 = vmul.bf16 %v5573, %v2022
      %v5601 = vmul.bf16 %v5576, %v2023
      %v5602 = vmul.bf16 %v5579, %v2024
      %v5603 = vmul.bf16 %v5582, %v2025
      %v5604 = vmul.bf16 %v5585, %v2026
      %v5605 = vmul.bf16 %v5588, %v2027
      %v5606 = vmul.bf16 %v5381, %v2268
      %v5607 = vmul.bf16 %v5382, %v2269
      %v5608 = vmul.bf16 %v5383, %v2270
      %v5609 = vmul.bf16 %v5384, %v2271
      %v5610 = vmul.bf16 %v5385, %v2272
      %v5611 = vmul.bf16 %v5386, %v2273
      %v5612 = vmul.bf16 %v5387, %v2274
      %v5613 = vmul.bf16 %v5388, %v2275
      %v5614 = vrot.slane %v5393, 1
      %v5615 = vor.u32 %v5390, %v5614
      %v5616 = vrot.slane %v5401, 1
      %v5617 = vsel %vm2292, %v5615, %v5616
      %v5618 = vor.u32 %v5398, %v5616
      %v5619 = vrot.slane %v5410, 1
      %v5620 = vsel %vm2292, %v5618, %v5619
      %v5621 = vor.u32 %v5407, %v5619
      %v5622 = vrot.slane %v5419, 1
      %v5623 = vsel %vm2292, %v5621, %v5622
      %v5624 = vor.u32 %v5416, %v5622
      %v5625 = vrot.slane %v5428, 1
      %v5626 = vsel %vm2292, %v5624, %v5625
      %v5627 = vor.u32 %v5425, %v5625
      %v5628 = vrot.slane %v5437, 1
      %v5629 = vsel %vm2292, %v5627, %v5628
      %v5630 = vor.u32 %v5434, %v5628
      %v5631 = vrot.slane %v5446, 1
      %v5632 = vsel %vm2292, %v5630, %v5631
      %v5633 = vor.u32 %v5443, %v5631
      %v5634 = vrot.slane %v5455, 1
      %v5635 = vsel %vm2292, %v5633, %v5634
      %v5636 = vor.u32 %v5452, %v5634
      %v5645 = vsel %vm2325, %v5636, 0
      %v5646 = vmul.bf16 %v5617, %v2551
      %v5647 = vmul.bf16 %v5620, %v2552
      %v5648 = vmul.bf16 %v5623, %v2553
      %v5649 = vmul.bf16 %v5626, %v2554
      %v5650 = vmul.bf16 %v5629, %v2555
      %v5651 = vmul.bf16 %v5632, %v2556
      %v5652 = vmul.bf16 %v5635, %v2557
      %v5653 = vmul.bf16 %v5645, %v2558
      %v5654 = vrot.slane %v5390, 1
      %v5655 = vrot.slane %v5393, 2
      %v5656 = vor.u32 %v5654, %v5655
      %v5657 = vrot.slane %v5398, 1
      %v5658 = vrot.slane %v5401, 2
      %v5659 = vor.u32 %v5657, %v5658
      %v5660 = vsel %vm2575, %v5656, %v5659
      %v5661 = vrot.slane %v5407, 1
      %v5662 = vrot.slane %v5410, 2
      %v5663 = vor.u32 %v5661, %v5662
      %v5664 = vsel %vm2575, %v5659, %v5663
      %v5665 = vrot.slane %v5416, 1
      %v5666 = vrot.slane %v5419, 2
      %v5667 = vor.u32 %v5665, %v5666
      %v5668 = vsel %vm2575, %v5663, %v5667
      %v5669 = vrot.slane %v5425, 1
      %v5670 = vrot.slane %v5428, 2
      %v5671 = vor.u32 %v5669, %v5670
      %v5672 = vsel %vm2575, %v5667, %v5671
      %v5673 = vrot.slane %v5434, 1
      %v5674 = vrot.slane %v5437, 2
      %v5675 = vor.u32 %v5673, %v5674
      %v5676 = vsel %vm2575, %v5671, %v5675
      %v5677 = vrot.slane %v5443, 1
      %v5678 = vrot.slane %v5446, 2
      %v5679 = vor.u32 %v5677, %v5678
      %v5680 = vsel %vm2575, %v5675, %v5679
      %v5681 = vrot.slane %v5452, 1
      %v5682 = vrot.slane %v5455, 2
      %v5683 = vor.u32 %v5681, %v5682
      %v5684 = vsel %vm2575, %v5679, %v5683
      %v5693 = vsel %vm2616, %v5683, 0
      %v5694 = vmul.bf16 %v5660, %v2842
      %v5695 = vmul.bf16 %v5664, %v2843
      %v5696 = vmul.bf16 %v5668, %v2844
      %v5697 = vmul.bf16 %v5672, %v2845
      %v5698 = vmul.bf16 %v5676, %v2846
      %v5699 = vmul.bf16 %v5680, %v2847
      %v5700 = vmul.bf16 %v5684, %v2848
      %v5701 = vmul.bf16 %v5693, %v2849
      %v5702 = vrot.slane %v5381, 2
      %v5703 = vrot.slane %v5382, 2
      %v5704 = vsel %vm2866, %v5702, %v5703
      %v5705 = vrot.slane %v5383, 2
      %v5706 = vsel %vm2866, %v5703, %v5705
      %v5707 = vrot.slane %v5384, 2
      %v5708 = vsel %vm2866, %v5705, %v5707
      %v5709 = vrot.slane %v5385, 2
      %v5710 = vsel %vm2866, %v5707, %v5709
      %v5711 = vrot.slane %v5386, 2
      %v5712 = vsel %vm2866, %v5709, %v5711
      %v5713 = vrot.slane %v5387, 2
      %v5714 = vsel %vm2866, %v5711, %v5713
      %v5715 = vrot.slane %v5388, 2
      %v5716 = vsel %vm2866, %v5713, %v5715
      %v5725 = vsel %vm2889, %v5715, 0
      %v5727 = vmul.bf16 %v5704, %v3117
      %v5728 = vmul.bf16 %v5706, %v3118
      %v5729 = vmul.bf16 %v5708, %v3119
      %v5730 = vmul.bf16 %v5710, %v3120
      %v5731 = vmul.bf16 %v5712, %v3121
      %v5732 = vmul.bf16 %v5714, %v3122
      %v5733 = vmul.bf16 %v5716, %v3123
      %v5734 = vmul.bf16 %v5725, %v3124
      %v5735 = vrot.slane %v5390, 2
      %v5736 = vrot.slane %v5393, 3
      %v5737 = vor.u32 %v5735, %v5736
      %v5738 = vrot.slane %v5398, 2
      %v5739 = vrot.slane %v5401, 3
      %v5740 = vor.u32 %v5738, %v5739
      %v5741 = vsel %vm3141, %v5737, %v5740
      %v5742 = vrot.slane %v5407, 2
      %v5743 = vrot.slane %v5410, 3
      %v5744 = vor.u32 %v5742, %v5743
      %v5745 = vsel %vm3141, %v5740, %v5744
      %v5746 = vrot.slane %v5416, 2
      %v5747 = vrot.slane %v5419, 3
      %v5748 = vor.u32 %v5746, %v5747
      %v5749 = vsel %vm3141, %v5744, %v5748
      %v5750 = vrot.slane %v5425, 2
      %v5751 = vrot.slane %v5428, 3
      %v5752 = vor.u32 %v5750, %v5751
      %v5753 = vsel %vm3141, %v5748, %v5752
      %v5754 = vrot.slane %v5434, 2
      %v5755 = vrot.slane %v5437, 3
      %v5756 = vor.u32 %v5754, %v5755
      %v5757 = vsel %vm3141, %v5752, %v5756
      %v5758 = vrot.slane %v5443, 2
      %v5759 = vrot.slane %v5446, 3
      %v5760 = vor.u32 %v5758, %v5759
      %v5761 = vsel %vm3141, %v5756, %v5760
      %v5762 = vrot.slane %v5452, 2
      %v5763 = vrot.slane %v5455, 3
      %v5764 = vor.u32 %v5762, %v5763
      %v5765 = vsel %vm3141, %v5760, %v5764
      %v5774 = vsel %vm3181, %v5764, 0
      %v5775 = vmul.bf16 %v5741, %v3407
      %v5776 = vmul.bf16 %v5745, %v3408
      %v5777 = vmul.bf16 %v5749, %v3409
      %v5778 = vmul.bf16 %v5753, %v3410
      %v5779 = vmul.bf16 %v5757, %v3411
      %v5780 = vmul.bf16 %v5761, %v3412
      %v5781 = vmul.bf16 %v5765, %v3413
      %v5782 = vmul.bf16 %v5774, %v3414
      %5791 = vrot.lane.b32.xlu0 %v5510, 64
      %v5792 = vpop.permute.xlu0 %5791
      %5793 = vrot.lane.b32.xlu0 %v5511, 64
      %v5794 = vpop.permute.xlu0 %5793
      %5795 = vrot.lane.b32.xlu0 %v5512, 64
      %v5796 = vpop.permute.xlu0 %5795
      %5797 = vrot.lane.b32.xlu0 %v5513, 64
      %v5798 = vpop.permute.xlu0 %5797
      %5799 = vrot.lane.b32.xlu0 %v5514, 64
      %v5800 = vpop.permute.xlu0 %5799
      %5801 = vrot.lane.b32.xlu0 %v5515, 64
      %v5802 = vpop.permute.xlu0 %5801
      %5803 = vrot.lane.b32.xlu0 %v5516, 64
      %v5804 = vpop.permute.xlu0 %5803
      %5805 = vrot.lane.b32.xlu0 %v5517, 64
      %v5806 = vpop.permute.xlu0 %5805
      %5815 = vrot.lane.b32.xlu0 %v5598, 64
      %v5816 = vpop.permute.xlu0 %5815
      %5817 = vrot.lane.b32.xlu0 %v5599, 64
      %v5818 = vpop.permute.xlu0 %5817
      %5819 = vrot.lane.b32.xlu0 %v5600, 64
      %v5820 = vpop.permute.xlu0 %5819
      %5821 = vrot.lane.b32.xlu0 %v5601, 64
      %v5822 = vpop.permute.xlu0 %5821
      %5823 = vrot.lane.b32.xlu0 %v5602, 64
      %v5824 = vpop.permute.xlu0 %5823
      %5825 = vrot.lane.b32.xlu0 %v5603, 64
      %v5826 = vpop.permute.xlu0 %5825
      %5827 = vrot.lane.b32.xlu0 %v5604, 64
      %v5828 = vpop.permute.xlu0 %5827
      %5829 = vrot.lane.b32.xlu0 %v5605, 64
      %v5830 = vpop.permute.xlu0 %5829
      %5839 = vrot.lane.b32.xlu0 %v5646, 64
      %v5840 = vpop.permute.xlu0 %5839
      %5841 = vrot.lane.b32.xlu0 %v5647, 64
      %v5842 = vpop.permute.xlu0 %5841
      %5843 = vrot.lane.b32.xlu0 %v5648, 64
      %v5844 = vpop.permute.xlu0 %5843
      %5845 = vrot.lane.b32.xlu0 %v5649, 64
      %v5846 = vpop.permute.xlu0 %5845
      %5847 = vrot.lane.b32.xlu0 %v5650, 64
      %v5848 = vpop.permute.xlu0 %5847
      %5849 = vrot.lane.b32.xlu0 %v5651, 64
      %v5850 = vpop.permute.xlu0 %5849
      %5851 = vrot.lane.b32.xlu0 %v5652, 64
      %v5852 = vpop.permute.xlu0 %5851
      %5853 = vrot.lane.b32.xlu0 %v5653, 64
      %v5854 = vpop.permute.xlu0 %5853
      %5863 = vrot.lane.b32.xlu0 %v5727, 64
      %v5864 = vpop.permute.xlu0 %5863
      %5865 = vrot.lane.b32.xlu0 %v5728, 64
      %v5866 = vpop.permute.xlu0 %5865
      %5867 = vrot.lane.b32.xlu0 %v5729, 64
      %v5868 = vpop.permute.xlu0 %5867
      %5869 = vrot.lane.b32.xlu0 %v5730, 64
      %v5870 = vpop.permute.xlu0 %5869
      %5871 = vrot.lane.b32.xlu0 %v5731, 64
      %v5872 = vpop.permute.xlu0 %5871
      %5873 = vrot.lane.b32.xlu0 %v5732, 64
      %v5874 = vpop.permute.xlu0 %5873
      %5875 = vrot.lane.b32.xlu0 %v5733, 64
      %v5876 = vpop.permute.xlu0 %5875
      %5877 = vrot.lane.b32.xlu0 %v5734, 64
      %v5878 = vpop.permute.xlu0 %5877
      %v5881 = vsel %vm3600, %v5469, %v5792
      %v5885 = vsel %vm3600, %v5470, %v5794
      %v5889 = vsel %vm3600, %v5471, %v5796
      %v5893 = vsel %vm3600, %v5472, %v5798
      %v5897 = vsel %vm3600, %v5473, %v5800
      %v5901 = vsel %vm3600, %v5474, %v5802
      %v5905 = vsel %vm3600, %v5475, %v5804
      %v5909 = vsel %vm3600, %v5476, %v5806
      %v5913 = vsel %vm3600, %v5558, %v5816
      %v5917 = vsel %vm3600, %v5559, %v5818
      %v5921 = vsel %vm3600, %v5560, %v5820
      %v5925 = vsel %vm3600, %v5561, %v5822
      %v5929 = vsel %vm3600, %v5562, %v5824
      %v5933 = vsel %vm3600, %v5563, %v5826
      %v5937 = vsel %vm3600, %v5564, %v5828
      %v5941 = vsel %vm3600, %v5565, %v5830
      %v5945 = vsel %vm3600, %v5606, %v5840
      %v5949 = vsel %vm3600, %v5607, %v5842
      %v5953 = vsel %vm3600, %v5608, %v5844
      %v5957 = vsel %vm3600, %v5609, %v5846
      %v5961 = vsel %vm3600, %v5610, %v5848
      %v5965 = vsel %vm3600, %v5611, %v5850
      %v5969 = vsel %vm3600, %v5612, %v5852
      %v5973 = vsel %vm3600, %v5613, %v5854
      %v5977 = vsel %vm3600, %v5694, %v5864
      %v5981 = vsel %vm3600, %v5695, %v5866
      %v5985 = vsel %vm3600, %v5696, %v5868
      %v5989 = vsel %vm3600, %v5697, %v5870
      %v5993 = vsel %vm3600, %v5698, %v5872
      %v5997 = vsel %vm3600, %v5699, %v5874
      %v6001 = vsel %vm3600, %v5700, %v5876
      %v6005 = vsel %vm3600, %v5701, %v5878
      %v6008 = vlaneseq
      %v6009 = vshrl.u32 %v6008, 7
      %v6010 = vsub.s32 0, %v6009
      %v6011 = vrot.slane %v5380, %v6010
      %v6085 = vunpack.c.l.b16 %v5307
      %v6086 = vunpack.c.l.b16 %v5308
      %v6087 = vunpack.c.l.b16 %v5309
      %v6088 = vunpack.c.l.b16 %v5310
      %v6089 = vunpack.c.l.b16 %v5311
      %v6090 = vunpack.c.l.b16 %v5312
      %v6091 = vunpack.c.l.b16 %v5313
      %v6092 = vunpack.c.l.b16 %v5314
      %v6093 = vunpack.c.l.b16 %v5315
      %v6094 = vunpack.c.l.b16 %v5316
      %v6095 = vunpack.c.l.b16 %v5317
      %v6096 = vunpack.c.l.b16 %v5318
      %v6097 = vunpack.c.l.b16 %v5319
      %v6098 = vunpack.c.l.b16 %v5320
      %v6099 = vunpack.c.l.b16 %v5321
      %v6100 = vunpack.c.l.b16 %v5322
      %v6101 = vunpack.c.l.b16 %v5323
      %v6102 = vunpack.c.l.b16 %v5324
      %v6103 = vunpack.c.l.b16 %v5325
      %v6104 = vunpack.c.l.b16 %v5326
      %v6105 = vunpack.c.l.b16 %v5327
      %v6106 = vunpack.c.l.b16 %v5328
      %v6107 = vunpack.c.l.b16 %v5329
      %v6108 = vunpack.c.l.b16 %v5330
      %v6109 = vunpack.c.l.b16 %v5331
      %v6110 = vunpack.c.l.b16 %v5332
      %v6111 = vunpack.c.l.b16 %v5333
      %v6112 = vunpack.c.l.b16 %v5334
      %v6113 = vunpack.c.l.b16 %v5335
      %v6114 = vunpack.c.l.b16 %v5336
      %v6115 = vunpack.c.l.b16 %v5337
      %v6116 = vunpack.c.l.b16 %v5338
      %v6117 = vunpack.c.l.b16 %v5339
      %v6118 = vunpack.c.l.b16 %v5340
      %v6119 = vunpack.c.l.b16 %v5341
      %v6120 = vunpack.c.l.b16 %v5342
      %v6121 = vunpack.c.l.b16 %v5343
      %v6122 = vunpack.c.l.b16 %v5344
      %v6123 = vunpack.c.l.b16 %v5345
      %v6124 = vunpack.c.l.b16 %v5346
      %v6125 = vunpack.c.l.b16 %v5347
      %v6126 = vunpack.c.l.b16 %v5348
      %v6127 = vunpack.c.l.b16 %v5349
      %v6128 = vunpack.c.l.b16 %v5350
      %v6129 = vunpack.c.l.b16 %v5351
      %v6130 = vunpack.c.l.b16 %v5352
      %v6131 = vunpack.c.l.b16 %v5353
      %v6132 = vunpack.c.l.b16 %v5354
      %v6133 = vunpack.c.l.b16 %v5355
      %v6134 = vunpack.c.l.b16 %v5356
      %v6135 = vunpack.c.l.b16 %v5357
      %v6136 = vunpack.c.l.b16 %v5358
      %v6137 = vunpack.c.l.b16 %v5359
      %v6138 = vunpack.c.l.b16 %v5360
      %v6139 = vunpack.c.l.b16 %v5361
      %v6140 = vunpack.c.l.b16 %v5362
      %v6141 = vunpack.c.l.b16 %v5363
      %v6142 = vunpack.c.l.b16 %v5364
      %v6143 = vunpack.c.l.b16 %v5365
      %v6144 = vunpack.c.l.b16 %v5366
      %v6145 = vunpack.c.l.b16 %v5367
      %v6146 = vunpack.c.l.b16 %v5368
      %v6147 = vunpack.c.l.b16 %v5369
      %v6148 = vunpack.c.l.b16 %v5370
      %v6149 = vunpack.c.l.b16 %v5371
      %v6150 = vunpack.c.l.b16 %v5372
      %v6151 = vunpack.c.l.b16 %v5373
      %v6152 = vunpack.c.l.b16 %v5374
      %v6153 = vunpack.c.l.b16 %v5375
      %v6154 = vunpack.c.l.b16 %v5376
      %v6155 = vunpack.c.l.b16 %v5377
      %v6156 = vunpack.c.l.b16 %v5378
      %v6157 = vpack.c.b16 %v6086, %v6085
      %v6158 = vpack.c.b16 %v6088, %v6087
      %v6159 = vpack.c.b16 %v6090, %v6089
      %v6160 = vpack.c.b16 %v6092, %v6091
      %v6161 = vpack.c.b16 %v6094, %v6093
      %v6162 = vpack.c.b16 %v6096, %v6095
      %v6163 = vpack.c.b16 %v6098, %v6097
      %v6164 = vpack.c.b16 %v6100, %v6099
      %v6165 = vpack.c.b16 %v6102, %v6101
      %v6166 = vpack.c.b16 %v6104, %v6103
      %v6167 = vpack.c.b16 %v6106, %v6105
      %v6168 = vpack.c.b16 %v6108, %v6107
      %v6169 = vpack.c.b16 %v6110, %v6109
      %v6170 = vpack.c.b16 %v6112, %v6111
      %v6171 = vpack.c.b16 %v6114, %v6113
      %v6172 = vpack.c.b16 %v6116, %v6115
      %v6173 = vpack.c.b16 %v6118, %v6117
      %v6174 = vpack.c.b16 %v6120, %v6119
      %v6175 = vpack.c.b16 %v6122, %v6121
      %v6176 = vpack.c.b16 %v6124, %v6123
      %v6177 = vpack.c.b16 %v6126, %v6125
      %v6178 = vpack.c.b16 %v6128, %v6127
      %v6179 = vpack.c.b16 %v6130, %v6129
      %v6180 = vpack.c.b16 %v6132, %v6131
      %v6181 = vpack.c.b16 %v6134, %v6133
      %v6182 = vpack.c.b16 %v6136, %v6135
      %v6183 = vpack.c.b16 %v6138, %v6137
      %v6184 = vpack.c.b16 %v6140, %v6139
      %v6185 = vpack.c.b16 %v6142, %v6141
      %v6186 = vpack.c.b16 %v6144, %v6143
      %v6187 = vpack.c.b16 %v6146, %v6145
      %v6188 = vpack.c.b16 %v6148, %v6147
      %v6189 = vpack.c.b16 %v6150, %v6149
      %v6190 = vpack.c.b16 %v6152, %v6151
      %v6191 = vpack.c.b16 %v6154, %v6153
      %v6192 = vpack.c.b16 %v6156, %v6155
      %v6230 = vsel %vm3600, %v5775, 0
      %v6233 = vsel %vm3600, %v5776, 0
      %v6236 = vsel %vm3600, %v5777, 0
      %v6239 = vsel %vm3600, %v5778, 0
      %v6242 = vsel %vm3600, %v5779, 0
      %v6245 = vsel %vm3600, %v5780, 0
      %v6248 = vsel %vm3600, %v5781, 0
      %v6251 = vsel %vm3600, %v5782, 0
      %6253 = vmatprep.subr.bf16.mxu0 0
      %6254 = vmatpush1.bf16.msra.mxu0 %v6164
      %6255 = vmatprep.subr.bf16.mxu0 0
      %6256 = vmatpush1.bf16.msra.mxu0 %v6163
      %6257 = vmatprep.subr.bf16.mxu0 0
      %6258 = vmatpush1.bf16.msra.mxu0 %v6162
      %6259 = vmatprep.subr.bf16.mxu0 0
      %6260 = vmatpush1.bf16.msra.mxu0 %v6161
      %6261 = vmatprep.subr.bf16.mxu0 0
      %6262 = vmatpush1.bf16.msra.mxu0 %v6160
      %6263 = vmatprep.subr.bf16.mxu0 0
      %6264 = vmatpush1.bf16.msra.mxu0 %v6159
      %6265 = vmatprep.subr.bf16.mxu0 0
      %6266 = vmatpush1.bf16.msra.mxu0 %v6158
      %6267 = vmatprep.subr.bf16.mxu0 0
      %6268 = vmatpush1.bf16.msra.mxu0 %v6157
      %6269 = vmatprep.subr.bf16.mxu0 0
      %6270 = vmatpush2.bf16.msra.mxu0 %v6172
      %6271 = vmatprep.subr.bf16.mxu0 0
      %6272 = vmatpush2.bf16.msra.mxu0 %v6171
      %6273 = vmatprep.subr.bf16.mxu0 0
      %6274 = vmatpush2.bf16.msra.mxu0 %v6170
      %6275 = vmatprep.subr.bf16.mxu0 0
      %6276 = vmatpush2.bf16.msra.mxu0 %v6169
      %6277 = vmatprep.subr.bf16.mxu0 0
      %6278 = vmatpush2.bf16.msra.mxu0 %v6168
      %6279 = vmatprep.subr.bf16.mxu0 0
      %6280 = vmatpush2.bf16.msra.mxu0 %v6167
      %6281 = vmatprep.subr.bf16.mxu0 0
      %6282 = vmatpush2.bf16.msra.mxu0 %v6166
      %6283 = vmatprep.subr.bf16.mxu0 0
      %6284 = vmatpush2.bf16.msra.mxu0 %v6165
      %6285 = vmatprep.mubr.bf16.mxu0 %v5913
      %6286 = vmatmul.mubr.bf16.gmra.mxu0 %v5881
      %v6287 = vpop.f32.mrf.mxu0
      %v6288 = vadd.f32 %v6011, %v6287
      %v6289 = vpop.f32.mrf.mxu0
      %v6290 = vpop.f32.mrf.mxu0
      %v6291 = vadd.f32 %v6011, %v6290
      %v6292 = vpop.f32.mrf.mxu0
      %6293 = vmatprep.mubr.bf16.mxu0 %v5917
      %6294 = vmatmul.mubr.bf16.gmra.mxu0 %v5885
      %v6295 = vpop.f32.mrf.mxu0
      %v6296 = vadd.f32 %v6011, %v6295
      %v6297 = vpop.f32.mrf.mxu0
      %v6298 = vpop.f32.mrf.mxu0
      %v6299 = vadd.f32 %v6011, %v6298
      %v6300 = vpop.f32.mrf.mxu0
      %6301 = vmatprep.mubr.bf16.mxu0 %v5921
      %6302 = vmatmul.mubr.bf16.gmra.mxu0 %v5889
      %v6303 = vpop.f32.mrf.mxu0
      %v6304 = vadd.f32 %v6011, %v6303
      %v6305 = vpop.f32.mrf.mxu0
      %v6306 = vpop.f32.mrf.mxu0
      %v6307 = vadd.f32 %v6011, %v6306
      %v6308 = vpop.f32.mrf.mxu0
      %6309 = vmatprep.mubr.bf16.mxu0 %v5925
      %6310 = vmatmul.mubr.bf16.gmra.mxu0 %v5893
      %v6311 = vpop.f32.mrf.mxu0
      %v6312 = vadd.f32 %v6011, %v6311
      %v6313 = vpop.f32.mrf.mxu0
      %v6314 = vpop.f32.mrf.mxu0
      %v6315 = vadd.f32 %v6011, %v6314
      %v6316 = vpop.f32.mrf.mxu0
      %6317 = vmatprep.mubr.bf16.mxu0 %v5929
      %6318 = vmatmul.mubr.bf16.gmra.mxu0 %v5897
      %v6319 = vpop.f32.mrf.mxu0
      %v6320 = vadd.f32 %v6011, %v6319
      %v6321 = vpop.f32.mrf.mxu0
      %v6322 = vpop.f32.mrf.mxu0
      %v6323 = vadd.f32 %v6011, %v6322
      %v6324 = vpop.f32.mrf.mxu0
      %6325 = vmatprep.mubr.bf16.mxu0 %v5933
      %6326 = vmatmul.mubr.bf16.gmra.mxu0 %v5901
      %v6327 = vpop.f32.mrf.mxu0
      %v6328 = vadd.f32 %v6011, %v6327
      %v6329 = vpop.f32.mrf.mxu0
      %v6330 = vpop.f32.mrf.mxu0
      %v6331 = vadd.f32 %v6011, %v6330
      %v6332 = vpop.f32.mrf.mxu0
      %6333 = vmatprep.mubr.bf16.mxu0 %v5937
      %6334 = vmatmul.mubr.bf16.gmra.mxu0 %v5905
      %v6335 = vpop.f32.mrf.mxu0
      %v6336 = vadd.f32 %v6011, %v6335
      %v6337 = vpop.f32.mrf.mxu0
      %v6338 = vpop.f32.mrf.mxu0
      %v6339 = vadd.f32 %v6011, %v6338
      %v6340 = vpop.f32.mrf.mxu0
      %6341 = vmatprep.mubr.bf16.mxu0 %v5941
      %6342 = vmatmul.mubr.bf16.gmra.mxu0 %v5909
      %v6343 = vpop.f32.mrf.mxu0
      %v6344 = vadd.f32 %v6011, %v6343
      %v6345 = vpop.f32.mrf.mxu0
      %v6346 = vpop.f32.mrf.mxu0
      %v6347 = vadd.f32 %v6011, %v6346
      %v6348 = vpop.f32.mrf.mxu0
      %6349 = vdwg.mxu0
      %6350 = vmatprep.subr.bf16.mxu0 0
      %6351 = vmatpush1.bf16.msra.mxu0 %v6180
      %6352 = vmatprep.subr.bf16.mxu0 0
      %6353 = vmatpush1.bf16.msra.mxu0 %v6179
      %6354 = vmatprep.subr.bf16.mxu0 0
      %6355 = vmatpush1.bf16.msra.mxu0 %v6178
      %6356 = vmatprep.subr.bf16.mxu0 0
      %6357 = vmatpush1.bf16.msra.mxu0 %v6177
      %6358 = vmatprep.subr.bf16.mxu0 0
      %6359 = vmatpush1.bf16.msra.mxu0 %v6176
      %6360 = vmatprep.subr.bf16.mxu0 0
      %6361 = vmatpush1.bf16.msra.mxu0 %v6175
      %6362 = vmatprep.subr.bf16.mxu0 0
      %6363 = vmatpush1.bf16.msra.mxu0 %v6174
      %6364 = vmatprep.subr.bf16.mxu0 0
      %6365 = vmatpush1.bf16.msra.mxu0 %v6173
      %6366 = vmatprep.subr.bf16.mxu0 0
      %6367 = vmatpush2.bf16.msra.mxu0 %v6188
      %6368 = vmatprep.subr.bf16.mxu0 0
      %6369 = vmatpush2.bf16.msra.mxu0 %v6187
      %6370 = vmatprep.subr.bf16.mxu0 0
      %6371 = vmatpush2.bf16.msra.mxu0 %v6186
      %6372 = vmatprep.subr.bf16.mxu0 0
      %6373 = vmatpush2.bf16.msra.mxu0 %v6185
      %6374 = vmatprep.subr.bf16.mxu0 0
      %6375 = vmatpush2.bf16.msra.mxu0 %v6184
      %6376 = vmatprep.subr.bf16.mxu0 0
      %6377 = vmatpush2.bf16.msra.mxu0 %v6183
      %6378 = vmatprep.subr.bf16.mxu0 0
      %6379 = vmatpush2.bf16.msra.mxu0 %v6182
      %6380 = vmatprep.subr.bf16.mxu0 0
      %6381 = vmatpush2.bf16.msra.mxu0 %v6181
      %6382 = vmatprep.mubr.bf16.mxu0 %v5977
      %6383 = vmatmul.mubr.bf16.gmra.mxu0 %v5945
      %v6384 = vpop.f32.mrf.mxu0
      %v6385 = vadd.f32 %v6288, %v6384
      %v6386 = vpop.f32.mrf.mxu0
      %v6387 = vpop.f32.mrf.mxu0
      %v6388 = vadd.f32 %v6291, %v6387
      %v6389 = vpop.f32.mrf.mxu0
      %6390 = vmatprep.mubr.bf16.mxu0 %v5981
      %6391 = vmatmul.mubr.bf16.gmra.mxu0 %v5949
      %v6392 = vpop.f32.mrf.mxu0
      %v6393 = vadd.f32 %v6296, %v6392
      %v6394 = vpop.f32.mrf.mxu0
      %v6395 = vpop.f32.mrf.mxu0
      %v6396 = vadd.f32 %v6299, %v6395
      %v6397 = vpop.f32.mrf.mxu0
      %6398 = vmatprep.mubr.bf16.mxu0 %v5985
      %6399 = vmatmul.mubr.bf16.gmra.mxu0 %v5953
      %v6400 = vpop.f32.mrf.mxu0
      %v6401 = vadd.f32 %v6304, %v6400
      %v6402 = vpop.f32.mrf.mxu0
      %v6403 = vpop.f32.mrf.mxu0
      %v6404 = vadd.f32 %v6307, %v6403
      %v6405 = vpop.f32.mrf.mxu0
      %6406 = vmatprep.mubr.bf16.mxu0 %v5989
      %6407 = vmatmul.mubr.bf16.gmra.mxu0 %v5957
      %v6408 = vpop.f32.mrf.mxu0
      %v6409 = vadd.f32 %v6312, %v6408
      %v6410 = vpop.f32.mrf.mxu0
      %v6411 = vpop.f32.mrf.mxu0
      %v6412 = vadd.f32 %v6315, %v6411
      %v6413 = vpop.f32.mrf.mxu0
      %6414 = vmatprep.mubr.bf16.mxu0 %v5993
      %6415 = vmatmul.mubr.bf16.gmra.mxu0 %v5961
      %v6416 = vpop.f32.mrf.mxu0
      %v6417 = vadd.f32 %v6320, %v6416
      %v6418 = vpop.f32.mrf.mxu0
      %v6419 = vpop.f32.mrf.mxu0
      %v6420 = vadd.f32 %v6323, %v6419
      %v6421 = vpop.f32.mrf.mxu0
      %6422 = vmatprep.mubr.bf16.mxu0 %v5997
      %6423 = vmatmul.mubr.bf16.gmra.mxu0 %v5965
      %v6424 = vpop.f32.mrf.mxu0
      %v6425 = vadd.f32 %v6328, %v6424
      %v6426 = vpop.f32.mrf.mxu0
      %v6427 = vpop.f32.mrf.mxu0
      %v6428 = vadd.f32 %v6331, %v6427
      %v6429 = vpop.f32.mrf.mxu0
      %6430 = vmatprep.mubr.bf16.mxu0 %v6001
      %6431 = vmatmul.mubr.bf16.gmra.mxu0 %v5969
      %v6432 = vpop.f32.mrf.mxu0
      %v6433 = vadd.f32 %v6336, %v6432
      %v6434 = vpop.f32.mrf.mxu0
      %v6435 = vpop.f32.mrf.mxu0
      %v6436 = vadd.f32 %v6339, %v6435
      %v6437 = vpop.f32.mrf.mxu0
      %6438 = vmatprep.mubr.bf16.mxu0 %v6005
      %6439 = vmatmul.mubr.bf16.gmra.mxu0 %v5973
      %v6440 = vpop.f32.mrf.mxu0
      %v6441 = vadd.f32 %v6344, %v6440
      %v6442 = vpop.f32.mrf.mxu0
      %v6443 = vpop.f32.mrf.mxu0
      %v6444 = vadd.f32 %v6347, %v6443
      %v6445 = vpop.f32.mrf.mxu0
      %6446 = vdwg.mxu0
      %6447 = vmatprep.subr.bf16.mxu0 0
      %6448 = vmatpush1.bf16.msra.mxu0 0
      %6449 = vmatprep.subr.bf16.mxu0 0
      %6450 = vmatpush1.bf16.msra.mxu0 0
      %6451 = vmatprep.subr.bf16.mxu0 0
      %6452 = vmatpush1.bf16.msra.mxu0 0
      %6453 = vmatprep.subr.bf16.mxu0 0
      %6454 = vmatpush1.bf16.msra.mxu0 0
      %6455 = vmatprep.subr.bf16.mxu0 0
      %6456 = vmatpush1.bf16.msra.mxu0 %v6192
      %6457 = vmatprep.subr.bf16.mxu0 0
      %6458 = vmatpush1.bf16.msra.mxu0 %v6191
      %6459 = vmatprep.subr.bf16.mxu0 0
      %6460 = vmatpush1.bf16.msra.mxu0 %v6190
      %6461 = vmatprep.subr.bf16.mxu0 0
      %6462 = vmatpush1.bf16.msra.mxu0 %v6189
      %6463 = vmatprep.subr.bf16.mxu0 0
      %6464 = vmatpush2.bf16.msra.mxu0 0
      %6465 = vmatprep.subr.bf16.mxu0 0
      %6466 = vmatpush2.bf16.msra.mxu0 0
      %6467 = vmatprep.subr.bf16.mxu0 0
      %6468 = vmatpush2.bf16.msra.mxu0 0
      %6469 = vmatprep.subr.bf16.mxu0 0
      %6470 = vmatpush2.bf16.msra.mxu0 0
      %6471 = vmatprep.subr.bf16.mxu0 0
      %6472 = vmatpush2.bf16.msra.mxu0 0
      %6473 = vmatprep.subr.bf16.mxu0 0
      %6474 = vmatpush2.bf16.msra.mxu0 0
      %6475 = vmatprep.subr.bf16.mxu0 0
      %6476 = vmatpush2.bf16.msra.mxu0 0
      %6477 = vmatprep.subr.bf16.mxu0 0
      %6478 = vmatpush2.bf16.msra.mxu0 0
      %6479 = vmatprep.mubr.bf16.mxu0 0
      %6480 = vmatmul.mubr.bf16.gmra.mxu0 %v6230
      %v6481 = vpop.f32.mrf.mxu0
      %v6482 = vadd.f32 %v6385, %v6481
      %v6483 = vpop.f32.mrf.mxu0
      %v6484 = vpop.f32.mrf.mxu0
      %v6485 = vadd.f32 %v6388, %v6484
      %v6486 = vpop.f32.mrf.mxu0
      %6487 = vmatprep.mubr.bf16.mxu0 0
      %6488 = vmatmul.mubr.bf16.gmra.mxu0 %v6233
      %v6489 = vpop.f32.mrf.mxu0
      %v6490 = vadd.f32 %v6393, %v6489
      %v6491 = vpop.f32.mrf.mxu0
      %v6492 = vpop.f32.mrf.mxu0
      %v6493 = vadd.f32 %v6396, %v6492
      %v6494 = vpop.f32.mrf.mxu0
      %6495 = vmatprep.mubr.bf16.mxu0 0
      %6496 = vmatmul.mubr.bf16.gmra.mxu0 %v6236
      %v6497 = vpop.f32.mrf.mxu0
      %v6498 = vadd.f32 %v6401, %v6497
      %v6499 = vpop.f32.mrf.mxu0
      %v6500 = vpop.f32.mrf.mxu0
      %v6501 = vadd.f32 %v6404, %v6500
      %v6502 = vpop.f32.mrf.mxu0
      %6503 = vmatprep.mubr.bf16.mxu0 0
      %6504 = vmatmul.mubr.bf16.gmra.mxu0 %v6239
      %v6505 = vpop.f32.mrf.mxu0
      %v6506 = vadd.f32 %v6409, %v6505
      %v6507 = vpop.f32.mrf.mxu0
      %v6508 = vpop.f32.mrf.mxu0
      %v6509 = vadd.f32 %v6412, %v6508
      %v6510 = vpop.f32.mrf.mxu0
      %6511 = vmatprep.mubr.bf16.mxu0 0
      %6512 = vmatmul.mubr.bf16.gmra.mxu0 %v6242
      %v6513 = vpop.f32.mrf.mxu0
      %v6514 = vadd.f32 %v6417, %v6513
      %v6515 = vpop.f32.mrf.mxu0
      %v6516 = vpop.f32.mrf.mxu0
      %v6517 = vadd.f32 %v6420, %v6516
      %v6518 = vpop.f32.mrf.mxu0
      %6519 = vmatprep.mubr.bf16.mxu0 0
      %6520 = vmatmul.mubr.bf16.gmra.mxu0 %v6245
      %v6521 = vpop.f32.mrf.mxu0
      %v6522 = vadd.f32 %v6425, %v6521
      %v6523 = vpop.f32.mrf.mxu0
      %v6524 = vpop.f32.mrf.mxu0
      %v6525 = vadd.f32 %v6428, %v6524
      %v6526 = vpop.f32.mrf.mxu0
      %6527 = vmatprep.mubr.bf16.mxu0 0
      %6528 = vmatmul.mubr.bf16.gmra.mxu0 %v6248
      %v6529 = vpop.f32.mrf.mxu0
      %v6530 = vadd.f32 %v6433, %v6529
      %v6531 = vpop.f32.mrf.mxu0
      %v6532 = vpop.f32.mrf.mxu0
      %v6533 = vadd.f32 %v6436, %v6532
      %v6534 = vpop.f32.mrf.mxu0
      %6535 = vmatprep.mubr.bf16.mxu0 0
      %6536 = vmatmul.mubr.bf16.gmra.mxu0 %v6251
      %v6537 = vpop.f32.mrf.mxu0
      %v6538 = vadd.f32 %v6441, %v6537
      %v6539 = vpop.f32.mrf.mxu0
      %v6540 = vpop.f32.mrf.mxu0
      %v6541 = vadd.f32 %v6444, %v6540
      %v6542 = vpop.f32.mrf.mxu0
      %6543 = vdwg.mxu0
      %v6544 = vadd.f32 %v6482, %v4038
      %v6545 = vadd.f32 %v6485, %v4039
      %v6546 = vadd.f32 %v6490, %v4040
      %v6547 = vadd.f32 %v6493, %v4041
      %v6548 = vadd.f32 %v6498, %v4042
      %v6549 = vadd.f32 %v6501, %v4043
      %v6550 = vadd.f32 %v6506, %v4044
      %v6551 = vadd.f32 %v6509, %v4045
      %v6552 = vadd.f32 %v6514, %v4046
      %v6553 = vadd.f32 %v6517, %v4047
      %v6554 = vadd.f32 %v6522, %v4048
      %v6555 = vadd.f32 %v6525, %v4049
      %v6556 = vadd.f32 %v6530, %v4050
      %v6557 = vadd.f32 %v6533, %v4051
      %v6558 = vadd.f32 %v6538, %v4052
      %v6559 = vadd.f32 %v6541, %v4053
      %v6560 = vmax.f32 %v6544, 0.0
      %v6561 = vmax.f32 %v6545, 0.0
      %v6562 = vmax.f32 %v6546, 0.0
      %v6563 = vmax.f32 %v6547, 0.0
      %v6564 = vmax.f32 %v6548, 0.0
      %v6565 = vmax.f32 %v6549, 0.0
      %v6566 = vmax.f32 %v6550, 0.0
      %v6567 = vmax.f32 %v6551, 0.0
      %v6568 = vmax.f32 %v6552, 0.0
      %v6569 = vmax.f32 %v6553, 0.0
      %v6570 = vmax.f32 %v6554, 0.0
      %v6571 = vmax.f32 %v6555, 0.0
      %v6572 = vmax.f32 %v6556, 0.0
      %v6573 = vmax.f32 %v6557, 0.0
      %v6574 = vmax.f32 %v6558, 0.0
      %v6575 = vmax.f32 %v6559, 0.0
      %s6576 = scalar_lea.vmem %s6, 576
      %v6577 = vld [vmem:[%s6576] sm:$0xf]
      %v6578 = vld [vmem:[%s6576 + $0x4] sm:$0xf]
      %v6579 = vld [vmem:[%s6576 + $0x8] sm:$0xf]
      %v6580 = vld [vmem:[%s6576 + $0xc] sm:$0xf]
      %v6581 = vld [vmem:[%s6576 + $0x10] sm:$0xf]
      %v6582 = vld [vmem:[%s6576 + $0x14] sm:$0xf]
      %v6583 = vld [vmem:[%s6576 + $0x18] sm:$0xf]
      %v6584 = vld [vmem:[%s6576 + $0x1c] sm:$0xf]
      %v6585 = vld [vmem:[%s6576 + $0x20] sm:$0xf]
      %v6586 = vld [vmem:[%s6576 + $0x24] sm:$0xf]
      %v6587 = vld [vmem:[%s6576 + $0x28] sm:$0xf]
      %v6588 = vld [vmem:[%s6576 + $0x2c] sm:$0xf]
      %v6589 = vld [vmem:[%s6576 + $0x30] sm:$0xf]
      %v6590 = vld [vmem:[%s6576 + $0x34] sm:$0xf]
      %v6591 = vld [vmem:[%s6576 + $0x38] sm:$0xf]
      %v6592 = vld [vmem:[%s6576 + $0x3c] sm:$0xf]
      %v6593 = vld [vmem:[%s6576 + $0x40] sm:$0xf]
      %v6594 = vld [vmem:[%s6576 + $0x44] sm:$0xf]
      %v6595 = vld [vmem:[%s6576 + $0x48] sm:$0xf]
      %v6596 = vld [vmem:[%s6576 + $0x4c] sm:$0xf]
      %v6597 = vld [vmem:[%s6576 + $0x50] sm:$0xf]
      %v6598 = vld [vmem:[%s6576 + $0x54] sm:$0xf]
      %v6599 = vld [vmem:[%s6576 + $0x58] sm:$0xf]
      %v6600 = vld [vmem:[%s6576 + $0x5c] sm:$0xf]
      %v6601 = vld [vmem:[%s6576 + $0x60] sm:$0xf]
      %v6602 = vld [vmem:[%s6576 + $0x64] sm:$0xf]
      %v6603 = vld [vmem:[%s6576 + $0x68] sm:$0xf]
      %v6604 = vld [vmem:[%s6576 + $0x6c] sm:$0xf]
      %v6605 = vld [vmem:[%s6576 + $0x70] sm:$0xf]
      %v6606 = vld [vmem:[%s6576 + $0x74] sm:$0xf]
      %v6607 = vld [vmem:[%s6576 + $0x78] sm:$0xf]
      %v6608 = vld [vmem:[%s6576 + $0x7c] sm:$0xf]
      %v6609 = vld [vmem:[%s6576 + $0x80] sm:$0xf]
      %v6610 = vld [vmem:[%s6576 + $0x84] sm:$0xf]
      %v6611 = vld [vmem:[%s6576 + $0x88] sm:$0xf]
      %v6612 = vld [vmem:[%s6576 + $0x8c] sm:$0xf]
      %v6613 = vld [vmem:[%s6576 + $0x90] sm:$0xf]
      %v6614 = vld [vmem:[%s6576 + $0x94] sm:$0xf]
      %v6615 = vld [vmem:[%s6576 + $0x98] sm:$0xf]
      %v6616 = vld [vmem:[%s6576 + $0x9c] sm:$0xf]
      %v6617 = vld [vmem:[%s6576 + $0xa0] sm:$0xf]
      %v6618 = vld [vmem:[%s6576 + $0xa4] sm:$0xf]
      %v6619 = vld [vmem:[%s6576 + $0xa8] sm:$0xf]
      %v6620 = vld [vmem:[%s6576 + $0xac] sm:$0xf]
      %v6621 = vld [vmem:[%s6576 + $0xb0] sm:$0xf]
      %v6622 = vld [vmem:[%s6576 + $0xb4] sm:$0xf]
      %v6623 = vld [vmem:[%s6576 + $0xb8] sm:$0xf]
      %v6624 = vld [vmem:[%s6576 + $0xbc] sm:$0xf]
      %v6625 = vld [vmem:[%s6576 + $0xc0] sm:$0xf]
      %v6626 = vld [vmem:[%s6576 + $0xc4] sm:$0xf]
      %v6627 = vld [vmem:[%s6576 + $0xc8] sm:$0xf]
      %v6628 = vld [vmem:[%s6576 + $0xcc] sm:$0xf]
      %v6629 = vld [vmem:[%s6576 + $0xd0] sm:$0xf]
      %v6630 = vld [vmem:[%s6576 + $0xd4] sm:$0xf]
      %v6631 = vld [vmem:[%s6576 + $0xd8] sm:$0xf]
      %v6632 = vld [vmem:[%s6576 + $0xdc] sm:$0xf]
      %v6633 = vld [vmem:[%s6576 + $0xe0] sm:$0xf]
      %v6634 = vld [vmem:[%s6576 + $0xe4] sm:$0xf]
      %v6635 = vld [vmem:[%s6576 + $0xe8] sm:$0xf]
      %v6636 = vld [vmem:[%s6576 + $0xec] sm:$0xf]
      %v6637 = vld [vmem:[%s6576 + $0xf0] sm:$0xf]
      %v6638 = vld [vmem:[%s6576 + $0xf4] sm:$0xf]
      %v6639 = vld [vmem:[%s6576 + $0xf8] sm:$0xf]
      %v6640 = vld [vmem:[%s6576 + $0xfc] sm:$0xf]
      %v6641 = vld [vmem:[%s6576 + $0x100] sm:$0xf]
      %v6642 = vld [vmem:[%s6576 + $0x104] sm:$0xf]
      %v6643 = vld [vmem:[%s6576 + $0x108] sm:$0xf]
      %v6644 = vld [vmem:[%s6576 + $0x10c] sm:$0xf]
      %v6645 = vld [vmem:[%s6576 + $0x110] sm:$0xf]
      %v6646 = vld [vmem:[%s6576 + $0x114] sm:$0xf]
      %v6647 = vld [vmem:[%s6576 + $0x118] sm:$0xf]
      %v6648 = vld [vmem:[%s6576 + $0x11c] sm:$0xf]
      %s6649 = scalar_lea.vmem %s7, 2
      %v6650 = vld [vmem:[%s6649] sm:$0x1]
      %v6651 = vpack.c.bf16 %v6561, %v6560
      %v6652 = vpack.c.bf16 %v6563, %v6562
      %v6653 = vpack.c.bf16 %v6565, %v6564
      %v6654 = vpack.c.bf16 %v6567, %v6566
      %v6655 = vpack.c.bf16 %v6569, %v6568
      %v6656 = vpack.c.bf16 %v6571, %v6570
      %v6657 = vpack.c.bf16 %v6573, %v6572
      %v6658 = vpack.c.bf16 %v6575, %v6574
      %v6660 = vshrl.u32 %v6651, 16
      %v6662 = vrot.slane %v6660, 5
      %v6663 = vshll.u32 %v6651, 16
      %v6665 = vrot.slane %v6663, 6
      %v6666 = vor.u32 %v6662, %v6665
      %v6668 = vshrl.u32 %v6652, 16
      %v6670 = vrot.slane %v6668, 5
      %v6671 = vshll.u32 %v6652, 16
      %v6673 = vrot.slane %v6671, 6
      %v6674 = vor.u32 %v6670, %v6673
      %v6675 = vsel %vm856, %v6666, %v6674
      %v6677 = vshrl.u32 %v6653, 16
      %v6679 = vrot.slane %v6677, 5
      %v6680 = vshll.u32 %v6653, 16
      %v6682 = vrot.slane %v6680, 6
      %v6683 = vor.u32 %v6679, %v6682
      %v6684 = vsel %vm856, %v6674, %v6683
      %v6686 = vshrl.u32 %v6654, 16
      %v6688 = vrot.slane %v6686, 5
      %v6689 = vshll.u32 %v6654, 16
      %v6691 = vrot.slane %v6689, 6
      %v6692 = vor.u32 %v6688, %v6691
      %v6693 = vsel %vm856, %v6683, %v6692
      %v6695 = vshrl.u32 %v6655, 16
      %v6697 = vrot.slane %v6695, 5
      %v6698 = vshll.u32 %v6655, 16
      %v6700 = vrot.slane %v6698, 6
      %v6701 = vor.u32 %v6697, %v6700
      %v6702 = vsel %vm856, %v6692, %v6701
      %v6704 = vshrl.u32 %v6656, 16
      %v6706 = vrot.slane %v6704, 5
      %v6707 = vshll.u32 %v6656, 16
      %v6709 = vrot.slane %v6707, 6
      %v6710 = vor.u32 %v6706, %v6709
      %v6711 = vsel %vm856, %v6701, %v6710
      %v6713 = vshrl.u32 %v6657, 16
      %v6715 = vrot.slane %v6713, 5
      %v6716 = vshll.u32 %v6657, 16
      %v6718 = vrot.slane %v6716, 6
      %v6719 = vor.u32 %v6715, %v6718
      %v6720 = vsel %vm856, %v6710, %v6719
      %v6722 = vshrl.u32 %v6658, 16
      %v6724 = vrot.slane %v6722, 5
      %v6725 = vshll.u32 %v6658, 16
      %v6727 = vrot.slane %v6725, 6
      %v6728 = vor.u32 %v6724, %v6727
      %v6729 = vsel %vm856, %v6719, %v6728
      %v6738 = vsel %vm937, 0, %v6666
      %v6739 = vmul.bf16 %v6738, %v1163
      %v6740 = vmul.bf16 %v6675, %v1164
      %v6741 = vmul.bf16 %v6684, %v1165
      %v6742 = vmul.bf16 %v6693, %v1166
      %v6743 = vmul.bf16 %v6702, %v1167
      %v6744 = vmul.bf16 %v6711, %v1168
      %v6745 = vmul.bf16 %v6720, %v1169
      %v6746 = vmul.bf16 %v6729, %v1170
      %v6755 = vrot.slane %v6651, 6
      %v6756 = vrot.slane %v6652, 6
      %v6757 = vsel %vm1195, %v6755, %v6756
      %v6758 = vrot.slane %v6653, 6
      %v6759 = vsel %vm1195, %v6756, %v6758
      %v6760 = vrot.slane %v6654, 6
      %v6761 = vsel %vm1195, %v6758, %v6760
      %v6762 = vrot.slane %v6655, 6
      %v6763 = vsel %vm1195, %v6760, %v6762
      %v6764 = vrot.slane %v6656, 6
      %v6765 = vsel %vm1195, %v6762, %v6764
      %v6766 = vrot.slane %v6657, 6
      %v6767 = vsel %vm1195, %v6764, %v6766
      %v6768 = vrot.slane %v6658, 6
      %v6769 = vsel %vm1195, %v6766, %v6768
      %v6778 = vsel %vm1218, 0, %v6755
      %v6780 = vmul.bf16 %v6778, %v1447
      %v6781 = vmul.bf16 %v6757, %v1448
      %v6782 = vmul.bf16 %v6759, %v1449
      %v6783 = vmul.bf16 %v6761, %v1450
      %v6784 = vmul.bf16 %v6763, %v1451
      %v6785 = vmul.bf16 %v6765, %v1452
      %v6786 = vmul.bf16 %v6767, %v1453
      %v6787 = vmul.bf16 %v6769, %v1454
      %v6788 = vrot.slane %v6660, 6
      %v6789 = vrot.slane %v6663, 7
      %v6790 = vor.u32 %v6788, %v6789
      %v6791 = vrot.slane %v6668, 6
      %v6792 = vrot.slane %v6671, 7
      %v6793 = vor.u32 %v6791, %v6792
      %v6794 = vsel %vm1471, %v6790, %v6793
      %v6795 = vrot.slane %v6677, 6
      %v6796 = vrot.slane %v6680, 7
      %v6797 = vor.u32 %v6795, %v6796
      %v6798 = vsel %vm1471, %v6793, %v6797
      %v6799 = vrot.slane %v6686, 6
      %v6800 = vrot.slane %v6689, 7
      %v6801 = vor.u32 %v6799, %v6800
      %v6802 = vsel %vm1471, %v6797, %v6801
      %v6803 = vrot.slane %v6695, 6
      %v6804 = vrot.slane %v6698, 7
      %v6805 = vor.u32 %v6803, %v6804
      %v6806 = vsel %vm1471, %v6801, %v6805
      %v6807 = vrot.slane %v6704, 6
      %v6808 = vrot.slane %v6707, 7
      %v6809 = vor.u32 %v6807, %v6808
      %v6810 = vsel %vm1471, %v6805, %v6809
      %v6811 = vrot.slane %v6713, 6
      %v6812 = vrot.slane %v6716, 7
      %v6813 = vor.u32 %v6811, %v6812
      %v6814 = vsel %vm1471, %v6809, %v6813
      %v6815 = vrot.slane %v6722, 6
      %v6816 = vrot.slane %v6725, 7
      %v6817 = vor.u32 %v6815, %v6816
      %v6818 = vsel %vm1471, %v6813, %v6817
      %v6827 = vsel %vm1511, 0, %v6790
      %v6828 = vmul.bf16 %v6827, %v1737
      %v6829 = vmul.bf16 %v6794, %v1738
      %v6830 = vmul.bf16 %v6798, %v1739
      %v6831 = vmul.bf16 %v6802, %v1740
      %v6832 = vmul.bf16 %v6806, %v1741
      %v6833 = vmul.bf16 %v6810, %v1742
      %v6834 = vmul.bf16 %v6814, %v1743
      %v6835 = vmul.bf16 %v6818, %v1744
      %v6836 = vrot.slane %v6660, 7
      %v6837 = vor.u32 %v6836, %v6663
      %v6838 = vrot.slane %v6668, 7
      %v6839 = vor.u32 %v6838, %v6671
      %v6840 = vsel %vm1761, %v6836, %v6839
      %v6841 = vrot.slane %v6677, 7
      %v6842 = vor.u32 %v6841, %v6680
      %v6843 = vsel %vm1761, %v6838, %v6842
      %v6844 = vrot.slane %v6686, 7
      %v6845 = vor.u32 %v6844, %v6689
      %v6846 = vsel %vm1761, %v6841, %v6845
      %v6847 = vrot.slane %v6695, 7
      %v6848 = vor.u32 %v6847, %v6698
      %v6849 = vsel %vm1761, %v6844, %v6848
      %v6850 = vrot.slane %v6704, 7
      %v6851 = vor.u32 %v6850, %v6707
      %v6852 = vsel %vm1761, %v6847, %v6851
      %v6853 = vrot.slane %v6713, 7
      %v6854 = vor.u32 %v6853, %v6716
      %v6855 = vsel %vm1761, %v6850, %v6854
      %v6856 = vrot.slane %v6722, 7
      %v6857 = vor.u32 %v6856, %v6725
      %v6858 = vsel %vm1761, %v6853, %v6857
      %v6867 = vsel %vm1794, 0, %v6837
      %v6868 = vmul.bf16 %v6867, %v2020
      %v6869 = vmul.bf16 %v6840, %v2021
      %v6870 = vmul.bf16 %v6843, %v2022
      %v6871 = vmul.bf16 %v6846, %v2023
      %v6872 = vmul.bf16 %v6849, %v2024
      %v6873 = vmul.bf16 %v6852, %v2025
      %v6874 = vmul.bf16 %v6855, %v2026
      %v6875 = vmul.bf16 %v6858, %v2027
      %v6876 = vmul.bf16 %v6651, %v2268
      %v6877 = vmul.bf16 %v6652, %v2269
      %v6878 = vmul.bf16 %v6653, %v2270
      %v6879 = vmul.bf16 %v6654, %v2271
      %v6880 = vmul.bf16 %v6655, %v2272
      %v6881 = vmul.bf16 %v6656, %v2273
      %v6882 = vmul.bf16 %v6657, %v2274
      %v6883 = vmul.bf16 %v6658, %v2275
      %v6884 = vrot.slane %v6663, 1
      %v6885 = vor.u32 %v6660, %v6884
      %v6886 = vrot.slane %v6671, 1
      %v6887 = vsel %vm2292, %v6885, %v6886
      %v6888 = vor.u32 %v6668, %v6886
      %v6889 = vrot.slane %v6680, 1
      %v6890 = vsel %vm2292, %v6888, %v6889
      %v6891 = vor.u32 %v6677, %v6889
      %v6892 = vrot.slane %v6689, 1
      %v6893 = vsel %vm2292, %v6891, %v6892
      %v6894 = vor.u32 %v6686, %v6892
      %v6895 = vrot.slane %v6698, 1
      %v6896 = vsel %vm2292, %v6894, %v6895
      %v6897 = vor.u32 %v6695, %v6895
      %v6898 = vrot.slane %v6707, 1
      %v6899 = vsel %vm2292, %v6897, %v6898
      %v6900 = vor.u32 %v6704, %v6898
      %v6901 = vrot.slane %v6716, 1
      %v6902 = vsel %vm2292, %v6900, %v6901
      %v6903 = vor.u32 %v6713, %v6901
      %v6904 = vrot.slane %v6725, 1
      %v6905 = vsel %vm2292, %v6903, %v6904
      %v6906 = vor.u32 %v6722, %v6904
      %v6915 = vsel %vm2325, %v6906, 0
      %v6916 = vmul.bf16 %v6887, %v2551
      %v6917 = vmul.bf16 %v6890, %v2552
      %v6918 = vmul.bf16 %v6893, %v2553
      %v6919 = vmul.bf16 %v6896, %v2554
      %v6920 = vmul.bf16 %v6899, %v2555
      %v6921 = vmul.bf16 %v6902, %v2556
      %v6922 = vmul.bf16 %v6905, %v2557
      %v6923 = vmul.bf16 %v6915, %v2558
      %v6924 = vrot.slane %v6660, 1
      %v6925 = vrot.slane %v6663, 2
      %v6926 = vor.u32 %v6924, %v6925
      %v6927 = vrot.slane %v6668, 1
      %v6928 = vrot.slane %v6671, 2
      %v6929 = vor.u32 %v6927, %v6928
      %v6930 = vsel %vm2575, %v6926, %v6929
      %v6931 = vrot.slane %v6677, 1
      %v6932 = vrot.slane %v6680, 2
      %v6933 = vor.u32 %v6931, %v6932
      %v6934 = vsel %vm2575, %v6929, %v6933
      %v6935 = vrot.slane %v6686, 1
      %v6936 = vrot.slane %v6689, 2
      %v6937 = vor.u32 %v6935, %v6936
      %v6938 = vsel %vm2575, %v6933, %v6937
      %v6939 = vrot.slane %v6695, 1
      %v6940 = vrot.slane %v6698, 2
      %v6941 = vor.u32 %v6939, %v6940
      %v6942 = vsel %vm2575, %v6937, %v6941
      %v6943 = vrot.slane %v6704, 1
      %v6944 = vrot.slane %v6707, 2
      %v6945 = vor.u32 %v6943, %v6944
      %v6946 = vsel %vm2575, %v6941, %v6945
      %v6947 = vrot.slane %v6713, 1
      %v6948 = vrot.slane %v6716, 2
      %v6949 = vor.u32 %v6947, %v6948
      %v6950 = vsel %vm2575, %v6945, %v6949
      %v6951 = vrot.slane %v6722, 1
      %v6952 = vrot.slane %v6725, 2
      %v6953 = vor.u32 %v6951, %v6952
      %v6954 = vsel %vm2575, %v6949, %v6953
      %v6963 = vsel %vm2616, %v6953, 0
      %v6964 = vmul.bf16 %v6930, %v2842
      %v6965 = vmul.bf16 %v6934, %v2843
      %v6966 = vmul.bf16 %v6938, %v2844
      %v6967 = vmul.bf16 %v6942, %v2845
      %v6968 = vmul.bf16 %v6946, %v2846
      %v6969 = vmul.bf16 %v6950, %v2847
      %v6970 = vmul.bf16 %v6954, %v2848
      %v6971 = vmul.bf16 %v6963, %v2849
      %v6972 = vrot.slane %v6651, 2
      %v6973 = vrot.slane %v6652, 2
      %v6974 = vsel %vm2866, %v6972, %v6973
      %v6975 = vrot.slane %v6653, 2
      %v6976 = vsel %vm2866, %v6973, %v6975
      %v6977 = vrot.slane %v6654, 2
      %v6978 = vsel %vm2866, %v6975, %v6977
      %v6979 = vrot.slane %v6655, 2
      %v6980 = vsel %vm2866, %v6977, %v6979
      %v6981 = vrot.slane %v6656, 2
      %v6982 = vsel %vm2866, %v6979, %v6981
      %v6983 = vrot.slane %v6657, 2
      %v6984 = vsel %vm2866, %v6981, %v6983
      %v6985 = vrot.slane %v6658, 2
      %v6986 = vsel %vm2866, %v6983, %v6985
      %v6995 = vsel %vm2889, %v6985, 0
      %v6997 = vmul.bf16 %v6974, %v3117
      %v6998 = vmul.bf16 %v6976, %v3118
      %v6999 = vmul.bf16 %v6978, %v3119
      %v7000 = vmul.bf16 %v6980, %v3120
      %v7001 = vmul.bf16 %v6982, %v3121
      %v7002 = vmul.bf16 %v6984, %v3122
      %v7003 = vmul.bf16 %v6986, %v3123
      %v7004 = vmul.bf16 %v6995, %v3124
      %v7005 = vrot.slane %v6660, 2
      %v7006 = vrot.slane %v6663, 3
      %v7007 = vor.u32 %v7005, %v7006
      %v7008 = vrot.slane %v6668, 2
      %v7009 = vrot.slane %v6671, 3
      %v7010 = vor.u32 %v7008, %v7009
      %v7011 = vsel %vm3141, %v7007, %v7010
      %v7012 = vrot.slane %v6677, 2
      %v7013 = vrot.slane %v6680, 3
      %v7014 = vor.u32 %v7012, %v7013
      %v7015 = vsel %vm3141, %v7010, %v7014
      %v7016 = vrot.slane %v6686, 2
      %v7017 = vrot.slane %v6689, 3
      %v7018 = vor.u32 %v7016, %v7017
      %v7019 = vsel %vm3141, %v7014, %v7018
      %v7020 = vrot.slane %v6695, 2
      %v7021 = vrot.slane %v6698, 3
      %v7022 = vor.u32 %v7020, %v7021
      %v7023 = vsel %vm3141, %v7018, %v7022
      %v7024 = vrot.slane %v6704, 2
      %v7025 = vrot.slane %v6707, 3
      %v7026 = vor.u32 %v7024, %v7025
      %v7027 = vsel %vm3141, %v7022, %v7026
      %v7028 = vrot.slane %v6713, 2
      %v7029 = vrot.slane %v6716, 3
      %v7030 = vor.u32 %v7028, %v7029
      %v7031 = vsel %vm3141, %v7026, %v7030
      %v7032 = vrot.slane %v6722, 2
      %v7033 = vrot.slane %v6725, 3
      %v7034 = vor.u32 %v7032, %v7033
      %v7035 = vsel %vm3141, %v7030, %v7034
      %v7044 = vsel %vm3181, %v7034, 0
      %v7045 = vmul.bf16 %v7011, %v3407
      %v7046 = vmul.bf16 %v7015, %v3408
      %v7047 = vmul.bf16 %v7019, %v3409
      %v7048 = vmul.bf16 %v7023, %v3410
      %v7049 = vmul.bf16 %v7027, %v3411
      %v7050 = vmul.bf16 %v7031, %v3412
      %v7051 = vmul.bf16 %v7035, %v3413
      %v7052 = vmul.bf16 %v7044, %v3414
      %7061 = vrot.lane.b32.xlu0 %v6780, 64
      %v7062 = vpop.permute.xlu0 %7061
      %7063 = vrot.lane.b32.xlu0 %v6781, 64
      %v7064 = vpop.permute.xlu0 %7063
      %7065 = vrot.lane.b32.xlu0 %v6782, 64
      %v7066 = vpop.permute.xlu0 %7065
      %7067 = vrot.lane.b32.xlu0 %v6783, 64
      %v7068 = vpop.permute.xlu0 %7067
      %7069 = vrot.lane.b32.xlu0 %v6784, 64
      %v7070 = vpop.permute.xlu0 %7069
      %7071 = vrot.lane.b32.xlu0 %v6785, 64
      %v7072 = vpop.permute.xlu0 %7071
      %7073 = vrot.lane.b32.xlu0 %v6786, 64
      %v7074 = vpop.permute.xlu0 %7073
      %7075 = vrot.lane.b32.xlu0 %v6787, 64
      %v7076 = vpop.permute.xlu0 %7075
      %7085 = vrot.lane.b32.xlu0 %v6868, 64
      %v7086 = vpop.permute.xlu0 %7085
      %7087 = vrot.lane.b32.xlu0 %v6869, 64
      %v7088 = vpop.permute.xlu0 %7087
      %7089 = vrot.lane.b32.xlu0 %v6870, 64
      %v7090 = vpop.permute.xlu0 %7089
      %7091 = vrot.lane.b32.xlu0 %v6871, 64
      %v7092 = vpop.permute.xlu0 %7091
      %7093 = vrot.lane.b32.xlu0 %v6872, 64
      %v7094 = vpop.permute.xlu0 %7093
      %7095 = vrot.lane.b32.xlu0 %v6873, 64
      %v7096 = vpop.permute.xlu0 %7095
      %7097 = vrot.lane.b32.xlu0 %v6874, 64
      %v7098 = vpop.permute.xlu0 %7097
      %7099 = vrot.lane.b32.xlu0 %v6875, 64
      %v7100 = vpop.permute.xlu0 %7099
      %7109 = vrot.lane.b32.xlu0 %v6916, 64
      %v7110 = vpop.permute.xlu0 %7109
      %7111 = vrot.lane.b32.xlu0 %v6917, 64
      %v7112 = vpop.permute.xlu0 %7111
      %7113 = vrot.lane.b32.xlu0 %v6918, 64
      %v7114 = vpop.permute.xlu0 %7113
      %7115 = vrot.lane.b32.xlu0 %v6919, 64
      %v7116 = vpop.permute.xlu0 %7115
      %7117 = vrot.lane.b32.xlu0 %v6920, 64
      %v7118 = vpop.permute.xlu0 %7117
      %7119 = vrot.lane.b32.xlu0 %v6921, 64
      %v7120 = vpop.permute.xlu0 %7119
      %7121 = vrot.lane.b32.xlu0 %v6922, 64
      %v7122 = vpop.permute.xlu0 %7121
      %7123 = vrot.lane.b32.xlu0 %v6923, 64
      %v7124 = vpop.permute.xlu0 %7123
      %7133 = vrot.lane.b32.xlu0 %v6997, 64
      %v7134 = vpop.permute.xlu0 %7133
      %7135 = vrot.lane.b32.xlu0 %v6998, 64
      %v7136 = vpop.permute.xlu0 %7135
      %7137 = vrot.lane.b32.xlu0 %v6999, 64
      %v7138 = vpop.permute.xlu0 %7137
      %7139 = vrot.lane.b32.xlu0 %v7000, 64
      %v7140 = vpop.permute.xlu0 %7139
      %7141 = vrot.lane.b32.xlu0 %v7001, 64
      %v7142 = vpop.permute.xlu0 %7141
      %7143 = vrot.lane.b32.xlu0 %v7002, 64
      %v7144 = vpop.permute.xlu0 %7143
      %7145 = vrot.lane.b32.xlu0 %v7003, 64
      %v7146 = vpop.permute.xlu0 %7145
      %7147 = vrot.lane.b32.xlu0 %v7004, 64
      %v7148 = vpop.permute.xlu0 %7147
      %v7151 = vsel %vm3600, %v6739, %v7062
      %v7155 = vsel %vm3600, %v6740, %v7064
      %v7159 = vsel %vm3600, %v6741, %v7066
      %v7163 = vsel %vm3600, %v6742, %v7068
      %v7167 = vsel %vm3600, %v6743, %v7070
      %v7171 = vsel %vm3600, %v6744, %v7072
      %v7175 = vsel %vm3600, %v6745, %v7074
      %v7179 = vsel %vm3600, %v6746, %v7076
      %v7183 = vsel %vm3600, %v6828, %v7086
      %v7187 = vsel %vm3600, %v6829, %v7088
      %v7191 = vsel %vm3600, %v6830, %v7090
      %v7195 = vsel %vm3600, %v6831, %v7092
      %v7199 = vsel %vm3600, %v6832, %v7094
      %v7203 = vsel %vm3600, %v6833, %v7096
      %v7207 = vsel %vm3600, %v6834, %v7098
      %v7211 = vsel %vm3600, %v6835, %v7100
      %v7215 = vsel %vm3600, %v6876, %v7110
      %v7219 = vsel %vm3600, %v6877, %v7112
      %v7223 = vsel %vm3600, %v6878, %v7114
      %v7227 = vsel %vm3600, %v6879, %v7116
      %v7231 = vsel %vm3600, %v6880, %v7118
      %v7235 = vsel %vm3600, %v6881, %v7120
      %v7239 = vsel %vm3600, %v6882, %v7122
      %v7243 = vsel %vm3600, %v6883, %v7124
      %v7247 = vsel %vm3600, %v6964, %v7134
      %v7251 = vsel %vm3600, %v6965, %v7136
      %v7255 = vsel %vm3600, %v6966, %v7138
      %v7259 = vsel %vm3600, %v6967, %v7140
      %v7263 = vsel %vm3600, %v6968, %v7142
      %v7267 = vsel %vm3600, %v6969, %v7144
      %v7271 = vsel %vm3600, %v6970, %v7146
      %v7275 = vsel %vm3600, %v6971, %v7148
      %v7278 = vlaneseq
      %v7279 = vshrl.u32 %v7278, 7
      %v7280 = vsub.s32 0, %v7279
      %v7281 = vrot.slane %v6650, %v7280
      %v7355 = vunpack.c.l.b16 %v6577
      %v7356 = vunpack.c.l.b16 %v6578
      %v7357 = vunpack.c.l.b16 %v6579
      %v7358 = vunpack.c.l.b16 %v6580
      %v7359 = vunpack.c.l.b16 %v6581
      %v7360 = vunpack.c.l.b16 %v6582
      %v7361 = vunpack.c.l.b16 %v6583
      %v7362 = vunpack.c.l.b16 %v6584
      %v7363 = vunpack.c.l.b16 %v6585
      %v7364 = vunpack.c.l.b16 %v6586
      %v7365 = vunpack.c.l.b16 %v6587
      %v7366 = vunpack.c.l.b16 %v6588
      %v7367 = vunpack.c.l.b16 %v6589
      %v7368 = vunpack.c.l.b16 %v6590
      %v7369 = vunpack.c.l.b16 %v6591
      %v7370 = vunpack.c.l.b16 %v6592
      %v7371 = vunpack.c.l.b16 %v6593
      %v7372 = vunpack.c.l.b16 %v6594
      %v7373 = vunpack.c.l.b16 %v6595
      %v7374 = vunpack.c.l.b16 %v6596
      %v7375 = vunpack.c.l.b16 %v6597
      %v7376 = vunpack.c.l.b16 %v6598
      %v7377 = vunpack.c.l.b16 %v6599
      %v7378 = vunpack.c.l.b16 %v6600
      %v7379 = vunpack.c.l.b16 %v6601
      %v7380 = vunpack.c.l.b16 %v6602
      %v7381 = vunpack.c.l.b16 %v6603
      %v7382 = vunpack.c.l.b16 %v6604
      %v7383 = vunpack.c.l.b16 %v6605
      %v7384 = vunpack.c.l.b16 %v6606
      %v7385 = vunpack.c.l.b16 %v6607
      %v7386 = vunpack.c.l.b16 %v6608
      %v7387 = vunpack.c.l.b16 %v6609
      %v7388 = vunpack.c.l.b16 %v6610
      %v7389 = vunpack.c.l.b16 %v6611
      %v7390 = vunpack.c.l.b16 %v6612
      %v7391 = vunpack.c.l.b16 %v6613
      %v7392 = vunpack.c.l.b16 %v6614
      %v7393 = vunpack.c.l.b16 %v6615
      %v7394 = vunpack.c.l.b16 %v6616
      %v7395 = vunpack.c.l.b16 %v6617
      %v7396 = vunpack.c.l.b16 %v6618
      %v7397 = vunpack.c.l.b16 %v6619
      %v7398 = vunpack.c.l.b16 %v6620
      %v7399 = vunpack.c.l.b16 %v6621
      %v7400 = vunpack.c.l.b16 %v6622
      %v7401 = vunpack.c.l.b16 %v6623
      %v7402 = vunpack.c.l.b16 %v6624
      %v7403 = vunpack.c.l.b16 %v6625
      %v7404 = vunpack.c.l.b16 %v6626
      %v7405 = vunpack.c.l.b16 %v6627
      %v7406 = vunpack.c.l.b16 %v6628
      %v7407 = vunpack.c.l.b16 %v6629
      %v7408 = vunpack.c.l.b16 %v6630
      %v7409 = vunpack.c.l.b16 %v6631
      %v7410 = vunpack.c.l.b16 %v6632
      %v7411 = vunpack.c.l.b16 %v6633
      %v7412 = vunpack.c.l.b16 %v6634
      %v7413 = vunpack.c.l.b16 %v6635
      %v7414 = vunpack.c.l.b16 %v6636
      %v7415 = vunpack.c.l.b16 %v6637
      %v7416 = vunpack.c.l.b16 %v6638
      %v7417 = vunpack.c.l.b16 %v6639
      %v7418 = vunpack.c.l.b16 %v6640
      %v7419 = vunpack.c.l.b16 %v6641
      %v7420 = vunpack.c.l.b16 %v6642
      %v7421 = vunpack.c.l.b16 %v6643
      %v7422 = vunpack.c.l.b16 %v6644
      %v7423 = vunpack.c.l.b16 %v6645
      %v7424 = vunpack.c.l.b16 %v6646
      %v7425 = vunpack.c.l.b16 %v6647
      %v7426 = vunpack.c.l.b16 %v6648
      %v7427 = vpack.c.b16 %v7356, %v7355
      %v7428 = vpack.c.b16 %v7358, %v7357
      %v7429 = vpack.c.b16 %v7360, %v7359
      %v7430 = vpack.c.b16 %v7362, %v7361
      %v7431 = vpack.c.b16 %v7364, %v7363
      %v7432 = vpack.c.b16 %v7366, %v7365
      %v7433 = vpack.c.b16 %v7368, %v7367
      %v7434 = vpack.c.b16 %v7370, %v7369
      %v7435 = vpack.c.b16 %v7372, %v7371
      %v7436 = vpack.c.b16 %v7374, %v7373
      %v7437 = vpack.c.b16 %v7376, %v7375
      %v7438 = vpack.c.b16 %v7378, %v7377
      %v7439 = vpack.c.b16 %v7380, %v7379
      %v7440 = vpack.c.b16 %v7382, %v7381
      %v7441 = vpack.c.b16 %v7384, %v7383
      %v7442 = vpack.c.b16 %v7386, %v7385
      %v7443 = vpack.c.b16 %v7388, %v7387
      %v7444 = vpack.c.b16 %v7390, %v7389
      %v7445 = vpack.c.b16 %v7392, %v7391
      %v7446 = vpack.c.b16 %v7394, %v7393
      %v7447 = vpack.c.b16 %v7396, %v7395
      %v7448 = vpack.c.b16 %v7398, %v7397
      %v7449 = vpack.c.b16 %v7400, %v7399
      %v7450 = vpack.c.b16 %v7402, %v7401
      %v7451 = vpack.c.b16 %v7404, %v7403
      %v7452 = vpack.c.b16 %v7406, %v7405
      %v7453 = vpack.c.b16 %v7408, %v7407
      %v7454 = vpack.c.b16 %v7410, %v7409
      %v7455 = vpack.c.b16 %v7412, %v7411
      %v7456 = vpack.c.b16 %v7414, %v7413
      %v7457 = vpack.c.b16 %v7416, %v7415
      %v7458 = vpack.c.b16 %v7418, %v7417
      %v7459 = vpack.c.b16 %v7420, %v7419
      %v7460 = vpack.c.b16 %v7422, %v7421
      %v7461 = vpack.c.b16 %v7424, %v7423
      %v7462 = vpack.c.b16 %v7426, %v7425
      %v7500 = vsel %vm3600, %v7045, 0
      %v7503 = vsel %vm3600, %v7046, 0
      %v7506 = vsel %vm3600, %v7047, 0
      %v7509 = vsel %vm3600, %v7048, 0
      %v7512 = vsel %vm3600, %v7049, 0
      %v7515 = vsel %vm3600, %v7050, 0
      %v7518 = vsel %vm3600, %v7051, 0
      %v7521 = vsel %vm3600, %v7052, 0
      %7523 = vmatprep.subr.bf16.mxu0 0
      %7524 = vmatpush1.bf16.msra.mxu0 %v7434
      %7525 = vmatprep.subr.bf16.mxu0 0
      %7526 = vmatpush1.bf16.msra.mxu0 %v7433
      %7527 = vmatprep.subr.bf16.mxu0 0
      %7528 = vmatpush1.bf16.msra.mxu0 %v7432
      %7529 = vmatprep.subr.bf16.mxu0 0
      %7530 = vmatpush1.bf16.msra.mxu0 %v7431
      %7531 = vmatprep.subr.bf16.mxu0 0
      %7532 = vmatpush1.bf16.msra.mxu0 %v7430
      %7533 = vmatprep.subr.bf16.mxu0 0
      %7534 = vmatpush1.bf16.msra.mxu0 %v7429
      %7535 = vmatprep.subr.bf16.mxu0 0
      %7536 = vmatpush1.bf16.msra.mxu0 %v7428
      %7537 = vmatprep.subr.bf16.mxu0 0
      %7538 = vmatpush1.bf16.msra.mxu0 %v7427
      %7539 = vmatprep.subr.bf16.mxu0 0
      %7540 = vmatpush2.bf16.msra.mxu0 %v7442
      %7541 = vmatprep.subr.bf16.mxu0 0
      %7542 = vmatpush2.bf16.msra.mxu0 %v7441
      %7543 = vmatprep.subr.bf16.mxu0 0
      %7544 = vmatpush2.bf16.msra.mxu0 %v7440
      %7545 = vmatprep.subr.bf16.mxu0 0
      %7546 = vmatpush2.bf16.msra.mxu0 %v7439
      %7547 = vmatprep.subr.bf16.mxu0 0
      %7548 = vmatpush2.bf16.msra.mxu0 %v7438
      %7549 = vmatprep.subr.bf16.mxu0 0
      %7550 = vmatpush2.bf16.msra.mxu0 %v7437
      %7551 = vmatprep.subr.bf16.mxu0 0
      %7552 = vmatpush2.bf16.msra.mxu0 %v7436
      %7553 = vmatprep.subr.bf16.mxu0 0
      %7554 = vmatpush2.bf16.msra.mxu0 %v7435
      %7555 = vmatprep.mubr.bf16.mxu0 %v7183
      %7556 = vmatmul.mubr.bf16.gmra.mxu0 %v7151
      %v7557 = vpop.f32.mrf.mxu0
      %v7558 = vadd.f32 %v7281, %v7557
      %v7559 = vpop.f32.mrf.mxu0
      %v7560 = vpop.f32.mrf.mxu0
      %v7561 = vadd.f32 %v7281, %v7560
      %v7562 = vpop.f32.mrf.mxu0
      %7563 = vmatprep.mubr.bf16.mxu0 %v7187
      %7564 = vmatmul.mubr.bf16.gmra.mxu0 %v7155
      %v7565 = vpop.f32.mrf.mxu0
      %v7566 = vadd.f32 %v7281, %v7565
      %v7567 = vpop.f32.mrf.mxu0
      %v7568 = vpop.f32.mrf.mxu0
      %v7569 = vadd.f32 %v7281, %v7568
      %v7570 = vpop.f32.mrf.mxu0
      %7571 = vmatprep.mubr.bf16.mxu0 %v7191
      %7572 = vmatmul.mubr.bf16.gmra.mxu0 %v7159
      %v7573 = vpop.f32.mrf.mxu0
      %v7574 = vadd.f32 %v7281, %v7573
      %v7575 = vpop.f32.mrf.mxu0
      %v7576 = vpop.f32.mrf.mxu0
      %v7577 = vadd.f32 %v7281, %v7576
      %v7578 = vpop.f32.mrf.mxu0
      %7579 = vmatprep.mubr.bf16.mxu0 %v7195
      %7580 = vmatmul.mubr.bf16.gmra.mxu0 %v7163
      %v7581 = vpop.f32.mrf.mxu0
      %v7582 = vadd.f32 %v7281, %v7581
      %v7583 = vpop.f32.mrf.mxu0
      %v7584 = vpop.f32.mrf.mxu0
      %v7585 = vadd.f32 %v7281, %v7584
      %v7586 = vpop.f32.mrf.mxu0
      %7587 = vmatprep.mubr.bf16.mxu0 %v7199
      %7588 = vmatmul.mubr.bf16.gmra.mxu0 %v7167
      %v7589 = vpop.f32.mrf.mxu0
      %v7590 = vadd.f32 %v7281, %v7589
      %v7591 = vpop.f32.mrf.mxu0
      %v7592 = vpop.f32.mrf.mxu0
      %v7593 = vadd.f32 %v7281, %v7592
      %v7594 = vpop.f32.mrf.mxu0
      %7595 = vmatprep.mubr.bf16.mxu0 %v7203
      %7596 = vmatmul.mubr.bf16.gmra.mxu0 %v7171
      %v7597 = vpop.f32.mrf.mxu0
      %v7598 = vadd.f32 %v7281, %v7597
      %v7599 = vpop.f32.mrf.mxu0
      %v7600 = vpop.f32.mrf.mxu0
      %v7601 = vadd.f32 %v7281, %v7600
      %v7602 = vpop.f32.mrf.mxu0
      %7603 = vmatprep.mubr.bf16.mxu0 %v7207
      %7604 = vmatmul.mubr.bf16.gmra.mxu0 %v7175
      %v7605 = vpop.f32.mrf.mxu0
      %v7606 = vadd.f32 %v7281, %v7605
      %v7607 = vpop.f32.mrf.mxu0
      %v7608 = vpop.f32.mrf.mxu0
      %v7609 = vadd.f32 %v7281, %v7608
      %v7610 = vpop.f32.mrf.mxu0
      %7611 = vmatprep.mubr.bf16.mxu0 %v7211
      %7612 = vmatmul.mubr.bf16.gmra.mxu0 %v7179
      %v7613 = vpop.f32.mrf.mxu0
      %v7614 = vadd.f32 %v7281, %v7613
      %v7615 = vpop.f32.mrf.mxu0
      %v7616 = vpop.f32.mrf.mxu0
      %v7617 = vadd.f32 %v7281, %v7616
      %v7618 = vpop.f32.mrf.mxu0
      %7619 = vdwg.mxu0
      %7620 = vmatprep.subr.bf16.mxu0 0
      %7621 = vmatpush1.bf16.msra.mxu0 %v7450
      %7622 = vmatprep.subr.bf16.mxu0 0
      %7623 = vmatpush1.bf16.msra.mxu0 %v7449
      %7624 = vmatprep.subr.bf16.mxu0 0
      %7625 = vmatpush1.bf16.msra.mxu0 %v7448
      %7626 = vmatprep.subr.bf16.mxu0 0
      %7627 = vmatpush1.bf16.msra.mxu0 %v7447
      %7628 = vmatprep.subr.bf16.mxu0 0
      %7629 = vmatpush1.bf16.msra.mxu0 %v7446
      %7630 = vmatprep.subr.bf16.mxu0 0
      %7631 = vmatpush1.bf16.msra.mxu0 %v7445
      %7632 = vmatprep.subr.bf16.mxu0 0
      %7633 = vmatpush1.bf16.msra.mxu0 %v7444
      %7634 = vmatprep.subr.bf16.mxu0 0
      %7635 = vmatpush1.bf16.msra.mxu0 %v7443
      %7636 = vmatprep.subr.bf16.mxu0 0
      %7637 = vmatpush2.bf16.msra.mxu0 %v7458
      %7638 = vmatprep.subr.bf16.mxu0 0
      %7639 = vmatpush2.bf16.msra.mxu0 %v7457
      %7640 = vmatprep.subr.bf16.mxu0 0
      %7641 = vmatpush2.bf16.msra.mxu0 %v7456
      %7642 = vmatprep.subr.bf16.mxu0 0
      %7643 = vmatpush2.bf16.msra.mxu0 %v7455
      %7644 = vmatprep.subr.bf16.mxu0 0
      %7645 = vmatpush2.bf16.msra.mxu0 %v7454
      %7646 = vmatprep.subr.bf16.mxu0 0
      %7647 = vmatpush2.bf16.msra.mxu0 %v7453
      %7648 = vmatprep.subr.bf16.mxu0 0
      %7649 = vmatpush2.bf16.msra.mxu0 %v7452
      %7650 = vmatprep.subr.bf16.mxu0 0
      %7651 = vmatpush2.bf16.msra.mxu0 %v7451
      %7652 = vmatprep.mubr.bf16.mxu0 %v7247
      %7653 = vmatmul.mubr.bf16.gmra.mxu0 %v7215
      %v7654 = vpop.f32.mrf.mxu0
      %v7655 = vadd.f32 %v7558, %v7654
      %v7656 = vpop.f32.mrf.mxu0
      %v7657 = vpop.f32.mrf.mxu0
      %v7658 = vadd.f32 %v7561, %v7657
      %v7659 = vpop.f32.mrf.mxu0
      %7660 = vmatprep.mubr.bf16.mxu0 %v7251
      %7661 = vmatmul.mubr.bf16.gmra.mxu0 %v7219
      %v7662 = vpop.f32.mrf.mxu0
      %v7663 = vadd.f32 %v7566, %v7662
      %v7664 = vpop.f32.mrf.mxu0
      %v7665 = vpop.f32.mrf.mxu0
      %v7666 = vadd.f32 %v7569, %v7665
      %v7667 = vpop.f32.mrf.mxu0
      %7668 = vmatprep.mubr.bf16.mxu0 %v7255
      %7669 = vmatmul.mubr.bf16.gmra.mxu0 %v7223
      %v7670 = vpop.f32.mrf.mxu0
      %v7671 = vadd.f32 %v7574, %v7670
      %v7672 = vpop.f32.mrf.mxu0
      %v7673 = vpop.f32.mrf.mxu0
      %v7674 = vadd.f32 %v7577, %v7673
      %v7675 = vpop.f32.mrf.mxu0
      %7676 = vmatprep.mubr.bf16.mxu0 %v7259
      %7677 = vmatmul.mubr.bf16.gmra.mxu0 %v7227
      %v7678 = vpop.f32.mrf.mxu0
      %v7679 = vadd.f32 %v7582, %v7678
      %v7680 = vpop.f32.mrf.mxu0
      %v7681 = vpop.f32.mrf.mxu0
      %v7682 = vadd.f32 %v7585, %v7681
      %v7683 = vpop.f32.mrf.mxu0
      %7684 = vmatprep.mubr.bf16.mxu0 %v7263
      %7685 = vmatmul.mubr.bf16.gmra.mxu0 %v7231
      %v7686 = vpop.f32.mrf.mxu0
      %v7687 = vadd.f32 %v7590, %v7686
      %v7688 = vpop.f32.mrf.mxu0
      %v7689 = vpop.f32.mrf.mxu0
      %v7690 = vadd.f32 %v7593, %v7689
      %v7691 = vpop.f32.mrf.mxu0
      %7692 = vmatprep.mubr.bf16.mxu0 %v7267
      %7693 = vmatmul.mubr.bf16.gmra.mxu0 %v7235
      %v7694 = vpop.f32.mrf.mxu0
      %v7695 = vadd.f32 %v7598, %v7694
      %v7696 = vpop.f32.mrf.mxu0
      %v7697 = vpop.f32.mrf.mxu0
      %v7698 = vadd.f32 %v7601, %v7697
      %v7699 = vpop.f32.mrf.mxu0
      %7700 = vmatprep.mubr.bf16.mxu0 %v7271
      %7701 = vmatmul.mubr.bf16.gmra.mxu0 %v7239
      %v7702 = vpop.f32.mrf.mxu0
      %v7703 = vadd.f32 %v7606, %v7702
      %v7704 = vpop.f32.mrf.mxu0
      %v7705 = vpop.f32.mrf.mxu0
      %v7706 = vadd.f32 %v7609, %v7705
      %v7707 = vpop.f32.mrf.mxu0
      %7708 = vmatprep.mubr.bf16.mxu0 %v7275
      %7709 = vmatmul.mubr.bf16.gmra.mxu0 %v7243
      %v7710 = vpop.f32.mrf.mxu0
      %v7711 = vadd.f32 %v7614, %v7710
      %v7712 = vpop.f32.mrf.mxu0
      %v7713 = vpop.f32.mrf.mxu0
      %v7714 = vadd.f32 %v7617, %v7713
      %v7715 = vpop.f32.mrf.mxu0
      %7716 = vdwg.mxu0
      %7717 = vmatprep.subr.bf16.mxu0 0
      %7718 = vmatpush1.bf16.msra.mxu0 0
      %7719 = vmatprep.subr.bf16.mxu0 0
      %7720 = vmatpush1.bf16.msra.mxu0 0
      %7721 = vmatprep.subr.bf16.mxu0 0
      %7722 = vmatpush1.bf16.msra.mxu0 0
      %7723 = vmatprep.subr.bf16.mxu0 0
      %7724 = vmatpush1.bf16.msra.mxu0 0
      %7725 = vmatprep.subr.bf16.mxu0 0
      %7726 = vmatpush1.bf16.msra.mxu0 %v7462
      %7727 = vmatprep.subr.bf16.mxu0 0
      %7728 = vmatpush1.bf16.msra.mxu0 %v7461
      %7729 = vmatprep.subr.bf16.mxu0 0
      %7730 = vmatpush1.bf16.msra.mxu0 %v7460
      %7731 = vmatprep.subr.bf16.mxu0 0
      %7732 = vmatpush1.bf16.msra.mxu0 %v7459
      %7733 = vmatprep.subr.bf16.mxu0 0
      %7734 = vmatpush2.bf16.msra.mxu0 0
      %7735 = vmatprep.subr.bf16.mxu0 0
      %7736 = vmatpush2.bf16.msra.mxu0 0
      %7737 = vmatprep.subr.bf16.mxu0 0
      %7738 = vmatpush2.bf16.msra.mxu0 0
      %7739 = vmatprep.subr.bf16.mxu0 0
      %7740 = vmatpush2.bf16.msra.mxu0 0
      %7741 = vmatprep.subr.bf16.mxu0 0
      %7742 = vmatpush2.bf16.msra.mxu0 0
      %7743 = vmatprep.subr.bf16.mxu0 0
      %7744 = vmatpush2.bf16.msra.mxu0 0
      %7745 = vmatprep.subr.bf16.mxu0 0
      %7746 = vmatpush2.bf16.msra.mxu0 0
      %7747 = vmatprep.subr.bf16.mxu0 0
      %7748 = vmatpush2.bf16.msra.mxu0 0
      %7749 = vmatprep.mubr.bf16.mxu0 0
      %7750 = vmatmul.mubr.bf16.gmra.mxu0 %v7500
      %v7751 = vpop.f32.mrf.mxu0
      %v7752 = vadd.f32 %v7655, %v7751
      %v7753 = vpop.f32.mrf.mxu0
      %v7754 = vpop.f32.mrf.mxu0
      %v7755 = vadd.f32 %v7658, %v7754
      %v7756 = vpop.f32.mrf.mxu0
      %7757 = vmatprep.mubr.bf16.mxu0 0
      %7758 = vmatmul.mubr.bf16.gmra.mxu0 %v7503
      %v7759 = vpop.f32.mrf.mxu0
      %v7760 = vadd.f32 %v7663, %v7759
      %v7761 = vpop.f32.mrf.mxu0
      %v7762 = vpop.f32.mrf.mxu0
      %v7763 = vadd.f32 %v7666, %v7762
      %v7764 = vpop.f32.mrf.mxu0
      %7765 = vmatprep.mubr.bf16.mxu0 0
      %7766 = vmatmul.mubr.bf16.gmra.mxu0 %v7506
      %v7767 = vpop.f32.mrf.mxu0
      %v7768 = vadd.f32 %v7671, %v7767
      %v7769 = vpop.f32.mrf.mxu0
      %v7770 = vpop.f32.mrf.mxu0
      %v7771 = vadd.f32 %v7674, %v7770
      %v7772 = vpop.f32.mrf.mxu0
      %7773 = vmatprep.mubr.bf16.mxu0 0
      %7774 = vmatmul.mubr.bf16.gmra.mxu0 %v7509
      %v7775 = vpop.f32.mrf.mxu0
      %v7776 = vadd.f32 %v7679, %v7775
      %v7777 = vpop.f32.mrf.mxu0
      %v7778 = vpop.f32.mrf.mxu0
      %v7779 = vadd.f32 %v7682, %v7778
      %v7780 = vpop.f32.mrf.mxu0
      %7781 = vmatprep.mubr.bf16.mxu0 0
      %7782 = vmatmul.mubr.bf16.gmra.mxu0 %v7512
      %v7783 = vpop.f32.mrf.mxu0
      %v7784 = vadd.f32 %v7687, %v7783
      %v7785 = vpop.f32.mrf.mxu0
      %v7786 = vpop.f32.mrf.mxu0
      %v7787 = vadd.f32 %v7690, %v7786
      %v7788 = vpop.f32.mrf.mxu0
      %7789 = vmatprep.mubr.bf16.mxu0 0
      %7790 = vmatmul.mubr.bf16.gmra.mxu0 %v7515
      %v7791 = vpop.f32.mrf.mxu0
      %v7792 = vadd.f32 %v7695, %v7791
      %v7793 = vpop.f32.mrf.mxu0
      %v7794 = vpop.f32.mrf.mxu0
      %v7795 = vadd.f32 %v7698, %v7794
      %v7796 = vpop.f32.mrf.mxu0
      %7797 = vmatprep.mubr.bf16.mxu0 0
      %7798 = vmatmul.mubr.bf16.gmra.mxu0 %v7518
      %v7799 = vpop.f32.mrf.mxu0
      %v7800 = vadd.f32 %v7703, %v7799
      %v7801 = vpop.f32.mrf.mxu0
      %v7802 = vpop.f32.mrf.mxu0
      %v7803 = vadd.f32 %v7706, %v7802
      %v7804 = vpop.f32.mrf.mxu0
      %7805 = vmatprep.mubr.bf16.mxu0 0
      %7806 = vmatmul.mubr.bf16.gmra.mxu0 %v7521
      %v7807 = vpop.f32.mrf.mxu0
      %v7808 = vadd.f32 %v7711, %v7807
      %v7809 = vpop.f32.mrf.mxu0
      %v7810 = vpop.f32.mrf.mxu0
      %v7811 = vadd.f32 %v7714, %v7810
      %v7812 = vpop.f32.mrf.mxu0
      %7813 = vdwg.mxu0
      %v7814 = vmax.f32 %v7752, 0.0
      %v7815 = vmax.f32 %v7755, 0.0
      %v7816 = vmax.f32 %v7760, 0.0
      %v7817 = vmax.f32 %v7763, 0.0
      %v7818 = vmax.f32 %v7768, 0.0
      %v7819 = vmax.f32 %v7771, 0.0
      %v7820 = vmax.f32 %v7776, 0.0
      %v7821 = vmax.f32 %v7779, 0.0
      %v7822 = vmax.f32 %v7784, 0.0
      %v7823 = vmax.f32 %v7787, 0.0
      %v7824 = vmax.f32 %v7792, 0.0
      %v7825 = vmax.f32 %v7795, 0.0
      %v7826 = vmax.f32 %v7800, 0.0
      %v7827 = vmax.f32 %v7803, 0.0
      %v7828 = vmax.f32 %v7808, 0.0
      %v7829 = vmax.f32 %v7811, 0.0
      %s7830 = scalar_lea.vmem %s6, 864
      %v7831 = vld [vmem:[%s7830] sm:$0xf]
      %v7832 = vld [vmem:[%s7830 + $0x4] sm:$0xf]
      %v7833 = vld [vmem:[%s7830 + $0x8] sm:$0xf]
      %v7834 = vld [vmem:[%s7830 + $0xc] sm:$0xf]
      %v7835 = vld [vmem:[%s7830 + $0x10] sm:$0xf]
      %v7836 = vld [vmem:[%s7830 + $0x14] sm:$0xf]
      %v7837 = vld [vmem:[%s7830 + $0x18] sm:$0xf]
      %v7838 = vld [vmem:[%s7830 + $0x1c] sm:$0xf]
      %v7839 = vld [vmem:[%s7830 + $0x20] sm:$0xf]
      %v7840 = vld [vmem:[%s7830 + $0x24] sm:$0xf]
      %v7841 = vld [vmem:[%s7830 + $0x28] sm:$0xf]
      %v7842 = vld [vmem:[%s7830 + $0x2c] sm:$0xf]
      %v7843 = vld [vmem:[%s7830 + $0x30] sm:$0xf]
      %v7844 = vld [vmem:[%s7830 + $0x34] sm:$0xf]
      %v7845 = vld [vmem:[%s7830 + $0x38] sm:$0xf]
      %v7846 = vld [vmem:[%s7830 + $0x3c] sm:$0xf]
      %v7847 = vld [vmem:[%s7830 + $0x40] sm:$0xf]
      %v7848 = vld [vmem:[%s7830 + $0x44] sm:$0xf]
      %v7849 = vld [vmem:[%s7830 + $0x48] sm:$0xf]
      %v7850 = vld [vmem:[%s7830 + $0x4c] sm:$0xf]
      %v7851 = vld [vmem:[%s7830 + $0x50] sm:$0xf]
      %v7852 = vld [vmem:[%s7830 + $0x54] sm:$0xf]
      %v7853 = vld [vmem:[%s7830 + $0x58] sm:$0xf]
      %v7854 = vld [vmem:[%s7830 + $0x5c] sm:$0xf]
      %v7855 = vld [vmem:[%s7830 + $0x60] sm:$0xf]
      %v7856 = vld [vmem:[%s7830 + $0x64] sm:$0xf]
      %v7857 = vld [vmem:[%s7830 + $0x68] sm:$0xf]
      %v7858 = vld [vmem:[%s7830 + $0x6c] sm:$0xf]
      %v7859 = vld [vmem:[%s7830 + $0x70] sm:$0xf]
      %v7860 = vld [vmem:[%s7830 + $0x74] sm:$0xf]
      %v7861 = vld [vmem:[%s7830 + $0x78] sm:$0xf]
      %v7862 = vld [vmem:[%s7830 + $0x7c] sm:$0xf]
      %v7863 = vld [vmem:[%s7830 + $0x80] sm:$0xf]
      %v7864 = vld [vmem:[%s7830 + $0x84] sm:$0xf]
      %v7865 = vld [vmem:[%s7830 + $0x88] sm:$0xf]
      %v7866 = vld [vmem:[%s7830 + $0x8c] sm:$0xf]
      %v7867 = vld [vmem:[%s7830 + $0x90] sm:$0xf]
      %v7868 = vld [vmem:[%s7830 + $0x94] sm:$0xf]
      %v7869 = vld [vmem:[%s7830 + $0x98] sm:$0xf]
      %v7870 = vld [vmem:[%s7830 + $0x9c] sm:$0xf]
      %v7871 = vld [vmem:[%s7830 + $0xa0] sm:$0xf]
      %v7872 = vld [vmem:[%s7830 + $0xa4] sm:$0xf]
      %v7873 = vld [vmem:[%s7830 + $0xa8] sm:$0xf]
      %v7874 = vld [vmem:[%s7830 + $0xac] sm:$0xf]
      %v7875 = vld [vmem:[%s7830 + $0xb0] sm:$0xf]
      %v7876 = vld [vmem:[%s7830 + $0xb4] sm:$0xf]
      %v7877 = vld [vmem:[%s7830 + $0xb8] sm:$0xf]
      %v7878 = vld [vmem:[%s7830 + $0xbc] sm:$0xf]
      %v7879 = vld [vmem:[%s7830 + $0xc0] sm:$0xf]
      %v7880 = vld [vmem:[%s7830 + $0xc4] sm:$0xf]
      %v7881 = vld [vmem:[%s7830 + $0xc8] sm:$0xf]
      %v7882 = vld [vmem:[%s7830 + $0xcc] sm:$0xf]
      %v7883 = vld [vmem:[%s7830 + $0xd0] sm:$0xf]
      %v7884 = vld [vmem:[%s7830 + $0xd4] sm:$0xf]
      %v7885 = vld [vmem:[%s7830 + $0xd8] sm:$0xf]
      %v7886 = vld [vmem:[%s7830 + $0xdc] sm:$0xf]
      %v7887 = vld [vmem:[%s7830 + $0xe0] sm:$0xf]
      %v7888 = vld [vmem:[%s7830 + $0xe4] sm:$0xf]
      %v7889 = vld [vmem:[%s7830 + $0xe8] sm:$0xf]
      %v7890 = vld [vmem:[%s7830 + $0xec] sm:$0xf]
      %v7891 = vld [vmem:[%s7830 + $0xf0] sm:$0xf]
      %v7892 = vld [vmem:[%s7830 + $0xf4] sm:$0xf]
      %v7893 = vld [vmem:[%s7830 + $0xf8] sm:$0xf]
      %v7894 = vld [vmem:[%s7830 + $0xfc] sm:$0xf]
      %v7895 = vld [vmem:[%s7830 + $0x100] sm:$0xf]
      %v7896 = vld [vmem:[%s7830 + $0x104] sm:$0xf]
      %v7897 = vld [vmem:[%s7830 + $0x108] sm:$0xf]
      %v7898 = vld [vmem:[%s7830 + $0x10c] sm:$0xf]
      %v7899 = vld [vmem:[%s7830 + $0x110] sm:$0xf]
      %v7900 = vld [vmem:[%s7830 + $0x114] sm:$0xf]
      %v7901 = vld [vmem:[%s7830 + $0x118] sm:$0xf]
      %v7902 = vld [vmem:[%s7830 + $0x11c] sm:$0xf]
      %s7903 = scalar_lea.vmem %s7, 3
      %v7904 = vld [vmem:[%s7903] sm:$0x1]
      %v7905 = vpack.c.bf16 %v7815, %v7814
      %v7906 = vpack.c.bf16 %v7817, %v7816
      %v7907 = vpack.c.bf16 %v7819, %v7818
      %v7908 = vpack.c.bf16 %v7821, %v7820
      %v7909 = vpack.c.bf16 %v7823, %v7822
      %v7910 = vpack.c.bf16 %v7825, %v7824
      %v7911 = vpack.c.bf16 %v7827, %v7826
      %v7912 = vpack.c.bf16 %v7829, %v7828
      %v7914 = vshrl.u32 %v7905, 16
      %v7916 = vrot.slane %v7914, 5
      %v7917 = vshll.u32 %v7905, 16
      %v7919 = vrot.slane %v7917, 6
      %v7920 = vor.u32 %v7916, %v7919
      %v7922 = vshrl.u32 %v7906, 16
      %v7924 = vrot.slane %v7922, 5
      %v7925 = vshll.u32 %v7906, 16
      %v7927 = vrot.slane %v7925, 6
      %v7928 = vor.u32 %v7924, %v7927
      %v7929 = vsel %vm856, %v7920, %v7928
      %v7931 = vshrl.u32 %v7907, 16
      %v7933 = vrot.slane %v7931, 5
      %v7934 = vshll.u32 %v7907, 16
      %v7936 = vrot.slane %v7934, 6
      %v7937 = vor.u32 %v7933, %v7936
      %v7938 = vsel %vm856, %v7928, %v7937
      %v7940 = vshrl.u32 %v7908, 16
      %v7942 = vrot.slane %v7940, 5
      %v7943 = vshll.u32 %v7908, 16
      %v7945 = vrot.slane %v7943, 6
      %v7946 = vor.u32 %v7942, %v7945
      %v7947 = vsel %vm856, %v7937, %v7946
      %v7949 = vshrl.u32 %v7909, 16
      %v7951 = vrot.slane %v7949, 5
      %v7952 = vshll.u32 %v7909, 16
      %v7954 = vrot.slane %v7952, 6
      %v7955 = vor.u32 %v7951, %v7954
      %v7956 = vsel %vm856, %v7946, %v7955
      %v7958 = vshrl.u32 %v7910, 16
      %v7960 = vrot.slane %v7958, 5
      %v7961 = vshll.u32 %v7910, 16
      %v7963 = vrot.slane %v7961, 6
      %v7964 = vor.u32 %v7960, %v7963
      %v7965 = vsel %vm856, %v7955, %v7964
      %v7967 = vshrl.u32 %v7911, 16
      %v7969 = vrot.slane %v7967, 5
      %v7970 = vshll.u32 %v7911, 16
      %v7972 = vrot.slane %v7970, 6
      %v7973 = vor.u32 %v7969, %v7972
      %v7974 = vsel %vm856, %v7964, %v7973
      %v7976 = vshrl.u32 %v7912, 16
      %v7978 = vrot.slane %v7976, 5
      %v7979 = vshll.u32 %v7912, 16
      %v7981 = vrot.slane %v7979, 6
      %v7982 = vor.u32 %v7978, %v7981
      %v7983 = vsel %vm856, %v7973, %v7982
      %v7992 = vsel %vm937, 0, %v7920
      %v7993 = vmul.bf16 %v7992, %v1163
      %v7994 = vmul.bf16 %v7929, %v1164
      %v7995 = vmul.bf16 %v7938, %v1165
      %v7996 = vmul.bf16 %v7947, %v1166
      %v7997 = vmul.bf16 %v7956, %v1167
      %v7998 = vmul.bf16 %v7965, %v1168
      %v7999 = vmul.bf16 %v7974, %v1169
      %v8000 = vmul.bf16 %v7983, %v1170
      %v8009 = vrot.slane %v7905, 6
      %v8010 = vrot.slane %v7906, 6
      %v8011 = vsel %vm1195, %v8009, %v8010
      %v8012 = vrot.slane %v7907, 6
      %v8013 = vsel %vm1195, %v8010, %v8012
      %v8014 = vrot.slane %v7908, 6
      %v8015 = vsel %vm1195, %v8012, %v8014
      %v8016 = vrot.slane %v7909, 6
      %v8017 = vsel %vm1195, %v8014, %v8016
      %v8018 = vrot.slane %v7910, 6
      %v8019 = vsel %vm1195, %v8016, %v8018
      %v8020 = vrot.slane %v7911, 6
      %v8021 = vsel %vm1195, %v8018, %v8020
      %v8022 = vrot.slane %v7912, 6
      %v8023 = vsel %vm1195, %v8020, %v8022
      %v8032 = vsel %vm1218, 0, %v8009
      %v8034 = vmul.bf16 %v8032, %v1447
      %v8035 = vmul.bf16 %v8011, %v1448
      %v8036 = vmul.bf16 %v8013, %v1449
      %v8037 = vmul.bf16 %v8015, %v1450
      %v8038 = vmul.bf16 %v8017, %v1451
      %v8039 = vmul.bf16 %v8019, %v1452
      %v8040 = vmul.bf16 %v8021, %v1453
      %v8041 = vmul.bf16 %v8023, %v1454
      %v8042 = vrot.slane %v7914, 6
      %v8043 = vrot.slane %v7917, 7
      %v8044 = vor.u32 %v8042, %v8043
      %v8045 = vrot.slane %v7922, 6
      %v8046 = vrot.slane %v7925, 7
      %v8047 = vor.u32 %v8045, %v8046
      %v8048 = vsel %vm1471, %v8044, %v8047
      %v8049 = vrot.slane %v7931, 6
      %v8050 = vrot.slane %v7934, 7
      %v8051 = vor.u32 %v8049, %v8050
      %v8052 = vsel %vm1471, %v8047, %v8051
      %v8053 = vrot.slane %v7940, 6
      %v8054 = vrot.slane %v7943, 7
      %v8055 = vor.u32 %v8053, %v8054
      %v8056 = vsel %vm1471, %v8051, %v8055
      %v8057 = vrot.slane %v7949, 6
      %v8058 = vrot.slane %v7952, 7
      %v8059 = vor.u32 %v8057, %v8058
      %v8060 = vsel %vm1471, %v8055, %v8059
      %v8061 = vrot.slane %v7958, 6
      %v8062 = vrot.slane %v7961, 7
      %v8063 = vor.u32 %v8061, %v8062
      %v8064 = vsel %vm1471, %v8059, %v8063
      %v8065 = vrot.slane %v7967, 6
      %v8066 = vrot.slane %v7970, 7
      %v8067 = vor.u32 %v8065, %v8066
      %v8068 = vsel %vm1471, %v8063, %v8067
      %v8069 = vrot.slane %v7976, 6
      %v8070 = vrot.slane %v7979, 7
      %v8071 = vor.u32 %v8069, %v8070
      %v8072 = vsel %vm1471, %v8067, %v8071
      %v8081 = vsel %vm1511, 0, %v8044
      %v8082 = vmul.bf16 %v8081, %v1737
      %v8083 = vmul.bf16 %v8048, %v1738
      %v8084 = vmul.bf16 %v8052, %v1739
      %v8085 = vmul.bf16 %v8056, %v1740
      %v8086 = vmul.bf16 %v8060, %v1741
      %v8087 = vmul.bf16 %v8064, %v1742
      %v8088 = vmul.bf16 %v8068, %v1743
      %v8089 = vmul.bf16 %v8072, %v1744
      %v8090 = vrot.slane %v7914, 7
      %v8091 = vor.u32 %v8090, %v7917
      %v8092 = vrot.slane %v7922, 7
      %v8093 = vor.u32 %v8092, %v7925
      %v8094 = vsel %vm1761, %v8090, %v8093
      %v8095 = vrot.slane %v7931, 7
      %v8096 = vor.u32 %v8095, %v7934
      %v8097 = vsel %vm1761, %v8092, %v8096
      %v8098 = vrot.slane %v7940, 7
      %v8099 = vor.u32 %v8098, %v7943
      %v8100 = vsel %vm1761, %v8095, %v8099
      %v8101 = vrot.slane %v7949, 7
      %v8102 = vor.u32 %v8101, %v7952
      %v8103 = vsel %vm1761, %v8098, %v8102
      %v8104 = vrot.slane %v7958, 7
      %v8105 = vor.u32 %v8104, %v7961
      %v8106 = vsel %vm1761, %v8101, %v8105
      %v8107 = vrot.slane %v7967, 7
      %v8108 = vor.u32 %v8107, %v7970
      %v8109 = vsel %vm1761, %v8104, %v8108
      %v8110 = vrot.slane %v7976, 7
      %v8111 = vor.u32 %v8110, %v7979
      %v8112 = vsel %vm1761, %v8107, %v8111
      %v8121 = vsel %vm1794, 0, %v8091
      %v8122 = vmul.bf16 %v8121, %v2020
      %v8123 = vmul.bf16 %v8094, %v2021
      %v8124 = vmul.bf16 %v8097, %v2022
      %v8125 = vmul.bf16 %v8100, %v2023
      %v8126 = vmul.bf16 %v8103, %v2024
      %v8127 = vmul.bf16 %v8106, %v2025
      %v8128 = vmul.bf16 %v8109, %v2026
      %v8129 = vmul.bf16 %v8112, %v2027
      %v8130 = vmul.bf16 %v7905, %v2268
      %v8131 = vmul.bf16 %v7906, %v2269
      %v8132 = vmul.bf16 %v7907, %v2270
      %v8133 = vmul.bf16 %v7908, %v2271
      %v8134 = vmul.bf16 %v7909, %v2272
      %v8135 = vmul.bf16 %v7910, %v2273
      %v8136 = vmul.bf16 %v7911, %v2274
      %v8137 = vmul.bf16 %v7912, %v2275
      %v8138 = vrot.slane %v7917, 1
      %v8139 = vor.u32 %v7914, %v8138
      %v8140 = vrot.slane %v7925, 1
      %v8141 = vsel %vm2292, %v8139, %v8140
      %v8142 = vor.u32 %v7922, %v8140
      %v8143 = vrot.slane %v7934, 1
      %v8144 = vsel %vm2292, %v8142, %v8143
      %v8145 = vor.u32 %v7931, %v8143
      %v8146 = vrot.slane %v7943, 1
      %v8147 = vsel %vm2292, %v8145, %v8146
      %v8148 = vor.u32 %v7940, %v8146
      %v8149 = vrot.slane %v7952, 1
      %v8150 = vsel %vm2292, %v8148, %v8149
      %v8151 = vor.u32 %v7949, %v8149
      %v8152 = vrot.slane %v7961, 1
      %v8153 = vsel %vm2292, %v8151, %v8152
      %v8154 = vor.u32 %v7958, %v8152
      %v8155 = vrot.slane %v7970, 1
      %v8156 = vsel %vm2292, %v8154, %v8155
      %v8157 = vor.u32 %v7967, %v8155
      %v8158 = vrot.slane %v7979, 1
      %v8159 = vsel %vm2292, %v8157, %v8158
      %v8160 = vor.u32 %v7976, %v8158
      %v8169 = vsel %vm2325, %v8160, 0
      %v8170 = vmul.bf16 %v8141, %v2551
      %v8171 = vmul.bf16 %v8144, %v2552
      %v8172 = vmul.bf16 %v8147, %v2553
      %v8173 = vmul.bf16 %v8150, %v2554
      %v8174 = vmul.bf16 %v8153, %v2555
      %v8175 = vmul.bf16 %v8156, %v2556
      %v8176 = vmul.bf16 %v8159, %v2557
      %v8177 = vmul.bf16 %v8169, %v2558
      %v8178 = vrot.slane %v7914, 1
      %v8179 = vrot.slane %v7917, 2
      %v8180 = vor.u32 %v8178, %v8179
      %v8181 = vrot.slane %v7922, 1
      %v8182 = vrot.slane %v7925, 2
      %v8183 = vor.u32 %v8181, %v8182
      %v8184 = vsel %vm2575, %v8180, %v8183
      %v8185 = vrot.slane %v7931, 1
      %v8186 = vrot.slane %v7934, 2
      %v8187 = vor.u32 %v8185, %v8186
      %v8188 = vsel %vm2575, %v8183, %v8187
      %v8189 = vrot.slane %v7940, 1
      %v8190 = vrot.slane %v7943, 2
      %v8191 = vor.u32 %v8189, %v8190
      %v8192 = vsel %vm2575, %v8187, %v8191
      %v8193 = vrot.slane %v7949, 1
      %v8194 = vrot.slane %v7952, 2
      %v8195 = vor.u32 %v8193, %v8194
      %v8196 = vsel %vm2575, %v8191, %v8195
      %v8197 = vrot.slane %v7958, 1
      %v8198 = vrot.slane %v7961, 2
      %v8199 = vor.u32 %v8197, %v8198
      %v8200 = vsel %vm2575, %v8195, %v8199
      %v8201 = vrot.slane %v7967, 1
      %v8202 = vrot.slane %v7970, 2
      %v8203 = vor.u32 %v8201, %v8202
      %v8204 = vsel %vm2575, %v8199, %v8203
      %v8205 = vrot.slane %v7976, 1
      %v8206 = vrot.slane %v7979, 2
      %v8207 = vor.u32 %v8205, %v8206
      %v8208 = vsel %vm2575, %v8203, %v8207
      %v8217 = vsel %vm2616, %v8207, 0
      %v8218 = vmul.bf16 %v8184, %v2842
      %v8219 = vmul.bf16 %v8188, %v2843
      %v8220 = vmul.bf16 %v8192, %v2844
      %v8221 = vmul.bf16 %v8196, %v2845
      %v8222 = vmul.bf16 %v8200, %v2846
      %v8223 = vmul.bf16 %v8204, %v2847
      %v8224 = vmul.bf16 %v8208, %v2848
      %v8225 = vmul.bf16 %v8217, %v2849
      %v8226 = vrot.slane %v7905, 2
      %v8227 = vrot.slane %v7906, 2
      %v8228 = vsel %vm2866, %v8226, %v8227
      %v8229 = vrot.slane %v7907, 2
      %v8230 = vsel %vm2866, %v8227, %v8229
      %v8231 = vrot.slane %v7908, 2
      %v8232 = vsel %vm2866, %v8229, %v8231
      %v8233 = vrot.slane %v7909, 2
      %v8234 = vsel %vm2866, %v8231, %v8233
      %v8235 = vrot.slane %v7910, 2
      %v8236 = vsel %vm2866, %v8233, %v8235
      %v8237 = vrot.slane %v7911, 2
      %v8238 = vsel %vm2866, %v8235, %v8237
      %v8239 = vrot.slane %v7912, 2
      %v8240 = vsel %vm2866, %v8237, %v8239
      %v8249 = vsel %vm2889, %v8239, 0
      %v8251 = vmul.bf16 %v8228, %v3117
      %v8252 = vmul.bf16 %v8230, %v3118
      %v8253 = vmul.bf16 %v8232, %v3119
      %v8254 = vmul.bf16 %v8234, %v3120
      %v8255 = vmul.bf16 %v8236, %v3121
      %v8256 = vmul.bf16 %v8238, %v3122
      %v8257 = vmul.bf16 %v8240, %v3123
      %v8258 = vmul.bf16 %v8249, %v3124
      %v8259 = vrot.slane %v7914, 2
      %v8260 = vrot.slane %v7917, 3
      %v8261 = vor.u32 %v8259, %v8260
      %v8262 = vrot.slane %v7922, 2
      %v8263 = vrot.slane %v7925, 3
      %v8264 = vor.u32 %v8262, %v8263
      %v8265 = vsel %vm3141, %v8261, %v8264
      %v8266 = vrot.slane %v7931, 2
      %v8267 = vrot.slane %v7934, 3
      %v8268 = vor.u32 %v8266, %v8267
      %v8269 = vsel %vm3141, %v8264, %v8268
      %v8270 = vrot.slane %v7940, 2
      %v8271 = vrot.slane %v7943, 3
      %v8272 = vor.u32 %v8270, %v8271
      %v8273 = vsel %vm3141, %v8268, %v8272
      %v8274 = vrot.slane %v7949, 2
      %v8275 = vrot.slane %v7952, 3
      %v8276 = vor.u32 %v8274, %v8275
      %v8277 = vsel %vm3141, %v8272, %v8276
      %v8278 = vrot.slane %v7958, 2
      %v8279 = vrot.slane %v7961, 3
      %v8280 = vor.u32 %v8278, %v8279
      %v8281 = vsel %vm3141, %v8276, %v8280
      %v8282 = vrot.slane %v7967, 2
      %v8283 = vrot.slane %v7970, 3
      %v8284 = vor.u32 %v8282, %v8283
      %v8285 = vsel %vm3141, %v8280, %v8284
      %v8286 = vrot.slane %v7976, 2
      %v8287 = vrot.slane %v7979, 3
      %v8288 = vor.u32 %v8286, %v8287
      %v8289 = vsel %vm3141, %v8284, %v8288
      %v8298 = vsel %vm3181, %v8288, 0
      %v8299 = vmul.bf16 %v8265, %v3407
      %v8300 = vmul.bf16 %v8269, %v3408
      %v8301 = vmul.bf16 %v8273, %v3409
      %v8302 = vmul.bf16 %v8277, %v3410
      %v8303 = vmul.bf16 %v8281, %v3411
      %v8304 = vmul.bf16 %v8285, %v3412
      %v8305 = vmul.bf16 %v8289, %v3413
      %v8306 = vmul.bf16 %v8298, %v3414
      %8315 = vrot.lane.b32.xlu0 %v8034, 64
      %v8316 = vpop.permute.xlu0 %8315
      %8317 = vrot.lane.b32.xlu0 %v8035, 64
      %v8318 = vpop.permute.xlu0 %8317
      %8319 = vrot.lane.b32.xlu0 %v8036, 64
      %v8320 = vpop.permute.xlu0 %8319
      %8321 = vrot.lane.b32.xlu0 %v8037, 64
      %v8322 = vpop.permute.xlu0 %8321
      %8323 = vrot.lane.b32.xlu0 %v8038, 64
      %v8324 = vpop.permute.xlu0 %8323
      %8325 = vrot.lane.b32.xlu0 %v8039, 64
      %v8326 = vpop.permute.xlu0 %8325
      %8327 = vrot.lane.b32.xlu0 %v8040, 64
      %v8328 = vpop.permute.xlu0 %8327
      %8329 = vrot.lane.b32.xlu0 %v8041, 64
      %v8330 = vpop.permute.xlu0 %8329
      %8339 = vrot.lane.b32.xlu0 %v8122, 64
      %v8340 = vpop.permute.xlu0 %8339
      %8341 = vrot.lane.b32.xlu0 %v8123, 64
      %v8342 = vpop.permute.xlu0 %8341
      %8343 = vrot.lane.b32.xlu0 %v8124, 64
      %v8344 = vpop.permute.xlu0 %8343
      %8345 = vrot.lane.b32.xlu0 %v8125, 64
      %v8346 = vpop.permute.xlu0 %8345
      %8347 = vrot.lane.b32.xlu0 %v8126, 64
      %v8348 = vpop.permute.xlu0 %8347
      %8349 = vrot.lane.b32.xlu0 %v8127, 64
      %v8350 = vpop.permute.xlu0 %8349
      %8351 = vrot.lane.b32.xlu0 %v8128, 64
      %v8352 = vpop.permute.xlu0 %8351
      %8353 = vrot.lane.b32.xlu0 %v8129, 64
      %v8354 = vpop.permute.xlu0 %8353
      %8363 = vrot.lane.b32.xlu0 %v8170, 64
      %v8364 = vpop.permute.xlu0 %8363
      %8365 = vrot.lane.b32.xlu0 %v8171, 64
      %v8366 = vpop.permute.xlu0 %8365
      %8367 = vrot.lane.b32.xlu0 %v8172, 64
      %v8368 = vpop.permute.xlu0 %8367
      %8369 = vrot.lane.b32.xlu0 %v8173, 64
      %v8370 = vpop.permute.xlu0 %8369
      %8371 = vrot.lane.b32.xlu0 %v8174, 64
      %v8372 = vpop.permute.xlu0 %8371
      %8373 = vrot.lane.b32.xlu0 %v8175, 64
      %v8374 = vpop.permute.xlu0 %8373
      %8375 = vrot.lane.b32.xlu0 %v8176, 64
      %v8376 = vpop.permute.xlu0 %8375
      %8377 = vrot.lane.b32.xlu0 %v8177, 64
      %v8378 = vpop.permute.xlu0 %8377
      %8387 = vrot.lane.b32.xlu0 %v8251, 64
      %v8388 = vpop.permute.xlu0 %8387
      %8389 = vrot.lane.b32.xlu0 %v8252, 64
      %v8390 = vpop.permute.xlu0 %8389
      %8391 = vrot.lane.b32.xlu0 %v8253, 64
      %v8392 = vpop.permute.xlu0 %8391
      %8393 = vrot.lane.b32.xlu0 %v8254, 64
      %v8394 = vpop.permute.xlu0 %8393
      %8395 = vrot.lane.b32.xlu0 %v8255, 64
      %v8396 = vpop.permute.xlu0 %8395
      %8397 = vrot.lane.b32.xlu0 %v8256, 64
      %v8398 = vpop.permute.xlu0 %8397
      %8399 = vrot.lane.b32.xlu0 %v8257, 64
      %v8400 = vpop.permute.xlu0 %8399
      %8401 = vrot.lane.b32.xlu0 %v8258, 64
      %v8402 = vpop.permute.xlu0 %8401
      %v8405 = vsel %vm3600, %v7993, %v8316
      %v8409 = vsel %vm3600, %v7994, %v8318
      %v8413 = vsel %vm3600, %v7995, %v8320
      %v8417 = vsel %vm3600, %v7996, %v8322
      %v8421 = vsel %vm3600, %v7997, %v8324
      %v8425 = vsel %vm3600, %v7998, %v8326
      %v8429 = vsel %vm3600, %v7999, %v8328
      %v8433 = vsel %vm3600, %v8000, %v8330
      %v8437 = vsel %vm3600, %v8082, %v8340
      %v8441 = vsel %vm3600, %v8083, %v8342
      %v8445 = vsel %vm3600, %v8084, %v8344
      %v8449 = vsel %vm3600, %v8085, %v8346
      %v8453 = vsel %vm3600, %v8086, %v8348
      %v8457 = vsel %vm3600, %v8087, %v8350
      %v8461 = vsel %vm3600, %v8088, %v8352
      %v8465 = vsel %vm3600, %v8089, %v8354
      %v8469 = vsel %vm3600, %v8130, %v8364
      %v8473 = vsel %vm3600, %v8131, %v8366
      %v8477 = vsel %vm3600, %v8132, %v8368
      %v8481 = vsel %vm3600, %v8133, %v8370
      %v8485 = vsel %vm3600, %v8134, %v8372
      %v8489 = vsel %vm3600, %v8135, %v8374
      %v8493 = vsel %vm3600, %v8136, %v8376
      %v8497 = vsel %vm3600, %v8137, %v8378
      %v8501 = vsel %vm3600, %v8218, %v8388
      %v8505 = vsel %vm3600, %v8219, %v8390
      %v8509 = vsel %vm3600, %v8220, %v8392
      %v8513 = vsel %vm3600, %v8221, %v8394
      %v8517 = vsel %vm3600, %v8222, %v8396
      %v8521 = vsel %vm3600, %v8223, %v8398
      %v8525 = vsel %vm3600, %v8224, %v8400
      %v8529 = vsel %vm3600, %v8225, %v8402
      %v8532 = vlaneseq
      %v8533 = vshrl.u32 %v8532, 7
      %v8534 = vsub.s32 0, %v8533
      %v8535 = vrot.slane %v7904, %v8534
      %v8609 = vunpack.c.l.b16 %v7831
      %v8610 = vunpack.c.l.b16 %v7832
      %v8611 = vunpack.c.l.b16 %v7833
      %v8612 = vunpack.c.l.b16 %v7834
      %v8613 = vunpack.c.l.b16 %v7835
      %v8614 = vunpack.c.l.b16 %v7836
      %v8615 = vunpack.c.l.b16 %v7837
      %v8616 = vunpack.c.l.b16 %v7838
      %v8617 = vunpack.c.l.b16 %v7839
      %v8618 = vunpack.c.l.b16 %v7840
      %v8619 = vunpack.c.l.b16 %v7841
      %v8620 = vunpack.c.l.b16 %v7842
      %v8621 = vunpack.c.l.b16 %v7843
      %v8622 = vunpack.c.l.b16 %v7844
      %v8623 = vunpack.c.l.b16 %v7845
      %v8624 = vunpack.c.l.b16 %v7846
      %v8625 = vunpack.c.l.b16 %v7847
      %v8626 = vunpack.c.l.b16 %v7848
      %v8627 = vunpack.c.l.b16 %v7849
      %v8628 = vunpack.c.l.b16 %v7850
      %v8629 = vunpack.c.l.b16 %v7851
      %v8630 = vunpack.c.l.b16 %v7852
      %v8631 = vunpack.c.l.b16 %v7853
      %v8632 = vunpack.c.l.b16 %v7854
      %v8633 = vunpack.c.l.b16 %v7855
      %v8634 = vunpack.c.l.b16 %v7856
      %v8635 = vunpack.c.l.b16 %v7857
      %v8636 = vunpack.c.l.b16 %v7858
      %v8637 = vunpack.c.l.b16 %v7859
      %v8638 = vunpack.c.l.b16 %v7860
      %v8639 = vunpack.c.l.b16 %v7861
      %v8640 = vunpack.c.l.b16 %v7862
      %v8641 = vunpack.c.l.b16 %v7863
      %v8642 = vunpack.c.l.b16 %v7864
      %v8643 = vunpack.c.l.b16 %v7865
      %v8644 = vunpack.c.l.b16 %v7866
      %v8645 = vunpack.c.l.b16 %v7867
      %v8646 = vunpack.c.l.b16 %v7868
      %v8647 = vunpack.c.l.b16 %v7869
      %v8648 = vunpack.c.l.b16 %v7870
      %v8649 = vunpack.c.l.b16 %v7871
      %v8650 = vunpack.c.l.b16 %v7872
      %v8651 = vunpack.c.l.b16 %v7873
      %v8652 = vunpack.c.l.b16 %v7874
      %v8653 = vunpack.c.l.b16 %v7875
      %v8654 = vunpack.c.l.b16 %v7876
      %v8655 = vunpack.c.l.b16 %v7877
      %v8656 = vunpack.c.l.b16 %v7878
      %v8657 = vunpack.c.l.b16 %v7879
      %v8658 = vunpack.c.l.b16 %v7880
      %v8659 = vunpack.c.l.b16 %v7881
      %v8660 = vunpack.c.l.b16 %v7882
      %v8661 = vunpack.c.l.b16 %v7883
      %v8662 = vunpack.c.l.b16 %v7884
      %v8663 = vunpack.c.l.b16 %v7885
      %v8664 = vunpack.c.l.b16 %v7886
      %v8665 = vunpack.c.l.b16 %v7887
      %v8666 = vunpack.c.l.b16 %v7888
      %v8667 = vunpack.c.l.b16 %v7889
      %v8668 = vunpack.c.l.b16 %v7890
      %v8669 = vunpack.c.l.b16 %v7891
      %v8670 = vunpack.c.l.b16 %v7892
      %v8671 = vunpack.c.l.b16 %v7893
      %v8672 = vunpack.c.l.b16 %v7894
      %v8673 = vunpack.c.l.b16 %v7895
      %v8674 = vunpack.c.l.b16 %v7896
      %v8675 = vunpack.c.l.b16 %v7897
      %v8676 = vunpack.c.l.b16 %v7898
      %v8677 = vunpack.c.l.b16 %v7899
      %v8678 = vunpack.c.l.b16 %v7900
      %v8679 = vunpack.c.l.b16 %v7901
      %v8680 = vunpack.c.l.b16 %v7902
      %v8681 = vpack.c.b16 %v8610, %v8609
      %v8682 = vpack.c.b16 %v8612, %v8611
      %v8683 = vpack.c.b16 %v8614, %v8613
      %v8684 = vpack.c.b16 %v8616, %v8615
      %v8685 = vpack.c.b16 %v8618, %v8617
      %v8686 = vpack.c.b16 %v8620, %v8619
      %v8687 = vpack.c.b16 %v8622, %v8621
      %v8688 = vpack.c.b16 %v8624, %v8623
      %v8689 = vpack.c.b16 %v8626, %v8625
      %v8690 = vpack.c.b16 %v8628, %v8627
      %v8691 = vpack.c.b16 %v8630, %v8629
      %v8692 = vpack.c.b16 %v8632, %v8631
      %v8693 = vpack.c.b16 %v8634, %v8633
      %v8694 = vpack.c.b16 %v8636, %v8635
      %v8695 = vpack.c.b16 %v8638, %v8637
      %v8696 = vpack.c.b16 %v8640, %v8639
      %v8697 = vpack.c.b16 %v8642, %v8641
      %v8698 = vpack.c.b16 %v8644, %v8643
      %v8699 = vpack.c.b16 %v8646, %v8645
      %v8700 = vpack.c.b16 %v8648, %v8647
      %v8701 = vpack.c.b16 %v8650, %v8649
      %v8702 = vpack.c.b16 %v8652, %v8651
      %v8703 = vpack.c.b16 %v8654, %v8653
      %v8704 = vpack.c.b16 %v8656, %v8655
      %v8705 = vpack.c.b16 %v8658, %v8657
      %v8706 = vpack.c.b16 %v8660, %v8659
      %v8707 = vpack.c.b16 %v8662, %v8661
      %v8708 = vpack.c.b16 %v8664, %v8663
      %v8709 = vpack.c.b16 %v8666, %v8665
      %v8710 = vpack.c.b16 %v8668, %v8667
      %v8711 = vpack.c.b16 %v8670, %v8669
      %v8712 = vpack.c.b16 %v8672, %v8671
      %v8713 = vpack.c.b16 %v8674, %v8673
      %v8714 = vpack.c.b16 %v8676, %v8675
      %v8715 = vpack.c.b16 %v8678, %v8677
      %v8716 = vpack.c.b16 %v8680, %v8679
      %v8754 = vsel %vm3600, %v8299, 0
      %v8757 = vsel %vm3600, %v8300, 0
      %v8760 = vsel %vm3600, %v8301, 0
      %v8763 = vsel %vm3600, %v8302, 0
      %v8766 = vsel %vm3600, %v8303, 0
      %v8769 = vsel %vm3600, %v8304, 0
      %v8772 = vsel %vm3600, %v8305, 0
      %v8775 = vsel %vm3600, %v8306, 0
      %8777 = vmatprep.subr.bf16.mxu0 0
      %8778 = vmatpush1.bf16.msra.mxu0 %v8688
      %8779 = vmatprep.subr.bf16.mxu0 0
      %8780 = vmatpush1.bf16.msra.mxu0 %v8687
      %8781 = vmatprep.subr.bf16.mxu0 0
      %8782 = vmatpush1.bf16.msra.mxu0 %v8686
      %8783 = vmatprep.subr.bf16.mxu0 0
      %8784 = vmatpush1.bf16.msra.mxu0 %v8685
      %8785 = vmatprep.subr.bf16.mxu0 0
      %8786 = vmatpush1.bf16.msra.mxu0 %v8684
      %8787 = vmatprep.subr.bf16.mxu0 0
      %8788 = vmatpush1.bf16.msra.mxu0 %v8683
      %8789 = vmatprep.subr.bf16.mxu0 0
      %8790 = vmatpush1.bf16.msra.mxu0 %v8682
      %8791 = vmatprep.subr.bf16.mxu0 0
      %8792 = vmatpush1.bf16.msra.mxu0 %v8681
      %8793 = vmatprep.subr.bf16.mxu0 0
      %8794 = vmatpush2.bf16.msra.mxu0 %v8696
      %8795 = vmatprep.subr.bf16.mxu0 0
      %8796 = vmatpush2.bf16.msra.mxu0 %v8695
      %8797 = vmatprep.subr.bf16.mxu0 0
      %8798 = vmatpush2.bf16.msra.mxu0 %v8694
      %8799 = vmatprep.subr.bf16.mxu0 0
      %8800 = vmatpush2.bf16.msra.mxu0 %v8693
      %8801 = vmatprep.subr.bf16.mxu0 0
      %8802 = vmatpush2.bf16.msra.mxu0 %v8692
      %8803 = vmatprep.subr.bf16.mxu0 0
      %8804 = vmatpush2.bf16.msra.mxu0 %v8691
      %8805 = vmatprep.subr.bf16.mxu0 0
      %8806 = vmatpush2.bf16.msra.mxu0 %v8690
      %8807 = vmatprep.subr.bf16.mxu0 0
      %8808 = vmatpush2.bf16.msra.mxu0 %v8689
      %8809 = vmatprep.mubr.bf16.mxu0 %v8437
      %8810 = vmatmul.mubr.bf16.gmra.mxu0 %v8405
      %v8811 = vpop.f32.mrf.mxu0
      %v8812 = vadd.f32 %v8535, %v8811
      %v8813 = vpop.f32.mrf.mxu0
      %v8814 = vpop.f32.mrf.mxu0
      %v8815 = vadd.f32 %v8535, %v8814
      %v8816 = vpop.f32.mrf.mxu0
      %8817 = vmatprep.mubr.bf16.mxu0 %v8441
      %8818 = vmatmul.mubr.bf16.gmra.mxu0 %v8409
      %v8819 = vpop.f32.mrf.mxu0
      %v8820 = vadd.f32 %v8535, %v8819
      %v8821 = vpop.f32.mrf.mxu0
      %v8822 = vpop.f32.mrf.mxu0
      %v8823 = vadd.f32 %v8535, %v8822
      %v8824 = vpop.f32.mrf.mxu0
      %8825 = vmatprep.mubr.bf16.mxu0 %v8445
      %8826 = vmatmul.mubr.bf16.gmra.mxu0 %v8413
      %v8827 = vpop.f32.mrf.mxu0
      %v8828 = vadd.f32 %v8535, %v8827
      %v8829 = vpop.f32.mrf.mxu0
      %v8830 = vpop.f32.mrf.mxu0
      %v8831 = vadd.f32 %v8535, %v8830
      %v8832 = vpop.f32.mrf.mxu0
      %8833 = vmatprep.mubr.bf16.mxu0 %v8449
      %8834 = vmatmul.mubr.bf16.gmra.mxu0 %v8417
      %v8835 = vpop.f32.mrf.mxu0
      %v8836 = vadd.f32 %v8535, %v8835
      %v8837 = vpop.f32.mrf.mxu0
      %v8838 = vpop.f32.mrf.mxu0
      %v8839 = vadd.f32 %v8535, %v8838
      %v8840 = vpop.f32.mrf.mxu0
      %8841 = vmatprep.mubr.bf16.mxu0 %v8453
      %8842 = vmatmul.mubr.bf16.gmra.mxu0 %v8421
      %v8843 = vpop.f32.mrf.mxu0
      %v8844 = vadd.f32 %v8535, %v8843
      %v8845 = vpop.f32.mrf.mxu0
      %v8846 = vpop.f32.mrf.mxu0
      %v8847 = vadd.f32 %v8535, %v8846
      %v8848 = vpop.f32.mrf.mxu0
      %8849 = vmatprep.mubr.bf16.mxu0 %v8457
      %8850 = vmatmul.mubr.bf16.gmra.mxu0 %v8425
      %v8851 = vpop.f32.mrf.mxu0
      %v8852 = vadd.f32 %v8535, %v8851
      %v8853 = vpop.f32.mrf.mxu0
      %v8854 = vpop.f32.mrf.mxu0
      %v8855 = vadd.f32 %v8535, %v8854
      %v8856 = vpop.f32.mrf.mxu0
      %8857 = vmatprep.mubr.bf16.mxu0 %v8461
      %8858 = vmatmul.mubr.bf16.gmra.mxu0 %v8429
      %v8859 = vpop.f32.mrf.mxu0
      %v8860 = vadd.f32 %v8535, %v8859
      %v8861 = vpop.f32.mrf.mxu0
      %v8862 = vpop.f32.mrf.mxu0
      %v8863 = vadd.f32 %v8535, %v8862
      %v8864 = vpop.f32.mrf.mxu0
      %8865 = vmatprep.mubr.bf16.mxu0 %v8465
      %8866 = vmatmul.mubr.bf16.gmra.mxu0 %v8433
      %v8867 = vpop.f32.mrf.mxu0
      %v8868 = vadd.f32 %v8535, %v8867
      %v8869 = vpop.f32.mrf.mxu0
      %v8870 = vpop.f32.mrf.mxu0
      %v8871 = vadd.f32 %v8535, %v8870
      %v8872 = vpop.f32.mrf.mxu0
      %8873 = vdwg.mxu0
      %8874 = vmatprep.subr.bf16.mxu0 0
      %8875 = vmatpush1.bf16.msra.mxu0 %v8704
      %8876 = vmatprep.subr.bf16.mxu0 0
      %8877 = vmatpush1.bf16.msra.mxu0 %v8703
      %8878 = vmatprep.subr.bf16.mxu0 0
      %8879 = vmatpush1.bf16.msra.mxu0 %v8702
      %8880 = vmatprep.subr.bf16.mxu0 0
      %8881 = vmatpush1.bf16.msra.mxu0 %v8701
      %8882 = vmatprep.subr.bf16.mxu0 0
      %8883 = vmatpush1.bf16.msra.mxu0 %v8700
      %8884 = vmatprep.subr.bf16.mxu0 0
      %8885 = vmatpush1.bf16.msra.mxu0 %v8699
      %8886 = vmatprep.subr.bf16.mxu0 0
      %8887 = vmatpush1.bf16.msra.mxu0 %v8698
      %8888 = vmatprep.subr.bf16.mxu0 0
      %8889 = vmatpush1.bf16.msra.mxu0 %v8697
      %8890 = vmatprep.subr.bf16.mxu0 0
      %8891 = vmatpush2.bf16.msra.mxu0 %v8712
      %8892 = vmatprep.subr.bf16.mxu0 0
      %8893 = vmatpush2.bf16.msra.mxu0 %v8711
      %8894 = vmatprep.subr.bf16.mxu0 0
      %8895 = vmatpush2.bf16.msra.mxu0 %v8710
      %8896 = vmatprep.subr.bf16.mxu0 0
      %8897 = vmatpush2.bf16.msra.mxu0 %v8709
      %8898 = vmatprep.subr.bf16.mxu0 0
      %8899 = vmatpush2.bf16.msra.mxu0 %v8708
      %8900 = vmatprep.subr.bf16.mxu0 0
      %8901 = vmatpush2.bf16.msra.mxu0 %v8707
      %8902 = vmatprep.subr.bf16.mxu0 0
      %8903 = vmatpush2.bf16.msra.mxu0 %v8706
      %8904 = vmatprep.subr.bf16.mxu0 0
      %8905 = vmatpush2.bf16.msra.mxu0 %v8705
      %8906 = vmatprep.mubr.bf16.mxu0 %v8501
      %8907 = vmatmul.mubr.bf16.gmra.mxu0 %v8469
      %v8908 = vpop.f32.mrf.mxu0
      %v8909 = vadd.f32 %v8812, %v8908
      %v8910 = vpop.f32.mrf.mxu0
      %v8911 = vpop.f32.mrf.mxu0
      %v8912 = vadd.f32 %v8815, %v8911
      %v8913 = vpop.f32.mrf.mxu0
      %8914 = vmatprep.mubr.bf16.mxu0 %v8505
      %8915 = vmatmul.mubr.bf16.gmra.mxu0 %v8473
      %v8916 = vpop.f32.mrf.mxu0
      %v8917 = vadd.f32 %v8820, %v8916
      %v8918 = vpop.f32.mrf.mxu0
      %v8919 = vpop.f32.mrf.mxu0
      %v8920 = vadd.f32 %v8823, %v8919
      %v8921 = vpop.f32.mrf.mxu0
      %8922 = vmatprep.mubr.bf16.mxu0 %v8509
      %8923 = vmatmul.mubr.bf16.gmra.mxu0 %v8477
      %v8924 = vpop.f32.mrf.mxu0
      %v8925 = vadd.f32 %v8828, %v8924
      %v8926 = vpop.f32.mrf.mxu0
      %v8927 = vpop.f32.mrf.mxu0
      %v8928 = vadd.f32 %v8831, %v8927
      %v8929 = vpop.f32.mrf.mxu0
      %8930 = vmatprep.mubr.bf16.mxu0 %v8513
      %8931 = vmatmul.mubr.bf16.gmra.mxu0 %v8481
      %v8932 = vpop.f32.mrf.mxu0
      %v8933 = vadd.f32 %v8836, %v8932
      %v8934 = vpop.f32.mrf.mxu0
      %v8935 = vpop.f32.mrf.mxu0
      %v8936 = vadd.f32 %v8839, %v8935
      %v8937 = vpop.f32.mrf.mxu0
      %8938 = vmatprep.mubr.bf16.mxu0 %v8517
      %8939 = vmatmul.mubr.bf16.gmra.mxu0 %v8485
      %v8940 = vpop.f32.mrf.mxu0
      %v8941 = vadd.f32 %v8844, %v8940
      %v8942 = vpop.f32.mrf.mxu0
      %v8943 = vpop.f32.mrf.mxu0
      %v8944 = vadd.f32 %v8847, %v8943
      %v8945 = vpop.f32.mrf.mxu0
      %8946 = vmatprep.mubr.bf16.mxu0 %v8521
      %8947 = vmatmul.mubr.bf16.gmra.mxu0 %v8489
      %v8948 = vpop.f32.mrf.mxu0
      %v8949 = vadd.f32 %v8852, %v8948
      %v8950 = vpop.f32.mrf.mxu0
      %v8951 = vpop.f32.mrf.mxu0
      %v8952 = vadd.f32 %v8855, %v8951
      %v8953 = vpop.f32.mrf.mxu0
      %8954 = vmatprep.mubr.bf16.mxu0 %v8525
      %8955 = vmatmul.mubr.bf16.gmra.mxu0 %v8493
      %v8956 = vpop.f32.mrf.mxu0
      %v8957 = vadd.f32 %v8860, %v8956
      %v8958 = vpop.f32.mrf.mxu0
      %v8959 = vpop.f32.mrf.mxu0
      %v8960 = vadd.f32 %v8863, %v8959
      %v8961 = vpop.f32.mrf.mxu0
      %8962 = vmatprep.mubr.bf16.mxu0 %v8529
      %8963 = vmatmul.mubr.bf16.gmra.mxu0 %v8497
      %v8964 = vpop.f32.mrf.mxu0
      %v8965 = vadd.f32 %v8868, %v8964
      %v8966 = vpop.f32.mrf.mxu0
      %v8967 = vpop.f32.mrf.mxu0
      %v8968 = vadd.f32 %v8871, %v8967
      %v8969 = vpop.f32.mrf.mxu0
      %8970 = vdwg.mxu0
      %8971 = vmatprep.subr.bf16.mxu0 0
      %8972 = vmatpush1.bf16.msra.mxu0 0
      %8973 = vmatprep.subr.bf16.mxu0 0
      %8974 = vmatpush1.bf16.msra.mxu0 0
      %8975 = vmatprep.subr.bf16.mxu0 0
      %8976 = vmatpush1.bf16.msra.mxu0 0
      %8977 = vmatprep.subr.bf16.mxu0 0
      %8978 = vmatpush1.bf16.msra.mxu0 0
      %8979 = vmatprep.subr.bf16.mxu0 0
      %8980 = vmatpush1.bf16.msra.mxu0 %v8716
      %8981 = vmatprep.subr.bf16.mxu0 0
      %8982 = vmatpush1.bf16.msra.mxu0 %v8715
      %8983 = vmatprep.subr.bf16.mxu0 0
      %8984 = vmatpush1.bf16.msra.mxu0 %v8714
      %8985 = vmatprep.subr.bf16.mxu0 0
      %8986 = vmatpush1.bf16.msra.mxu0 %v8713
      %8987 = vmatprep.subr.bf16.mxu0 0
      %8988 = vmatpush2.bf16.msra.mxu0 0
      %8989 = vmatprep.subr.bf16.mxu0 0
      %8990 = vmatpush2.bf16.msra.mxu0 0
      %8991 = vmatprep.subr.bf16.mxu0 0
      %8992 = vmatpush2.bf16.msra.mxu0 0
      %8993 = vmatprep.subr.bf16.mxu0 0
      %8994 = vmatpush2.bf16.msra.mxu0 0
      %8995 = vmatprep.subr.bf16.mxu0 0
      %8996 = vmatpush2.bf16.msra.mxu0 0
      %8997 = vmatprep.subr.bf16.mxu0 0
      %8998 = vmatpush2.bf16.msra.mxu0 0
      %8999 = vmatprep.subr.bf16.mxu0 0
      %9000 = vmatpush2.bf16.msra.mxu0 0
      %9001 = vmatprep.subr.bf16.mxu0 0
      %9002 = vmatpush2.bf16.msra.mxu0 0
      %9003 = vmatprep.mubr.bf16.mxu0 0
      %9004 = vmatmul.mubr.bf16.gmra.mxu0 %v8754
      %v9005 = vpop.f32.mrf.mxu0
      %v9006 = vadd.f32 %v8909, %v9005
      %v9007 = vpop.f32.mrf.mxu0
      %v9008 = vpop.f32.mrf.mxu0
      %v9009 = vadd.f32 %v8912, %v9008
      %v9010 = vpop.f32.mrf.mxu0
      %9011 = vmatprep.mubr.bf16.mxu0 0
      %9012 = vmatmul.mubr.bf16.gmra.mxu0 %v8757
      %v9013 = vpop.f32.mrf.mxu0
      %v9014 = vadd.f32 %v8917, %v9013
      %v9015 = vpop.f32.mrf.mxu0
      %v9016 = vpop.f32.mrf.mxu0
      %v9017 = vadd.f32 %v8920, %v9016
      %v9018 = vpop.f32.mrf.mxu0
      %9019 = vmatprep.mubr.bf16.mxu0 0
      %9020 = vmatmul.mubr.bf16.gmra.mxu0 %v8760
      %v9021 = vpop.f32.mrf.mxu0
      %v9022 = vadd.f32 %v8925, %v9021
      %v9023 = vpop.f32.mrf.mxu0
      %v9024 = vpop.f32.mrf.mxu0
      %v9025 = vadd.f32 %v8928, %v9024
      %v9026 = vpop.f32.mrf.mxu0
      %9027 = vmatprep.mubr.bf16.mxu0 0
      %9028 = vmatmul.mubr.bf16.gmra.mxu0 %v8763
      %v9029 = vpop.f32.mrf.mxu0
      %v9030 = vadd.f32 %v8933, %v9029
      %v9031 = vpop.f32.mrf.mxu0
      %v9032 = vpop.f32.mrf.mxu0
      %v9033 = vadd.f32 %v8936, %v9032
      %v9034 = vpop.f32.mrf.mxu0
      %9035 = vmatprep.mubr.bf16.mxu0 0
      %9036 = vmatmul.mubr.bf16.gmra.mxu0 %v8766
      %v9037 = vpop.f32.mrf.mxu0
      %v9038 = vadd.f32 %v8941, %v9037
      %v9039 = vpop.f32.mrf.mxu0
      %v9040 = vpop.f32.mrf.mxu0
      %v9041 = vadd.f32 %v8944, %v9040
      %v9042 = vpop.f32.mrf.mxu0
      %9043 = vmatprep.mubr.bf16.mxu0 0
      %9044 = vmatmul.mubr.bf16.gmra.mxu0 %v8769
      %v9045 = vpop.f32.mrf.mxu0
      %v9046 = vadd.f32 %v8949, %v9045
      %v9047 = vpop.f32.mrf.mxu0
      %v9048 = vpop.f32.mrf.mxu0
      %v9049 = vadd.f32 %v8952, %v9048
      %v9050 = vpop.f32.mrf.mxu0
      %9051 = vmatprep.mubr.bf16.mxu0 0
      %9052 = vmatmul.mubr.bf16.gmra.mxu0 %v8772
      %v9053 = vpop.f32.mrf.mxu0
      %v9054 = vadd.f32 %v8957, %v9053
      %v9055 = vpop.f32.mrf.mxu0
      %v9056 = vpop.f32.mrf.mxu0
      %v9057 = vadd.f32 %v8960, %v9056
      %v9058 = vpop.f32.mrf.mxu0
      %9059 = vmatprep.mubr.bf16.mxu0 0
      %9060 = vmatmul.mubr.bf16.gmra.mxu0 %v8775
      %v9061 = vpop.f32.mrf.mxu0
      %v9062 = vadd.f32 %v8965, %v9061
      %v9063 = vpop.f32.mrf.mxu0
      %v9064 = vpop.f32.mrf.mxu0
      %v9065 = vadd.f32 %v8968, %v9064
      %v9066 = vpop.f32.mrf.mxu0
      %9067 = vdwg.mxu0
      %v9068 = vadd.f32 %v9006, %v6560
      %v9069 = vadd.f32 %v9009, %v6561
      %v9070 = vadd.f32 %v9014, %v6562
      %v9071 = vadd.f32 %v9017, %v6563
      %v9072 = vadd.f32 %v9022, %v6564
      %v9073 = vadd.f32 %v9025, %v6565
      %v9074 = vadd.f32 %v9030, %v6566
      %v9075 = vadd.f32 %v9033, %v6567
      %v9076 = vadd.f32 %v9038, %v6568
      %v9077 = vadd.f32 %v9041, %v6569
      %v9078 = vadd.f32 %v9046, %v6570
      %v9079 = vadd.f32 %v9049, %v6571
      %v9080 = vadd.f32 %v9054, %v6572
      %v9081 = vadd.f32 %v9057, %v6573
      %v9082 = vadd.f32 %v9062, %v6574
      %v9083 = vadd.f32 %v9065, %v6575
      %v9084 = vmax.f32 %v9068, 0.0
      %v9085 = vmax.f32 %v9069, 0.0
      %v9086 = vmax.f32 %v9070, 0.0
      %v9087 = vmax.f32 %v9071, 0.0
      %v9088 = vmax.f32 %v9072, 0.0
      %v9089 = vmax.f32 %v9073, 0.0
      %v9090 = vmax.f32 %v9074, 0.0
      %v9091 = vmax.f32 %v9075, 0.0
      %v9092 = vmax.f32 %v9076, 0.0
      %v9093 = vmax.f32 %v9077, 0.0
      %v9094 = vmax.f32 %v9078, 0.0
      %v9095 = vmax.f32 %v9079, 0.0
      %v9096 = vmax.f32 %v9080, 0.0
      %v9097 = vmax.f32 %v9081, 0.0
      %v9098 = vmax.f32 %v9082, 0.0
      %v9099 = vmax.f32 %v9083, 0.0
      %v9100 = vpack.c.bf16 %v9085, %v9084
      %v9101 = vpack.c.bf16 %v9087, %v9086
      %v9102 = vpack.c.bf16 %v9089, %v9088
      %v9103 = vpack.c.bf16 %v9091, %v9090
      %v9104 = vpack.c.bf16 %v9093, %v9092
      %v9105 = vpack.c.bf16 %v9095, %v9094
      %v9106 = vpack.c.bf16 %v9097, %v9096
      %v9107 = vpack.c.bf16 %v9099, %v9098
      %v9108 = vld [vmem:[%s8] sm:$0xf]
      %v9109 = vld [vmem:[%s8 + $0x4] sm:$0xf]
      %v9110 = vld [vmem:[%s8 + $0x8] sm:$0xf]
      %v9111 = vld [vmem:[%s8 + $0xc] sm:$0xf]
      %v9112 = vld [vmem:[%s8 + $0x10] sm:$0xf]
      %v9113 = vld [vmem:[%s8 + $0x14] sm:$0xf]
      %v9114 = vld [vmem:[%s8 + $0x18] sm:$0xf]
      %v9115 = vld [vmem:[%s8 + $0x1c] sm:$0xf]
      %v9116 = vld [vmem:[%s9] sm:$0x1]
      %v9118 = vlaneseq
      %v9119 = vshrl.u32 %v9118, 7
      %v9120 = vsub.s32 0, %v9119
      %v9121 = vrot.slane %v9116, %v9120
      %v9131 = vunpack.c.l.b16 %v9108
      %v9132 = vunpack.c.l.b16 %v9109
      %v9133 = vunpack.c.l.b16 %v9110
      %v9134 = vunpack.c.l.b16 %v9111
      %v9135 = vunpack.c.l.b16 %v9112
      %v9136 = vunpack.c.l.b16 %v9113
      %v9137 = vunpack.c.l.b16 %v9114
      %v9138 = vunpack.c.l.b16 %v9115
      %v9139 = vpack.c.b16 %v9132, %v9131
      %v9140 = vpack.c.b16 %v9134, %v9133
      %v9141 = vpack.c.b16 %v9136, %v9135
      %v9142 = vpack.c.b16 %v9138, %v9137
      %v9148 = vsel %vm3600, %v9100, 0
      %v9151 = vsel %vm3600, %v9101, 0
      %v9154 = vsel %vm3600, %v9102, 0
      %v9157 = vsel %vm3600, %v9103, 0
      %v9160 = vsel %vm3600, %v9104, 0
      %v9163 = vsel %vm3600, %v9105, 0
      %v9166 = vsel %vm3600, %v9106, 0
      %v9169 = vsel %vm3600, %v9107, 0
      %9171 = vmatprep.subr.bf16.mxu0 0
      %9172 = vmatpush1.bf16.msra.mxu0 0
      %9173 = vmatprep.subr.bf16.mxu0 0
      %9174 = vmatpush1.bf16.msra.mxu0 0
      %9175 = vmatprep.subr.bf16.mxu0 0
      %9176 = vmatpush1.bf16.msra.mxu0 0
      %9177 = vmatprep.subr.bf16.mxu0 0
      %9178 = vmatpush1.bf16.msra.mxu0 0
      %9179 = vmatprep.subr.bf16.mxu0 0
      %9180 = vmatpush1.bf16.msra.mxu0 %v9142
      %9181 = vmatprep.subr.bf16.mxu0 0
      %9182 = vmatpush1.bf16.msra.mxu0 %v9141
      %9183 = vmatprep.subr.bf16.mxu0 0
      %9184 = vmatpush1.bf16.msra.mxu0 %v9140
      %9185 = vmatprep.subr.bf16.mxu0 0
      %9186 = vmatpush1.bf16.msra.mxu0 %v9139
      %9187 = vmatprep.subr.bf16.mxu0 0
      %9188 = vmatpush2.bf16.msra.mxu0 0
      %9189 = vmatprep.subr.bf16.mxu0 0
      %9190 = vmatpush2.bf16.msra.mxu0 0
      %9191 = vmatprep.subr.bf16.mxu0 0
      %9192 = vmatpush2.bf16.msra.mxu0 0
      %9193 = vmatprep.subr.bf16.mxu0 0
      %9194 = vmatpush2.bf16.msra.mxu0 0
      %9195 = vmatprep.subr.bf16.mxu0 0
      %9196 = vmatpush2.bf16.msra.mxu0 0
      %9197 = vmatprep.subr.bf16.mxu0 0
      %9198 = vmatpush2.bf16.msra.mxu0 0
      %9199 = vmatprep.subr.bf16.mxu0 0
      %9200 = vmatpush2.bf16.msra.mxu0 0
      %9201 = vmatprep.subr.bf16.mxu0 0
      %9202 = vmatpush2.bf16.msra.mxu0 0
      %9203 = vmatprep.mubr.bf16.mxu0 0
      %9204 = vmatmul.mubr.bf16.gmra.mxu0 %v9148
      %v9205 = vpop.f32.mrf.mxu0
      %v9206 = vadd.f32 %v9121, %v9205
      %v9207 = vpop.f32.mrf.mxu0
      %v9208 = vpop.f32.mrf.mxu0
      %v9209 = vadd.f32 %v9121, %v9208
      %v9210 = vpop.f32.mrf.mxu0
      %9211 = vmatprep.mubr.bf16.mxu0 0
      %9212 = vmatmul.mubr.bf16.gmra.mxu0 %v9151
      %v9213 = vpop.f32.mrf.mxu0
      %v9214 = vadd.f32 %v9121, %v9213
      %v9215 = vpop.f32.mrf.mxu0
      %v9216 = vpop.f32.mrf.mxu0
      %v9217 = vadd.f32 %v9121, %v9216
      %v9218 = vpop.f32.mrf.mxu0
      %9219 = vmatprep.mubr.bf16.mxu0 0
      %9220 = vmatmul.mubr.bf16.gmra.mxu0 %v9154
      %v9221 = vpop.f32.mrf.mxu0
      %v9222 = vadd.f32 %v9121, %v9221
      %v9223 = vpop.f32.mrf.mxu0
      %v9224 = vpop.f32.mrf.mxu0
      %v9225 = vadd.f32 %v9121, %v9224
      %v9226 = vpop.f32.mrf.mxu0
      %9227 = vmatprep.mubr.bf16.mxu0 0
      %9228 = vmatmul.mubr.bf16.gmra.mxu0 %v9157
      %v9229 = vpop.f32.mrf.mxu0
      %v9230 = vadd.f32 %v9121, %v9229
      %v9231 = vpop.f32.mrf.mxu0
      %v9232 = vpop.f32.mrf.mxu0
      %v9233 = vadd.f32 %v9121, %v9232
      %v9234 = vpop.f32.mrf.mxu0
      %9235 = vmatprep.mubr.bf16.mxu0 0
      %9236 = vmatmul.mubr.bf16.gmra.mxu0 %v9160
      %v9237 = vpop.f32.mrf.mxu0
      %v9238 = vadd.f32 %v9121, %v9237
      %v9239 = vpop.f32.mrf.mxu0
      %v9240 = vpop.f32.mrf.mxu0
      %v9241 = vadd.f32 %v9121, %v9240
      %v9242 = vpop.f32.mrf.mxu0
      %9243 = vmatprep.mubr.bf16.mxu0 0
      %9244 = vmatmul.mubr.bf16.gmra.mxu0 %v9163
      %v9245 = vpop.f32.mrf.mxu0
      %v9246 = vadd.f32 %v9121, %v9245
      %v9247 = vpop.f32.mrf.mxu0
      %v9248 = vpop.f32.mrf.mxu0
      %v9249 = vadd.f32 %v9121, %v9248
      %v9250 = vpop.f32.mrf.mxu0
      %9251 = vmatprep.mubr.bf16.mxu0 0
      %9252 = vmatmul.mubr.bf16.gmra.mxu0 %v9166
      %v9253 = vpop.f32.mrf.mxu0
      %v9254 = vadd.f32 %v9121, %v9253
      %v9255 = vpop.f32.mrf.mxu0
      %v9256 = vpop.f32.mrf.mxu0
      %v9257 = vadd.f32 %v9121, %v9256
      %v9258 = vpop.f32.mrf.mxu0
      %9259 = vmatprep.mubr.bf16.mxu0 0
      %9260 = vmatmul.mubr.bf16.gmra.mxu0 %v9169
      %v9261 = vpop.f32.mrf.mxu0
      %v9262 = vadd.f32 %v9121, %v9261
      %v9263 = vpop.f32.mrf.mxu0
      %v9264 = vpop.f32.mrf.mxu0
      %v9265 = vadd.f32 %v9121, %v9264
      %v9266 = vpop.f32.mrf.mxu0
      %9267 = vdwg.mxu0
      %v9268 = vmax.f32 %v9206, 0.0
      %v9269 = vmax.f32 %v9209, 0.0
      %v9270 = vmax.f32 %v9214, 0.0
      %v9271 = vmax.f32 %v9217, 0.0
      %v9272 = vmax.f32 %v9222, 0.0
      %v9273 = vmax.f32 %v9225, 0.0
      %v9274 = vmax.f32 %v9230, 0.0
      %v9275 = vmax.f32 %v9233, 0.0
      %v9276 = vmax.f32 %v9238, 0.0
      %v9277 = vmax.f32 %v9241, 0.0
      %v9278 = vmax.f32 %v9246, 0.0
      %v9279 = vmax.f32 %v9249, 0.0
      %v9280 = vmax.f32 %v9254, 0.0
      %v9281 = vmax.f32 %v9257, 0.0
      %v9282 = vmax.f32 %v9262, 0.0
      %v9283 = vmax.f32 %v9265, 0.0
      %v9284 = vpack.c.bf16 %v9269, %v9268
      %v9285 = vpack.c.bf16 %v9271, %v9270
      %v9286 = vpack.c.bf16 %v9273, %v9272
      %v9287 = vpack.c.bf16 %v9275, %v9274
      %v9288 = vpack.c.bf16 %v9277, %v9276
      %v9289 = vpack.c.bf16 %v9279, %v9278
      %v9290 = vpack.c.bf16 %v9281, %v9280
      %v9291 = vpack.c.bf16 %v9283, %v9282
      %v9292 = vld [vmem:[%s10] sm:$0xf]
      %v9293 = vld [vmem:[%s10 + $0x4] sm:$0xf]
      %v9294 = vld [vmem:[%s10 + $0x8] sm:$0xf]
      %v9295 = vld [vmem:[%s10 + $0xc] sm:$0xf]
      %v9296 = vld [vmem:[%s11] sm:$0x1]
      %v9298 = vlaneseq
      %v9299 = vshrl.u32 %v9298, 7
      %v9300 = vsub.s32 0, %v9299
      %v9301 = vrot.slane %v9296, %v9300
      %v9307 = vunpack.c.l.b16 %v9292
      %v9308 = vunpack.c.l.b16 %v9293
      %v9309 = vunpack.c.l.b16 %v9294
      %v9310 = vunpack.c.l.b16 %v9295
      %v9311 = vpack.c.b16 %v9308, %v9307
      %v9312 = vpack.c.b16 %v9310, %v9309
      %v9316 = vsel %vm3575, %v9284, 0
      %v9319 = vsel %vm3575, %v9285, 0
      %v9322 = vsel %vm3575, %v9286, 0
      %v9325 = vsel %vm3575, %v9287, 0
      %v9328 = vsel %vm3575, %v9288, 0
      %v9331 = vsel %vm3575, %v9289, 0
      %v9334 = vsel %vm3575, %v9290, 0
      %v9337 = vsel %vm3575, %v9291, 0
      %9339 = vmatprep.subr.bf16.mxu0 0
      %9340 = vmatpush1.bf16.msra.mxu0 0
      %9341 = vmatprep.subr.bf16.mxu0 0
      %9342 = vmatpush1.bf16.msra.mxu0 0
      %9343 = vmatprep.subr.bf16.mxu0 0
      %9344 = vmatpush1.bf16.msra.mxu0 0
      %9345 = vmatprep.subr.bf16.mxu0 0
      %9346 = vmatpush1.bf16.msra.mxu0 0
      %9347 = vmatprep.subr.bf16.mxu0 0
      %9348 = vmatpush1.bf16.msra.mxu0 0
      %9349 = vmatprep.subr.bf16.mxu0 0
      %9350 = vmatpush1.bf16.msra.mxu0 0
      %9351 = vmatprep.subr.bf16.mxu0 0
      %9352 = vmatpush1.bf16.msra.mxu0 %v9312
      %9353 = vmatprep.subr.bf16.mxu0 0
      %9354 = vmatpush1.bf16.msra.mxu0 %v9311
      %9355 = vmatprep.subr.bf16.mxu0 0
      %9356 = vmatpush2.bf16.msra.mxu0 0
      %9357 = vmatprep.subr.bf16.mxu0 0
      %9358 = vmatpush2.bf16.msra.mxu0 0
      %9359 = vmatprep.subr.bf16.mxu0 0
      %9360 = vmatpush2.bf16.msra.mxu0 0
      %9361 = vmatprep.subr.bf16.mxu0 0
      %9362 = vmatpush2.bf16.msra.mxu0 0
      %9363 = vmatprep.subr.bf16.mxu0 0
      %9364 = vmatpush2.bf16.msra.mxu0 0
      %9365 = vmatprep.subr.bf16.mxu0 0
      %9366 = vmatpush2.bf16.msra.mxu0 0
      %9367 = vmatprep.subr.bf16.mxu0 0
      %9368 = vmatpush2.bf16.msra.mxu0 0
      %9369 = vmatprep.subr.bf16.mxu0 0
      %9370 = vmatpush2.bf16.msra.mxu0 0
      %9371 = vmatprep.mubr.bf16.mxu0 0
      %9372 = vmatmul.mubr.bf16.gmra.mxu0 %v9316
      %v9373 = vpop.f32.mrf.mxu0
      %v9374 = vadd.f32 %v9301, %v9373
      %v9375 = vpop.f32.mrf.mxu0
      %v9376 = vpop.f32.mrf.mxu0
      %v9377 = vadd.f32 %v9301, %v9376
      %v9378 = vpop.f32.mrf.mxu0
      %9379 = vmatprep.mubr.bf16.mxu0 0
      %9380 = vmatmul.mubr.bf16.gmra.mxu0 %v9319
      %v9381 = vpop.f32.mrf.mxu0
      %v9382 = vadd.f32 %v9301, %v9381
      %v9383 = vpop.f32.mrf.mxu0
      %v9384 = vpop.f32.mrf.mxu0
      %v9385 = vadd.f32 %v9301, %v9384
      %v9386 = vpop.f32.mrf.mxu0
      %9387 = vmatprep.mubr.bf16.mxu0 0
      %9388 = vmatmul.mubr.bf16.gmra.mxu0 %v9322
      %v9389 = vpop.f32.mrf.mxu0
      %v9390 = vadd.f32 %v9301, %v9389
      %v9391 = vpop.f32.mrf.mxu0
      %v9392 = vpop.f32.mrf.mxu0
      %v9393 = vadd.f32 %v9301, %v9392
      %v9394 = vpop.f32.mrf.mxu0
      %9395 = vmatprep.mubr.bf16.mxu0 0
      %9396 = vmatmul.mubr.bf16.gmra.mxu0 %v9325
      %v9397 = vpop.f32.mrf.mxu0
      %v9398 = vadd.f32 %v9301, %v9397
      %v9399 = vpop.f32.mrf.mxu0
      %v9400 = vpop.f32.mrf.mxu0
      %v9401 = vadd.f32 %v9301, %v9400
      %v9402 = vpop.f32.mrf.mxu0
      %9403 = vmatprep.mubr.bf16.mxu0 0
      %9404 = vmatmul.mubr.bf16.gmra.mxu0 %v9328
      %v9405 = vpop.f32.mrf.mxu0
      %v9406 = vadd.f32 %v9301, %v9405
      %v9407 = vpop.f32.mrf.mxu0
      %v9408 = vpop.f32.mrf.mxu0
      %v9409 = vadd.f32 %v9301, %v9408
      %v9410 = vpop.f32.mrf.mxu0
      %9411 = vmatprep.mubr.bf16.mxu0 0
      %9412 = vmatmul.mubr.bf16.gmra.mxu0 %v9331
      %v9413 = vpop.f32.mrf.mxu0
      %v9414 = vadd.f32 %v9301, %v9413
      %v9415 = vpop.f32.mrf.mxu0
      %v9416 = vpop.f32.mrf.mxu0
      %v9417 = vadd.f32 %v9301, %v9416
      %v9418 = vpop.f32.mrf.mxu0
      %9419 = vmatprep.mubr.bf16.mxu0 0
      %9420 = vmatmul.mubr.bf16.gmra.mxu0 %v9334
      %v9421 = vpop.f32.mrf.mxu0
      %v9422 = vadd.f32 %v9301, %v9421
      %v9423 = vpop.f32.mrf.mxu0
      %v9424 = vpop.f32.mrf.mxu0
      %v9425 = vadd.f32 %v9301, %v9424
      %v9426 = vpop.f32.mrf.mxu0
      %9427 = vmatprep.mubr.bf16.mxu0 0
      %9428 = vmatmul.mubr.bf16.gmra.mxu0 %v9337
      %v9429 = vpop.f32.mrf.mxu0
      %v9430 = vadd.f32 %v9301, %v9429
      %v9431 = vpop.f32.mrf.mxu0
      %v9432 = vpop.f32.mrf.mxu0
      %v9433 = vadd.f32 %v9301, %v9432
      %v9434 = vpop.f32.mrf.mxu0
      %9435 = vdwg.mxu0
      %9436 = vst.msk [vmem:[%s415] sm:$0xff] %vm3600, %v9374
      %9437 = vst.msk [vmem:[%s415 + $0x8] sm:$0xff] %vm3600, %v9377
      %9438 = vst.msk [vmem:[%s415 + $0x10] sm:$0xff] %vm3600, %v9382
      %9439 = vst.msk [vmem:[%s415 + $0x18] sm:$0xff] %vm3600, %v9385
      %9440 = vst.msk [vmem:[%s415 + $0x20] sm:$0xff] %vm3600, %v9390
      %9441 = vst.msk [vmem:[%s415 + $0x28] sm:$0xff] %vm3600, %v9393
      %9442 = vst.msk [vmem:[%s415 + $0x30] sm:$0xff] %vm3600, %v9398
      %9443 = vst.msk [vmem:[%s415 + $0x38] sm:$0xff] %vm3600, %v9401
      %9444 = vst.msk [vmem:[%s415 + $0x40] sm:$0xff] %vm3600, %v9406
      %9445 = vst.msk [vmem:[%s415 + $0x48] sm:$0xff] %vm3600, %v9409
      %9446 = vst.msk [vmem:[%s415 + $0x50] sm:$0xff] %vm3600, %v9414
      %9447 = vst.msk [vmem:[%s415 + $0x58] sm:$0xff] %vm3600, %v9417
      %9448 = vst.msk [vmem:[%s415 + $0x60] sm:$0xff] %vm3600, %v9422
      %9449 = vst.msk [vmem:[%s415 + $0x68] sm:$0xff] %vm3600, %v9425
      %9450 = vst.msk [vmem:[%s415 + $0x70] sm:$0xff] %vm3600, %v9430
      %9451 = vst.msk [vmem:[%s415 + $0x78] sm:$0xff] %vm3600, %v9433
      %s9452 = smul.u32 16, %s23
      %p9453 = scmp.lt.s32.totalorder %s9452, 31
      %s9454 = scalar_select %p9453, %s9452, 31
      %s9455 = smul.addr %s9454, 8
      %s9456 = scalar_lea.vmem %s12, %s9455
      // Predicated region
      $region69: #{model_forward.1} parent=67 // pred_check
        %p9457 = pneg %p298
      $region70: #{model_forward.1} parent=67 // pred_check_branch
        %9459 = sbr.rel (%p9457) target = $region72
      $region71: #{model_forward.1} parent=67 // pred_region
        %s9460 = smul.u32 16, %s23
      $region72: #{model_forward.1} parent=67 // pred_fallthru
        _
    $region68: #{model_forward.1} parent=5 // pred_fallthru
      _
    %p9461 = scmp.le.s32.totalorder 2, %s18
    // Predicated region
    $region73: #{model_forward.1} parent=5 // pred_check
      %p9462 = pneg %p9461
    $region74: #{model_forward.1} parent=5 // pred_check_branch
      %9464 = sbr.rel (%p9462) target = $region76
    $region75: #{model_forward.1} parent=5 // pred_region
      %s9465 = ssub.s32 %s18, 2
      // Predicated region
      $region77: #{model_forward.1} parent=75 // pred_check
        %p9466 = pneg %p304
      $region78: #{model_forward.1} parent=75 // pred_check_branch
        %9468 = sbr.rel (%p9466) target = $region80
      $region79: #{model_forward.1} parent=75 // pred_region
        %s9469 = smul.u32 16, %s24
        %p9470 = scmp.lt.s32.totalorder %s9469, 31
        %s9471 = scalar_select %p9470, %s9469, 31
        %s9472 = smul.addr %s9471, 8
        %s9473 = scalar_lea.vmem %s12, %s9472
      $region80: #{model_forward.1} parent=75 // pred_fallthru
        _
    $region76: #{model_forward.1} parent=5 // pred_fallthru
      _
  $region6: #{model_forward.1} parent=0 // loop_footer
    %s22 = sadd.s32 1, %s18
  $region7: #{model_forward.1} parent=0 // loop_footer_branch
    %17 = sbr.rel target = $region3
  $region8: #{model_forward.1} parent=0 // loop_exit
    _

</llo_original>
